<compile_context>
chip_gen: v6e
topology: v6e:2x2x1
jax: 0.10.0
libtpu: 0.0.40
codegen_flags: <defaults>
</compile_context>

<pallas_src>
import functools

import numpy as np

import jax
import jax.numpy as jnp
from jax.experimental import pallas as pl
from jax.experimental.pallas import tpu as pltpu

# ---------------------------------------------------------------------------
# Static geometry (matches nn.Linear(1536, 512): 64 ch * 4 * 6 spatial).
# ---------------------------------------------------------------------------
BATCH = 2
IMG_CHANNELS = 4
IMG_ROWS = 20
IMG_COLS = 40
NUM_ACTIONS = 4

K1, S1, P1 = 8, 4, 4   # conv1
K2, S2, P2 = 4, 2, 2   # conv2
K3, S3, P3 = 3, 1, 1   # conv3


def _conv_out(n, k, s, p):
    return (n + 2 * p - k) // s + 1


def _geometry(batch):
    h1, w1 = _conv_out(IMG_ROWS, K1, S1, P1), _conv_out(IMG_COLS, K1, S1, P1)
    h2, w2 = _conv_out(h1, K2, S2, P2), _conv_out(w1, K2, S2, P2)
    h3, w3 = _conv_out(h2, K3, S3, P3), _conv_out(w2, K3, S3, P3)
    return dict(h1=h1, w1=w1, h2=h2, w2=w2, h3=h3, w3=w3,
                r1=batch * h1 * w1, r2=batch * h2 * w2, r3=batch * h3 * w3,
                feat_rows=h3 * w3)


# ---------------------------------------------------------------------------
# One-time preprocessing helpers (NOT in the per-forward hot path).
# ---------------------------------------------------------------------------
def _build_gather(batch, h_in, w_in, k, stride, pad):
    """0/1 matrix of shape (k*k*R_out, R_in): tap-major row-gather of the
    previous activation (rows ordered (n, h, w)); entries for the conv's
    zero padding are all-zero rows."""
    h_out, w_out = _conv_out(h_in, k, stride, pad), _conv_out(w_in, k, stride, pad)
    r_out, r_in = batch * h_out * w_out, batch * h_in * w_in
    g = np.zeros((k * k, r_out, r_in), np.float32)
    for i in range(k):
        for j in range(k):
            for b in range(batch):
                for oh in range(h_out):
                    ih = oh * stride + i - pad
                    if not 0 <= ih < h_in:
                        continue
                    for ow in range(w_out):
                        iw = ow * stride + j - pad
                        if not 0 <= iw < w_in:
                            continue
                        g[i * k + j,
                          (b * h_out + oh) * w_out + ow,
                          (b * h_in + ih) * w_in + iw] = 1.0
    return g.reshape(k * k * r_out, r_in)


def init_params(key, img_channels, num_actions):
    def unif(k, shape, fan_in):
        bound = 1.0 / float(fan_in) ** 0.5
        return jax.random.uniform(k, shape, jnp.float32, -bound, bound)

    ks = jax.random.split(key, 10)
    return {
        "conv1_w": unif(ks[0], (32, img_channels, 8, 8), img_channels * 64),
        "conv1_b": unif(ks[1], (32,), img_channels * 64),
        "conv2_w": unif(ks[2], (64, 32, 4, 4), 32 * 16),
        "conv2_b": unif(ks[3], (64,), 32 * 16),
        "conv3_w": unif(ks[4], (64, 64, 3, 3), 64 * 9),
        "conv3_b": unif(ks[5], (64,), 64 * 9),
        "fc1_w": unif(ks[6], (512, 1536), 1536),
        "fc1_b": unif(ks[7], (512,), 1536),
        "fc2_w": unif(ks[8], (num_actions, 512), 512),
        "fc2_b": unif(ks[9], (num_actions,), 512),
    }


def preprocess_params(params, batch=BATCH):
    """One-time weight preprocessing: conv weights to tap-major bf16, gather
    matrices in bf16 (0/1, exact), fc1 weight permuted from PyTorch
    NCHW-flatten column order to our (position, channel) row order and
    pre-flattened to 2-D bf16, fc2 pre-transposed (kept f32)."""
    geo = _geometry(batch)
    bf16 = jnp.bfloat16

    def tapped(w):                                   # (O, I, k, k) -> (k*k, I, O)
        o, i, kh, kw = w.shape
        return jnp.transpose(w, (2, 3, 1, 0)).reshape(kh * kw, i, o)

    w1f = tapped(params["conv1_w"]).reshape(K1 * K1 * IMG_CHANNELS, -1)  # (256, 32)
    w2t = tapped(params["conv2_w"])                                      # (16, 32, 64)
    w3t = tapped(params["conv3_w"])                                      # (9, 64, 64)

    c3 = params["conv3_w"].shape[0]                   # 64
    out_f = params["fc1_w"].shape[0]                  # 512
    # PyTorch flatten index = c*feat_rows + p ; our flatten index = p*c3 + c.
    wf1 = (params["fc1_w"]
           .reshape(out_f, c3, geo["feat_rows"])      # (512, 64, 24)
           .transpose(2, 1, 0)                        # (24, 64, 512) = (p, c, o)
           .reshape(geo["feat_rows"] * c3, out_f)     # (1536, 512)
           .astype(bf16))

    return {
        "w1": w1f.astype(bf16), "b1": params["conv1_b"].reshape(1, -1),
        "g2": jnp.asarray(_build_gather(batch, geo["h1"], geo["w1"], K2, S2, P2),
                          dtype=bf16),
        "w2": w2t.astype(bf16), "b2": params["conv2_b"].reshape(1, -1),
        "g3": jnp.asarray(_build_gather(batch, geo["h2"], geo["w2"], K3, S3, P3),
                          dtype=bf16),
        "w3": w3t.astype(bf16), "b3": params["conv3_b"].reshape(1, -1),
        "wf1": wf1, "bf1": params["fc1_b"].reshape(1, -1),
        "wf2": params["fc2_w"].T, "bf2": params["fc2_b"].reshape(1, -1),
    }


# ---------------------------------------------------------------------------
# The fused Pallas kernel: conv1+conv2+conv3+fc1+fc2, all VMEM-resident.
# ---------------------------------------------------------------------------
def _fused_kernel(p1_ref, w1_ref, b1_ref, w2_ref, b2_ref, w3_ref, b3_ref,
                  bf1_ref, wf2_ref, bf2_ref,
                  g2_hbm, g3_hbm, wf1_hbm,
                  out_ref,
                  g2_vmem, g3_vmem, wf1_vmem, y3_scr, flat_scr, sems,
                  *, batch, r2, r3, taps2, taps3, feat_rows):
    f32, bf16 = jnp.float32, jnp.bfloat16

    # Kick off all large prologue DMAs up front (issued in order of first use)
    # so they overlap the conv compute instead of being exposed latency.
    cp_g2 = pltpu.make_async_copy(g2_hbm, g2_vmem, sems.at[0])
    cp_g3 = pltpu.make_async_copy(g3_hbm, g3_vmem, sems.at[1])
    cp_wf1 = pltpu.make_async_copy(wf1_hbm, wf1_vmem, sems.at[2])
    cp_g2.start()
    cp_g3.start()
    cp_wf1.start()

    # ---- conv1: im2col GEMM (bf16 x bf16 -> f32) + bias + ReLU -------------
    y1 = jnp.dot(p1_ref[...], w1_ref[...], preferred_element_type=f32)
    y1 = jnp.maximum(y1 + b1_ref[...], 0.0).astype(bf16)          # (R1, 32)

    # ---- conv2: ONE fused gather matmul, then per-tap weight GEMMs ---------
    cp_g2.wait()
    # p2 rows are tap-major: tap t occupies rows [t*r2, (t+1)*r2). 0/1 gather
    # keeps values exactly bf16-representable, so the cast below is exact.
    p2 = jnp.dot(g2_vmem[...], y1, preferred_element_type=f32).astype(bf16)
    acc2 = jnp.dot(p2[0:r2, :], w2_ref[0], preferred_element_type=f32)
    for t in range(1, taps2):
        acc2 = acc2 + jnp.dot(p2[t * r2:(t + 1) * r2, :], w2_ref[t],
                              preferred_element_type=f32)
    y2 = jnp.maximum(acc2 + b2_ref[...], 0.0).astype(bf16)        # (R2, 64)

    # ---- conv3: same scheme -------------------------------------------------
    cp_g3.wait()
    p3 = jnp.dot(g3_vmem[...], y2, preferred_element_type=f32).astype(bf16)
    acc3 = jnp.dot(p3[0:r3, :], w3_ref[0], preferred_element_type=f32)
    for t in range(1, taps3):
        acc3 = acc3 + jnp.dot(p3[t * r3:(t + 1) * r3, :], w3_ref[t],
                              preferred_element_type=f32)
    y3 = jnp.maximum(acc3 + b3_ref[...], 0.0)                     # (R3, 64) f32

    # ---- flatten (b, p, c) -> (b, p*64 + c) via explicit VMEM relayout ------
    # wf1's rows were pre-permuted to this (p, c) order. Static row copies are
    # guaranteed to lower (a generic (48,64)->(2,1536) value reshape is not).
    c3 = y3_scr.shape[1]
    y3_scr[...] = y3
    for b in range(batch):
        for p in range(feat_rows):
            r = b * feat_rows + p
            flat_scr[b:b + 1, p * c3:(p + 1) * c3] = y3_scr[r:r + 1, :]

    # ---- fc1: ONE (B, 1536) x (1536, 512) bf16 matmul + bias + ReLU ---------
    cp_wf1.wait()
    flat = flat_scr[...].astype(bf16)
    h = jnp.dot(flat, wf1_vmem[...], preferred_element_type=f32)
    h = jnp.maximum(h + bf1_ref[...], 0.0)                        # (B, 512)

    # ---- fc2 (no ReLU; kept f32 — it is tiny and sets final accuracy) -------
    out_ref[...] = (jnp.dot(h, wf2_ref[...], preferred_element_type=f32)
                    + bf2_ref[...]).astype(out_ref.dtype)


# ---------------------------------------------------------------------------
# Forward wrapper.
# ---------------------------------------------------------------------------
def _im2col_conv1(x_nhwc):
    """conv1 patch matrix (tap-major, channel-minor columns) built from the
    tiny raw input; its (R1, 256) bf16 output is the kernel's activation
    input."""
    n, h, w, c = x_nhwc.shape
    ho, wo = _conv_out(h, K1, S1, P1), _conv_out(w, K1, S1, P1)
    xp = jnp.pad(x_nhwc, ((0, 0), (P1, P1), (P1, P1), (0, 0)))
    taps = []
    for i in range(K1):
        for j in range(K1):
            taps.append(xp[:, i:i + S1 * ho:S1, j:j + S1 * wo:S1, :])
    cols = jnp.stack(taps, axis=3)                   # (n, ho, wo, K1*K1, c)
    return cols.reshape(n * ho * wo, K1 * K1 * c).astype(jnp.bfloat16)


@jax.jit
def qlearning_forward(prep, x):
    """x: NCHW (B, C, H, W) float32 -> (B, num_actions) float32."""
    batch = x.shape[0]
    geo = _geometry(batch)
    p1 = _im2col_conv1(jnp.transpose(x, (0, 2, 3, 1)))           # (R1, 256) bf16

    num_actions = prep["wf2"].shape[1]
    c3 = prep["w3"].shape[2]
    kernel = functools.partial(
        _fused_kernel, batch=batch, r2=geo["r2"], r3=geo["r3"],
        taps2=K2 * K2, taps3=K3 * K3, feat_rows=geo["feat_rows"])

    vmem = pltpu.MemorySpace.VMEM
    in_specs = ([pl.BlockSpec(memory_space=vmem)] * 10
                + [pl.BlockSpec(memory_space=pl.ANY)] * 3)   # g2, g3, wf1 in HBM

    # TODO(synk): for batch scaling / v7x dual-TensorCore use, switch to
    # per-sample gather matrices and a leading grid=(batch,) "parallel" axis.
    return pl.pallas_call(
        kernel,
        out_shape=jax.ShapeDtypeStruct((batch, num_actions), jnp.float32),
        in_specs=in_specs,
        out_specs=pl.BlockSpec(memory_space=vmem),
        scratch_shapes=[
            pltpu.VMEM(prep["g2"].shape, jnp.bfloat16),          # g2 landing buf
            pltpu.VMEM(prep["g3"].shape, jnp.bfloat16),          # g3 landing buf
            pltpu.VMEM(prep["wf1"].shape, jnp.bfloat16),         # fc1 weight buf
            pltpu.VMEM((geo["r3"], c3), jnp.float32),            # y3 relayout src
            pltpu.VMEM((batch, geo["feat_rows"] * c3), jnp.float32),  # flat lhs
            pltpu.SemaphoreType.DMA((3,)),
        ],
    )(p1, prep["w1"], prep["b1"], prep["w2"], prep["b2"],
      prep["w3"], prep["b3"], prep["bf1"], prep["wf2"], prep["bf2"],
      prep["g2"], prep["g3"], prep["wf1"])


# ---------------------------------------------------------------------------
# Pure-JAX reference (XLA conv / dot, all f32) for correctness checking.
# ---------------------------------------------------------------------------
def reference_forward(params, x):
    def conv(x, w, b, stride, pad):
        y = jax.lax.conv_general_dilated(
            x, w, window_strides=(stride, stride),
            padding=((pad, pad), (pad, pad)),
            dimension_numbers=("NCHW", "OIHW", "NCHW"))
        return y + b[None, :, None, None]

    x = jax.nn.relu(conv(x, params["conv1_w"], params["conv1_b"], 4, 4))
    x = jax.nn.relu(conv(x, params["conv2_w"], params["conv2_b"], 2, 2))
    x = jax.nn.relu(conv(x, params["conv3_w"], params["conv3_b"], 1, 1))
    x = x.reshape(x.shape[0], -1)
    x = jax.nn.relu(x @ params["fc1_w"].T + params["fc1_b"])
    return x @ params["fc2_w"].T + params["fc2_b"]


if __name__ == "__main__":
    # Spatial size 20x40 so the flattened conv3 output is exactly 1536
    # (64 channels * 4 * 6), as hardcoded in fc1 of the module.
    key = jax.random.PRNGKey(0)
    k_param, k_x = jax.random.split(key)
    params = init_params(k_param, IMG_CHANNELS, NUM_ACTIONS)
    x = jax.random.normal(k_x, (BATCH, IMG_CHANNELS, IMG_ROWS, IMG_COLS),
                          dtype=jnp.float32)

    prep = preprocess_params(params)          # one-time, outside the hot path

    out = jax.block_until_ready(qlearning_forward(prep, x))
    assert out.shape == (BATCH, NUM_ACTIONS), out.shape

    ref = jax.block_until_ready(reference_forward(params, x))
    # Tolerance loose because the whole GEMM path (activations + weights) is
    # bf16 with f32 accumulation; a layout bug would produce O(0.1+) errors.
    assert jnp.allclose(out, ref, atol=2e-2, rtol=2e-2), (
        float(jnp.max(jnp.abs(out - ref))))

    print("KERNEL_OK")
</pallas_src>

<mosaic_0001>
module attributes {stable_mosaic.version = 11 : i64} {
  func.func @_fused_kernel(%arg0: memref<132x256xbf16, #tpu.memory_space<vmem>>, %arg1: memref<256x32xbf16, #tpu.memory_space<vmem>>, %arg2: memref<1x32xf32, #tpu.memory_space<vmem>>, %arg3: memref<16x32x64xbf16, #tpu.memory_space<vmem>>, %arg4: memref<1x64xf32, #tpu.memory_space<vmem>>, %arg5: memref<9x64x64xbf16, #tpu.memory_space<vmem>>, %arg6: memref<1x64xf32, #tpu.memory_space<vmem>>, %arg7: memref<1x512xf32, #tpu.memory_space<vmem>>, %arg8: memref<512x4xf32, #tpu.memory_space<vmem>>, %arg9: memref<1x4xf32, #tpu.memory_space<vmem>>, %arg10: memref<768x132xbf16, #tpu.memory_space<any>>, %arg11: memref<432x48xbf16, #tpu.memory_space<any>>, %arg12: memref<1536x512xbf16, #tpu.memory_space<any>>, %arg13: memref<2x4xf32, #tpu.memory_space<vmem>>, %arg14: memref<768x132xbf16, #tpu.memory_space<vmem>>, %arg15: memref<432x48xbf16, #tpu.memory_space<vmem>>, %arg16: memref<1536x512xbf16, #tpu.memory_space<vmem>>, %arg17: memref<48x64xf32, #tpu.memory_space<vmem>>, %arg18: memref<2x1536xf32, #tpu.memory_space<vmem>>, %arg19: memref<3x!tpu.dma_semaphore, #tpu.memory_space<semaphore_mem>>) attributes {dimension_semantics = [], scalar_prefetch = 0 : i64, scratch_operands = 6 : i64, tpu.core_type = #tpu.core_type<tc>} {
    %c0_i32 = arith.constant 0 : i32
    %0 = tpu.memref_slice %arg19[%c0_i32] : memref<3x!tpu.dma_semaphore, #tpu.memory_space<semaphore_mem>> -> memref<1x!tpu.dma_semaphore, #tpu.memory_space<semaphore_mem>>
    %1 = tpu.memref_squeeze %0 : memref<1x!tpu.dma_semaphore, #tpu.memory_space<semaphore_mem>> -> memref<!tpu.dma_semaphore, #tpu.memory_space<semaphore_mem>>
    tpu.enqueue_dma source(%arg10 : memref<768x132xbf16, #tpu.memory_space<any>>) target(%arg14 : memref<768x132xbf16, #tpu.memory_space<vmem>>) target_semaphore(%1 : memref<!tpu.dma_semaphore, #tpu.memory_space<semaphore_mem>>)
    %c1_i32 = arith.constant 1 : i32
    %2 = tpu.memref_slice %arg19[%c1_i32] : memref<3x!tpu.dma_semaphore, #tpu.memory_space<semaphore_mem>> -> memref<1x!tpu.dma_semaphore, #tpu.memory_space<semaphore_mem>>
    %3 = tpu.memref_squeeze %2 : memref<1x!tpu.dma_semaphore, #tpu.memory_space<semaphore_mem>> -> memref<!tpu.dma_semaphore, #tpu.memory_space<semaphore_mem>>
    tpu.enqueue_dma source(%arg11 : memref<432x48xbf16, #tpu.memory_space<any>>) target(%arg15 : memref<432x48xbf16, #tpu.memory_space<vmem>>) target_semaphore(%3 : memref<!tpu.dma_semaphore, #tpu.memory_space<semaphore_mem>>)
    %c2_i32 = arith.constant 2 : i32
    %4 = tpu.memref_slice %arg19[%c2_i32] : memref<3x!tpu.dma_semaphore, #tpu.memory_space<semaphore_mem>> -> memref<1x!tpu.dma_semaphore, #tpu.memory_space<semaphore_mem>>
    %5 = tpu.memref_squeeze %4 : memref<1x!tpu.dma_semaphore, #tpu.memory_space<semaphore_mem>> -> memref<!tpu.dma_semaphore, #tpu.memory_space<semaphore_mem>>
    tpu.enqueue_dma source(%arg12 : memref<1536x512xbf16, #tpu.memory_space<any>>) target(%arg16 : memref<1536x512xbf16, #tpu.memory_space<vmem>>) target_semaphore(%5 : memref<!tpu.dma_semaphore, #tpu.memory_space<semaphore_mem>>)
    %c0 = arith.constant 0 : index
    %c0_0 = arith.constant 0 : index
    %6 = vector.load %arg0[%c0, %c0_0] : memref<132x256xbf16, #tpu.memory_space<vmem>>, vector<132x256xbf16>
    %c0_1 = arith.constant 0 : index
    %c0_2 = arith.constant 0 : index
    %7 = vector.load %arg1[%c0_1, %c0_2] : memref<256x32xbf16, #tpu.memory_space<vmem>>, vector<256x32xbf16>
    %cst = arith.constant dense<0.000000e+00> : vector<132x32xf32>
    %8 = tpu.matmul %6, %7, %cst {dimension_numbers = #tpu.dot_dimension_numbers<[1], [0], [0], [1], [0, 0, 1, 1], [], []>} : vector<132x256xbf16>, vector<256x32xbf16>, vector<132x32xf32> -> vector<132x32xf32>
    %c0_3 = arith.constant 0 : index
    %c0_4 = arith.constant 0 : index
    %9 = vector.load %arg2[%c0_3, %c0_4] : memref<1x32xf32, #tpu.memory_space<vmem>>, vector<1x32xf32>
    %10 = vector.broadcast %9 : vector<1x32xf32> to vector<132x32xf32>
    %11 = arith.addf %8, %10 : vector<132x32xf32>
    %cst_5 = arith.constant 0.000000e+00 : f32
    %12 = vector.broadcast %cst_5 : f32 to vector<132x32xf32>
    %13 = arith.maximumf %11, %12 : vector<132x32xf32>
    %14 = arith.truncf %13 : vector<132x32xf32> to vector<132x32xbf16>
    %c0_i32_6 = arith.constant 0 : i32
    %15 = tpu.memref_slice %arg19[%c0_i32_6] : memref<3x!tpu.dma_semaphore, #tpu.memory_space<semaphore_mem>> -> memref<1x!tpu.dma_semaphore, #tpu.memory_space<semaphore_mem>>
    %16 = tpu.memref_squeeze %15 : memref<1x!tpu.dma_semaphore, #tpu.memory_space<semaphore_mem>> -> memref<!tpu.dma_semaphore, #tpu.memory_space<semaphore_mem>>
    tpu.wait_dma2 semaphore(%16 : memref<!tpu.dma_semaphore, #tpu.memory_space<semaphore_mem>>) src(%arg10 : memref<768x132xbf16, #tpu.memory_space<any>>) dst(%arg14 : memref<768x132xbf16, #tpu.memory_space<vmem>>)
    %c0_7 = arith.constant 0 : index
    %c0_8 = arith.constant 0 : index
    %17 = vector.load %arg14[%c0_7, %c0_8] : memref<768x132xbf16, #tpu.memory_space<vmem>>, vector<768x132xbf16>
    %cst_9 = arith.constant dense<0.000000e+00> : vector<768x32xf32>
    %18 = tpu.matmul %17, %14, %cst_9 {dimension_numbers = #tpu.dot_dimension_numbers<[1], [0], [0], [1], [0, 0, 1, 1], [], []>} : vector<768x132xbf16>, vector<132x32xbf16>, vector<768x32xf32> -> vector<768x32xf32>
    %19 = arith.truncf %18 : vector<768x32xf32> to vector<768x32xbf16>
    %20 = vector.extract_strided_slice %19 {offsets = [0, 0], sizes = [48, 32], strides = [1, 1]} : vector<768x32xbf16> to vector<48x32xbf16>
    %c0_10 = arith.constant 0 : index
    %c0_11 = arith.constant 0 : index
    %c0_12 = arith.constant 0 : index
    %21 = vector.load %arg3[%c0_10, %c0_11, %c0_12] : memref<16x32x64xbf16, #tpu.memory_space<vmem>>, vector<1x32x64xbf16>
    %22 = vector.shape_cast %21 : vector<1x32x64xbf16> to vector<32x64xbf16>
    %cst_13 = arith.constant dense<0.000000e+00> : vector<48x64xf32>
    %23 = tpu.matmul %20, %22, %cst_13 {dimension_numbers = #tpu.dot_dimension_numbers<[1], [0], [0], [1], [0, 0, 1, 1], [], []>} : vector<48x32xbf16>, vector<32x64xbf16>, vector<48x64xf32> -> vector<48x64xf32>
    %24 = vector.extract_strided_slice %19 {offsets = [48, 0], sizes = [48, 32], strides = [1, 1]} : vector<768x32xbf16> to vector<48x32xbf16>
    %c1 = arith.constant 1 : index
    %c0_14 = arith.constant 0 : index
    %c0_15 = arith.constant 0 : index
    %25 = vector.load %arg3[%c1, %c0_14, %c0_15] : memref<16x32x64xbf16, #tpu.memory_space<vmem>>, vector<1x32x64xbf16>
    %26 = vector.shape_cast %25 : vector<1x32x64xbf16> to vector<32x64xbf16>
    %cst_16 = arith.constant dense<0.000000e+00> : vector<48x64xf32>
    %27 = tpu.matmul %24, %26, %cst_16 {dimension_numbers = #tpu.dot_dimension_numbers<[1], [0], [0], [1], [0, 0, 1, 1], [], []>} : vector<48x32xbf16>, vector<32x64xbf16>, vector<48x64xf32> -> vector<48x64xf32>
    %28 = arith.addf %23, %27 : vector<48x64xf32>
    %29 = vector.extract_strided_slice %19 {offsets = [96, 0], sizes = [48, 32], strides = [1, 1]} : vector<768x32xbf16> to vector<48x32xbf16>
    %c2 = arith.constant 2 : index
    %c0_17 = arith.constant 0 : index
    %c0_18 = arith.constant 0 : index
    %30 = vector.load %arg3[%c2, %c0_17, %c0_18] : memref<16x32x64xbf16, #tpu.memory_space<vmem>>, vector<1x32x64xbf16>
    %31 = vector.shape_cast %30 : vector<1x32x64xbf16> to vector<32x64xbf16>
    %cst_19 = arith.constant dense<0.000000e+00> : vector<48x64xf32>
    %32 = tpu.matmul %29, %31, %cst_19 {dimension_numbers = #tpu.dot_dimension_numbers<[1], [0], [0], [1], [0, 0, 1, 1], [], []>} : vector<48x32xbf16>, vector<32x64xbf16>, vector<48x64xf32> -> vector<48x64xf32>
    %33 = arith.addf %28, %32 : vector<48x64xf32>
    %34 = vector.extract_strided_slice %19 {offsets = [144, 0], sizes = [48, 32], strides = [1, 1]} : vector<768x32xbf16> to vector<48x32xbf16>
    %c3 = arith.constant 3 : index
    %c0_20 = arith.constant 0 : index
    %c0_21 = arith.constant 0 : index
    %35 = vector.load %arg3[%c3, %c0_20, %c0_21] : memref<16x32x64xbf16, #tpu.memory_space<vmem>>, vector<1x32x64xbf16>
    %36 = vector.shape_cast %35 : vector<1x32x64xbf16> to vector<32x64xbf16>
    %cst_22 = arith.constant dense<0.000000e+00> : vector<48x64xf32>
    %37 = tpu.matmul %34, %36, %cst_22 {dimension_numbers = #tpu.dot_dimension_numbers<[1], [0], [0], [1], [0, 0, 1, 1], [], []>} : vector<48x32xbf16>, vector<32x64xbf16>, vector<48x64xf32> -> vector<48x64xf32>
    %38 = arith.addf %33, %37 : vector<48x64xf32>
    %39 = vector.extract_strided_slice %19 {offsets = [192, 0], sizes = [48, 32], strides = [1, 1]} : vector<768x32xbf16> to vector<48x32xbf16>
    %c4 = arith.constant 4 : index
    %c0_23 = arith.constant 0 : index
    %c0_24 = arith.constant 0 : index
    %40 = vector.load %arg3[%c4, %c0_23, %c0_24] : memref<16x32x64xbf16, #tpu.memory_space<vmem>>, vector<1x32x64xbf16>
    %41 = vector.shape_cast %40 : vector<1x32x64xbf16> to vector<32x64xbf16>
    %cst_25 = arith.constant dense<0.000000e+00> : vector<48x64xf32>
    %42 = tpu.matmul %39, %41, %cst_25 {dimension_numbers = #tpu.dot_dimension_numbers<[1], [0], [0], [1], [0, 0, 1, 1], [], []>} : vector<48x32xbf16>, vector<32x64xbf16>, vector<48x64xf32> -> vector<48x64xf32>
    %43 = arith.addf %38, %42 : vector<48x64xf32>
    %44 = vector.extract_strided_slice %19 {offsets = [240, 0], sizes = [48, 32], strides = [1, 1]} : vector<768x32xbf16> to vector<48x32xbf16>
    %c5 = arith.constant 5 : index
    %c0_26 = arith.constant 0 : index
    %c0_27 = arith.constant 0 : index
    %45 = vector.load %arg3[%c5, %c0_26, %c0_27] : memref<16x32x64xbf16, #tpu.memory_space<vmem>>, vector<1x32x64xbf16>
    %46 = vector.shape_cast %45 : vector<1x32x64xbf16> to vector<32x64xbf16>
    %cst_28 = arith.constant dense<0.000000e+00> : vector<48x64xf32>
    %47 = tpu.matmul %44, %46, %cst_28 {dimension_numbers = #tpu.dot_dimension_numbers<[1], [0], [0], [1], [0, 0, 1, 1], [], []>} : vector<48x32xbf16>, vector<32x64xbf16>, vector<48x64xf32> -> vector<48x64xf32>
    %48 = arith.addf %43, %47 : vector<48x64xf32>
    %49 = vector.extract_strided_slice %19 {offsets = [288, 0], sizes = [48, 32], strides = [1, 1]} : vector<768x32xbf16> to vector<48x32xbf16>
    %c6 = arith.constant 6 : index
    %c0_29 = arith.constant 0 : index
    %c0_30 = arith.constant 0 : index
    %50 = vector.load %arg3[%c6, %c0_29, %c0_30] : memref<16x32x64xbf16, #tpu.memory_space<vmem>>, vector<1x32x64xbf16>
    %51 = vector.shape_cast %50 : vector<1x32x64xbf16> to vector<32x64xbf16>
    %cst_31 = arith.constant dense<0.000000e+00> : vector<48x64xf32>
    %52 = tpu.matmul %49, %51, %cst_31 {dimension_numbers = #tpu.dot_dimension_numbers<[1], [0], [0], [1], [0, 0, 1, 1], [], []>} : vector<48x32xbf16>, vector<32x64xbf16>, vector<48x64xf32> -> vector<48x64xf32>
    %53 = arith.addf %48, %52 : vector<48x64xf32>
    %54 = vector.extract_strided_slice %19 {offsets = [336, 0], sizes = [48, 32], strides = [1, 1]} : vector<768x32xbf16> to vector<48x32xbf16>
    %c7 = arith.constant 7 : index
    %c0_32 = arith.constant 0 : index
    %c0_33 = arith.constant 0 : index
    %55 = vector.load %arg3[%c7, %c0_32, %c0_33] : memref<16x32x64xbf16, #tpu.memory_space<vmem>>, vector<1x32x64xbf16>
    %56 = vector.shape_cast %55 : vector<1x32x64xbf16> to vector<32x64xbf16>
    %cst_34 = arith.constant dense<0.000000e+00> : vector<48x64xf32>
    %57 = tpu.matmul %54, %56, %cst_34 {dimension_numbers = #tpu.dot_dimension_numbers<[1], [0], [0], [1], [0, 0, 1, 1], [], []>} : vector<48x32xbf16>, vector<32x64xbf16>, vector<48x64xf32> -> vector<48x64xf32>
    %58 = arith.addf %53, %57 : vector<48x64xf32>
    %59 = vector.extract_strided_slice %19 {offsets = [384, 0], sizes = [48, 32], strides = [1, 1]} : vector<768x32xbf16> to vector<48x32xbf16>
    %c8 = arith.constant 8 : index
    %c0_35 = arith.constant 0 : index
    %c0_36 = arith.constant 0 : index
    %60 = vector.load %arg3[%c8, %c0_35, %c0_36] : memref<16x32x64xbf16, #tpu.memory_space<vmem>>, vector<1x32x64xbf16>
    %61 = vector.shape_cast %60 : vector<1x32x64xbf16> to vector<32x64xbf16>
    %cst_37 = arith.constant dense<0.000000e+00> : vector<48x64xf32>
    %62 = tpu.matmul %59, %61, %cst_37 {dimension_numbers = #tpu.dot_dimension_numbers<[1], [0], [0], [1], [0, 0, 1, 1], [], []>} : vector<48x32xbf16>, vector<32x64xbf16>, vector<48x64xf32> -> vector<48x64xf32>
    %63 = arith.addf %58, %62 : vector<48x64xf32>
    %64 = vector.extract_strided_slice %19 {offsets = [432, 0], sizes = [48, 32], strides = [1, 1]} : vector<768x32xbf16> to vector<48x32xbf16>
    %c9 = arith.constant 9 : index
    %c0_38 = arith.constant 0 : index
    %c0_39 = arith.constant 0 : index
    %65 = vector.load %arg3[%c9, %c0_38, %c0_39] : memref<16x32x64xbf16, #tpu.memory_space<vmem>>, vector<1x32x64xbf16>
    %66 = vector.shape_cast %65 : vector<1x32x64xbf16> to vector<32x64xbf16>
    %cst_40 = arith.constant dense<0.000000e+00> : vector<48x64xf32>
    %67 = tpu.matmul %64, %66, %cst_40 {dimension_numbers = #tpu.dot_dimension_numbers<[1], [0], [0], [1], [0, 0, 1, 1], [], []>} : vector<48x32xbf16>, vector<32x64xbf16>, vector<48x64xf32> -> vector<48x64xf32>
    %68 = arith.addf %63, %67 : vector<48x64xf32>
    %69 = vector.extract_strided_slice %19 {offsets = [480, 0], sizes = [48, 32], strides = [1, 1]} : vector<768x32xbf16> to vector<48x32xbf16>
    %c10 = arith.constant 10 : index
    %c0_41 = arith.constant 0 : index
    %c0_42 = arith.constant 0 : index
    %70 = vector.load %arg3[%c10, %c0_41, %c0_42] : memref<16x32x64xbf16, #tpu.memory_space<vmem>>, vector<1x32x64xbf16>
    %71 = vector.shape_cast %70 : vector<1x32x64xbf16> to vector<32x64xbf16>
    %cst_43 = arith.constant dense<0.000000e+00> : vector<48x64xf32>
    %72 = tpu.matmul %69, %71, %cst_43 {dimension_numbers = #tpu.dot_dimension_numbers<[1], [0], [0], [1], [0, 0, 1, 1], [], []>} : vector<48x32xbf16>, vector<32x64xbf16>, vector<48x64xf32> -> vector<48x64xf32>
    %73 = arith.addf %68, %72 : vector<48x64xf32>
    %74 = vector.extract_strided_slice %19 {offsets = [528, 0], sizes = [48, 32], strides = [1, 1]} : vector<768x32xbf16> to vector<48x32xbf16>
    %c11 = arith.constant 11 : index
    %c0_44 = arith.constant 0 : index
    %c0_45 = arith.constant 0 : index
    %75 = vector.load %arg3[%c11, %c0_44, %c0_45] : memref<16x32x64xbf16, #tpu.memory_space<vmem>>, vector<1x32x64xbf16>
    %76 = vector.shape_cast %75 : vector<1x32x64xbf16> to vector<32x64xbf16>
    %cst_46 = arith.constant dense<0.000000e+00> : vector<48x64xf32>
    %77 = tpu.matmul %74, %76, %cst_46 {dimension_numbers = #tpu.dot_dimension_numbers<[1], [0], [0], [1], [0, 0, 1, 1], [], []>} : vector<48x32xbf16>, vector<32x64xbf16>, vector<48x64xf32> -> vector<48x64xf32>
    %78 = arith.addf %73, %77 : vector<48x64xf32>
    %79 = vector.extract_strided_slice %19 {offsets = [576, 0], sizes = [48, 32], strides = [1, 1]} : vector<768x32xbf16> to vector<48x32xbf16>
    %c12 = arith.constant 12 : index
    %c0_47 = arith.constant 0 : index
    %c0_48 = arith.constant 0 : index
    %80 = vector.load %arg3[%c12, %c0_47, %c0_48] : memref<16x32x64xbf16, #tpu.memory_space<vmem>>, vector<1x32x64xbf16>
    %81 = vector.shape_cast %80 : vector<1x32x64xbf16> to vector<32x64xbf16>
    %cst_49 = arith.constant dense<0.000000e+00> : vector<48x64xf32>
    %82 = tpu.matmul %79, %81, %cst_49 {dimension_numbers = #tpu.dot_dimension_numbers<[1], [0], [0], [1], [0, 0, 1, 1], [], []>} : vector<48x32xbf16>, vector<32x64xbf16>, vector<48x64xf32> -> vector<48x64xf32>
    %83 = arith.addf %78, %82 : vector<48x64xf32>
    %84 = vector.extract_strided_slice %19 {offsets = [624, 0], sizes = [48, 32], strides = [1, 1]} : vector<768x32xbf16> to vector<48x32xbf16>
    %c13 = arith.constant 13 : index
    %c0_50 = arith.constant 0 : index
    %c0_51 = arith.constant 0 : index
    %85 = vector.load %arg3[%c13, %c0_50, %c0_51] : memref<16x32x64xbf16, #tpu.memory_space<vmem>>, vector<1x32x64xbf16>
    %86 = vector.shape_cast %85 : vector<1x32x64xbf16> to vector<32x64xbf16>
    %cst_52 = arith.constant dense<0.000000e+00> : vector<48x64xf32>
    %87 = tpu.matmul %84, %86, %cst_52 {dimension_numbers = #tpu.dot_dimension_numbers<[1], [0], [0], [1], [0, 0, 1, 1], [], []>} : vector<48x32xbf16>, vector<32x64xbf16>, vector<48x64xf32> -> vector<48x64xf32>
    %88 = arith.addf %83, %87 : vector<48x64xf32>
    %89 = vector.extract_strided_slice %19 {offsets = [672, 0], sizes = [48, 32], strides = [1, 1]} : vector<768x32xbf16> to vector<48x32xbf16>
    %c14 = arith.constant 14 : index
    %c0_53 = arith.constant 0 : index
    %c0_54 = arith.constant 0 : index
    %90 = vector.load %arg3[%c14, %c0_53, %c0_54] : memref<16x32x64xbf16, #tpu.memory_space<vmem>>, vector<1x32x64xbf16>
    %91 = vector.shape_cast %90 : vector<1x32x64xbf16> to vector<32x64xbf16>
    %cst_55 = arith.constant dense<0.000000e+00> : vector<48x64xf32>
    %92 = tpu.matmul %89, %91, %cst_55 {dimension_numbers = #tpu.dot_dimension_numbers<[1], [0], [0], [1], [0, 0, 1, 1], [], []>} : vector<48x32xbf16>, vector<32x64xbf16>, vector<48x64xf32> -> vector<48x64xf32>
    %93 = arith.addf %88, %92 : vector<48x64xf32>
    %94 = vector.extract_strided_slice %19 {offsets = [720, 0], sizes = [48, 32], strides = [1, 1]} : vector<768x32xbf16> to vector<48x32xbf16>
    %c15 = arith.constant 15 : index
    %c0_56 = arith.constant 0 : index
    %c0_57 = arith.constant 0 : index
    %95 = vector.load %arg3[%c15, %c0_56, %c0_57] : memref<16x32x64xbf16, #tpu.memory_space<vmem>>, vector<1x32x64xbf16>
    %96 = vector.shape_cast %95 : vector<1x32x64xbf16> to vector<32x64xbf16>
    %cst_58 = arith.constant dense<0.000000e+00> : vector<48x64xf32>
    %97 = tpu.matmul %94, %96, %cst_58 {dimension_numbers = #tpu.dot_dimension_numbers<[1], [0], [0], [1], [0, 0, 1, 1], [], []>} : vector<48x32xbf16>, vector<32x64xbf16>, vector<48x64xf32> -> vector<48x64xf32>
    %98 = arith.addf %93, %97 : vector<48x64xf32>
    %c0_59 = arith.constant 0 : index
    %c0_60 = arith.constant 0 : index
    %99 = vector.load %arg4[%c0_59, %c0_60] : memref<1x64xf32, #tpu.memory_space<vmem>>, vector<1x64xf32>
    %100 = vector.broadcast %99 : vector<1x64xf32> to vector<48x64xf32>
    %101 = arith.addf %98, %100 : vector<48x64xf32>
    %cst_61 = arith.constant 0.000000e+00 : f32
    %102 = vector.broadcast %cst_61 : f32 to vector<48x64xf32>
    %103 = arith.maximumf %101, %102 : vector<48x64xf32>
    %104 = arith.truncf %103 : vector<48x64xf32> to vector<48x64xbf16>
    %c1_i32_62 = arith.constant 1 : i32
    %105 = tpu.memref_slice %arg19[%c1_i32_62] : memref<3x!tpu.dma_semaphore, #tpu.memory_space<semaphore_mem>> -> memref<1x!tpu.dma_semaphore, #tpu.memory_space<semaphore_mem>>
    %106 = tpu.memref_squeeze %105 : memref<1x!tpu.dma_semaphore, #tpu.memory_space<semaphore_mem>> -> memref<!tpu.dma_semaphore, #tpu.memory_space<semaphore_mem>>
    tpu.wait_dma2 semaphore(%106 : memref<!tpu.dma_semaphore, #tpu.memory_space<semaphore_mem>>) src(%arg11 : memref<432x48xbf16, #tpu.memory_space<any>>) dst(%arg15 : memref<432x48xbf16, #tpu.memory_space<vmem>>)
    %c0_63 = arith.constant 0 : index
    %c0_64 = arith.constant 0 : index
    %107 = vector.load %arg15[%c0_63, %c0_64] : memref<432x48xbf16, #tpu.memory_space<vmem>>, vector<432x48xbf16>
    %cst_65 = arith.constant dense<0.000000e+00> : vector<432x64xf32>
    %108 = tpu.matmul %107, %104, %cst_65 {dimension_numbers = #tpu.dot_dimension_numbers<[1], [0], [0], [1], [0, 0, 1, 1], [], []>} : vector<432x48xbf16>, vector<48x64xbf16>, vector<432x64xf32> -> vector<432x64xf32>
    %109 = arith.truncf %108 : vector<432x64xf32> to vector<432x64xbf16>
    %110 = vector.extract_strided_slice %109 {offsets = [0, 0], sizes = [48, 64], strides = [1, 1]} : vector<432x64xbf16> to vector<48x64xbf16>
    %c0_66 = arith.constant 0 : index
    %c0_67 = arith.constant 0 : index
    %c0_68 = arith.constant 0 : index
    %111 = vector.load %arg5[%c0_66, %c0_67, %c0_68] : memref<9x64x64xbf16, #tpu.memory_space<vmem>>, vector<1x64x64xbf16>
    %112 = vector.shape_cast %111 : vector<1x64x64xbf16> to vector<64x64xbf16>
    %cst_69 = arith.constant dense<0.000000e+00> : vector<48x64xf32>
    %113 = tpu.matmul %110, %112, %cst_69 {dimension_numbers = #tpu.dot_dimension_numbers<[1], [0], [0], [1], [0, 0, 1, 1], [], []>} : vector<48x64xbf16>, vector<64x64xbf16>, vector<48x64xf32> -> vector<48x64xf32>
    %114 = vector.extract_strided_slice %109 {offsets = [48, 0], sizes = [48, 64], strides = [1, 1]} : vector<432x64xbf16> to vector<48x64xbf16>
    %c1_70 = arith.constant 1 : index
    %c0_71 = arith.constant 0 : index
    %c0_72 = arith.constant 0 : index
    %115 = vector.load %arg5[%c1_70, %c0_71, %c0_72] : memref<9x64x64xbf16, #tpu.memory_space<vmem>>, vector<1x64x64xbf16>
    %116 = vector.shape_cast %115 : vector<1x64x64xbf16> to vector<64x64xbf16>
    %cst_73 = arith.constant dense<0.000000e+00> : vector<48x64xf32>
    %117 = tpu.matmul %114, %116, %cst_73 {dimension_numbers = #tpu.dot_dimension_numbers<[1], [0], [0], [1], [0, 0, 1, 1], [], []>} : vector<48x64xbf16>, vector<64x64xbf16>, vector<48x64xf32> -> vector<48x64xf32>
    %118 = arith.addf %113, %117 : vector<48x64xf32>
    %119 = vector.extract_strided_slice %109 {offsets = [96, 0], sizes = [48, 64], strides = [1, 1]} : vector<432x64xbf16> to vector<48x64xbf16>
    %c2_74 = arith.constant 2 : index
    %c0_75 = arith.constant 0 : index
    %c0_76 = arith.constant 0 : index
    %120 = vector.load %arg5[%c2_74, %c0_75, %c0_76] : memref<9x64x64xbf16, #tpu.memory_space<vmem>>, vector<1x64x64xbf16>
    %121 = vector.shape_cast %120 : vector<1x64x64xbf16> to vector<64x64xbf16>
    %cst_77 = arith.constant dense<0.000000e+00> : vector<48x64xf32>
    %122 = tpu.matmul %119, %121, %cst_77 {dimension_numbers = #tpu.dot_dimension_numbers<[1], [0], [0], [1], [0, 0, 1, 1], [], []>} : vector<48x64xbf16>, vector<64x64xbf16>, vector<48x64xf32> -> vector<48x64xf32>
    %123 = arith.addf %118, %122 : vector<48x64xf32>
    %124 = vector.extract_strided_slice %109 {offsets = [144, 0], sizes = [48, 64], strides = [1, 1]} : vector<432x64xbf16> to vector<48x64xbf16>
    %c3_78 = arith.constant 3 : index
    %c0_79 = arith.constant 0 : index
    %c0_80 = arith.constant 0 : index
    %125 = vector.load %arg5[%c3_78, %c0_79, %c0_80] : memref<9x64x64xbf16, #tpu.memory_space<vmem>>, vector<1x64x64xbf16>
    %126 = vector.shape_cast %125 : vector<1x64x64xbf16> to vector<64x64xbf16>
    %cst_81 = arith.constant dense<0.000000e+00> : vector<48x64xf32>
    %127 = tpu.matmul %124, %126, %cst_81 {dimension_numbers = #tpu.dot_dimension_numbers<[1], [0], [0], [1], [0, 0, 1, 1], [], []>} : vector<48x64xbf16>, vector<64x64xbf16>, vector<48x64xf32> -> vector<48x64xf32>
    %128 = arith.addf %123, %127 : vector<48x64xf32>
    %129 = vector.extract_strided_slice %109 {offsets = [192, 0], sizes = [48, 64], strides = [1, 1]} : vector<432x64xbf16> to vector<48x64xbf16>
    %c4_82 = arith.constant 4 : index
    %c0_83 = arith.constant 0 : index
    %c0_84 = arith.constant 0 : index
    %130 = vector.load %arg5[%c4_82, %c0_83, %c0_84] : memref<9x64x64xbf16, #tpu.memory_space<vmem>>, vector<1x64x64xbf16>
    %131 = vector.shape_cast %130 : vector<1x64x64xbf16> to vector<64x64xbf16>
    %cst_85 = arith.constant dense<0.000000e+00> : vector<48x64xf32>
    %132 = tpu.matmul %129, %131, %cst_85 {dimension_numbers = #tpu.dot_dimension_numbers<[1], [0], [0], [1], [0, 0, 1, 1], [], []>} : vector<48x64xbf16>, vector<64x64xbf16>, vector<48x64xf32> -> vector<48x64xf32>
    %133 = arith.addf %128, %132 : vector<48x64xf32>
    %134 = vector.extract_strided_slice %109 {offsets = [240, 0], sizes = [48, 64], strides = [1, 1]} : vector<432x64xbf16> to vector<48x64xbf16>
    %c5_86 = arith.constant 5 : index
    %c0_87 = arith.constant 0 : index
    %c0_88 = arith.constant 0 : index
    %135 = vector.load %arg5[%c5_86, %c0_87, %c0_88] : memref<9x64x64xbf16, #tpu.memory_space<vmem>>, vector<1x64x64xbf16>
    %136 = vector.shape_cast %135 : vector<1x64x64xbf16> to vector<64x64xbf16>
    %cst_89 = arith.constant dense<0.000000e+00> : vector<48x64xf32>
    %137 = tpu.matmul %134, %136, %cst_89 {dimension_numbers = #tpu.dot_dimension_numbers<[1], [0], [0], [1], [0, 0, 1, 1], [], []>} : vector<48x64xbf16>, vector<64x64xbf16>, vector<48x64xf32> -> vector<48x64xf32>
    %138 = arith.addf %133, %137 : vector<48x64xf32>
    %139 = vector.extract_strided_slice %109 {offsets = [288, 0], sizes = [48, 64], strides = [1, 1]} : vector<432x64xbf16> to vector<48x64xbf16>
    %c6_90 = arith.constant 6 : index
    %c0_91 = arith.constant 0 : index
    %c0_92 = arith.constant 0 : index
    %140 = vector.load %arg5[%c6_90, %c0_91, %c0_92] : memref<9x64x64xbf16, #tpu.memory_space<vmem>>, vector<1x64x64xbf16>
    %141 = vector.shape_cast %140 : vector<1x64x64xbf16> to vector<64x64xbf16>
    %cst_93 = arith.constant dense<0.000000e+00> : vector<48x64xf32>
    %142 = tpu.matmul %139, %141, %cst_93 {dimension_numbers = #tpu.dot_dimension_numbers<[1], [0], [0], [1], [0, 0, 1, 1], [], []>} : vector<48x64xbf16>, vector<64x64xbf16>, vector<48x64xf32> -> vector<48x64xf32>
    %143 = arith.addf %138, %142 : vector<48x64xf32>
    %144 = vector.extract_strided_slice %109 {offsets = [336, 0], sizes = [48, 64], strides = [1, 1]} : vector<432x64xbf16> to vector<48x64xbf16>
    %c7_94 = arith.constant 7 : index
    %c0_95 = arith.constant 0 : index
    %c0_96 = arith.constant 0 : index
    %145 = vector.load %arg5[%c7_94, %c0_95, %c0_96] : memref<9x64x64xbf16, #tpu.memory_space<vmem>>, vector<1x64x64xbf16>
    %146 = vector.shape_cast %145 : vector<1x64x64xbf16> to vector<64x64xbf16>
    %cst_97 = arith.constant dense<0.000000e+00> : vector<48x64xf32>
    %147 = tpu.matmul %144, %146, %cst_97 {dimension_numbers = #tpu.dot_dimension_numbers<[1], [0], [0], [1], [0, 0, 1, 1], [], []>} : vector<48x64xbf16>, vector<64x64xbf16>, vector<48x64xf32> -> vector<48x64xf32>
    %148 = arith.addf %143, %147 : vector<48x64xf32>
    %149 = vector.extract_strided_slice %109 {offsets = [384, 0], sizes = [48, 64], strides = [1, 1]} : vector<432x64xbf16> to vector<48x64xbf16>
    %c8_98 = arith.constant 8 : index
    %c0_99 = arith.constant 0 : index
    %c0_100 = arith.constant 0 : index
    %150 = vector.load %arg5[%c8_98, %c0_99, %c0_100] : memref<9x64x64xbf16, #tpu.memory_space<vmem>>, vector<1x64x64xbf16>
    %151 = vector.shape_cast %150 : vector<1x64x64xbf16> to vector<64x64xbf16>
    %cst_101 = arith.constant dense<0.000000e+00> : vector<48x64xf32>
    %152 = tpu.matmul %149, %151, %cst_101 {dimension_numbers = #tpu.dot_dimension_numbers<[1], [0], [0], [1], [0, 0, 1, 1], [], []>} : vector<48x64xbf16>, vector<64x64xbf16>, vector<48x64xf32> -> vector<48x64xf32>
    %153 = arith.addf %148, %152 : vector<48x64xf32>
    %c0_102 = arith.constant 0 : index
    %c0_103 = arith.constant 0 : index
    %154 = vector.load %arg6[%c0_102, %c0_103] : memref<1x64xf32, #tpu.memory_space<vmem>>, vector<1x64xf32>
    %155 = vector.broadcast %154 : vector<1x64xf32> to vector<48x64xf32>
    %156 = arith.addf %153, %155 : vector<48x64xf32>
    %cst_104 = arith.constant 0.000000e+00 : f32
    %157 = vector.broadcast %cst_104 : f32 to vector<48x64xf32>
    %158 = arith.maximumf %156, %157 : vector<48x64xf32>
    %c0_105 = arith.constant 0 : index
    %c0_106 = arith.constant 0 : index
    %159 = vector.load %arg17[%c0_105, %c0_106] : memref<48x64xf32, #tpu.memory_space<vmem>>, vector<48x64xf32>
    tpu.vector_store %arg17[%c0_105, %c0_106], %158 {strides = array<i32>} : memref<48x64xf32, #tpu.memory_space<vmem>>, vector<48x64xf32>,
    %c0_107 = arith.constant 0 : index
    %c0_108 = arith.constant 0 : index
    %160 = vector.load %arg17[%c0_107, %c0_108] : memref<48x64xf32, #tpu.memory_space<vmem>>, vector<1x64xf32>
    %c0_109 = arith.constant 0 : index
    %c0_110 = arith.constant 0 : index
    %161 = vector.load %arg18[%c0_109, %c0_110] : memref<2x1536xf32, #tpu.memory_space<vmem>>, vector<1x64xf32>
    tpu.vector_store %arg18[%c0_109, %c0_110], %160 {strides = array<i32>} : memref<2x1536xf32, #tpu.memory_space<vmem>>, vector<1x64xf32>,
    %c1_111 = arith.constant 1 : index
    %c0_112 = arith.constant 0 : index
    %162 = vector.load %arg17[%c1_111, %c0_112] : memref<48x64xf32, #tpu.memory_space<vmem>>, vector<1x64xf32>
    %c0_113 = arith.constant 0 : index
    %c64 = arith.constant 64 : index
    %163 = vector.load %arg18[%c0_113, %c64] : memref<2x1536xf32, #tpu.memory_space<vmem>>, vector<1x64xf32>
    tpu.vector_store %arg18[%c0_113, %c64], %162 {strides = array<i32>} : memref<2x1536xf32, #tpu.memory_space<vmem>>, vector<1x64xf32>,
    %c2_114 = arith.constant 2 : index
    %c0_115 = arith.constant 0 : index
    %164 = vector.load %arg17[%c2_114, %c0_115] : memref<48x64xf32, #tpu.memory_space<vmem>>, vector<1x64xf32>
    %c0_116 = arith.constant 0 : index
    %c128 = arith.constant 128 : index
    %165 = vector.load %arg18[%c0_116, %c128] : memref<2x1536xf32, #tpu.memory_space<vmem>>, vector<1x64xf32>
    tpu.vector_store %arg18[%c0_116, %c128], %164 {strides = array<i32>} : memref<2x1536xf32, #tpu.memory_space<vmem>>, vector<1x64xf32>,
    %c3_117 = arith.constant 3 : index
    %c0_118 = arith.constant 0 : index
    %166 = vector.load %arg17[%c3_117, %c0_118] : memref<48x64xf32, #tpu.memory_space<vmem>>, vector<1x64xf32>
    %c0_119 = arith.constant 0 : index
    %c192 = arith.constant 192 : index
    %167 = vector.load %arg18[%c0_119, %c192] : memref<2x1536xf32, #tpu.memory_space<vmem>>, vector<1x64xf32>
    tpu.vector_store %arg18[%c0_119, %c192], %166 {strides = array<i32>} : memref<2x1536xf32, #tpu.memory_space<vmem>>, vector<1x64xf32>,
    %c4_120 = arith.constant 4 : index
    %c0_121 = arith.constant 0 : index
    %168 = vector.load %arg17[%c4_120, %c0_121] : memref<48x64xf32, #tpu.memory_space<vmem>>, vector<1x64xf32>
    %c0_122 = arith.constant 0 : index
    %c256 = arith.constant 256 : index
    %169 = vector.load %arg18[%c0_122, %c256] : memref<2x1536xf32, #tpu.memory_space<vmem>>, vector<1x64xf32>
    tpu.vector_store %arg18[%c0_122, %c256], %168 {strides = array<i32>} : memref<2x1536xf32, #tpu.memory_space<vmem>>, vector<1x64xf32>,
    %c5_123 = arith.constant 5 : index
    %c0_124 = arith.constant 0 : index
    %170 = vector.load %arg17[%c5_123, %c0_124] : memref<48x64xf32, #tpu.memory_space<vmem>>, vector<1x64xf32>
    %c0_125 = arith.constant 0 : index
    %c320 = arith.constant 320 : index
    %171 = vector.load %arg18[%c0_125, %c320] : memref<2x1536xf32, #tpu.memory_space<vmem>>, vector<1x64xf32>
    tpu.vector_store %arg18[%c0_125, %c320], %170 {strides = array<i32>} : memref<2x1536xf32, #tpu.memory_space<vmem>>, vector<1x64xf32>,
    %c6_126 = arith.constant 6 : index
    %c0_127 = arith.constant 0 : index
    %172 = vector.load %arg17[%c6_126, %c0_127] : memref<48x64xf32, #tpu.memory_space<vmem>>, vector<1x64xf32>
    %c0_128 = arith.constant 0 : index
    %c384 = arith.constant 384 : index
    %173 = vector.load %arg18[%c0_128, %c384] : memref<2x1536xf32, #tpu.memory_space<vmem>>, vector<1x64xf32>
    tpu.vector_store %arg18[%c0_128, %c384], %172 {strides = array<i32>} : memref<2x1536xf32, #tpu.memory_space<vmem>>, vector<1x64xf32>,
    %c7_129 = arith.constant 7 : index
    %c0_130 = arith.constant 0 : index
    %174 = vector.load %arg17[%c7_129, %c0_130] : memref<48x64xf32, #tpu.memory_space<vmem>>, vector<1x64xf32>
    %c0_131 = arith.constant 0 : index
    %c448 = arith.constant 448 : index
    %175 = vector.load %arg18[%c0_131, %c448] : memref<2x1536xf32, #tpu.memory_space<vmem>>, vector<1x64xf32>
    tpu.vector_store %arg18[%c0_131, %c448], %174 {strides = array<i32>} : memref<2x1536xf32, #tpu.memory_space<vmem>>, vector<1x64xf32>,
    %c8_132 = arith.constant 8 : index
    %c0_133 = arith.constant 0 : index
    %176 = vector.load %arg17[%c8_132, %c0_133] : memref<48x64xf32, #tpu.memory_space<vmem>>, vector<1x64xf32>
    %c0_134 = arith.constant 0 : index
    %c512 = arith.constant 512 : index
    %177 = vector.load %arg18[%c0_134, %c512] : memref<2x1536xf32, #tpu.memory_space<vmem>>, vector<1x64xf32>
    tpu.vector_store %arg18[%c0_134, %c512], %176 {strides = array<i32>} : memref<2x1536xf32, #tpu.memory_space<vmem>>, vector<1x64xf32>,
    %c9_135 = arith.constant 9 : index
    %c0_136 = arith.constant 0 : index
    %178 = vector.load %arg17[%c9_135, %c0_136] : memref<48x64xf32, #tpu.memory_space<vmem>>, vector<1x64xf32>
    %c0_137 = arith.constant 0 : index
    %c576 = arith.constant 576 : index
    %179 = vector.load %arg18[%c0_137, %c576] : memref<2x1536xf32, #tpu.memory_space<vmem>>, vector<1x64xf32>
    tpu.vector_store %arg18[%c0_137, %c576], %178 {strides = array<i32>} : memref<2x1536xf32, #tpu.memory_space<vmem>>, vector<1x64xf32>,
    %c10_138 = arith.constant 10 : index
    %c0_139 = arith.constant 0 : index
    %180 = vector.load %arg17[%c10_138, %c0_139] : memref<48x64xf32, #tpu.memory_space<vmem>>, vector<1x64xf32>
    %c0_140 = arith.constant 0 : index
    %c640 = arith.constant 640 : index
    %181 = vector.load %arg18[%c0_140, %c640] : memref<2x1536xf32, #tpu.memory_space<vmem>>, vector<1x64xf32>
    tpu.vector_store %arg18[%c0_140, %c640], %180 {strides = array<i32>} : memref<2x1536xf32, #tpu.memory_space<vmem>>, vector<1x64xf32>,
    %c11_141 = arith.constant 11 : index
    %c0_142 = arith.constant 0 : index
    %182 = vector.load %arg17[%c11_141, %c0_142] : memref<48x64xf32, #tpu.memory_space<vmem>>, vector<1x64xf32>
    %c0_143 = arith.constant 0 : index
    %c704 = arith.constant 704 : index
    %183 = vector.load %arg18[%c0_143, %c704] : memref<2x1536xf32, #tpu.memory_space<vmem>>, vector<1x64xf32>
    tpu.vector_store %arg18[%c0_143, %c704], %182 {strides = array<i32>} : memref<2x1536xf32, #tpu.memory_space<vmem>>, vector<1x64xf32>,
    %c12_144 = arith.constant 12 : index
    %c0_145 = arith.constant 0 : index
    %184 = vector.load %arg17[%c12_144, %c0_145] : memref<48x64xf32, #tpu.memory_space<vmem>>, vector<1x64xf32>
    %c0_146 = arith.constant 0 : index
    %c768 = arith.constant 768 : index
    %185 = vector.load %arg18[%c0_146, %c768] : memref<2x1536xf32, #tpu.memory_space<vmem>>, vector<1x64xf32>
    tpu.vector_store %arg18[%c0_146, %c768], %184 {strides = array<i32>} : memref<2x1536xf32, #tpu.memory_space<vmem>>, vector<1x64xf32>,
    %c13_147 = arith.constant 13 : index
    %c0_148 = arith.constant 0 : index
    %186 = vector.load %arg17[%c13_147, %c0_148] : memref<48x64xf32, #tpu.memory_space<vmem>>, vector<1x64xf32>
    %c0_149 = arith.constant 0 : index
    %c832 = arith.constant 832 : index
    %187 = vector.load %arg18[%c0_149, %c832] : memref<2x1536xf32, #tpu.memory_space<vmem>>, vector<1x64xf32>
    tpu.vector_store %arg18[%c0_149, %c832], %186 {strides = array<i32>} : memref<2x1536xf32, #tpu.memory_space<vmem>>, vector<1x64xf32>,
    %c14_150 = arith.constant 14 : index
    %c0_151 = arith.constant 0 : index
    %188 = vector.load %arg17[%c14_150, %c0_151] : memref<48x64xf32, #tpu.memory_space<vmem>>, vector<1x64xf32>
    %c0_152 = arith.constant 0 : index
    %c896 = arith.constant 896 : index
    %189 = vector.load %arg18[%c0_152, %c896] : memref<2x1536xf32, #tpu.memory_space<vmem>>, vector<1x64xf32>
    tpu.vector_store %arg18[%c0_152, %c896], %188 {strides = array<i32>} : memref<2x1536xf32, #tpu.memory_space<vmem>>, vector<1x64xf32>,
    %c15_153 = arith.constant 15 : index
    %c0_154 = arith.constant 0 : index
    %190 = vector.load %arg17[%c15_153, %c0_154] : memref<48x64xf32, #tpu.memory_space<vmem>>, vector<1x64xf32>
    %c0_155 = arith.constant 0 : index
    %c960 = arith.constant 960 : index
    %191 = vector.load %arg18[%c0_155, %c960] : memref<2x1536xf32, #tpu.memory_space<vmem>>, vector<1x64xf32>
    tpu.vector_store %arg18[%c0_155, %c960], %190 {strides = array<i32>} : memref<2x1536xf32, #tpu.memory_space<vmem>>, vector<1x64xf32>,
    %c16 = arith.constant 16 : index
    %c0_156 = arith.constant 0 : index
    %192 = vector.load %arg17[%c16, %c0_156] : memref<48x64xf32, #tpu.memory_space<vmem>>, vector<1x64xf32>
    %c0_157 = arith.constant 0 : index
    %c1024 = arith.constant 1024 : index
    %193 = vector.load %arg18[%c0_157, %c1024] : memref<2x1536xf32, #tpu.memory_space<vmem>>, vector<1x64xf32>
    tpu.vector_store %arg18[%c0_157, %c1024], %192 {strides = array<i32>} : memref<2x1536xf32, #tpu.memory_space<vmem>>, vector<1x64xf32>,
    %c17 = arith.constant 17 : index
    %c0_158 = arith.constant 0 : index
    %194 = vector.load %arg17[%c17, %c0_158] : memref<48x64xf32, #tpu.memory_space<vmem>>, vector<1x64xf32>
    %c0_159 = arith.constant 0 : index
    %c1088 = arith.constant 1088 : index
    %195 = vector.load %arg18[%c0_159, %c1088] : memref<2x1536xf32, #tpu.memory_space<vmem>>, vector<1x64xf32>
    tpu.vector_store %arg18[%c0_159, %c1088], %194 {strides = array<i32>} : memref<2x1536xf32, #tpu.memory_space<vmem>>, vector<1x64xf32>,
    %c18 = arith.constant 18 : index
    %c0_160 = arith.constant 0 : index
    %196 = vector.load %arg17[%c18, %c0_160] : memref<48x64xf32, #tpu.memory_space<vmem>>, vector<1x64xf32>
    %c0_161 = arith.constant 0 : index
    %c1152 = arith.constant 1152 : index
    %197 = vector.load %arg18[%c0_161, %c1152] : memref<2x1536xf32, #tpu.memory_space<vmem>>, vector<1x64xf32>
    tpu.vector_store %arg18[%c0_161, %c1152], %196 {strides = array<i32>} : memref<2x1536xf32, #tpu.memory_space<vmem>>, vector<1x64xf32>,
    %c19 = arith.constant 19 : index
    %c0_162 = arith.constant 0 : index
    %198 = vector.load %arg17[%c19, %c0_162] : memref<48x64xf32, #tpu.memory_space<vmem>>, vector<1x64xf32>
    %c0_163 = arith.constant 0 : index
    %c1216 = arith.constant 1216 : index
    %199 = vector.load %arg18[%c0_163, %c1216] : memref<2x1536xf32, #tpu.memory_space<vmem>>, vector<1x64xf32>
    tpu.vector_store %arg18[%c0_163, %c1216], %198 {strides = array<i32>} : memref<2x1536xf32, #tpu.memory_space<vmem>>, vector<1x64xf32>,
    %c20 = arith.constant 20 : index
    %c0_164 = arith.constant 0 : index
    %200 = vector.load %arg17[%c20, %c0_164] : memref<48x64xf32, #tpu.memory_space<vmem>>, vector<1x64xf32>
    %c0_165 = arith.constant 0 : index
    %c1280 = arith.constant 1280 : index
    %201 = vector.load %arg18[%c0_165, %c1280] : memref<2x1536xf32, #tpu.memory_space<vmem>>, vector<1x64xf32>
    tpu.vector_store %arg18[%c0_165, %c1280], %200 {strides = array<i32>} : memref<2x1536xf32, #tpu.memory_space<vmem>>, vector<1x64xf32>,
    %c21 = arith.constant 21 : index
    %c0_166 = arith.constant 0 : index
    %202 = vector.load %arg17[%c21, %c0_166] : memref<48x64xf32, #tpu.memory_space<vmem>>, vector<1x64xf32>
    %c0_167 = arith.constant 0 : index
    %c1344 = arith.constant 1344 : index
    %203 = vector.load %arg18[%c0_167, %c1344] : memref<2x1536xf32, #tpu.memory_space<vmem>>, vector<1x64xf32>
    tpu.vector_store %arg18[%c0_167, %c1344], %202 {strides = array<i32>} : memref<2x1536xf32, #tpu.memory_space<vmem>>, vector<1x64xf32>,
    %c22 = arith.constant 22 : index
    %c0_168 = arith.constant 0 : index
    %204 = vector.load %arg17[%c22, %c0_168] : memref<48x64xf32, #tpu.memory_space<vmem>>, vector<1x64xf32>
    %c0_169 = arith.constant 0 : index
    %c1408 = arith.constant 1408 : index
    %205 = vector.load %arg18[%c0_169, %c1408] : memref<2x1536xf32, #tpu.memory_space<vmem>>, vector<1x64xf32>
    tpu.vector_store %arg18[%c0_169, %c1408], %204 {strides = array<i32>} : memref<2x1536xf32, #tpu.memory_space<vmem>>, vector<1x64xf32>,
    %c23 = arith.constant 23 : index
    %c0_170 = arith.constant 0 : index
    %206 = vector.load %arg17[%c23, %c0_170] : memref<48x64xf32, #tpu.memory_space<vmem>>, vector<1x64xf32>
    %c0_171 = arith.constant 0 : index
    %c1472 = arith.constant 1472 : index
    %207 = vector.load %arg18[%c0_171, %c1472] : memref<2x1536xf32, #tpu.memory_space<vmem>>, vector<1x64xf32>
    tpu.vector_store %arg18[%c0_171, %c1472], %206 {strides = array<i32>} : memref<2x1536xf32, #tpu.memory_space<vmem>>, vector<1x64xf32>,
    %c24 = arith.constant 24 : index
    %c0_172 = arith.constant 0 : index
    %208 = vector.load %arg17[%c24, %c0_172] : memref<48x64xf32, #tpu.memory_space<vmem>>, vector<1x64xf32>
    %c1_173 = arith.constant 1 : index
    %c0_174 = arith.constant 0 : index
    %209 = vector.load %arg18[%c1_173, %c0_174] : memref<2x1536xf32, #tpu.memory_space<vmem>>, vector<1x64xf32>
    tpu.vector_store %arg18[%c1_173, %c0_174], %208 {strides = array<i32>} : memref<2x1536xf32, #tpu.memory_space<vmem>>, vector<1x64xf32>,
    %c25 = arith.constant 25 : index
    %c0_175 = arith.constant 0 : index
    %210 = vector.load %arg17[%c25, %c0_175] : memref<48x64xf32, #tpu.memory_space<vmem>>, vector<1x64xf32>
    %c1_176 = arith.constant 1 : index
    %c64_177 = arith.constant 64 : index
    %211 = vector.load %arg18[%c1_176, %c64_177] : memref<2x1536xf32, #tpu.memory_space<vmem>>, vector<1x64xf32>
    tpu.vector_store %arg18[%c1_176, %c64_177], %210 {strides = array<i32>} : memref<2x1536xf32, #tpu.memory_space<vmem>>, vector<1x64xf32>,
    %c26 = arith.constant 26 : index
    %c0_178 = arith.constant 0 : index
    %212 = vector.load %arg17[%c26, %c0_178] : memref<48x64xf32, #tpu.memory_space<vmem>>, vector<1x64xf32>
    %c1_179 = arith.constant 1 : index
    %c128_180 = arith.constant 128 : index
    %213 = vector.load %arg18[%c1_179, %c128_180] : memref<2x1536xf32, #tpu.memory_space<vmem>>, vector<1x64xf32>
    tpu.vector_store %arg18[%c1_179, %c128_180], %212 {strides = array<i32>} : memref<2x1536xf32, #tpu.memory_space<vmem>>, vector<1x64xf32>,
    %c27 = arith.constant 27 : index
    %c0_181 = arith.constant 0 : index
    %214 = vector.load %arg17[%c27, %c0_181] : memref<48x64xf32, #tpu.memory_space<vmem>>, vector<1x64xf32>
    %c1_182 = arith.constant 1 : index
    %c192_183 = arith.constant 192 : index
    %215 = vector.load %arg18[%c1_182, %c192_183] : memref<2x1536xf32, #tpu.memory_space<vmem>>, vector<1x64xf32>
    tpu.vector_store %arg18[%c1_182, %c192_183], %214 {strides = array<i32>} : memref<2x1536xf32, #tpu.memory_space<vmem>>, vector<1x64xf32>,
    %c28 = arith.constant 28 : index
    %c0_184 = arith.constant 0 : index
    %216 = vector.load %arg17[%c28, %c0_184] : memref<48x64xf32, #tpu.memory_space<vmem>>, vector<1x64xf32>
    %c1_185 = arith.constant 1 : index
    %c256_186 = arith.constant 256 : index
    %217 = vector.load %arg18[%c1_185, %c256_186] : memref<2x1536xf32, #tpu.memory_space<vmem>>, vector<1x64xf32>
    tpu.vector_store %arg18[%c1_185, %c256_186], %216 {strides = array<i32>} : memref<2x1536xf32, #tpu.memory_space<vmem>>, vector<1x64xf32>,
    %c29 = arith.constant 29 : index
    %c0_187 = arith.constant 0 : index
    %218 = vector.load %arg17[%c29, %c0_187] : memref<48x64xf32, #tpu.memory_space<vmem>>, vector<1x64xf32>
    %c1_188 = arith.constant 1 : index
    %c320_189 = arith.constant 320 : index
    %219 = vector.load %arg18[%c1_188, %c320_189] : memref<2x1536xf32, #tpu.memory_space<vmem>>, vector<1x64xf32>
    tpu.vector_store %arg18[%c1_188, %c320_189], %218 {strides = array<i32>} : memref<2x1536xf32, #tpu.memory_space<vmem>>, vector<1x64xf32>,
    %c30 = arith.constant 30 : index
    %c0_190 = arith.constant 0 : index
    %220 = vector.load %arg17[%c30, %c0_190] : memref<48x64xf32, #tpu.memory_space<vmem>>, vector<1x64xf32>
    %c1_191 = arith.constant 1 : index
    %c384_192 = arith.constant 384 : index
    %221 = vector.load %arg18[%c1_191, %c384_192] : memref<2x1536xf32, #tpu.memory_space<vmem>>, vector<1x64xf32>
    tpu.vector_store %arg18[%c1_191, %c384_192], %220 {strides = array<i32>} : memref<2x1536xf32, #tpu.memory_space<vmem>>, vector<1x64xf32>,
    %c31 = arith.constant 31 : index
    %c0_193 = arith.constant 0 : index
    %222 = vector.load %arg17[%c31, %c0_193] : memref<48x64xf32, #tpu.memory_space<vmem>>, vector<1x64xf32>
    %c1_194 = arith.constant 1 : index
    %c448_195 = arith.constant 448 : index
    %223 = vector.load %arg18[%c1_194, %c448_195] : memref<2x1536xf32, #tpu.memory_space<vmem>>, vector<1x64xf32>
    tpu.vector_store %arg18[%c1_194, %c448_195], %222 {strides = array<i32>} : memref<2x1536xf32, #tpu.memory_space<vmem>>, vector<1x64xf32>,
    %c32 = arith.constant 32 : index
    %c0_196 = arith.constant 0 : index
    %224 = vector.load %arg17[%c32, %c0_196] : memref<48x64xf32, #tpu.memory_space<vmem>>, vector<1x64xf32>
    %c1_197 = arith.constant 1 : index
    %c512_198 = arith.constant 512 : index
    %225 = vector.load %arg18[%c1_197, %c512_198] : memref<2x1536xf32, #tpu.memory_space<vmem>>, vector<1x64xf32>
    tpu.vector_store %arg18[%c1_197, %c512_198], %224 {strides = array<i32>} : memref<2x1536xf32, #tpu.memory_space<vmem>>, vector<1x64xf32>,
    %c33 = arith.constant 33 : index
    %c0_199 = arith.constant 0 : index
    %226 = vector.load %arg17[%c33, %c0_199] : memref<48x64xf32, #tpu.memory_space<vmem>>, vector<1x64xf32>
    %c1_200 = arith.constant 1 : index
    %c576_201 = arith.constant 576 : index
    %227 = vector.load %arg18[%c1_200, %c576_201] : memref<2x1536xf32, #tpu.memory_space<vmem>>, vector<1x64xf32>
    tpu.vector_store %arg18[%c1_200, %c576_201], %226 {strides = array<i32>} : memref<2x1536xf32, #tpu.memory_space<vmem>>, vector<1x64xf32>,
    %c34 = arith.constant 34 : index
    %c0_202 = arith.constant 0 : index
    %228 = vector.load %arg17[%c34, %c0_202] : memref<48x64xf32, #tpu.memory_space<vmem>>, vector<1x64xf32>
    %c1_203 = arith.constant 1 : index
    %c640_204 = arith.constant 640 : index
    %229 = vector.load %arg18[%c1_203, %c640_204] : memref<2x1536xf32, #tpu.memory_space<vmem>>, vector<1x64xf32>
    tpu.vector_store %arg18[%c1_203, %c640_204], %228 {strides = array<i32>} : memref<2x1536xf32, #tpu.memory_space<vmem>>, vector<1x64xf32>,
    %c35 = arith.constant 35 : index
    %c0_205 = arith.constant 0 : index
    %230 = vector.load %arg17[%c35, %c0_205] : memref<48x64xf32, #tpu.memory_space<vmem>>, vector<1x64xf32>
    %c1_206 = arith.constant 1 : index
    %c704_207 = arith.constant 704 : index
    %231 = vector.load %arg18[%c1_206, %c704_207] : memref<2x1536xf32, #tpu.memory_space<vmem>>, vector<1x64xf32>
    tpu.vector_store %arg18[%c1_206, %c704_207], %230 {strides = array<i32>} : memref<2x1536xf32, #tpu.memory_space<vmem>>, vector<1x64xf32>,
    %c36 = arith.constant 36 : index
    %c0_208 = arith.constant 0 : index
    %232 = vector.load %arg17[%c36, %c0_208] : memref<48x64xf32, #tpu.memory_space<vmem>>, vector<1x64xf32>
    %c1_209 = arith.constant 1 : index
    %c768_210 = arith.constant 768 : index
    %233 = vector.load %arg18[%c1_209, %c768_210] : memref<2x1536xf32, #tpu.memory_space<vmem>>, vector<1x64xf32>
    tpu.vector_store %arg18[%c1_209, %c768_210], %232 {strides = array<i32>} : memref<2x1536xf32, #tpu.memory_space<vmem>>, vector<1x64xf32>,
    %c37 = arith.constant 37 : index
    %c0_211 = arith.constant 0 : index
    %234 = vector.load %arg17[%c37, %c0_211] : memref<48x64xf32, #tpu.memory_space<vmem>>, vector<1x64xf32>
    %c1_212 = arith.constant 1 : index
    %c832_213 = arith.constant 832 : index
    %235 = vector.load %arg18[%c1_212, %c832_213] : memref<2x1536xf32, #tpu.memory_space<vmem>>, vector<1x64xf32>
    tpu.vector_store %arg18[%c1_212, %c832_213], %234 {strides = array<i32>} : memref<2x1536xf32, #tpu.memory_space<vmem>>, vector<1x64xf32>,
    %c38 = arith.constant 38 : index
    %c0_214 = arith.constant 0 : index
    %236 = vector.load %arg17[%c38, %c0_214] : memref<48x64xf32, #tpu.memory_space<vmem>>, vector<1x64xf32>
    %c1_215 = arith.constant 1 : index
    %c896_216 = arith.constant 896 : index
    %237 = vector.load %arg18[%c1_215, %c896_216] : memref<2x1536xf32, #tpu.memory_space<vmem>>, vector<1x64xf32>
    tpu.vector_store %arg18[%c1_215, %c896_216], %236 {strides = array<i32>} : memref<2x1536xf32, #tpu.memory_space<vmem>>, vector<1x64xf32>,
    %c39 = arith.constant 39 : index
    %c0_217 = arith.constant 0 : index
    %238 = vector.load %arg17[%c39, %c0_217] : memref<48x64xf32, #tpu.memory_space<vmem>>, vector<1x64xf32>
    %c1_218 = arith.constant 1 : index
    %c960_219 = arith.constant 960 : index
    %239 = vector.load %arg18[%c1_218, %c960_219] : memref<2x1536xf32, #tpu.memory_space<vmem>>, vector<1x64xf32>
    tpu.vector_store %arg18[%c1_218, %c960_219], %238 {strides = array<i32>} : memref<2x1536xf32, #tpu.memory_space<vmem>>, vector<1x64xf32>,
    %c40 = arith.constant 40 : index
    %c0_220 = arith.constant 0 : index
    %240 = vector.load %arg17[%c40, %c0_220] : memref<48x64xf32, #tpu.memory_space<vmem>>, vector<1x64xf32>
    %c1_221 = arith.constant 1 : index
    %c1024_222 = arith.constant 1024 : index
    %241 = vector.load %arg18[%c1_221, %c1024_222] : memref<2x1536xf32, #tpu.memory_space<vmem>>, vector<1x64xf32>
    tpu.vector_store %arg18[%c1_221, %c1024_222], %240 {strides = array<i32>} : memref<2x1536xf32, #tpu.memory_space<vmem>>, vector<1x64xf32>,
    %c41 = arith.constant 41 : index
    %c0_223 = arith.constant 0 : index
    %242 = vector.load %arg17[%c41, %c0_223] : memref<48x64xf32, #tpu.memory_space<vmem>>, vector<1x64xf32>
    %c1_224 = arith.constant 1 : index
    %c1088_225 = arith.constant 1088 : index
    %243 = vector.load %arg18[%c1_224, %c1088_225] : memref<2x1536xf32, #tpu.memory_space<vmem>>, vector<1x64xf32>
    tpu.vector_store %arg18[%c1_224, %c1088_225], %242 {strides = array<i32>} : memref<2x1536xf32, #tpu.memory_space<vmem>>, vector<1x64xf32>,
    %c42 = arith.constant 42 : index
    %c0_226 = arith.constant 0 : index
    %244 = vector.load %arg17[%c42, %c0_226] : memref<48x64xf32, #tpu.memory_space<vmem>>, vector<1x64xf32>
    %c1_227 = arith.constant 1 : index
    %c1152_228 = arith.constant 1152 : index
    %245 = vector.load %arg18[%c1_227, %c1152_228] : memref<2x1536xf32, #tpu.memory_space<vmem>>, vector<1x64xf32>
    tpu.vector_store %arg18[%c1_227, %c1152_228], %244 {strides = array<i32>} : memref<2x1536xf32, #tpu.memory_space<vmem>>, vector<1x64xf32>,
    %c43 = arith.constant 43 : index
    %c0_229 = arith.constant 0 : index
    %246 = vector.load %arg17[%c43, %c0_229] : memref<48x64xf32, #tpu.memory_space<vmem>>, vector<1x64xf32>
    %c1_230 = arith.constant 1 : index
    %c1216_231 = arith.constant 1216 : index
    %247 = vector.load %arg18[%c1_230, %c1216_231] : memref<2x1536xf32, #tpu.memory_space<vmem>>, vector<1x64xf32>
    tpu.vector_store %arg18[%c1_230, %c1216_231], %246 {strides = array<i32>} : memref<2x1536xf32, #tpu.memory_space<vmem>>, vector<1x64xf32>,
    %c44 = arith.constant 44 : index
    %c0_232 = arith.constant 0 : index
    %248 = vector.load %arg17[%c44, %c0_232] : memref<48x64xf32, #tpu.memory_space<vmem>>, vector<1x64xf32>
    %c1_233 = arith.constant 1 : index
    %c1280_234 = arith.constant 1280 : index
    %249 = vector.load %arg18[%c1_233, %c1280_234] : memref<2x1536xf32, #tpu.memory_space<vmem>>, vector<1x64xf32>
    tpu.vector_store %arg18[%c1_233, %c1280_234], %248 {strides = array<i32>} : memref<2x1536xf32, #tpu.memory_space<vmem>>, vector<1x64xf32>,
    %c45 = arith.constant 45 : index
    %c0_235 = arith.constant 0 : index
    %250 = vector.load %arg17[%c45, %c0_235] : memref<48x64xf32, #tpu.memory_space<vmem>>, vector<1x64xf32>
    %c1_236 = arith.constant 1 : index
    %c1344_237 = arith.constant 1344 : index
    %251 = vector.load %arg18[%c1_236, %c1344_237] : memref<2x1536xf32, #tpu.memory_space<vmem>>, vector<1x64xf32>
    tpu.vector_store %arg18[%c1_236, %c1344_237], %250 {strides = array<i32>} : memref<2x1536xf32, #tpu.memory_space<vmem>>, vector<1x64xf32>,
    %c46 = arith.constant 46 : index
    %c0_238 = arith.constant 0 : index
    %252 = vector.load %arg17[%c46, %c0_238] : memref<48x64xf32, #tpu.memory_space<vmem>>, vector<1x64xf32>
    %c1_239 = arith.constant 1 : index
    %c1408_240 = arith.constant 1408 : index
    %253 = vector.load %arg18[%c1_239, %c1408_240] : memref<2x1536xf32, #tpu.memory_space<vmem>>, vector<1x64xf32>
    tpu.vector_store %arg18[%c1_239, %c1408_240], %252 {strides = array<i32>} : memref<2x1536xf32, #tpu.memory_space<vmem>>, vector<1x64xf32>,
    %c47 = arith.constant 47 : index
    %c0_241 = arith.constant 0 : index
    %254 = vector.load %arg17[%c47, %c0_241] : memref<48x64xf32, #tpu.memory_space<vmem>>, vector<1x64xf32>
    %c1_242 = arith.constant 1 : index
    %c1472_243 = arith.constant 1472 : index
    %255 = vector.load %arg18[%c1_242, %c1472_243] : memref<2x1536xf32, #tpu.memory_space<vmem>>, vector<1x64xf32>
    tpu.vector_store %arg18[%c1_242, %c1472_243], %254 {strides = array<i32>} : memref<2x1536xf32, #tpu.memory_space<vmem>>, vector<1x64xf32>,
    %c2_i32_244 = arith.constant 2 : i32
    %256 = tpu.memref_slice %arg19[%c2_i32_244] : memref<3x!tpu.dma_semaphore, #tpu.memory_space<semaphore_mem>> -> memref<1x!tpu.dma_semaphore, #tpu.memory_space<semaphore_mem>>
    %257 = tpu.memref_squeeze %256 : memref<1x!tpu.dma_semaphore, #tpu.memory_space<semaphore_mem>> -> memref<!tpu.dma_semaphore, #tpu.memory_space<semaphore_mem>>
    tpu.wait_dma2 semaphore(%257 : memref<!tpu.dma_semaphore, #tpu.memory_space<semaphore_mem>>) src(%arg12 : memref<1536x512xbf16, #tpu.memory_space<any>>) dst(%arg16 : memref<1536x512xbf16, #tpu.memory_space<vmem>>)
    %c0_245 = arith.constant 0 : index
    %c0_246 = arith.constant 0 : index
    %258 = vector.load %arg18[%c0_245, %c0_246] : memref<2x1536xf32, #tpu.memory_space<vmem>>, vector<2x1536xf32>
    %259 = arith.truncf %258 : vector<2x1536xf32> to vector<2x1536xbf16>
    %c0_247 = arith.constant 0 : index
    %c0_248 = arith.constant 0 : index
    %260 = vector.load %arg16[%c0_247, %c0_248] : memref<1536x512xbf16, #tpu.memory_space<vmem>>, vector<1536x512xbf16>
    %cst_249 = arith.constant dense<0.000000e+00> : vector<2x512xf32>
    %261 = tpu.matmul %259, %260, %cst_249 {dimension_numbers = #tpu.dot_dimension_numbers<[1], [0], [0], [1], [0, 0, 1, 1], [], []>} : vector<2x1536xbf16>, vector<1536x512xbf16>, vector<2x512xf32> -> vector<2x512xf32>
    %c0_250 = arith.constant 0 : index
    %c0_251 = arith.constant 0 : index
    %262 = vector.load %arg7[%c0_250, %c0_251] : memref<1x512xf32, #tpu.memory_space<vmem>>, vector<1x512xf32>
    %263 = vector.broadcast %262 : vector<1x512xf32> to vector<2x512xf32>
    %264 = arith.addf %261, %263 : vector<2x512xf32>
    %cst_252 = arith.constant 0.000000e+00 : f32
    %265 = vector.broadcast %cst_252 : f32 to vector<2x512xf32>
    %266 = arith.maximumf %264, %265 : vector<2x512xf32>
    %c0_253 = arith.constant 0 : index
    %c0_254 = arith.constant 0 : index
    %267 = vector.load %arg8[%c0_253, %c0_254] : memref<512x4xf32, #tpu.memory_space<vmem>>, vector<512x4xf32>
    %cst_255 = arith.constant dense<0.000000e+00> : vector<2x4xf32>
    %268 = tpu.matmul %266, %267, %cst_255 {dimension_numbers = #tpu.dot_dimension_numbers<[1], [0], [0], [1], [0, 0, 1, 1], [], []>} : vector<2x512xf32>, vector<512x4xf32>, vector<2x4xf32> -> vector<2x4xf32>
    %c0_256 = arith.constant 0 : index
    %c0_257 = arith.constant 0 : index
    %269 = vector.load %arg9[%c0_256, %c0_257] : memref<1x4xf32, #tpu.memory_space<vmem>>, vector<1x4xf32>
    %270 = vector.broadcast %269 : vector<1x4xf32> to vector<2x4xf32>
    %271 = arith.addf %268, %270 : vector<2x4xf32>
    %c0_258 = arith.constant 0 : index
    %c0_259 = arith.constant 0 : index
    %272 = vector.load %arg13[%c0_258, %c0_259] : memref<2x4xf32, #tpu.memory_space<vmem>>, vector<2x4xf32>
    tpu.vector_store %arg13[%c0_258, %c0_259], %271 {strides = array<i32>} : memref<2x4xf32, #tpu.memory_space<vmem>>, vector<2x4xf32>,
    return
  }
}

</mosaic_0001>

<llo_original>
// kernel: qlearning_forward.1
$region0: #{qlearning_forward.1}
  #allocation0 [shape = 'u32[]', space=smem, size = 0x4, offset = 0x4, fixed_abs, tag = 'smem constant byte address 0x4 - core index']
  #allocation1 [shape = 'u32[144,128]{1,0:T(1,128)}', space=vmem, size = 0x12000, scoped, tag = 'internal scratch']
  #allocation2 [shape = 'bf16[768,132]{1,0:T(8,128)(2,1)}', space=vmem, size = 0x60000, scoped, tag = 'scratch operand']
  #allocation3 [shape = 'bf16[432,48]{1,0:T(8,128)(2,1)}', space=vmem, size = 0x1b000, scoped, tag = 'scratch operand']
  #allocation4 [shape = 'bf16[1536,512]{1,0:T(8,128)(2,1)}', space=vmem, size = 0x180000, scoped, tag = 'scratch operand']
  #allocation5 [shape = 'f32[48,64]{1,0:T(8,128)}', space=vmem, size = 0x6000, scoped, tag = 'scratch operand']
  #allocation6 [shape = 'f32[2,1536]{1,0:T(2,128)}', space=vmem, size = 0x3000, scoped, tag = 'scratch operand']
  #allocation7 [shape = 's32[3]{0}', space=sflag, size = 0xc, scoped, tag = 'scratch operand']
  #allocation10 [shape = 's32[]', space=sflag, size = 0x4, offset = 0, fixed_abs, tag = 'sflag constant byte address 0x0 - dummy sync flag']
  #allocation11 [shape = 's32[]', space=sflag, size = 0x4, offset = 0, fixed_abs, tag = 'sflag constant byte address 0x0 - dummy sync flag']
  #allocation12 [shape = 's32[]', space=sflag, size = 0x4, offset = 0, fixed_abs, tag = 'sflag constant byte address 0x0 - dummy sync flag']
  %s0 = inlined_call_operand.vmem [shape: bf16[132,256], index: 0, kind: input, shape index: {}]
  %s1 = inlined_call_operand.vmem [shape: bf16[256,32], index: 1, kind: input, shape index: {}]
  %s2 = inlined_call_operand.vmem [shape: f32[1,32], index: 2, kind: input, shape index: {}]
  %s3 = inlined_call_operand.vmem [shape: bf16[16,32,64], index: 3, kind: input, shape index: {}]
  %s4 = inlined_call_operand.vmem [shape: f32[1,64], index: 4, kind: input, shape index: {}]
  %s5 = inlined_call_operand.vmem [shape: bf16[9,64,64], index: 5, kind: input, shape index: {}]
  %s6 = inlined_call_operand.vmem [shape: f32[1,64], index: 6, kind: input, shape index: {}]
  %s7 = inlined_call_operand.vmem [shape: f32[1,512], index: 7, kind: input, shape index: {}]
  %s8 = inlined_call_operand.vmem [shape: f32[512,4], index: 8, kind: input, shape index: {}]
  %s9 = inlined_call_operand.vmem [shape: f32[1,4], index: 9, kind: input, shape index: {}]
  %s10 = inlined_call_operand.vmem [shape: bf16[768,132], index: 10, kind: input, shape index: {}]
  %s11 = inlined_call_operand.vmem [shape: bf16[432,48], index: 11, kind: input, shape index: {}]
  %s12 = inlined_call_operand.vmem [shape: bf16[1536,512], index: 12, kind: input, shape index: {}]
  %s13 = inlined_call_operand.hbm [shape: f32[2,4], index: 13, kind: output, shape index: {}]
  %s14 = sld [smem:[#allocation0]]
  $region152: #{qlearning_forward.1} parent=0
    _
  %s16 = ssub.s32 1, %s14
  %s17 = scalar_select 0, %s16, %s14
  $region1: #{qlearning_forward.1} parent=0
    #allocation8 [shape = 'u8[1024]{0}', space=vmem, size = 0x400, scoped, tag = 'output window, operand 0, single buffered']
    #allocation9 [shape = 's32[1]{0}', space=sflag, size = 0x4, scoped, tag = 'scoped memory for qlearning_forward.1']
    %18 = vsyncpa [#allocation9], 0
    // Predicated region
    $region2: #{qlearning_forward.1} parent=1 // pred_check
      _
    $region3: #{qlearning_forward.1} parent=1 // pred_check_branch
      %20 = sbr.rel (0) target = $region5
    $region4: #{qlearning_forward.1} parent=1 // pred_region
      _
    $region5: #{qlearning_forward.1} parent=1 // pred_fallthru
      _
    // Predicated region
    $region6: #{qlearning_forward.1} parent=1 // pred_check
      _
    $region7: #{qlearning_forward.1} parent=1 // pred_check_branch
      %22 = sbr.rel (0) target = $region9
    $region8: #{qlearning_forward.1} parent=1 // pred_region
      _
    $region9: #{qlearning_forward.1} parent=1 // pred_fallthru
      _
    // Predicated region
    $region10: #{qlearning_forward.1} parent=1 // pred_check
      _
    $region11: #{qlearning_forward.1} parent=1 // pred_check_branch
      %24 = sbr.rel (0) target = $region13
    $region12: #{qlearning_forward.1} parent=1 // pred_region
      _
    $region13: #{qlearning_forward.1} parent=1 // pred_fallthru
      _
    // Predicated region
    $region14: #{qlearning_forward.1} parent=1 // pred_check
      _
    $region15: #{qlearning_forward.1} parent=1 // pred_check_branch
      %26 = sbr.rel (0) target = $region17
    $region16: #{qlearning_forward.1} parent=1 // pred_region
      _
    $region17: #{qlearning_forward.1} parent=1 // pred_fallthru
      _
    // Predicated region
    $region18: #{qlearning_forward.1} parent=1 // pred_check
      _
    $region19: #{qlearning_forward.1} parent=1 // pred_check_branch
      %28 = sbr.rel (0) target = $region21
    $region20: #{qlearning_forward.1} parent=1 // pred_region
      _
    $region21: #{qlearning_forward.1} parent=1 // pred_fallthru
      _
    // Predicated region
    $region22: #{qlearning_forward.1} parent=1 // pred_check
      _
    $region23: #{qlearning_forward.1} parent=1 // pred_check_branch
      %30 = sbr.rel (0) target = $region25
    $region24: #{qlearning_forward.1} parent=1 // pred_region
      _
    $region25: #{qlearning_forward.1} parent=1 // pred_fallthru
      _
    // Predicated region
    $region26: #{qlearning_forward.1} parent=1 // pred_check
      _
    $region27: #{qlearning_forward.1} parent=1 // pred_check_branch
      %32 = sbr.rel (0) target = $region29
    $region28: #{qlearning_forward.1} parent=1 // pred_region
      _
    $region29: #{qlearning_forward.1} parent=1 // pred_fallthru
      _
    // Predicated region
    $region30: #{qlearning_forward.1} parent=1 // pred_check
      _
    $region31: #{qlearning_forward.1} parent=1 // pred_check_branch
      %34 = sbr.rel (0) target = $region33
    $region32: #{qlearning_forward.1} parent=1 // pred_region
      _
    $region33: #{qlearning_forward.1} parent=1 // pred_fallthru
      _
    // Predicated region
    $region34: #{qlearning_forward.1} parent=1 // pred_check
      _
    $region35: #{qlearning_forward.1} parent=1 // pred_check_branch
      %36 = sbr.rel (0) target = $region37
    $region36: #{qlearning_forward.1} parent=1 // pred_region
      _
    $region37: #{qlearning_forward.1} parent=1 // pred_fallthru
      _
    // Predicated region
    $region38: #{qlearning_forward.1} parent=1 // pred_check
      _
    $region39: #{qlearning_forward.1} parent=1 // pred_check_branch
      %38 = sbr.rel (0) target = $region41
    $region40: #{qlearning_forward.1} parent=1 // pred_region
      _
    $region41: #{qlearning_forward.1} parent=1 // pred_fallthru
      _
    %p41 = scmp.lt.u32.totalorder 768, 8
    %p42 = pneg %p41
    // Predicated region
    $region42: #{qlearning_forward.1} parent=1 // pred_check
      _
    $region43: #{qlearning_forward.1} parent=1 // pred_check_branch
      %44 = sbr.rel (%p41) target = $region45
    $region44: #{qlearning_forward.1} parent=1 // pred_region
      %s60 = sand.u32 768, 7
      %p61 = scmp.eq.s32.totalorder %s60, 0
      // Predicated region
      $region57: #{qlearning_forward.1} parent=44 // pred_check
        %p62 = pneg %p61
      $region58: #{qlearning_forward.1} parent=44 // pred_check_branch
        %64 = sbr.rel (%p62) target = $region60
      $region59: #{qlearning_forward.1} parent=44 // pred_region
        loop: start=0, step=1, limit=1
        $region61: #{qlearning_forward.1} parent=59 // loop_pre_header
          _
        $region62: #{qlearning_forward.1} parent=59 // loop_header
          %s66 = sphi 0, %s70
          %p67 = scmp.ge.s32.totalorder %s66, 1
          %s71 = sphi %s10, %s10
          %s72 = sphi [#allocation2], [#allocation2]
        $region63: #{qlearning_forward.1} parent=59 // loop_header_branch
          %69 = sbr.rel (%p67) target = $region67
        $region64: #{qlearning_forward.1} parent=59 // loop_body
          %v73 = vld [vmem:[%s71] sm:$0xff]
          %74 = vst [vmem:[%s72] sm:$0xff] %v73
          %v75 = vld [vmem:[%s71 + $0x8] sm:$0xff]
          %76 = vst [vmem:[%s72 + $0x8] sm:$0xff] %v75
          %v77 = vld [vmem:[%s71 + $0x10] sm:$0xff]
          %78 = vst [vmem:[%s72 + $0x10] sm:$0xff] %v77
          %v79 = vld [vmem:[%s71 + $0x18] sm:$0xff]
          %80 = vst [vmem:[%s72 + $0x18] sm:$0xff] %v79
          %v81 = vld [vmem:[%s71 + $0x20] sm:$0xff]
          %82 = vst [vmem:[%s72 + $0x20] sm:$0xff] %v81
          %v83 = vld [vmem:[%s71 + $0x28] sm:$0xff]
          %84 = vst [vmem:[%s72 + $0x28] sm:$0xff] %v83
          %v85 = vld [vmem:[%s71 + $0x30] sm:$0xff]
          %86 = vst [vmem:[%s72 + $0x30] sm:$0xff] %v85
          %v87 = vld [vmem:[%s71 + $0x38] sm:$0xff]
          %88 = vst [vmem:[%s72 + $0x38] sm:$0xff] %v87
          %v89 = vld [vmem:[%s71 + $0x40] sm:$0xff]
          %90 = vst [vmem:[%s72 + $0x40] sm:$0xff] %v89
          %v91 = vld [vmem:[%s71 + $0x48] sm:$0xff]
          %92 = vst [vmem:[%s72 + $0x48] sm:$0xff] %v91
          %v93 = vld [vmem:[%s71 + $0x50] sm:$0xff]
          %94 = vst [vmem:[%s72 + $0x50] sm:$0xff] %v93
          %v95 = vld [vmem:[%s71 + $0x58] sm:$0xff]
          %96 = vst [vmem:[%s72 + $0x58] sm:$0xff] %v95
          %v97 = vld [vmem:[%s71 + $0x60] sm:$0xff]
          %98 = vst [vmem:[%s72 + $0x60] sm:$0xff] %v97
          %v99 = vld [vmem:[%s71 + $0x68] sm:$0xff]
          %100 = vst [vmem:[%s72 + $0x68] sm:$0xff] %v99
          %v101 = vld [vmem:[%s71 + $0x70] sm:$0xff]
          %102 = vst [vmem:[%s72 + $0x70] sm:$0xff] %v101
          %v103 = vld [vmem:[%s71 + $0x78] sm:$0xff]
          %104 = vst [vmem:[%s72 + $0x78] sm:$0xff] %v103
          %v105 = vld [vmem:[%s71 + $0x80] sm:$0xff]
          %106 = vst [vmem:[%s72 + $0x80] sm:$0xff] %v105
          %v107 = vld [vmem:[%s71 + $0x88] sm:$0xff]
          %108 = vst [vmem:[%s72 + $0x88] sm:$0xff] %v107
          %v109 = vld [vmem:[%s71 + $0x90] sm:$0xff]
          %110 = vst [vmem:[%s72 + $0x90] sm:$0xff] %v109
          %v111 = vld [vmem:[%s71 + $0x98] sm:$0xff]
          %112 = vst [vmem:[%s72 + $0x98] sm:$0xff] %v111
          %v113 = vld [vmem:[%s71 + $0xa0] sm:$0xff]
          %114 = vst [vmem:[%s72 + $0xa0] sm:$0xff] %v113
          %v115 = vld [vmem:[%s71 + $0xa8] sm:$0xff]
          %116 = vst [vmem:[%s72 + $0xa8] sm:$0xff] %v115
          %v117 = vld [vmem:[%s71 + $0xb0] sm:$0xff]
          %118 = vst [vmem:[%s72 + $0xb0] sm:$0xff] %v117
          %v119 = vld [vmem:[%s71 + $0xb8] sm:$0xff]
          %120 = vst [vmem:[%s72 + $0xb8] sm:$0xff] %v119
          %v121 = vld [vmem:[%s71 + $0xc0] sm:$0xff]
          %122 = vst [vmem:[%s72 + $0xc0] sm:$0xff] %v121
          %v123 = vld [vmem:[%s71 + $0xc8] sm:$0xff]
          %124 = vst [vmem:[%s72 + $0xc8] sm:$0xff] %v123
          %v125 = vld [vmem:[%s71 + $0xd0] sm:$0xff]
          %126 = vst [vmem:[%s72 + $0xd0] sm:$0xff] %v125
          %v127 = vld [vmem:[%s71 + $0xd8] sm:$0xff]
          %128 = vst [vmem:[%s72 + $0xd8] sm:$0xff] %v127
          %v129 = vld [vmem:[%s71 + $0xe0] sm:$0xff]
          %130 = vst [vmem:[%s72 + $0xe0] sm:$0xff] %v129
          %v131 = vld [vmem:[%s71 + $0xe8] sm:$0xff]
          %132 = vst [vmem:[%s72 + $0xe8] sm:$0xff] %v131
          %v133 = vld [vmem:[%s71 + $0xf0] sm:$0xff]
          %134 = vst [vmem:[%s72 + $0xf0] sm:$0xff] %v133
          %v135 = vld [vmem:[%s71 + $0xf8] sm:$0xff]
          %136 = vst [vmem:[%s72 + $0xf8] sm:$0xff] %v135
          %v137 = vld [vmem:[%s71 + $0x100] sm:$0xff]
          %138 = vst [vmem:[%s72 + $0x100] sm:$0xff] %v137
          %v139 = vld [vmem:[%s71 + $0x108] sm:$0xff]
          %140 = vst [vmem:[%s72 + $0x108] sm:$0xff] %v139
          %v141 = vld [vmem:[%s71 + $0x110] sm:$0xff]
          %142 = vst [vmem:[%s72 + $0x110] sm:$0xff] %v141
          %v143 = vld [vmem:[%s71 + $0x118] sm:$0xff]
          %144 = vst [vmem:[%s72 + $0x118] sm:$0xff] %v143
          %v145 = vld [vmem:[%s71 + $0x120] sm:$0xff]
          %146 = vst [vmem:[%s72 + $0x120] sm:$0xff] %v145
          %v147 = vld [vmem:[%s71 + $0x128] sm:$0xff]
          %148 = vst [vmem:[%s72 + $0x128] sm:$0xff] %v147
          %v149 = vld [vmem:[%s71 + $0x130] sm:$0xff]
          %150 = vst [vmem:[%s72 + $0x130] sm:$0xff] %v149
          %v151 = vld [vmem:[%s71 + $0x138] sm:$0xff]
          %152 = vst [vmem:[%s72 + $0x138] sm:$0xff] %v151
          %v153 = vld [vmem:[%s71 + $0x140] sm:$0xff]
          %154 = vst [vmem:[%s72 + $0x140] sm:$0xff] %v153
          %v155 = vld [vmem:[%s71 + $0x148] sm:$0xff]
          %156 = vst [vmem:[%s72 + $0x148] sm:$0xff] %v155
          %v157 = vld [vmem:[%s71 + $0x150] sm:$0xff]
          %158 = vst [vmem:[%s72 + $0x150] sm:$0xff] %v157
          %v159 = vld [vmem:[%s71 + $0x158] sm:$0xff]
          %160 = vst [vmem:[%s72 + $0x158] sm:$0xff] %v159
          %v161 = vld [vmem:[%s71 + $0x160] sm:$0xff]
          %162 = vst [vmem:[%s72 + $0x160] sm:$0xff] %v161
          %v163 = vld [vmem:[%s71 + $0x168] sm:$0xff]
          %164 = vst [vmem:[%s72 + $0x168] sm:$0xff] %v163
          %v165 = vld [vmem:[%s71 + $0x170] sm:$0xff]
          %166 = vst [vmem:[%s72 + $0x170] sm:$0xff] %v165
          %v167 = vld [vmem:[%s71 + $0x178] sm:$0xff]
          %168 = vst [vmem:[%s72 + $0x178] sm:$0xff] %v167
          %v169 = vld [vmem:[%s71 + $0x180] sm:$0xff]
          %170 = vst [vmem:[%s72 + $0x180] sm:$0xff] %v169
          %v171 = vld [vmem:[%s71 + $0x188] sm:$0xff]
          %172 = vst [vmem:[%s72 + $0x188] sm:$0xff] %v171
          %v173 = vld [vmem:[%s71 + $0x190] sm:$0xff]
          %174 = vst [vmem:[%s72 + $0x190] sm:$0xff] %v173
          %v175 = vld [vmem:[%s71 + $0x198] sm:$0xff]
          %176 = vst [vmem:[%s72 + $0x198] sm:$0xff] %v175
          %v177 = vld [vmem:[%s71 + $0x1a0] sm:$0xff]
          %178 = vst [vmem:[%s72 + $0x1a0] sm:$0xff] %v177
          %v179 = vld [vmem:[%s71 + $0x1a8] sm:$0xff]
          %180 = vst [vmem:[%s72 + $0x1a8] sm:$0xff] %v179
          %v181 = vld [vmem:[%s71 + $0x1b0] sm:$0xff]
          %182 = vst [vmem:[%s72 + $0x1b0] sm:$0xff] %v181
          %v183 = vld [vmem:[%s71 + $0x1b8] sm:$0xff]
          %184 = vst [vmem:[%s72 + $0x1b8] sm:$0xff] %v183
          %v185 = vld [vmem:[%s71 + $0x1c0] sm:$0xff]
          %186 = vst [vmem:[%s72 + $0x1c0] sm:$0xff] %v185
          %v187 = vld [vmem:[%s71 + $0x1c8] sm:$0xff]
          %188 = vst [vmem:[%s72 + $0x1c8] sm:$0xff] %v187
          %v189 = vld [vmem:[%s71 + $0x1d0] sm:$0xff]
          %190 = vst [vmem:[%s72 + $0x1d0] sm:$0xff] %v189
          %v191 = vld [vmem:[%s71 + $0x1d8] sm:$0xff]
          %192 = vst [vmem:[%s72 + $0x1d8] sm:$0xff] %v191
          %v193 = vld [vmem:[%s71 + $0x1e0] sm:$0xff]
          %194 = vst [vmem:[%s72 + $0x1e0] sm:$0xff] %v193
          %v195 = vld [vmem:[%s71 + $0x1e8] sm:$0xff]
          %196 = vst [vmem:[%s72 + $0x1e8] sm:$0xff] %v195
          %v197 = vld [vmem:[%s71 + $0x1f0] sm:$0xff]
          %198 = vst [vmem:[%s72 + $0x1f0] sm:$0xff] %v197
          %v199 = vld [vmem:[%s71 + $0x1f8] sm:$0xff]
          %200 = vst [vmem:[%s72 + $0x1f8] sm:$0xff] %v199
          %v201 = vld [vmem:[%s71 + $0x200] sm:$0xff]
          %202 = vst [vmem:[%s72 + $0x200] sm:$0xff] %v201
          %v203 = vld [vmem:[%s71 + $0x208] sm:$0xff]
          %204 = vst [vmem:[%s72 + $0x208] sm:$0xff] %v203
          %v205 = vld [vmem:[%s71 + $0x210] sm:$0xff]
          %206 = vst [vmem:[%s72 + $0x210] sm:$0xff] %v205
          %v207 = vld [vmem:[%s71 + $0x218] sm:$0xff]
          %208 = vst [vmem:[%s72 + $0x218] sm:$0xff] %v207
          %v209 = vld [vmem:[%s71 + $0x220] sm:$0xff]
          %210 = vst [vmem:[%s72 + $0x220] sm:$0xff] %v209
          %v211 = vld [vmem:[%s71 + $0x228] sm:$0xff]
          %212 = vst [vmem:[%s72 + $0x228] sm:$0xff] %v211
          %v213 = vld [vmem:[%s71 + $0x230] sm:$0xff]
          %214 = vst [vmem:[%s72 + $0x230] sm:$0xff] %v213
          %v215 = vld [vmem:[%s71 + $0x238] sm:$0xff]
          %216 = vst [vmem:[%s72 + $0x238] sm:$0xff] %v215
          %v217 = vld [vmem:[%s71 + $0x240] sm:$0xff]
          %218 = vst [vmem:[%s72 + $0x240] sm:$0xff] %v217
          %v219 = vld [vmem:[%s71 + $0x248] sm:$0xff]
          %220 = vst [vmem:[%s72 + $0x248] sm:$0xff] %v219
          %v221 = vld [vmem:[%s71 + $0x250] sm:$0xff]
          %222 = vst [vmem:[%s72 + $0x250] sm:$0xff] %v221
          %v223 = vld [vmem:[%s71 + $0x258] sm:$0xff]
          %224 = vst [vmem:[%s72 + $0x258] sm:$0xff] %v223
          %v225 = vld [vmem:[%s71 + $0x260] sm:$0xff]
          %226 = vst [vmem:[%s72 + $0x260] sm:$0xff] %v225
          %v227 = vld [vmem:[%s71 + $0x268] sm:$0xff]
          %228 = vst [vmem:[%s72 + $0x268] sm:$0xff] %v227
          %v229 = vld [vmem:[%s71 + $0x270] sm:$0xff]
          %230 = vst [vmem:[%s72 + $0x270] sm:$0xff] %v229
          %v231 = vld [vmem:[%s71 + $0x278] sm:$0xff]
          %232 = vst [vmem:[%s72 + $0x278] sm:$0xff] %v231
          %v233 = vld [vmem:[%s71 + $0x280] sm:$0xff]
          %234 = vst [vmem:[%s72 + $0x280] sm:$0xff] %v233
          %v235 = vld [vmem:[%s71 + $0x288] sm:$0xff]
          %236 = vst [vmem:[%s72 + $0x288] sm:$0xff] %v235
          %v237 = vld [vmem:[%s71 + $0x290] sm:$0xff]
          %238 = vst [vmem:[%s72 + $0x290] sm:$0xff] %v237
          %v239 = vld [vmem:[%s71 + $0x298] sm:$0xff]
          %240 = vst [vmem:[%s72 + $0x298] sm:$0xff] %v239
          %v241 = vld [vmem:[%s71 + $0x2a0] sm:$0xff]
          %242 = vst [vmem:[%s72 + $0x2a0] sm:$0xff] %v241
          %v243 = vld [vmem:[%s71 + $0x2a8] sm:$0xff]
          %244 = vst [vmem:[%s72 + $0x2a8] sm:$0xff] %v243
          %v245 = vld [vmem:[%s71 + $0x2b0] sm:$0xff]
          %246 = vst [vmem:[%s72 + $0x2b0] sm:$0xff] %v245
          %v247 = vld [vmem:[%s71 + $0x2b8] sm:$0xff]
          %248 = vst [vmem:[%s72 + $0x2b8] sm:$0xff] %v247
          %v249 = vld [vmem:[%s71 + $0x2c0] sm:$0xff]
          %250 = vst [vmem:[%s72 + $0x2c0] sm:$0xff] %v249
          %v251 = vld [vmem:[%s71 + $0x2c8] sm:$0xff]
          %252 = vst [vmem:[%s72 + $0x2c8] sm:$0xff] %v251
          %v253 = vld [vmem:[%s71 + $0x2d0] sm:$0xff]
          %254 = vst [vmem:[%s72 + $0x2d0] sm:$0xff] %v253
          %v255 = vld [vmem:[%s71 + $0x2d8] sm:$0xff]
          %256 = vst [vmem:[%s72 + $0x2d8] sm:$0xff] %v255
          %v257 = vld [vmem:[%s71 + $0x2e0] sm:$0xff]
          %258 = vst [vmem:[%s72 + $0x2e0] sm:$0xff] %v257
          %v259 = vld [vmem:[%s71 + $0x2e8] sm:$0xff]
          %260 = vst [vmem:[%s72 + $0x2e8] sm:$0xff] %v259
          %v261 = vld [vmem:[%s71 + $0x2f0] sm:$0xff]
          %262 = vst [vmem:[%s72 + $0x2f0] sm:$0xff] %v261
          %v263 = vld [vmem:[%s71 + $0x2f8] sm:$0xff]
          %264 = vst [vmem:[%s72 + $0x2f8] sm:$0xff] %v263
        $region65: #{qlearning_forward.1} parent=59 // loop_footer
          %s70 = sadd.s32 1, %s66
        $region66: #{qlearning_forward.1} parent=59 // loop_footer_branch
          %65 = sbr.rel target = $region62
        $region67: #{qlearning_forward.1} parent=59 // loop_exit
          _
      $region60: #{qlearning_forward.1} parent=44 // pred_fallthru
        _
      %p265 = pneg %p61
      // Predicated region
      $region68: #{qlearning_forward.1} parent=44 // pred_check
        _
      $region69: #{qlearning_forward.1} parent=44 // pred_check_branch
        %267 = sbr.rel (%p61) target = $region71
      $region70: #{qlearning_forward.1} parent=44 // pred_region
        %s268 = sand.u32 768, 7
      $region71: #{qlearning_forward.1} parent=44 // pred_fallthru
        _
    $region45: #{qlearning_forward.1} parent=1 // pred_fallthru
      _
    // Predicated region
    $region46: #{qlearning_forward.1} parent=1 // pred_check
      %p45 = pneg %p41
    $region47: #{qlearning_forward.1} parent=1 // pred_check_branch
      %47 = sbr.rel (%p45) target = $region49
    $region48: #{qlearning_forward.1} parent=1 // pred_region
      %s48 = sshll.u32 1, 768
      %s49 = ssub.s32 %s48, 1
      loop: start=0, step=1, limit=1
      $region50: #{qlearning_forward.1} parent=48 // loop_pre_header
        _
      $region51: #{qlearning_forward.1} parent=48 // loop_header
        %s51 = sphi 0, %s55
        %p52 = scmp.ge.s32.totalorder %s51, 1
        %s56 = sphi %s10, %s10
        %s57 = sphi [#allocation2], [#allocation2]
      $region52: #{qlearning_forward.1} parent=48 // loop_header_branch
        %54 = sbr.rel (%p52) target = $region56
      $region53: #{qlearning_forward.1} parent=48 // loop_body
        %v58 = vld [vmem:[%s56] sm:%s49]
        %59 = vst [vmem:[%s57] sm:%s49] %v58
      $region54: #{qlearning_forward.1} parent=48 // loop_footer
        %s55 = sadd.s32 1, %s51
      $region55: #{qlearning_forward.1} parent=48 // loop_footer_branch
        %50 = sbr.rel target = $region51
      $region56: #{qlearning_forward.1} parent=48 // loop_exit
        _
    $region49: #{qlearning_forward.1} parent=1 // pred_fallthru
      _
    // Predicated region
    $region72: #{qlearning_forward.1} parent=1 // pred_check
      _
    $region73: #{qlearning_forward.1} parent=1 // pred_check_branch
      %271 = sbr.rel (0) target = $region75
    $region74: #{qlearning_forward.1} parent=1 // pred_region
      %272 = vsyncadd [#allocation7], 12288
    $region75: #{qlearning_forward.1} parent=1 // pred_fallthru
      _
    %s273 = scalar_lea.sflag [#allocation7], 1
    %p275 = scmp.lt.u32.totalorder 216, 8
    %p276 = pneg %p275
    // Predicated region
    $region76: #{qlearning_forward.1} parent=1 // pred_check
      _
    $region77: #{qlearning_forward.1} parent=1 // pred_check_branch
      %278 = sbr.rel (%p275) target = $region79
    $region78: #{qlearning_forward.1} parent=1 // pred_region
      %s294 = sand.u32 216, 7
      %p295 = scmp.eq.s32.totalorder %s294, 0
      // Predicated region
      $region91: #{qlearning_forward.1} parent=78 // pred_check
        %p296 = pneg %p295
      $region92: #{qlearning_forward.1} parent=78 // pred_check_branch
        %298 = sbr.rel (%p296) target = $region94
      $region93: #{qlearning_forward.1} parent=78 // pred_region
        loop: start=0, step=1, limit=1
        $region95: #{qlearning_forward.1} parent=93 // loop_pre_header
          _
        $region96: #{qlearning_forward.1} parent=93 // loop_header
          %s300 = sphi 0, %s304
          %p301 = scmp.ge.s32.totalorder %s300, 1
          %s305 = sphi %s11, %s11
          %s306 = sphi [#allocation3], [#allocation3]
        $region97: #{qlearning_forward.1} parent=93 // loop_header_branch
          %303 = sbr.rel (%p301) target = $region101
        $region98: #{qlearning_forward.1} parent=93 // loop_body
          %v307 = vld [vmem:[%s305] sm:$0xff]
          %308 = vst [vmem:[%s306] sm:$0xff] %v307
          %v309 = vld [vmem:[%s305 + $0x8] sm:$0xff]
          %310 = vst [vmem:[%s306 + $0x8] sm:$0xff] %v309
          %v311 = vld [vmem:[%s305 + $0x10] sm:$0xff]
          %312 = vst [vmem:[%s306 + $0x10] sm:$0xff] %v311
          %v313 = vld [vmem:[%s305 + $0x18] sm:$0xff]
          %314 = vst [vmem:[%s306 + $0x18] sm:$0xff] %v313
          %v315 = vld [vmem:[%s305 + $0x20] sm:$0xff]
          %316 = vst [vmem:[%s306 + $0x20] sm:$0xff] %v315
          %v317 = vld [vmem:[%s305 + $0x28] sm:$0xff]
          %318 = vst [vmem:[%s306 + $0x28] sm:$0xff] %v317
          %v319 = vld [vmem:[%s305 + $0x30] sm:$0xff]
          %320 = vst [vmem:[%s306 + $0x30] sm:$0xff] %v319
          %v321 = vld [vmem:[%s305 + $0x38] sm:$0xff]
          %322 = vst [vmem:[%s306 + $0x38] sm:$0xff] %v321
          %v323 = vld [vmem:[%s305 + $0x40] sm:$0xff]
          %324 = vst [vmem:[%s306 + $0x40] sm:$0xff] %v323
          %v325 = vld [vmem:[%s305 + $0x48] sm:$0xff]
          %326 = vst [vmem:[%s306 + $0x48] sm:$0xff] %v325
          %v327 = vld [vmem:[%s305 + $0x50] sm:$0xff]
          %328 = vst [vmem:[%s306 + $0x50] sm:$0xff] %v327
          %v329 = vld [vmem:[%s305 + $0x58] sm:$0xff]
          %330 = vst [vmem:[%s306 + $0x58] sm:$0xff] %v329
          %v331 = vld [vmem:[%s305 + $0x60] sm:$0xff]
          %332 = vst [vmem:[%s306 + $0x60] sm:$0xff] %v331
          %v333 = vld [vmem:[%s305 + $0x68] sm:$0xff]
          %334 = vst [vmem:[%s306 + $0x68] sm:$0xff] %v333
          %v335 = vld [vmem:[%s305 + $0x70] sm:$0xff]
          %336 = vst [vmem:[%s306 + $0x70] sm:$0xff] %v335
          %v337 = vld [vmem:[%s305 + $0x78] sm:$0xff]
          %338 = vst [vmem:[%s306 + $0x78] sm:$0xff] %v337
          %v339 = vld [vmem:[%s305 + $0x80] sm:$0xff]
          %340 = vst [vmem:[%s306 + $0x80] sm:$0xff] %v339
          %v341 = vld [vmem:[%s305 + $0x88] sm:$0xff]
          %342 = vst [vmem:[%s306 + $0x88] sm:$0xff] %v341
          %v343 = vld [vmem:[%s305 + $0x90] sm:$0xff]
          %344 = vst [vmem:[%s306 + $0x90] sm:$0xff] %v343
          %v345 = vld [vmem:[%s305 + $0x98] sm:$0xff]
          %346 = vst [vmem:[%s306 + $0x98] sm:$0xff] %v345
          %v347 = vld [vmem:[%s305 + $0xa0] sm:$0xff]
          %348 = vst [vmem:[%s306 + $0xa0] sm:$0xff] %v347
          %v349 = vld [vmem:[%s305 + $0xa8] sm:$0xff]
          %350 = vst [vmem:[%s306 + $0xa8] sm:$0xff] %v349
          %v351 = vld [vmem:[%s305 + $0xb0] sm:$0xff]
          %352 = vst [vmem:[%s306 + $0xb0] sm:$0xff] %v351
          %v353 = vld [vmem:[%s305 + $0xb8] sm:$0xff]
          %354 = vst [vmem:[%s306 + $0xb8] sm:$0xff] %v353
          %v355 = vld [vmem:[%s305 + $0xc0] sm:$0xff]
          %356 = vst [vmem:[%s306 + $0xc0] sm:$0xff] %v355
          %v357 = vld [vmem:[%s305 + $0xc8] sm:$0xff]
          %358 = vst [vmem:[%s306 + $0xc8] sm:$0xff] %v357
          %v359 = vld [vmem:[%s305 + $0xd0] sm:$0xff]
          %360 = vst [vmem:[%s306 + $0xd0] sm:$0xff] %v359
        $region99: #{qlearning_forward.1} parent=93 // loop_footer
          %s304 = sadd.s32 1, %s300
        $region100: #{qlearning_forward.1} parent=93 // loop_footer_branch
          %299 = sbr.rel target = $region96
        $region101: #{qlearning_forward.1} parent=93 // loop_exit
          _
      $region94: #{qlearning_forward.1} parent=78 // pred_fallthru
        _
      %p361 = pneg %p295
      // Predicated region
      $region102: #{qlearning_forward.1} parent=78 // pred_check
        _
      $region103: #{qlearning_forward.1} parent=78 // pred_check_branch
        %363 = sbr.rel (%p295) target = $region105
      $region104: #{qlearning_forward.1} parent=78 // pred_region
        %s364 = sand.u32 216, 7
      $region105: #{qlearning_forward.1} parent=78 // pred_fallthru
        _
    $region79: #{qlearning_forward.1} parent=1 // pred_fallthru
      _
    // Predicated region
    $region80: #{qlearning_forward.1} parent=1 // pred_check
      %p279 = pneg %p275
    $region81: #{qlearning_forward.1} parent=1 // pred_check_branch
      %281 = sbr.rel (%p279) target = $region83
    $region82: #{qlearning_forward.1} parent=1 // pred_region
      %s282 = sshll.u32 1, 216
      %s283 = ssub.s32 %s282, 1
      loop: start=0, step=1, limit=1
      $region84: #{qlearning_forward.1} parent=82 // loop_pre_header
        _
      $region85: #{qlearning_forward.1} parent=82 // loop_header
        %s285 = sphi 0, %s289
        %p286 = scmp.ge.s32.totalorder %s285, 1
        %s290 = sphi %s11, %s11
        %s291 = sphi [#allocation3], [#allocation3]
      $region86: #{qlearning_forward.1} parent=82 // loop_header_branch
        %288 = sbr.rel (%p286) target = $region90
      $region87: #{qlearning_forward.1} parent=82 // loop_body
        %v292 = vld [vmem:[%s290] sm:%s283]
        %293 = vst [vmem:[%s291] sm:%s283] %v292
      $region88: #{qlearning_forward.1} parent=82 // loop_footer
        %s289 = sadd.s32 1, %s285
      $region89: #{qlearning_forward.1} parent=82 // loop_footer_branch
        %284 = sbr.rel target = $region85
      $region90: #{qlearning_forward.1} parent=82 // loop_exit
        _
    $region83: #{qlearning_forward.1} parent=1 // pred_fallthru
      _
    // Predicated region
    $region106: #{qlearning_forward.1} parent=1 // pred_check
      _
    $region107: #{qlearning_forward.1} parent=1 // pred_check_branch
      %367 = sbr.rel (0) target = $region109
    $region108: #{qlearning_forward.1} parent=1 // pred_region
      %368 = vsyncadd %s273, 3456
    $region109: #{qlearning_forward.1} parent=1 // pred_fallthru
      _
    %s369 = scalar_lea.sflag [#allocation7], 2
    %p371 = scmp.lt.u32.totalorder 3072, 8
    %p372 = pneg %p371
    // Predicated region
    $region110: #{qlearning_forward.1} parent=1 // pred_check
      _
    $region111: #{qlearning_forward.1} parent=1 // pred_check_branch
      %374 = sbr.rel (%p371) target = $region113
    $region112: #{qlearning_forward.1} parent=1 // pred_region
      %s390 = sand.u32 3072, 7
      %p391 = scmp.eq.s32.totalorder %s390, 0
      // Predicated region
      $region125: #{qlearning_forward.1} parent=112 // pred_check
        %p392 = pneg %p391
      $region126: #{qlearning_forward.1} parent=112 // pred_check_branch
        %394 = sbr.rel (%p392) target = $region128
      $region127: #{qlearning_forward.1} parent=112 // pred_region
        loop: start=0, step=1, limit=1
        $region129: #{qlearning_forward.1} parent=127 // loop_pre_header
          _
        $region130: #{qlearning_forward.1} parent=127 // loop_header
          %s396 = sphi 0, %s400
          %p397 = scmp.ge.s32.totalorder %s396, 1
          %s401 = sphi %s12, %s12
          %s402 = sphi [#allocation4], [#allocation4]
        $region131: #{qlearning_forward.1} parent=127 // loop_header_branch
          %399 = sbr.rel (%p397) target = $region135
        $region132: #{qlearning_forward.1} parent=127 // loop_body
          %v403 = vld [vmem:[%s401] sm:$0xff]
          %404 = vst [vmem:[%s402] sm:$0xff] %v403
          %v405 = vld [vmem:[%s401 + $0x8] sm:$0xff]
          %406 = vst [vmem:[%s402 + $0x8] sm:$0xff] %v405
          %v407 = vld [vmem:[%s401 + $0x10] sm:$0xff]
          %408 = vst [vmem:[%s402 + $0x10] sm:$0xff] %v407
          %v409 = vld [vmem:[%s401 + $0x18] sm:$0xff]
          %410 = vst [vmem:[%s402 + $0x18] sm:$0xff] %v409
          %v411 = vld [vmem:[%s401 + $0x20] sm:$0xff]
          %412 = vst [vmem:[%s402 + $0x20] sm:$0xff] %v411
          %v413 = vld [vmem:[%s401 + $0x28] sm:$0xff]
          %414 = vst [vmem:[%s402 + $0x28] sm:$0xff] %v413
          %v415 = vld [vmem:[%s401 + $0x30] sm:$0xff]
          %416 = vst [vmem:[%s402 + $0x30] sm:$0xff] %v415
          %v417 = vld [vmem:[%s401 + $0x38] sm:$0xff]
          %418 = vst [vmem:[%s402 + $0x38] sm:$0xff] %v417
          %v419 = vld [vmem:[%s401 + $0x40] sm:$0xff]
          %420 = vst [vmem:[%s402 + $0x40] sm:$0xff] %v419
          %v421 = vld [vmem:[%s401 + $0x48] sm:$0xff]
          %422 = vst [vmem:[%s402 + $0x48] sm:$0xff] %v421
          %v423 = vld [vmem:[%s401 + $0x50] sm:$0xff]
          %424 = vst [vmem:[%s402 + $0x50] sm:$0xff] %v423
          %v425 = vld [vmem:[%s401 + $0x58] sm:$0xff]
          %426 = vst [vmem:[%s402 + $0x58] sm:$0xff] %v425
          %v427 = vld [vmem:[%s401 + $0x60] sm:$0xff]
          %428 = vst [vmem:[%s402 + $0x60] sm:$0xff] %v427
          %v429 = vld [vmem:[%s401 + $0x68] sm:$0xff]
          %430 = vst [vmem:[%s402 + $0x68] sm:$0xff] %v429
          %v431 = vld [vmem:[%s401 + $0x70] sm:$0xff]
          %432 = vst [vmem:[%s402 + $0x70] sm:$0xff] %v431
          %v433 = vld [vmem:[%s401 + $0x78] sm:$0xff]
          %434 = vst [vmem:[%s402 + $0x78] sm:$0xff] %v433
          %v435 = vld [vmem:[%s401 + $0x80] sm:$0xff]
          %436 = vst [vmem:[%s402 + $0x80] sm:$0xff] %v435
          %v437 = vld [vmem:[%s401 + $0x88] sm:$0xff]
          %438 = vst [vmem:[%s402 + $0x88] sm:$0xff] %v437
          %v439 = vld [vmem:[%s401 + $0x90] sm:$0xff]
          %440 = vst [vmem:[%s402 + $0x90] sm:$0xff] %v439
          %v441 = vld [vmem:[%s401 + $0x98] sm:$0xff]
          %442 = vst [vmem:[%s402 + $0x98] sm:$0xff] %v441
          %v443 = vld [vmem:[%s401 + $0xa0] sm:$0xff]
          %444 = vst [vmem:[%s402 + $0xa0] sm:$0xff] %v443
          %v445 = vld [vmem:[%s401 + $0xa8] sm:$0xff]
          %446 = vst [vmem:[%s402 + $0xa8] sm:$0xff] %v445
          %v447 = vld [vmem:[%s401 + $0xb0] sm:$0xff]
          %448 = vst [vmem:[%s402 + $0xb0] sm:$0xff] %v447
          %v449 = vld [vmem:[%s401 + $0xb8] sm:$0xff]
          %450 = vst [vmem:[%s402 + $0xb8] sm:$0xff] %v449
          %v451 = vld [vmem:[%s401 + $0xc0] sm:$0xff]
          %452 = vst [vmem:[%s402 + $0xc0] sm:$0xff] %v451
          %v453 = vld [vmem:[%s401 + $0xc8] sm:$0xff]
          %454 = vst [vmem:[%s402 + $0xc8] sm:$0xff] %v453
          %v455 = vld [vmem:[%s401 + $0xd0] sm:$0xff]
          %456 = vst [vmem:[%s402 + $0xd0] sm:$0xff] %v455
          %v457 = vld [vmem:[%s401 + $0xd8] sm:$0xff]
          %458 = vst [vmem:[%s402 + $0xd8] sm:$0xff] %v457
          %v459 = vld [vmem:[%s401 + $0xe0] sm:$0xff]
          %460 = vst [vmem:[%s402 + $0xe0] sm:$0xff] %v459
          %v461 = vld [vmem:[%s401 + $0xe8] sm:$0xff]
          %462 = vst [vmem:[%s402 + $0xe8] sm:$0xff] %v461
          %v463 = vld [vmem:[%s401 + $0xf0] sm:$0xff]
          %464 = vst [vmem:[%s402 + $0xf0] sm:$0xff] %v463
          %v465 = vld [vmem:[%s401 + $0xf8] sm:$0xff]
          %466 = vst [vmem:[%s402 + $0xf8] sm:$0xff] %v465
          %v467 = vld [vmem:[%s401 + $0x100] sm:$0xff]
          %468 = vst [vmem:[%s402 + $0x100] sm:$0xff] %v467
          %v469 = vld [vmem:[%s401 + $0x108] sm:$0xff]
          %470 = vst [vmem:[%s402 + $0x108] sm:$0xff] %v469
          %v471 = vld [vmem:[%s401 + $0x110] sm:$0xff]
          %472 = vst [vmem:[%s402 + $0x110] sm:$0xff] %v471
          %v473 = vld [vmem:[%s401 + $0x118] sm:$0xff]
          %474 = vst [vmem:[%s402 + $0x118] sm:$0xff] %v473
          %v475 = vld [vmem:[%s401 + $0x120] sm:$0xff]
          %476 = vst [vmem:[%s402 + $0x120] sm:$0xff] %v475
          %v477 = vld [vmem:[%s401 + $0x128] sm:$0xff]
          %478 = vst [vmem:[%s402 + $0x128] sm:$0xff] %v477
          %v479 = vld [vmem:[%s401 + $0x130] sm:$0xff]
          %480 = vst [vmem:[%s402 + $0x130] sm:$0xff] %v479
          %v481 = vld [vmem:[%s401 + $0x138] sm:$0xff]
          %482 = vst [vmem:[%s402 + $0x138] sm:$0xff] %v481
          %v483 = vld [vmem:[%s401 + $0x140] sm:$0xff]
          %484 = vst [vmem:[%s402 + $0x140] sm:$0xff] %v483
          %v485 = vld [vmem:[%s401 + $0x148] sm:$0xff]
          %486 = vst [vmem:[%s402 + $0x148] sm:$0xff] %v485
          %v487 = vld [vmem:[%s401 + $0x150] sm:$0xff]
          %488 = vst [vmem:[%s402 + $0x150] sm:$0xff] %v487
          %v489 = vld [vmem:[%s401 + $0x158] sm:$0xff]
          %490 = vst [vmem:[%s402 + $0x158] sm:$0xff] %v489
          %v491 = vld [vmem:[%s401 + $0x160] sm:$0xff]
          %492 = vst [vmem:[%s402 + $0x160] sm:$0xff] %v491
          %v493 = vld [vmem:[%s401 + $0x168] sm:$0xff]
          %494 = vst [vmem:[%s402 + $0x168] sm:$0xff] %v493
          %v495 = vld [vmem:[%s401 + $0x170] sm:$0xff]
          %496 = vst [vmem:[%s402 + $0x170] sm:$0xff] %v495
          %v497 = vld [vmem:[%s401 + $0x178] sm:$0xff]
          %498 = vst [vmem:[%s402 + $0x178] sm:$0xff] %v497
          %v499 = vld [vmem:[%s401 + $0x180] sm:$0xff]
          %500 = vst [vmem:[%s402 + $0x180] sm:$0xff] %v499
          %v501 = vld [vmem:[%s401 + $0x188] sm:$0xff]
          %502 = vst [vmem:[%s402 + $0x188] sm:$0xff] %v501
          %v503 = vld [vmem:[%s401 + $0x190] sm:$0xff]
          %504 = vst [vmem:[%s402 + $0x190] sm:$0xff] %v503
          %v505 = vld [vmem:[%s401 + $0x198] sm:$0xff]
          %506 = vst [vmem:[%s402 + $0x198] sm:$0xff] %v505
          %v507 = vld [vmem:[%s401 + $0x1a0] sm:$0xff]
          %508 = vst [vmem:[%s402 + $0x1a0] sm:$0xff] %v507
          %v509 = vld [vmem:[%s401 + $0x1a8] sm:$0xff]
          %510 = vst [vmem:[%s402 + $0x1a8] sm:$0xff] %v509
          %v511 = vld [vmem:[%s401 + $0x1b0] sm:$0xff]
          %512 = vst [vmem:[%s402 + $0x1b0] sm:$0xff] %v511
          %v513 = vld [vmem:[%s401 + $0x1b8] sm:$0xff]
          %514 = vst [vmem:[%s402 + $0x1b8] sm:$0xff] %v513
          %v515 = vld [vmem:[%s401 + $0x1c0] sm:$0xff]
          %516 = vst [vmem:[%s402 + $0x1c0] sm:$0xff] %v515
          %v517 = vld [vmem:[%s401 + $0x1c8] sm:$0xff]
          %518 = vst [vmem:[%s402 + $0x1c8] sm:$0xff] %v517
          %v519 = vld [vmem:[%s401 + $0x1d0] sm:$0xff]
          %520 = vst [vmem:[%s402 + $0x1d0] sm:$0xff] %v519
          %v521 = vld [vmem:[%s401 + $0x1d8] sm:$0xff]
          %522 = vst [vmem:[%s402 + $0x1d8] sm:$0xff] %v521
          %v523 = vld [vmem:[%s401 + $0x1e0] sm:$0xff]
          %524 = vst [vmem:[%s402 + $0x1e0] sm:$0xff] %v523
          %v525 = vld [vmem:[%s401 + $0x1e8] sm:$0xff]
          %526 = vst [vmem:[%s402 + $0x1e8] sm:$0xff] %v525
          %v527 = vld [vmem:[%s401 + $0x1f0] sm:$0xff]
          %528 = vst [vmem:[%s402 + $0x1f0] sm:$0xff] %v527
          %v529 = vld [vmem:[%s401 + $0x1f8] sm:$0xff]
          %530 = vst [vmem:[%s402 + $0x1f8] sm:$0xff] %v529
          %v531 = vld [vmem:[%s401 + $0x200] sm:$0xff]
          %532 = vst [vmem:[%s402 + $0x200] sm:$0xff] %v531
          %v533 = vld [vmem:[%s401 + $0x208] sm:$0xff]
          %534 = vst [vmem:[%s402 + $0x208] sm:$0xff] %v533
          %v535 = vld [vmem:[%s401 + $0x210] sm:$0xff]
          %536 = vst [vmem:[%s402 + $0x210] sm:$0xff] %v535
          %v537 = vld [vmem:[%s401 + $0x218] sm:$0xff]
          %538 = vst [vmem:[%s402 + $0x218] sm:$0xff] %v537
          %v539 = vld [vmem:[%s401 + $0x220] sm:$0xff]
          %540 = vst [vmem:[%s402 + $0x220] sm:$0xff] %v539
          %v541 = vld [vmem:[%s401 + $0x228] sm:$0xff]
          %542 = vst [vmem:[%s402 + $0x228] sm:$0xff] %v541
          %v543 = vld [vmem:[%s401 + $0x230] sm:$0xff]
          %544 = vst [vmem:[%s402 + $0x230] sm:$0xff] %v543
          %v545 = vld [vmem:[%s401 + $0x238] sm:$0xff]
          %546 = vst [vmem:[%s402 + $0x238] sm:$0xff] %v545
          %v547 = vld [vmem:[%s401 + $0x240] sm:$0xff]
          %548 = vst [vmem:[%s402 + $0x240] sm:$0xff] %v547
          %v549 = vld [vmem:[%s401 + $0x248] sm:$0xff]
          %550 = vst [vmem:[%s402 + $0x248] sm:$0xff] %v549
          %v551 = vld [vmem:[%s401 + $0x250] sm:$0xff]
          %552 = vst [vmem:[%s402 + $0x250] sm:$0xff] %v551
          %v553 = vld [vmem:[%s401 + $0x258] sm:$0xff]
          %554 = vst [vmem:[%s402 + $0x258] sm:$0xff] %v553
          %v555 = vld [vmem:[%s401 + $0x260] sm:$0xff]
          %556 = vst [vmem:[%s402 + $0x260] sm:$0xff] %v555
          %v557 = vld [vmem:[%s401 + $0x268] sm:$0xff]
          %558 = vst [vmem:[%s402 + $0x268] sm:$0xff] %v557
          %v559 = vld [vmem:[%s401 + $0x270] sm:$0xff]
          %560 = vst [vmem:[%s402 + $0x270] sm:$0xff] %v559
          %v561 = vld [vmem:[%s401 + $0x278] sm:$0xff]
          %562 = vst [vmem:[%s402 + $0x278] sm:$0xff] %v561
          %v563 = vld [vmem:[%s401 + $0x280] sm:$0xff]
          %564 = vst [vmem:[%s402 + $0x280] sm:$0xff] %v563
          %v565 = vld [vmem:[%s401 + $0x288] sm:$0xff]
          %566 = vst [vmem:[%s402 + $0x288] sm:$0xff] %v565
          %v567 = vld [vmem:[%s401 + $0x290] sm:$0xff]
          %568 = vst [vmem:[%s402 + $0x290] sm:$0xff] %v567
          %v569 = vld [vmem:[%s401 + $0x298] sm:$0xff]
          %570 = vst [vmem:[%s402 + $0x298] sm:$0xff] %v569
          %v571 = vld [vmem:[%s401 + $0x2a0] sm:$0xff]
          %572 = vst [vmem:[%s402 + $0x2a0] sm:$0xff] %v571
          %v573 = vld [vmem:[%s401 + $0x2a8] sm:$0xff]
          %574 = vst [vmem:[%s402 + $0x2a8] sm:$0xff] %v573
          %v575 = vld [vmem:[%s401 + $0x2b0] sm:$0xff]
          %576 = vst [vmem:[%s402 + $0x2b0] sm:$0xff] %v575
          %v577 = vld [vmem:[%s401 + $0x2b8] sm:$0xff]
          %578 = vst [vmem:[%s402 + $0x2b8] sm:$0xff] %v577
          %v579 = vld [vmem:[%s401 + $0x2c0] sm:$0xff]
          %580 = vst [vmem:[%s402 + $0x2c0] sm:$0xff] %v579
          %v581 = vld [vmem:[%s401 + $0x2c8] sm:$0xff]
          %582 = vst [vmem:[%s402 + $0x2c8] sm:$0xff] %v581
          %v583 = vld [vmem:[%s401 + $0x2d0] sm:$0xff]
          %584 = vst [vmem:[%s402 + $0x2d0] sm:$0xff] %v583
          %v585 = vld [vmem:[%s401 + $0x2d8] sm:$0xff]
          %586 = vst [vmem:[%s402 + $0x2d8] sm:$0xff] %v585
          %v587 = vld [vmem:[%s401 + $0x2e0] sm:$0xff]
          %588 = vst [vmem:[%s402 + $0x2e0] sm:$0xff] %v587
          %v589 = vld [vmem:[%s401 + $0x2e8] sm:$0xff]
          %590 = vst [vmem:[%s402 + $0x2e8] sm:$0xff] %v589
          %v591 = vld [vmem:[%s401 + $0x2f0] sm:$0xff]
          %592 = vst [vmem:[%s402 + $0x2f0] sm:$0xff] %v591
          %v593 = vld [vmem:[%s401 + $0x2f8] sm:$0xff]
          %594 = vst [vmem:[%s402 + $0x2f8] sm:$0xff] %v593
          %v595 = vld [vmem:[%s401 + $0x300] sm:$0xff]
          %596 = vst [vmem:[%s402 + $0x300] sm:$0xff] %v595
          %v597 = vld [vmem:[%s401 + $0x308] sm:$0xff]
          %598 = vst [vmem:[%s402 + $0x308] sm:$0xff] %v597
          %v599 = vld [vmem:[%s401 + $0x310] sm:$0xff]
          %600 = vst [vmem:[%s402 + $0x310] sm:$0xff] %v599
          %v601 = vld [vmem:[%s401 + $0x318] sm:$0xff]
          %602 = vst [vmem:[%s402 + $0x318] sm:$0xff] %v601
          %v603 = vld [vmem:[%s401 + $0x320] sm:$0xff]
          %604 = vst [vmem:[%s402 + $0x320] sm:$0xff] %v603
          %v605 = vld [vmem:[%s401 + $0x328] sm:$0xff]
          %606 = vst [vmem:[%s402 + $0x328] sm:$0xff] %v605
          %v607 = vld [vmem:[%s401 + $0x330] sm:$0xff]
          %608 = vst [vmem:[%s402 + $0x330] sm:$0xff] %v607
          %v609 = vld [vmem:[%s401 + $0x338] sm:$0xff]
          %610 = vst [vmem:[%s402 + $0x338] sm:$0xff] %v609
          %v611 = vld [vmem:[%s401 + $0x340] sm:$0xff]
          %612 = vst [vmem:[%s402 + $0x340] sm:$0xff] %v611
          %v613 = vld [vmem:[%s401 + $0x348] sm:$0xff]
          %614 = vst [vmem:[%s402 + $0x348] sm:$0xff] %v613
          %v615 = vld [vmem:[%s401 + $0x350] sm:$0xff]
          %616 = vst [vmem:[%s402 + $0x350] sm:$0xff] %v615
          %v617 = vld [vmem:[%s401 + $0x358] sm:$0xff]
          %618 = vst [vmem:[%s402 + $0x358] sm:$0xff] %v617
          %v619 = vld [vmem:[%s401 + $0x360] sm:$0xff]
          %620 = vst [vmem:[%s402 + $0x360] sm:$0xff] %v619
          %v621 = vld [vmem:[%s401 + $0x368] sm:$0xff]
          %622 = vst [vmem:[%s402 + $0x368] sm:$0xff] %v621
          %v623 = vld [vmem:[%s401 + $0x370] sm:$0xff]
          %624 = vst [vmem:[%s402 + $0x370] sm:$0xff] %v623
          %v625 = vld [vmem:[%s401 + $0x378] sm:$0xff]
          %626 = vst [vmem:[%s402 + $0x378] sm:$0xff] %v625
          %v627 = vld [vmem:[%s401 + $0x380] sm:$0xff]
          %628 = vst [vmem:[%s402 + $0x380] sm:$0xff] %v627
          %v629 = vld [vmem:[%s401 + $0x388] sm:$0xff]
          %630 = vst [vmem:[%s402 + $0x388] sm:$0xff] %v629
          %v631 = vld [vmem:[%s401 + $0x390] sm:$0xff]
          %632 = vst [vmem:[%s402 + $0x390] sm:$0xff] %v631
          %v633 = vld [vmem:[%s401 + $0x398] sm:$0xff]
          %634 = vst [vmem:[%s402 + $0x398] sm:$0xff] %v633
          %v635 = vld [vmem:[%s401 + $0x3a0] sm:$0xff]
          %636 = vst [vmem:[%s402 + $0x3a0] sm:$0xff] %v635
          %v637 = vld [vmem:[%s401 + $0x3a8] sm:$0xff]
          %638 = vst [vmem:[%s402 + $0x3a8] sm:$0xff] %v637
          %v639 = vld [vmem:[%s401 + $0x3b0] sm:$0xff]
          %640 = vst [vmem:[%s402 + $0x3b0] sm:$0xff] %v639
          %v641 = vld [vmem:[%s401 + $0x3b8] sm:$0xff]
          %642 = vst [vmem:[%s402 + $0x3b8] sm:$0xff] %v641
          %v643 = vld [vmem:[%s401 + $0x3c0] sm:$0xff]
          %644 = vst [vmem:[%s402 + $0x3c0] sm:$0xff] %v643
          %v645 = vld [vmem:[%s401 + $0x3c8] sm:$0xff]
          %646 = vst [vmem:[%s402 + $0x3c8] sm:$0xff] %v645
          %v647 = vld [vmem:[%s401 + $0x3d0] sm:$0xff]
          %648 = vst [vmem:[%s402 + $0x3d0] sm:$0xff] %v647
          %v649 = vld [vmem:[%s401 + $0x3d8] sm:$0xff]
          %650 = vst [vmem:[%s402 + $0x3d8] sm:$0xff] %v649
          %v651 = vld [vmem:[%s401 + $0x3e0] sm:$0xff]
          %652 = vst [vmem:[%s402 + $0x3e0] sm:$0xff] %v651
          %v653 = vld [vmem:[%s401 + $0x3e8] sm:$0xff]
          %654 = vst [vmem:[%s402 + $0x3e8] sm:$0xff] %v653
          %v655 = vld [vmem:[%s401 + $0x3f0] sm:$0xff]
          %656 = vst [vmem:[%s402 + $0x3f0] sm:$0xff] %v655
          %v657 = vld [vmem:[%s401 + $0x3f8] sm:$0xff]
          %658 = vst [vmem:[%s402 + $0x3f8] sm:$0xff] %v657
          %v659 = vld [vmem:[%s401 + $0x400] sm:$0xff]
          %660 = vst [vmem:[%s402 + $0x400] sm:$0xff] %v659
          %v661 = vld [vmem:[%s401 + $0x408] sm:$0xff]
          %662 = vst [vmem:[%s402 + $0x408] sm:$0xff] %v661
          %v663 = vld [vmem:[%s401 + $0x410] sm:$0xff]
          %664 = vst [vmem:[%s402 + $0x410] sm:$0xff] %v663
          %v665 = vld [vmem:[%s401 + $0x418] sm:$0xff]
          %666 = vst [vmem:[%s402 + $0x418] sm:$0xff] %v665
          %v667 = vld [vmem:[%s401 + $0x420] sm:$0xff]
          %668 = vst [vmem:[%s402 + $0x420] sm:$0xff] %v667
          %v669 = vld [vmem:[%s401 + $0x428] sm:$0xff]
          %670 = vst [vmem:[%s402 + $0x428] sm:$0xff] %v669
          %v671 = vld [vmem:[%s401 + $0x430] sm:$0xff]
          %672 = vst [vmem:[%s402 + $0x430] sm:$0xff] %v671
          %v673 = vld [vmem:[%s401 + $0x438] sm:$0xff]
          %674 = vst [vmem:[%s402 + $0x438] sm:$0xff] %v673
          %v675 = vld [vmem:[%s401 + $0x440] sm:$0xff]
          %676 = vst [vmem:[%s402 + $0x440] sm:$0xff] %v675
          %v677 = vld [vmem:[%s401 + $0x448] sm:$0xff]
          %678 = vst [vmem:[%s402 + $0x448] sm:$0xff] %v677
          %v679 = vld [vmem:[%s401 + $0x450] sm:$0xff]
          %680 = vst [vmem:[%s402 + $0x450] sm:$0xff] %v679
          %v681 = vld [vmem:[%s401 + $0x458] sm:$0xff]
          %682 = vst [vmem:[%s402 + $0x458] sm:$0xff] %v681
          %v683 = vld [vmem:[%s401 + $0x460] sm:$0xff]
          %684 = vst [vmem:[%s402 + $0x460] sm:$0xff] %v683
          %v685 = vld [vmem:[%s401 + $0x468] sm:$0xff]
          %686 = vst [vmem:[%s402 + $0x468] sm:$0xff] %v685
          %v687 = vld [vmem:[%s401 + $0x470] sm:$0xff]
          %688 = vst [vmem:[%s402 + $0x470] sm:$0xff] %v687
          %v689 = vld [vmem:[%s401 + $0x478] sm:$0xff]
          %690 = vst [vmem:[%s402 + $0x478] sm:$0xff] %v689
          %v691 = vld [vmem:[%s401 + $0x480] sm:$0xff]
          %692 = vst [vmem:[%s402 + $0x480] sm:$0xff] %v691
          %v693 = vld [vmem:[%s401 + $0x488] sm:$0xff]
          %694 = vst [vmem:[%s402 + $0x488] sm:$0xff] %v693
          %v695 = vld [vmem:[%s401 + $0x490] sm:$0xff]
          %696 = vst [vmem:[%s402 + $0x490] sm:$0xff] %v695
          %v697 = vld [vmem:[%s401 + $0x498] sm:$0xff]
          %698 = vst [vmem:[%s402 + $0x498] sm:$0xff] %v697
          %v699 = vld [vmem:[%s401 + $0x4a0] sm:$0xff]
          %700 = vst [vmem:[%s402 + $0x4a0] sm:$0xff] %v699
          %v701 = vld [vmem:[%s401 + $0x4a8] sm:$0xff]
          %702 = vst [vmem:[%s402 + $0x4a8] sm:$0xff] %v701
          %v703 = vld [vmem:[%s401 + $0x4b0] sm:$0xff]
          %704 = vst [vmem:[%s402 + $0x4b0] sm:$0xff] %v703
          %v705 = vld [vmem:[%s401 + $0x4b8] sm:$0xff]
          %706 = vst [vmem:[%s402 + $0x4b8] sm:$0xff] %v705
          %v707 = vld [vmem:[%s401 + $0x4c0] sm:$0xff]
          %708 = vst [vmem:[%s402 + $0x4c0] sm:$0xff] %v707
          %v709 = vld [vmem:[%s401 + $0x4c8] sm:$0xff]
          %710 = vst [vmem:[%s402 + $0x4c8] sm:$0xff] %v709
          %v711 = vld [vmem:[%s401 + $0x4d0] sm:$0xff]
          %712 = vst [vmem:[%s402 + $0x4d0] sm:$0xff] %v711
          %v713 = vld [vmem:[%s401 + $0x4d8] sm:$0xff]
          %714 = vst [vmem:[%s402 + $0x4d8] sm:$0xff] %v713
          %v715 = vld [vmem:[%s401 + $0x4e0] sm:$0xff]
          %716 = vst [vmem:[%s402 + $0x4e0] sm:$0xff] %v715
          %v717 = vld [vmem:[%s401 + $0x4e8] sm:$0xff]
          %718 = vst [vmem:[%s402 + $0x4e8] sm:$0xff] %v717
          %v719 = vld [vmem:[%s401 + $0x4f0] sm:$0xff]
          %720 = vst [vmem:[%s402 + $0x4f0] sm:$0xff] %v719
          %v721 = vld [vmem:[%s401 + $0x4f8] sm:$0xff]
          %722 = vst [vmem:[%s402 + $0x4f8] sm:$0xff] %v721
          %v723 = vld [vmem:[%s401 + $0x500] sm:$0xff]
          %724 = vst [vmem:[%s402 + $0x500] sm:$0xff] %v723
          %v725 = vld [vmem:[%s401 + $0x508] sm:$0xff]
          %726 = vst [vmem:[%s402 + $0x508] sm:$0xff] %v725
          %v727 = vld [vmem:[%s401 + $0x510] sm:$0xff]
          %728 = vst [vmem:[%s402 + $0x510] sm:$0xff] %v727
          %v729 = vld [vmem:[%s401 + $0x518] sm:$0xff]
          %730 = vst [vmem:[%s402 + $0x518] sm:$0xff] %v729
          %v731 = vld [vmem:[%s401 + $0x520] sm:$0xff]
          %732 = vst [vmem:[%s402 + $0x520] sm:$0xff] %v731
          %v733 = vld [vmem:[%s401 + $0x528] sm:$0xff]
          %734 = vst [vmem:[%s402 + $0x528] sm:$0xff] %v733
          %v735 = vld [vmem:[%s401 + $0x530] sm:$0xff]
          %736 = vst [vmem:[%s402 + $0x530] sm:$0xff] %v735
          %v737 = vld [vmem:[%s401 + $0x538] sm:$0xff]
          %738 = vst [vmem:[%s402 + $0x538] sm:$0xff] %v737
          %v739 = vld [vmem:[%s401 + $0x540] sm:$0xff]
          %740 = vst [vmem:[%s402 + $0x540] sm:$0xff] %v739
          %v741 = vld [vmem:[%s401 + $0x548] sm:$0xff]
          %742 = vst [vmem:[%s402 + $0x548] sm:$0xff] %v741
          %v743 = vld [vmem:[%s401 + $0x550] sm:$0xff]
          %744 = vst [vmem:[%s402 + $0x550] sm:$0xff] %v743
          %v745 = vld [vmem:[%s401 + $0x558] sm:$0xff]
          %746 = vst [vmem:[%s402 + $0x558] sm:$0xff] %v745
          %v747 = vld [vmem:[%s401 + $0x560] sm:$0xff]
          %748 = vst [vmem:[%s402 + $0x560] sm:$0xff] %v747
          %v749 = vld [vmem:[%s401 + $0x568] sm:$0xff]
          %750 = vst [vmem:[%s402 + $0x568] sm:$0xff] %v749
          %v751 = vld [vmem:[%s401 + $0x570] sm:$0xff]
          %752 = vst [vmem:[%s402 + $0x570] sm:$0xff] %v751
          %v753 = vld [vmem:[%s401 + $0x578] sm:$0xff]
          %754 = vst [vmem:[%s402 + $0x578] sm:$0xff] %v753
          %v755 = vld [vmem:[%s401 + $0x580] sm:$0xff]
          %756 = vst [vmem:[%s402 + $0x580] sm:$0xff] %v755
          %v757 = vld [vmem:[%s401 + $0x588] sm:$0xff]
          %758 = vst [vmem:[%s402 + $0x588] sm:$0xff] %v757
          %v759 = vld [vmem:[%s401 + $0x590] sm:$0xff]
          %760 = vst [vmem:[%s402 + $0x590] sm:$0xff] %v759
          %v761 = vld [vmem:[%s401 + $0x598] sm:$0xff]
          %762 = vst [vmem:[%s402 + $0x598] sm:$0xff] %v761
          %v763 = vld [vmem:[%s401 + $0x5a0] sm:$0xff]
          %764 = vst [vmem:[%s402 + $0x5a0] sm:$0xff] %v763
          %v765 = vld [vmem:[%s401 + $0x5a8] sm:$0xff]
          %766 = vst [vmem:[%s402 + $0x5a8] sm:$0xff] %v765
          %v767 = vld [vmem:[%s401 + $0x5b0] sm:$0xff]
          %768 = vst [vmem:[%s402 + $0x5b0] sm:$0xff] %v767
          %v769 = vld [vmem:[%s401 + $0x5b8] sm:$0xff]
          %770 = vst [vmem:[%s402 + $0x5b8] sm:$0xff] %v769
          %v771 = vld [vmem:[%s401 + $0x5c0] sm:$0xff]
          %772 = vst [vmem:[%s402 + $0x5c0] sm:$0xff] %v771
          %v773 = vld [vmem:[%s401 + $0x5c8] sm:$0xff]
          %774 = vst [vmem:[%s402 + $0x5c8] sm:$0xff] %v773
          %v775 = vld [vmem:[%s401 + $0x5d0] sm:$0xff]
          %776 = vst [vmem:[%s402 + $0x5d0] sm:$0xff] %v775
          %v777 = vld [vmem:[%s401 + $0x5d8] sm:$0xff]
          %778 = vst [vmem:[%s402 + $0x5d8] sm:$0xff] %v777
          %v779 = vld [vmem:[%s401 + $0x5e0] sm:$0xff]
          %780 = vst [vmem:[%s402 + $0x5e0] sm:$0xff] %v779
          %v781 = vld [vmem:[%s401 + $0x5e8] sm:$0xff]
          %782 = vst [vmem:[%s402 + $0x5e8] sm:$0xff] %v781
          %v783 = vld [vmem:[%s401 + $0x5f0] sm:$0xff]
          %784 = vst [vmem:[%s402 + $0x5f0] sm:$0xff] %v783
          %v785 = vld [vmem:[%s401 + $0x5f8] sm:$0xff]
          %786 = vst [vmem:[%s402 + $0x5f8] sm:$0xff] %v785
          %v787 = vld [vmem:[%s401 + $0x600] sm:$0xff]
          %788 = vst [vmem:[%s402 + $0x600] sm:$0xff] %v787
          %v789 = vld [vmem:[%s401 + $0x608] sm:$0xff]
          %790 = vst [vmem:[%s402 + $0x608] sm:$0xff] %v789
          %v791 = vld [vmem:[%s401 + $0x610] sm:$0xff]
          %792 = vst [vmem:[%s402 + $0x610] sm:$0xff] %v791
          %v793 = vld [vmem:[%s401 + $0x618] sm:$0xff]
          %794 = vst [vmem:[%s402 + $0x618] sm:$0xff] %v793
          %v795 = vld [vmem:[%s401 + $0x620] sm:$0xff]
          %796 = vst [vmem:[%s402 + $0x620] sm:$0xff] %v795
          %v797 = vld [vmem:[%s401 + $0x628] sm:$0xff]
          %798 = vst [vmem:[%s402 + $0x628] sm:$0xff] %v797
          %v799 = vld [vmem:[%s401 + $0x630] sm:$0xff]
          %800 = vst [vmem:[%s402 + $0x630] sm:$0xff] %v799
          %v801 = vld [vmem:[%s401 + $0x638] sm:$0xff]
          %802 = vst [vmem:[%s402 + $0x638] sm:$0xff] %v801
          %v803 = vld [vmem:[%s401 + $0x640] sm:$0xff]
          %804 = vst [vmem:[%s402 + $0x640] sm:$0xff] %v803
          %v805 = vld [vmem:[%s401 + $0x648] sm:$0xff]
          %806 = vst [vmem:[%s402 + $0x648] sm:$0xff] %v805
          %v807 = vld [vmem:[%s401 + $0x650] sm:$0xff]
          %808 = vst [vmem:[%s402 + $0x650] sm:$0xff] %v807
          %v809 = vld [vmem:[%s401 + $0x658] sm:$0xff]
          %810 = vst [vmem:[%s402 + $0x658] sm:$0xff] %v809
          %v811 = vld [vmem:[%s401 + $0x660] sm:$0xff]
          %812 = vst [vmem:[%s402 + $0x660] sm:$0xff] %v811
          %v813 = vld [vmem:[%s401 + $0x668] sm:$0xff]
          %814 = vst [vmem:[%s402 + $0x668] sm:$0xff] %v813
          %v815 = vld [vmem:[%s401 + $0x670] sm:$0xff]
          %816 = vst [vmem:[%s402 + $0x670] sm:$0xff] %v815
          %v817 = vld [vmem:[%s401 + $0x678] sm:$0xff]
          %818 = vst [vmem:[%s402 + $0x678] sm:$0xff] %v817
          %v819 = vld [vmem:[%s401 + $0x680] sm:$0xff]
          %820 = vst [vmem:[%s402 + $0x680] sm:$0xff] %v819
          %v821 = vld [vmem:[%s401 + $0x688] sm:$0xff]
          %822 = vst [vmem:[%s402 + $0x688] sm:$0xff] %v821
          %v823 = vld [vmem:[%s401 + $0x690] sm:$0xff]
          %824 = vst [vmem:[%s402 + $0x690] sm:$0xff] %v823
          %v825 = vld [vmem:[%s401 + $0x698] sm:$0xff]
          %826 = vst [vmem:[%s402 + $0x698] sm:$0xff] %v825
          %v827 = vld [vmem:[%s401 + $0x6a0] sm:$0xff]
          %828 = vst [vmem:[%s402 + $0x6a0] sm:$0xff] %v827
          %v829 = vld [vmem:[%s401 + $0x6a8] sm:$0xff]
          %830 = vst [vmem:[%s402 + $0x6a8] sm:$0xff] %v829
          %v831 = vld [vmem:[%s401 + $0x6b0] sm:$0xff]
          %832 = vst [vmem:[%s402 + $0x6b0] sm:$0xff] %v831
          %v833 = vld [vmem:[%s401 + $0x6b8] sm:$0xff]
          %834 = vst [vmem:[%s402 + $0x6b8] sm:$0xff] %v833
          %v835 = vld [vmem:[%s401 + $0x6c0] sm:$0xff]
          %836 = vst [vmem:[%s402 + $0x6c0] sm:$0xff] %v835
          %v837 = vld [vmem:[%s401 + $0x6c8] sm:$0xff]
          %838 = vst [vmem:[%s402 + $0x6c8] sm:$0xff] %v837
          %v839 = vld [vmem:[%s401 + $0x6d0] sm:$0xff]
          %840 = vst [vmem:[%s402 + $0x6d0] sm:$0xff] %v839
          %v841 = vld [vmem:[%s401 + $0x6d8] sm:$0xff]
          %842 = vst [vmem:[%s402 + $0x6d8] sm:$0xff] %v841
          %v843 = vld [vmem:[%s401 + $0x6e0] sm:$0xff]
          %844 = vst [vmem:[%s402 + $0x6e0] sm:$0xff] %v843
          %v845 = vld [vmem:[%s401 + $0x6e8] sm:$0xff]
          %846 = vst [vmem:[%s402 + $0x6e8] sm:$0xff] %v845
          %v847 = vld [vmem:[%s401 + $0x6f0] sm:$0xff]
          %848 = vst [vmem:[%s402 + $0x6f0] sm:$0xff] %v847
          %v849 = vld [vmem:[%s401 + $0x6f8] sm:$0xff]
          %850 = vst [vmem:[%s402 + $0x6f8] sm:$0xff] %v849
          %v851 = vld [vmem:[%s401 + $0x700] sm:$0xff]
          %852 = vst [vmem:[%s402 + $0x700] sm:$0xff] %v851
          %v853 = vld [vmem:[%s401 + $0x708] sm:$0xff]
          %854 = vst [vmem:[%s402 + $0x708] sm:$0xff] %v853
          %v855 = vld [vmem:[%s401 + $0x710] sm:$0xff]
          %856 = vst [vmem:[%s402 + $0x710] sm:$0xff] %v855
          %v857 = vld [vmem:[%s401 + $0x718] sm:$0xff]
          %858 = vst [vmem:[%s402 + $0x718] sm:$0xff] %v857
          %v859 = vld [vmem:[%s401 + $0x720] sm:$0xff]
          %860 = vst [vmem:[%s402 + $0x720] sm:$0xff] %v859
          %v861 = vld [vmem:[%s401 + $0x728] sm:$0xff]
          %862 = vst [vmem:[%s402 + $0x728] sm:$0xff] %v861
          %v863 = vld [vmem:[%s401 + $0x730] sm:$0xff]
          %864 = vst [vmem:[%s402 + $0x730] sm:$0xff] %v863
          %v865 = vld [vmem:[%s401 + $0x738] sm:$0xff]
          %866 = vst [vmem:[%s402 + $0x738] sm:$0xff] %v865
          %v867 = vld [vmem:[%s401 + $0x740] sm:$0xff]
          %868 = vst [vmem:[%s402 + $0x740] sm:$0xff] %v867
          %v869 = vld [vmem:[%s401 + $0x748] sm:$0xff]
          %870 = vst [vmem:[%s402 + $0x748] sm:$0xff] %v869
          %v871 = vld [vmem:[%s401 + $0x750] sm:$0xff]
          %872 = vst [vmem:[%s402 + $0x750] sm:$0xff] %v871
          %v873 = vld [vmem:[%s401 + $0x758] sm:$0xff]
          %874 = vst [vmem:[%s402 + $0x758] sm:$0xff] %v873
          %v875 = vld [vmem:[%s401 + $0x760] sm:$0xff]
          %876 = vst [vmem:[%s402 + $0x760] sm:$0xff] %v875
          %v877 = vld [vmem:[%s401 + $0x768] sm:$0xff]
          %878 = vst [vmem:[%s402 + $0x768] sm:$0xff] %v877
          %v879 = vld [vmem:[%s401 + $0x770] sm:$0xff]
          %880 = vst [vmem:[%s402 + $0x770] sm:$0xff] %v879
          %v881 = vld [vmem:[%s401 + $0x778] sm:$0xff]
          %882 = vst [vmem:[%s402 + $0x778] sm:$0xff] %v881
          %v883 = vld [vmem:[%s401 + $0x780] sm:$0xff]
          %884 = vst [vmem:[%s402 + $0x780] sm:$0xff] %v883
          %v885 = vld [vmem:[%s401 + $0x788] sm:$0xff]
          %886 = vst [vmem:[%s402 + $0x788] sm:$0xff] %v885
          %v887 = vld [vmem:[%s401 + $0x790] sm:$0xff]
          %888 = vst [vmem:[%s402 + $0x790] sm:$0xff] %v887
          %v889 = vld [vmem:[%s401 + $0x798] sm:$0xff]
          %890 = vst [vmem:[%s402 + $0x798] sm:$0xff] %v889
          %v891 = vld [vmem:[%s401 + $0x7a0] sm:$0xff]
          %892 = vst [vmem:[%s402 + $0x7a0] sm:$0xff] %v891
          %v893 = vld [vmem:[%s401 + $0x7a8] sm:$0xff]
          %894 = vst [vmem:[%s402 + $0x7a8] sm:$0xff] %v893
          %v895 = vld [vmem:[%s401 + $0x7b0] sm:$0xff]
          %896 = vst [vmem:[%s402 + $0x7b0] sm:$0xff] %v895
          %v897 = vld [vmem:[%s401 + $0x7b8] sm:$0xff]
          %898 = vst [vmem:[%s402 + $0x7b8] sm:$0xff] %v897
          %v899 = vld [vmem:[%s401 + $0x7c0] sm:$0xff]
          %900 = vst [vmem:[%s402 + $0x7c0] sm:$0xff] %v899
          %v901 = vld [vmem:[%s401 + $0x7c8] sm:$0xff]
          %902 = vst [vmem:[%s402 + $0x7c8] sm:$0xff] %v901
          %v903 = vld [vmem:[%s401 + $0x7d0] sm:$0xff]
          %904 = vst [vmem:[%s402 + $0x7d0] sm:$0xff] %v903
          %v905 = vld [vmem:[%s401 + $0x7d8] sm:$0xff]
          %906 = vst [vmem:[%s402 + $0x7d8] sm:$0xff] %v905
          %v907 = vld [vmem:[%s401 + $0x7e0] sm:$0xff]
          %908 = vst [vmem:[%s402 + $0x7e0] sm:$0xff] %v907
          %v909 = vld [vmem:[%s401 + $0x7e8] sm:$0xff]
          %910 = vst [vmem:[%s402 + $0x7e8] sm:$0xff] %v909
          %v911 = vld [vmem:[%s401 + $0x7f0] sm:$0xff]
          %912 = vst [vmem:[%s402 + $0x7f0] sm:$0xff] %v911
          %v913 = vld [vmem:[%s401 + $0x7f8] sm:$0xff]
          %914 = vst [vmem:[%s402 + $0x7f8] sm:$0xff] %v913
          %v915 = vld [vmem:[%s401 + $0x800] sm:$0xff]
          %916 = vst [vmem:[%s402 + $0x800] sm:$0xff] %v915
          %v917 = vld [vmem:[%s401 + $0x808] sm:$0xff]
          %918 = vst [vmem:[%s402 + $0x808] sm:$0xff] %v917
          %v919 = vld [vmem:[%s401 + $0x810] sm:$0xff]
          %920 = vst [vmem:[%s402 + $0x810] sm:$0xff] %v919
          %v921 = vld [vmem:[%s401 + $0x818] sm:$0xff]
          %922 = vst [vmem:[%s402 + $0x818] sm:$0xff] %v921
          %v923 = vld [vmem:[%s401 + $0x820] sm:$0xff]
          %924 = vst [vmem:[%s402 + $0x820] sm:$0xff] %v923
          %v925 = vld [vmem:[%s401 + $0x828] sm:$0xff]
          %926 = vst [vmem:[%s402 + $0x828] sm:$0xff] %v925
          %v927 = vld [vmem:[%s401 + $0x830] sm:$0xff]
          %928 = vst [vmem:[%s402 + $0x830] sm:$0xff] %v927
          %v929 = vld [vmem:[%s401 + $0x838] sm:$0xff]
          %930 = vst [vmem:[%s402 + $0x838] sm:$0xff] %v929
          %v931 = vld [vmem:[%s401 + $0x840] sm:$0xff]
          %932 = vst [vmem:[%s402 + $0x840] sm:$0xff] %v931
          %v933 = vld [vmem:[%s401 + $0x848] sm:$0xff]
          %934 = vst [vmem:[%s402 + $0x848] sm:$0xff] %v933
          %v935 = vld [vmem:[%s401 + $0x850] sm:$0xff]
          %936 = vst [vmem:[%s402 + $0x850] sm:$0xff] %v935
          %v937 = vld [vmem:[%s401 + $0x858] sm:$0xff]
          %938 = vst [vmem:[%s402 + $0x858] sm:$0xff] %v937
          %v939 = vld [vmem:[%s401 + $0x860] sm:$0xff]
          %940 = vst [vmem:[%s402 + $0x860] sm:$0xff] %v939
          %v941 = vld [vmem:[%s401 + $0x868] sm:$0xff]
          %942 = vst [vmem:[%s402 + $0x868] sm:$0xff] %v941
          %v943 = vld [vmem:[%s401 + $0x870] sm:$0xff]
          %944 = vst [vmem:[%s402 + $0x870] sm:$0xff] %v943
          %v945 = vld [vmem:[%s401 + $0x878] sm:$0xff]
          %946 = vst [vmem:[%s402 + $0x878] sm:$0xff] %v945
          %v947 = vld [vmem:[%s401 + $0x880] sm:$0xff]
          %948 = vst [vmem:[%s402 + $0x880] sm:$0xff] %v947
          %v949 = vld [vmem:[%s401 + $0x888] sm:$0xff]
          %950 = vst [vmem:[%s402 + $0x888] sm:$0xff] %v949
          %v951 = vld [vmem:[%s401 + $0x890] sm:$0xff]
          %952 = vst [vmem:[%s402 + $0x890] sm:$0xff] %v951
          %v953 = vld [vmem:[%s401 + $0x898] sm:$0xff]
          %954 = vst [vmem:[%s402 + $0x898] sm:$0xff] %v953
          %v955 = vld [vmem:[%s401 + $0x8a0] sm:$0xff]
          %956 = vst [vmem:[%s402 + $0x8a0] sm:$0xff] %v955
          %v957 = vld [vmem:[%s401 + $0x8a8] sm:$0xff]
          %958 = vst [vmem:[%s402 + $0x8a8] sm:$0xff] %v957
          %v959 = vld [vmem:[%s401 + $0x8b0] sm:$0xff]
          %960 = vst [vmem:[%s402 + $0x8b0] sm:$0xff] %v959
          %v961 = vld [vmem:[%s401 + $0x8b8] sm:$0xff]
          %962 = vst [vmem:[%s402 + $0x8b8] sm:$0xff] %v961
          %v963 = vld [vmem:[%s401 + $0x8c0] sm:$0xff]
          %964 = vst [vmem:[%s402 + $0x8c0] sm:$0xff] %v963
          %v965 = vld [vmem:[%s401 + $0x8c8] sm:$0xff]
          %966 = vst [vmem:[%s402 + $0x8c8] sm:$0xff] %v965
          %v967 = vld [vmem:[%s401 + $0x8d0] sm:$0xff]
          %968 = vst [vmem:[%s402 + $0x8d0] sm:$0xff] %v967
          %v969 = vld [vmem:[%s401 + $0x8d8] sm:$0xff]
          %970 = vst [vmem:[%s402 + $0x8d8] sm:$0xff] %v969
          %v971 = vld [vmem:[%s401 + $0x8e0] sm:$0xff]
          %972 = vst [vmem:[%s402 + $0x8e0] sm:$0xff] %v971
          %v973 = vld [vmem:[%s401 + $0x8e8] sm:$0xff]
          %974 = vst [vmem:[%s402 + $0x8e8] sm:$0xff] %v973
          %v975 = vld [vmem:[%s401 + $0x8f0] sm:$0xff]
          %976 = vst [vmem:[%s402 + $0x8f0] sm:$0xff] %v975
          %v977 = vld [vmem:[%s401 + $0x8f8] sm:$0xff]
          %978 = vst [vmem:[%s402 + $0x8f8] sm:$0xff] %v977
          %v979 = vld [vmem:[%s401 + $0x900] sm:$0xff]
          %980 = vst [vmem:[%s402 + $0x900] sm:$0xff] %v979
          %v981 = vld [vmem:[%s401 + $0x908] sm:$0xff]
          %982 = vst [vmem:[%s402 + $0x908] sm:$0xff] %v981
          %v983 = vld [vmem:[%s401 + $0x910] sm:$0xff]
          %984 = vst [vmem:[%s402 + $0x910] sm:$0xff] %v983
          %v985 = vld [vmem:[%s401 + $0x918] sm:$0xff]
          %986 = vst [vmem:[%s402 + $0x918] sm:$0xff] %v985
          %v987 = vld [vmem:[%s401 + $0x920] sm:$0xff]
          %988 = vst [vmem:[%s402 + $0x920] sm:$0xff] %v987
          %v989 = vld [vmem:[%s401 + $0x928] sm:$0xff]
          %990 = vst [vmem:[%s402 + $0x928] sm:$0xff] %v989
          %v991 = vld [vmem:[%s401 + $0x930] sm:$0xff]
          %992 = vst [vmem:[%s402 + $0x930] sm:$0xff] %v991
          %v993 = vld [vmem:[%s401 + $0x938] sm:$0xff]
          %994 = vst [vmem:[%s402 + $0x938] sm:$0xff] %v993
          %v995 = vld [vmem:[%s401 + $0x940] sm:$0xff]
          %996 = vst [vmem:[%s402 + $0x940] sm:$0xff] %v995
          %v997 = vld [vmem:[%s401 + $0x948] sm:$0xff]
          %998 = vst [vmem:[%s402 + $0x948] sm:$0xff] %v997
          %v999 = vld [vmem:[%s401 + $0x950] sm:$0xff]
          %1000 = vst [vmem:[%s402 + $0x950] sm:$0xff] %v999
          %v1001 = vld [vmem:[%s401 + $0x958] sm:$0xff]
          %1002 = vst [vmem:[%s402 + $0x958] sm:$0xff] %v1001
          %v1003 = vld [vmem:[%s401 + $0x960] sm:$0xff]
          %1004 = vst [vmem:[%s402 + $0x960] sm:$0xff] %v1003
          %v1005 = vld [vmem:[%s401 + $0x968] sm:$0xff]
          %1006 = vst [vmem:[%s402 + $0x968] sm:$0xff] %v1005
          %v1007 = vld [vmem:[%s401 + $0x970] sm:$0xff]
          %1008 = vst [vmem:[%s402 + $0x970] sm:$0xff] %v1007
          %v1009 = vld [vmem:[%s401 + $0x978] sm:$0xff]
          %1010 = vst [vmem:[%s402 + $0x978] sm:$0xff] %v1009
          %v1011 = vld [vmem:[%s401 + $0x980] sm:$0xff]
          %1012 = vst [vmem:[%s402 + $0x980] sm:$0xff] %v1011
          %v1013 = vld [vmem:[%s401 + $0x988] sm:$0xff]
          %1014 = vst [vmem:[%s402 + $0x988] sm:$0xff] %v1013
          %v1015 = vld [vmem:[%s401 + $0x990] sm:$0xff]
          %1016 = vst [vmem:[%s402 + $0x990] sm:$0xff] %v1015
          %v1017 = vld [vmem:[%s401 + $0x998] sm:$0xff]
          %1018 = vst [vmem:[%s402 + $0x998] sm:$0xff] %v1017
          %v1019 = vld [vmem:[%s401 + $0x9a0] sm:$0xff]
          %1020 = vst [vmem:[%s402 + $0x9a0] sm:$0xff] %v1019
          %v1021 = vld [vmem:[%s401 + $0x9a8] sm:$0xff]
          %1022 = vst [vmem:[%s402 + $0x9a8] sm:$0xff] %v1021
          %v1023 = vld [vmem:[%s401 + $0x9b0] sm:$0xff]
          %1024 = vst [vmem:[%s402 + $0x9b0] sm:$0xff] %v1023
          %v1025 = vld [vmem:[%s401 + $0x9b8] sm:$0xff]
          %1026 = vst [vmem:[%s402 + $0x9b8] sm:$0xff] %v1025
          %v1027 = vld [vmem:[%s401 + $0x9c0] sm:$0xff]
          %1028 = vst [vmem:[%s402 + $0x9c0] sm:$0xff] %v1027
          %v1029 = vld [vmem:[%s401 + $0x9c8] sm:$0xff]
          %1030 = vst [vmem:[%s402 + $0x9c8] sm:$0xff] %v1029
          %v1031 = vld [vmem:[%s401 + $0x9d0] sm:$0xff]
          %1032 = vst [vmem:[%s402 + $0x9d0] sm:$0xff] %v1031
          %v1033 = vld [vmem:[%s401 + $0x9d8] sm:$0xff]
          %1034 = vst [vmem:[%s402 + $0x9d8] sm:$0xff] %v1033
          %v1035 = vld [vmem:[%s401 + $0x9e0] sm:$0xff]
          %1036 = vst [vmem:[%s402 + $0x9e0] sm:$0xff] %v1035
          %v1037 = vld [vmem:[%s401 + $0x9e8] sm:$0xff]
          %1038 = vst [vmem:[%s402 + $0x9e8] sm:$0xff] %v1037
          %v1039 = vld [vmem:[%s401 + $0x9f0] sm:$0xff]
          %1040 = vst [vmem:[%s402 + $0x9f0] sm:$0xff] %v1039
          %v1041 = vld [vmem:[%s401 + $0x9f8] sm:$0xff]
          %1042 = vst [vmem:[%s402 + $0x9f8] sm:$0xff] %v1041
          %v1043 = vld [vmem:[%s401 + $0xa00] sm:$0xff]
          %1044 = vst [vmem:[%s402 + $0xa00] sm:$0xff] %v1043
          %v1045 = vld [vmem:[%s401 + $0xa08] sm:$0xff]
          %1046 = vst [vmem:[%s402 + $0xa08] sm:$0xff] %v1045
          %v1047 = vld [vmem:[%s401 + $0xa10] sm:$0xff]
          %1048 = vst [vmem:[%s402 + $0xa10] sm:$0xff] %v1047
          %v1049 = vld [vmem:[%s401 + $0xa18] sm:$0xff]
          %1050 = vst [vmem:[%s402 + $0xa18] sm:$0xff] %v1049
          %v1051 = vld [vmem:[%s401 + $0xa20] sm:$0xff]
          %1052 = vst [vmem:[%s402 + $0xa20] sm:$0xff] %v1051
          %v1053 = vld [vmem:[%s401 + $0xa28] sm:$0xff]
          %1054 = vst [vmem:[%s402 + $0xa28] sm:$0xff] %v1053
          %v1055 = vld [vmem:[%s401 + $0xa30] sm:$0xff]
          %1056 = vst [vmem:[%s402 + $0xa30] sm:$0xff] %v1055
          %v1057 = vld [vmem:[%s401 + $0xa38] sm:$0xff]
          %1058 = vst [vmem:[%s402 + $0xa38] sm:$0xff] %v1057
          %v1059 = vld [vmem:[%s401 + $0xa40] sm:$0xff]
          %1060 = vst [vmem:[%s402 + $0xa40] sm:$0xff] %v1059
          %v1061 = vld [vmem:[%s401 + $0xa48] sm:$0xff]
          %1062 = vst [vmem:[%s402 + $0xa48] sm:$0xff] %v1061
          %v1063 = vld [vmem:[%s401 + $0xa50] sm:$0xff]
          %1064 = vst [vmem:[%s402 + $0xa50] sm:$0xff] %v1063
          %v1065 = vld [vmem:[%s401 + $0xa58] sm:$0xff]
          %1066 = vst [vmem:[%s402 + $0xa58] sm:$0xff] %v1065
          %v1067 = vld [vmem:[%s401 + $0xa60] sm:$0xff]
          %1068 = vst [vmem:[%s402 + $0xa60] sm:$0xff] %v1067
          %v1069 = vld [vmem:[%s401 + $0xa68] sm:$0xff]
          %1070 = vst [vmem:[%s402 + $0xa68] sm:$0xff] %v1069
          %v1071 = vld [vmem:[%s401 + $0xa70] sm:$0xff]
          %1072 = vst [vmem:[%s402 + $0xa70] sm:$0xff] %v1071
          %v1073 = vld [vmem:[%s401 + $0xa78] sm:$0xff]
          %1074 = vst [vmem:[%s402 + $0xa78] sm:$0xff] %v1073
          %v1075 = vld [vmem:[%s401 + $0xa80] sm:$0xff]
          %1076 = vst [vmem:[%s402 + $0xa80] sm:$0xff] %v1075
          %v1077 = vld [vmem:[%s401 + $0xa88] sm:$0xff]
          %1078 = vst [vmem:[%s402 + $0xa88] sm:$0xff] %v1077
          %v1079 = vld [vmem:[%s401 + $0xa90] sm:$0xff]
          %1080 = vst [vmem:[%s402 + $0xa90] sm:$0xff] %v1079
          %v1081 = vld [vmem:[%s401 + $0xa98] sm:$0xff]
          %1082 = vst [vmem:[%s402 + $0xa98] sm:$0xff] %v1081
          %v1083 = vld [vmem:[%s401 + $0xaa0] sm:$0xff]
          %1084 = vst [vmem:[%s402 + $0xaa0] sm:$0xff] %v1083
          %v1085 = vld [vmem:[%s401 + $0xaa8] sm:$0xff]
          %1086 = vst [vmem:[%s402 + $0xaa8] sm:$0xff] %v1085
          %v1087 = vld [vmem:[%s401 + $0xab0] sm:$0xff]
          %1088 = vst [vmem:[%s402 + $0xab0] sm:$0xff] %v1087
          %v1089 = vld [vmem:[%s401 + $0xab8] sm:$0xff]
          %1090 = vst [vmem:[%s402 + $0xab8] sm:$0xff] %v1089
          %v1091 = vld [vmem:[%s401 + $0xac0] sm:$0xff]
          %1092 = vst [vmem:[%s402 + $0xac0] sm:$0xff] %v1091
          %v1093 = vld [vmem:[%s401 + $0xac8] sm:$0xff]
          %1094 = vst [vmem:[%s402 + $0xac8] sm:$0xff] %v1093
          %v1095 = vld [vmem:[%s401 + $0xad0] sm:$0xff]
          %1096 = vst [vmem:[%s402 + $0xad0] sm:$0xff] %v1095
          %v1097 = vld [vmem:[%s401 + $0xad8] sm:$0xff]
          %1098 = vst [vmem:[%s402 + $0xad8] sm:$0xff] %v1097
          %v1099 = vld [vmem:[%s401 + $0xae0] sm:$0xff]
          %1100 = vst [vmem:[%s402 + $0xae0] sm:$0xff] %v1099
          %v1101 = vld [vmem:[%s401 + $0xae8] sm:$0xff]
          %1102 = vst [vmem:[%s402 + $0xae8] sm:$0xff] %v1101
          %v1103 = vld [vmem:[%s401 + $0xaf0] sm:$0xff]
          %1104 = vst [vmem:[%s402 + $0xaf0] sm:$0xff] %v1103
          %v1105 = vld [vmem:[%s401 + $0xaf8] sm:$0xff]
          %1106 = vst [vmem:[%s402 + $0xaf8] sm:$0xff] %v1105
          %v1107 = vld [vmem:[%s401 + $0xb00] sm:$0xff]
          %1108 = vst [vmem:[%s402 + $0xb00] sm:$0xff] %v1107
          %v1109 = vld [vmem:[%s401 + $0xb08] sm:$0xff]
          %1110 = vst [vmem:[%s402 + $0xb08] sm:$0xff] %v1109
          %v1111 = vld [vmem:[%s401 + $0xb10] sm:$0xff]
          %1112 = vst [vmem:[%s402 + $0xb10] sm:$0xff] %v1111
          %v1113 = vld [vmem:[%s401 + $0xb18] sm:$0xff]
          %1114 = vst [vmem:[%s402 + $0xb18] sm:$0xff] %v1113
          %v1115 = vld [vmem:[%s401 + $0xb20] sm:$0xff]
          %1116 = vst [vmem:[%s402 + $0xb20] sm:$0xff] %v1115
          %v1117 = vld [vmem:[%s401 + $0xb28] sm:$0xff]
          %1118 = vst [vmem:[%s402 + $0xb28] sm:$0xff] %v1117
          %v1119 = vld [vmem:[%s401 + $0xb30] sm:$0xff]
          %1120 = vst [vmem:[%s402 + $0xb30] sm:$0xff] %v1119
          %v1121 = vld [vmem:[%s401 + $0xb38] sm:$0xff]
          %1122 = vst [vmem:[%s402 + $0xb38] sm:$0xff] %v1121
          %v1123 = vld [vmem:[%s401 + $0xb40] sm:$0xff]
          %1124 = vst [vmem:[%s402 + $0xb40] sm:$0xff] %v1123
          %v1125 = vld [vmem:[%s401 + $0xb48] sm:$0xff]
          %1126 = vst [vmem:[%s402 + $0xb48] sm:$0xff] %v1125
          %v1127 = vld [vmem:[%s401 + $0xb50] sm:$0xff]
          %1128 = vst [vmem:[%s402 + $0xb50] sm:$0xff] %v1127
          %v1129 = vld [vmem:[%s401 + $0xb58] sm:$0xff]
          %1130 = vst [vmem:[%s402 + $0xb58] sm:$0xff] %v1129
          %v1131 = vld [vmem:[%s401 + $0xb60] sm:$0xff]
          %1132 = vst [vmem:[%s402 + $0xb60] sm:$0xff] %v1131
          %v1133 = vld [vmem:[%s401 + $0xb68] sm:$0xff]
          %1134 = vst [vmem:[%s402 + $0xb68] sm:$0xff] %v1133
          %v1135 = vld [vmem:[%s401 + $0xb70] sm:$0xff]
          %1136 = vst [vmem:[%s402 + $0xb70] sm:$0xff] %v1135
          %v1137 = vld [vmem:[%s401 + $0xb78] sm:$0xff]
          %1138 = vst [vmem:[%s402 + $0xb78] sm:$0xff] %v1137
          %v1139 = vld [vmem:[%s401 + $0xb80] sm:$0xff]
          %1140 = vst [vmem:[%s402 + $0xb80] sm:$0xff] %v1139
          %v1141 = vld [vmem:[%s401 + $0xb88] sm:$0xff]
          %1142 = vst [vmem:[%s402 + $0xb88] sm:$0xff] %v1141
          %v1143 = vld [vmem:[%s401 + $0xb90] sm:$0xff]
          %1144 = vst [vmem:[%s402 + $0xb90] sm:$0xff] %v1143
          %v1145 = vld [vmem:[%s401 + $0xb98] sm:$0xff]
          %1146 = vst [vmem:[%s402 + $0xb98] sm:$0xff] %v1145
          %v1147 = vld [vmem:[%s401 + $0xba0] sm:$0xff]
          %1148 = vst [vmem:[%s402 + $0xba0] sm:$0xff] %v1147
          %v1149 = vld [vmem:[%s401 + $0xba8] sm:$0xff]
          %1150 = vst [vmem:[%s402 + $0xba8] sm:$0xff] %v1149
          %v1151 = vld [vmem:[%s401 + $0xbb0] sm:$0xff]
          %1152 = vst [vmem:[%s402 + $0xbb0] sm:$0xff] %v1151
          %v1153 = vld [vmem:[%s401 + $0xbb8] sm:$0xff]
          %1154 = vst [vmem:[%s402 + $0xbb8] sm:$0xff] %v1153
          %v1155 = vld [vmem:[%s401 + $0xbc0] sm:$0xff]
          %1156 = vst [vmem:[%s402 + $0xbc0] sm:$0xff] %v1155
          %v1157 = vld [vmem:[%s401 + $0xbc8] sm:$0xff]
          %1158 = vst [vmem:[%s402 + $0xbc8] sm:$0xff] %v1157
          %v1159 = vld [vmem:[%s401 + $0xbd0] sm:$0xff]
          %1160 = vst [vmem:[%s402 + $0xbd0] sm:$0xff] %v1159
          %v1161 = vld [vmem:[%s401 + $0xbd8] sm:$0xff]
          %1162 = vst [vmem:[%s402 + $0xbd8] sm:$0xff] %v1161
          %v1163 = vld [vmem:[%s401 + $0xbe0] sm:$0xff]
          %1164 = vst [vmem:[%s402 + $0xbe0] sm:$0xff] %v1163
          %v1165 = vld [vmem:[%s401 + $0xbe8] sm:$0xff]
          %1166 = vst [vmem:[%s402 + $0xbe8] sm:$0xff] %v1165
          %v1167 = vld [vmem:[%s401 + $0xbf0] sm:$0xff]
          %1168 = vst [vmem:[%s402 + $0xbf0] sm:$0xff] %v1167
          %v1169 = vld [vmem:[%s401 + $0xbf8] sm:$0xff]
          %1170 = vst [vmem:[%s402 + $0xbf8] sm:$0xff] %v1169
        $region133: #{qlearning_forward.1} parent=127 // loop_footer
          %s400 = sadd.s32 1, %s396
        $region134: #{qlearning_forward.1} parent=127 // loop_footer_branch
          %395 = sbr.rel target = $region130
        $region135: #{qlearning_forward.1} parent=127 // loop_exit
          _
      $region128: #{qlearning_forward.1} parent=112 // pred_fallthru
        _
      %p1171 = pneg %p391
      // Predicated region
      $region136: #{qlearning_forward.1} parent=112 // pred_check
        _
      $region137: #{qlearning_forward.1} parent=112 // pred_check_branch
        %1173 = sbr.rel (%p391) target = $region139
      $region138: #{qlearning_forward.1} parent=112 // pred_region
        %s1174 = sand.u32 3072, 7
      $region139: #{qlearning_forward.1} parent=112 // pred_fallthru
        _
    $region113: #{qlearning_forward.1} parent=1 // pred_fallthru
      _
    // Predicated region
    $region114: #{qlearning_forward.1} parent=1 // pred_check
      %p375 = pneg %p371
    $region115: #{qlearning_forward.1} parent=1 // pred_check_branch
      %377 = sbr.rel (%p375) target = $region117
    $region116: #{qlearning_forward.1} parent=1 // pred_region
      %s378 = sshll.u32 1, 3072
      %s379 = ssub.s32 %s378, 1
      loop: start=0, step=1, limit=1
      $region118: #{qlearning_forward.1} parent=116 // loop_pre_header
        _
      $region119: #{qlearning_forward.1} parent=116 // loop_header
        %s381 = sphi 0, %s385
        %p382 = scmp.ge.s32.totalorder %s381, 1
        %s386 = sphi %s12, %s12
        %s387 = sphi [#allocation4], [#allocation4]
      $region120: #{qlearning_forward.1} parent=116 // loop_header_branch
        %384 = sbr.rel (%p382) target = $region124
      $region121: #{qlearning_forward.1} parent=116 // loop_body
        %v388 = vld [vmem:[%s386] sm:%s379]
        %389 = vst [vmem:[%s387] sm:%s379] %v388
      $region122: #{qlearning_forward.1} parent=116 // loop_footer
        %s385 = sadd.s32 1, %s381
      $region123: #{qlearning_forward.1} parent=116 // loop_footer_branch
        %380 = sbr.rel target = $region119
      $region124: #{qlearning_forward.1} parent=116 // loop_exit
        _
    $region117: #{qlearning_forward.1} parent=1 // pred_fallthru
      _
    // Predicated region
    $region140: #{qlearning_forward.1} parent=1 // pred_check
      _
    $region141: #{qlearning_forward.1} parent=1 // pred_check_branch
      %1177 = sbr.rel (0) target = $region143
    $region142: #{qlearning_forward.1} parent=1 // pred_region
      %1178 = vsyncadd %s369, 49152
    $region143: #{qlearning_forward.1} parent=1 // pred_fallthru
      _
    %v1179 = vld [vmem:[%s0] sm:$0xff]
    %v1180 = vld [vmem:[%s0 + $0x8] sm:$0xff]
    %v1181 = vld [vmem:[%s0 + $0x10] sm:$0xff]
    %v1182 = vld [vmem:[%s0 + $0x18] sm:$0xff]
    %v1183 = vld [vmem:[%s0 + $0x20] sm:$0xff]
    %v1184 = vld [vmem:[%s0 + $0x28] sm:$0xff]
    %v1185 = vld [vmem:[%s0 + $0x30] sm:$0xff]
    %v1186 = vld [vmem:[%s0 + $0x38] sm:$0xff]
    %v1187 = vld [vmem:[%s0 + $0x40] sm:$0xff]
    %v1188 = vld [vmem:[%s0 + $0x48] sm:$0xff]
    %v1189 = vld [vmem:[%s0 + $0x50] sm:$0xff]
    %v1190 = vld [vmem:[%s0 + $0x58] sm:$0xff]
    %v1191 = vld [vmem:[%s0 + $0x60] sm:$0xff]
    %v1192 = vld [vmem:[%s0 + $0x68] sm:$0xff]
    %v1193 = vld [vmem:[%s0 + $0x70] sm:$0xff]
    %v1194 = vld [vmem:[%s0 + $0x78] sm:$0xff]
    %v1195 = vld [vmem:[%s0 + $0x80] sm:$0x33]
    %v1196 = vld [vmem:[%s1] sm:$0xf]
    %v1197 = vld [vmem:[%s1 + $0x4] sm:$0xf]
    %v1198 = vld [vmem:[%s1 + $0x8] sm:$0xf]
    %v1199 = vld [vmem:[%s1 + $0xc] sm:$0xf]
    %v1200 = vld [vmem:[%s1 + $0x10] sm:$0xf]
    %v1201 = vld [vmem:[%s1 + $0x14] sm:$0xf]
    %v1202 = vld [vmem:[%s1 + $0x18] sm:$0xf]
    %v1203 = vld [vmem:[%s1 + $0x1c] sm:$0xf]
    %v1204 = vld [vmem:[%s1 + $0x20] sm:$0xf]
    %v1205 = vld [vmem:[%s1 + $0x24] sm:$0xf]
    %v1206 = vld [vmem:[%s1 + $0x28] sm:$0xf]
    %v1207 = vld [vmem:[%s1 + $0x2c] sm:$0xf]
    %v1208 = vld [vmem:[%s1 + $0x30] sm:$0xf]
    %v1209 = vld [vmem:[%s1 + $0x34] sm:$0xf]
    %v1210 = vld [vmem:[%s1 + $0x38] sm:$0xf]
    %v1211 = vld [vmem:[%s1 + $0x3c] sm:$0xf]
    %v1212 = vld [vmem:[%s1 + $0x40] sm:$0xf]
    %v1213 = vld [vmem:[%s1 + $0x44] sm:$0xf]
    %v1214 = vld [vmem:[%s1 + $0x48] sm:$0xf]
    %v1215 = vld [vmem:[%s1 + $0x4c] sm:$0xf]
    %v1216 = vld [vmem:[%s1 + $0x50] sm:$0xf]
    %v1217 = vld [vmem:[%s1 + $0x54] sm:$0xf]
    %v1218 = vld [vmem:[%s1 + $0x58] sm:$0xf]
    %v1219 = vld [vmem:[%s1 + $0x5c] sm:$0xf]
    %v1220 = vld [vmem:[%s1 + $0x60] sm:$0xf]
    %v1221 = vld [vmem:[%s1 + $0x64] sm:$0xf]
    %v1222 = vld [vmem:[%s1 + $0x68] sm:$0xf]
    %v1223 = vld [vmem:[%s1 + $0x6c] sm:$0xf]
    %v1224 = vld [vmem:[%s1 + $0x70] sm:$0xf]
    %v1225 = vld [vmem:[%s1 + $0x74] sm:$0xf]
    %v1226 = vld [vmem:[%s1 + $0x78] sm:$0xf]
    %v1227 = vld [vmem:[%s1 + $0x7c] sm:$0xf]
    %v1228 = vld [vmem:[%s2] sm:$0x1]
    %v1230 = vlaneseq
    %v1231 = vshrl.u32 %v1230, 7
    %v1232 = vsub.s32 0, %v1231
    %v1233 = vrot.slane %v1228, %v1232
    %v1252 = vunpack.c.l.b16 %v1179
    %v1253 = vunpack.c.h.b16 %v1179
    %v1254 = vunpack.c.l.b16 %v1180
    %v1255 = vunpack.c.h.b16 %v1180
    %v1256 = vunpack.c.l.b16 %v1181
    %v1257 = vunpack.c.h.b16 %v1181
    %v1258 = vunpack.c.l.b16 %v1182
    %v1259 = vunpack.c.h.b16 %v1182
    %v1260 = vunpack.c.l.b16 %v1183
    %v1261 = vunpack.c.h.b16 %v1183
    %v1262 = vunpack.c.l.b16 %v1184
    %v1263 = vunpack.c.h.b16 %v1184
    %v1264 = vunpack.c.l.b16 %v1185
    %v1265 = vunpack.c.h.b16 %v1185
    %v1266 = vunpack.c.l.b16 %v1186
    %v1267 = vunpack.c.h.b16 %v1186
    %v1268 = vunpack.c.l.b16 %v1187
    %v1269 = vunpack.c.h.b16 %v1187
    %v1270 = vunpack.c.l.b16 %v1188
    %v1271 = vunpack.c.h.b16 %v1188
    %v1272 = vunpack.c.l.b16 %v1189
    %v1273 = vunpack.c.h.b16 %v1189
    %v1274 = vunpack.c.l.b16 %v1190
    %v1275 = vunpack.c.h.b16 %v1190
    %v1276 = vunpack.c.l.b16 %v1191
    %v1277 = vunpack.c.h.b16 %v1191
    %v1278 = vunpack.c.l.b16 %v1192
    %v1279 = vunpack.c.h.b16 %v1192
    %v1280 = vunpack.c.l.b16 %v1193
    %v1281 = vunpack.c.h.b16 %v1193
    %v1282 = vunpack.c.l.b16 %v1194
    %v1283 = vunpack.c.h.b16 %v1194
    %v1284 = vunpack.c.l.b16 %v1195
    %v1285 = vunpack.c.h.b16 %v1195
    %v1286 = vpack.c.b16 %v1254, %v1252
    %v1287 = vpack.c.b16 %v1255, %v1253
    %v1288 = vpack.c.b16 %v1258, %v1256
    %v1289 = vpack.c.b16 %v1259, %v1257
    %v1290 = vpack.c.b16 %v1262, %v1260
    %v1291 = vpack.c.b16 %v1263, %v1261
    %v1292 = vpack.c.b16 %v1266, %v1264
    %v1293 = vpack.c.b16 %v1267, %v1265
    %v1294 = vpack.c.b16 %v1270, %v1268
    %v1295 = vpack.c.b16 %v1271, %v1269
    %v1296 = vpack.c.b16 %v1274, %v1272
    %v1297 = vpack.c.b16 %v1275, %v1273
    %v1298 = vpack.c.b16 %v1278, %v1276
    %v1299 = vpack.c.b16 %v1279, %v1277
    %v1300 = vpack.c.b16 %v1282, %v1280
    %v1301 = vpack.c.b16 %v1283, %v1281
    %v1302 = vpack.c.b16 %v1284, %v1284
    %v1303 = vpack.c.b16 %v1285, %v1285
    %v1354 = vunpack.c.l.b16 %v1196
    %v1355 = vunpack.c.l.b16 %v1197
    %v1356 = vunpack.c.l.b16 %v1198
    %v1357 = vunpack.c.l.b16 %v1199
    %v1358 = vunpack.c.l.b16 %v1200
    %v1359 = vunpack.c.l.b16 %v1201
    %v1360 = vunpack.c.l.b16 %v1202
    %v1361 = vunpack.c.l.b16 %v1203
    %v1362 = vunpack.c.l.b16 %v1204
    %v1363 = vunpack.c.l.b16 %v1205
    %v1364 = vunpack.c.l.b16 %v1206
    %v1365 = vunpack.c.l.b16 %v1207
    %v1366 = vunpack.c.l.b16 %v1208
    %v1367 = vunpack.c.l.b16 %v1209
    %v1368 = vunpack.c.l.b16 %v1210
    %v1369 = vunpack.c.l.b16 %v1211
    %v1370 = vunpack.c.l.b16 %v1212
    %v1371 = vunpack.c.l.b16 %v1213
    %v1372 = vunpack.c.l.b16 %v1214
    %v1373 = vunpack.c.l.b16 %v1215
    %v1374 = vunpack.c.l.b16 %v1216
    %v1375 = vunpack.c.l.b16 %v1217
    %v1376 = vunpack.c.l.b16 %v1218
    %v1377 = vunpack.c.l.b16 %v1219
    %v1378 = vunpack.c.l.b16 %v1220
    %v1379 = vunpack.c.l.b16 %v1221
    %v1380 = vunpack.c.l.b16 %v1222
    %v1381 = vunpack.c.l.b16 %v1223
    %v1382 = vunpack.c.l.b16 %v1224
    %v1383 = vunpack.c.l.b16 %v1225
    %v1384 = vunpack.c.l.b16 %v1226
    %v1385 = vunpack.c.l.b16 %v1227
    %v1386 = vpack.c.b16 %v1355, %v1354
    %v1387 = vpack.c.b16 %v1357, %v1356
    %v1388 = vpack.c.b16 %v1359, %v1358
    %v1389 = vpack.c.b16 %v1361, %v1360
    %v1390 = vpack.c.b16 %v1363, %v1362
    %v1391 = vpack.c.b16 %v1365, %v1364
    %v1392 = vpack.c.b16 %v1367, %v1366
    %v1393 = vpack.c.b16 %v1369, %v1368
    %v1394 = vpack.c.b16 %v1371, %v1370
    %v1395 = vpack.c.b16 %v1373, %v1372
    %v1396 = vpack.c.b16 %v1375, %v1374
    %v1397 = vpack.c.b16 %v1377, %v1376
    %v1398 = vpack.c.b16 %v1379, %v1378
    %v1399 = vpack.c.b16 %v1381, %v1380
    %v1400 = vpack.c.b16 %v1383, %v1382
    %v1401 = vpack.c.b16 %v1385, %v1384
    %1418 = vmatprep.subr.bf16.mxu0 0
    %1419 = vmatpush1.bf16.msra.mxu0 %v1393
    %1420 = vmatprep.subr.bf16.mxu0 0
    %1421 = vmatpush1.bf16.msra.mxu0 %v1392
    %1422 = vmatprep.subr.bf16.mxu0 0
    %1423 = vmatpush1.bf16.msra.mxu0 %v1391
    %1424 = vmatprep.subr.bf16.mxu0 0
    %1425 = vmatpush1.bf16.msra.mxu0 %v1390
    %1426 = vmatprep.subr.bf16.mxu0 0
    %1427 = vmatpush1.bf16.msra.mxu0 %v1389
    %1428 = vmatprep.subr.bf16.mxu0 0
    %1429 = vmatpush1.bf16.msra.mxu0 %v1388
    %1430 = vmatprep.subr.bf16.mxu0 0
    %1431 = vmatpush1.bf16.msra.mxu0 %v1387
    %1432 = vmatprep.subr.bf16.mxu0 0
    %1433 = vmatpush1.bf16.msra.mxu0 %v1386
    %1434 = vmatprep.subr.bf16.mxu0 0
    %1435 = vmatpush2.bf16.msra.mxu0 %v1401
    %1436 = vmatprep.subr.bf16.mxu0 0
    %1437 = vmatpush2.bf16.msra.mxu0 %v1400
    %1438 = vmatprep.subr.bf16.mxu0 0
    %1439 = vmatpush2.bf16.msra.mxu0 %v1399
    %1440 = vmatprep.subr.bf16.mxu0 0
    %1441 = vmatpush2.bf16.msra.mxu0 %v1398
    %1442 = vmatprep.subr.bf16.mxu0 0
    %1443 = vmatpush2.bf16.msra.mxu0 %v1397
    %1444 = vmatprep.subr.bf16.mxu0 0
    %1445 = vmatpush2.bf16.msra.mxu0 %v1396
    %1446 = vmatprep.subr.bf16.mxu0 0
    %1447 = vmatpush2.bf16.msra.mxu0 %v1395
    %1448 = vmatprep.subr.bf16.mxu0 0
    %1449 = vmatpush2.bf16.msra.mxu0 %v1394
    %1450 = vmatprep.mubr.bf16.mxu0 %v1287
    %1451 = vmatmul.mubr.bf16.gmra.mxu0 %v1286
    %v1452 = vpop.f32.mrf.mxu0
    %v1453 = vadd.f32 %v1233, %v1452
    %v1454 = vpop.f32.mrf.mxu0
    %v1455 = vpop.f32.mrf.mxu0
    %v1456 = vadd.f32 %v1233, %v1455
    %v1457 = vpop.f32.mrf.mxu0
    %1458 = vmatprep.mubr.bf16.mxu0 %v1289
    %1459 = vmatmul.mubr.bf16.gmra.mxu0 %v1288
    %v1460 = vpop.f32.mrf.mxu0
    %v1461 = vadd.f32 %v1233, %v1460
    %v1462 = vpop.f32.mrf.mxu0
    %v1463 = vpop.f32.mrf.mxu0
    %v1464 = vadd.f32 %v1233, %v1463
    %v1465 = vpop.f32.mrf.mxu0
    %1466 = vmatprep.mubr.bf16.mxu0 %v1291
    %1467 = vmatmul.mubr.bf16.gmra.mxu0 %v1290
    %v1468 = vpop.f32.mrf.mxu0
    %v1469 = vadd.f32 %v1233, %v1468
    %v1470 = vpop.f32.mrf.mxu0
    %v1471 = vpop.f32.mrf.mxu0
    %v1472 = vadd.f32 %v1233, %v1471
    %v1473 = vpop.f32.mrf.mxu0
    %1474 = vmatprep.mubr.bf16.mxu0 %v1293
    %1475 = vmatmul.mubr.bf16.gmra.mxu0 %v1292
    %v1476 = vpop.f32.mrf.mxu0
    %v1477 = vadd.f32 %v1233, %v1476
    %v1478 = vpop.f32.mrf.mxu0
    %v1479 = vpop.f32.mrf.mxu0
    %v1480 = vadd.f32 %v1233, %v1479
    %v1481 = vpop.f32.mrf.mxu0
    %1482 = vmatprep.mubr.bf16.mxu0 %v1295
    %1483 = vmatmul.mubr.bf16.gmra.mxu0 %v1294
    %v1484 = vpop.f32.mrf.mxu0
    %v1485 = vadd.f32 %v1233, %v1484
    %v1486 = vpop.f32.mrf.mxu0
    %v1487 = vpop.f32.mrf.mxu0
    %v1488 = vadd.f32 %v1233, %v1487
    %v1489 = vpop.f32.mrf.mxu0
    %1490 = vmatprep.mubr.bf16.mxu0 %v1297
    %1491 = vmatmul.mubr.bf16.gmra.mxu0 %v1296
    %v1492 = vpop.f32.mrf.mxu0
    %v1493 = vadd.f32 %v1233, %v1492
    %v1494 = vpop.f32.mrf.mxu0
    %v1495 = vpop.f32.mrf.mxu0
    %v1496 = vadd.f32 %v1233, %v1495
    %v1497 = vpop.f32.mrf.mxu0
    %1498 = vmatprep.mubr.bf16.mxu0 %v1299
    %1499 = vmatmul.mubr.bf16.gmra.mxu0 %v1298
    %v1500 = vpop.f32.mrf.mxu0
    %v1501 = vadd.f32 %v1233, %v1500
    %v1502 = vpop.f32.mrf.mxu0
    %v1503 = vpop.f32.mrf.mxu0
    %v1504 = vadd.f32 %v1233, %v1503
    %v1505 = vpop.f32.mrf.mxu0
    %1506 = vmatprep.mubr.bf16.mxu0 %v1301
    %1507 = vmatmul.mubr.bf16.gmra.mxu0 %v1300
    %v1508 = vpop.f32.mrf.mxu0
    %v1509 = vadd.f32 %v1233, %v1508
    %v1510 = vpop.f32.mrf.mxu0
    %v1511 = vpop.f32.mrf.mxu0
    %v1512 = vadd.f32 %v1233, %v1511
    %v1513 = vpop.f32.mrf.mxu0
    %1514 = vmatprep.mubr.bf16.mxu0 %v1303
    %1515 = vmatmul.mubr.bf16.gmra.mxu0 %v1302
    %v1516 = vpop.f32.mrf.mxu0
    %v1517 = vadd.f32 %v1233, %v1516
    %v1518 = vpop.f32.mrf.mxu0
    %v1519 = vpop.f32.mrf.mxu0
    %v1520 = vpop.f32.mrf.mxu0
    %1521 = vdwg.mxu0
    %v1522 = vmax.f32 %v1453, 0.0
    %v1523 = vmax.f32 %v1456, 0.0
    %v1524 = vmax.f32 %v1461, 0.0
    %v1525 = vmax.f32 %v1464, 0.0
    %v1526 = vmax.f32 %v1469, 0.0
    %v1527 = vmax.f32 %v1472, 0.0
    %v1528 = vmax.f32 %v1477, 0.0
    %v1529 = vmax.f32 %v1480, 0.0
    %v1530 = vmax.f32 %v1485, 0.0
    %v1531 = vmax.f32 %v1488, 0.0
    %v1532 = vmax.f32 %v1493, 0.0
    %v1533 = vmax.f32 %v1496, 0.0
    %v1534 = vmax.f32 %v1501, 0.0
    %v1535 = vmax.f32 %v1504, 0.0
    %v1536 = vmax.f32 %v1509, 0.0
    %v1537 = vmax.f32 %v1512, 0.0
    %v1538 = vmax.f32 %v1517, 0.0
    %v1539 = vpack.c.bf16 %v1523, %v1522
    %v1540 = vpack.c.bf16 %v1525, %v1524
    %v1541 = vpack.c.bf16 %v1527, %v1526
    %v1542 = vpack.c.bf16 %v1529, %v1528
    %v1543 = vpack.c.bf16 %v1531, %v1530
    %v1544 = vpack.c.bf16 %v1533, %v1532
    %v1545 = vpack.c.bf16 %v1535, %v1534
    %v1546 = vpack.c.bf16 %v1537, %v1536
    %v1547 = vpack.c.bf16 %v1538, %v1538
    %s1548 = smul.u32 4, 96
    %s1549 = smul.u32 %s1548, 2
    %s1550 = sshll.u32 %s1549, 4
    %1551 = dma.done [#allocation7], %s1550
    %v1552 = vld [vmem:[#allocation2] sm:$0xff]
    %v1553 = vld [vmem:[#allocation2 + $0x8] sm:$0xff]
    %v1554 = vld [vmem:[#allocation2 + $0x10] sm:$0xff]
    %v1555 = vld [vmem:[#allocation2 + $0x18] sm:$0xff]
    %v1556 = vld [vmem:[#allocation2 + $0x20] sm:$0xff]
    %v1557 = vld [vmem:[#allocation2 + $0x28] sm:$0xff]
    %v1558 = vld [vmem:[#allocation2 + $0x30] sm:$0xff]
    %v1559 = vld [vmem:[#allocation2 + $0x38] sm:$0xff]
    %v1560 = vld [vmem:[#allocation2 + $0x40] sm:$0xff]
    %v1561 = vld [vmem:[#allocation2 + $0x48] sm:$0xff]
    %v1562 = vld [vmem:[#allocation2 + $0x50] sm:$0xff]
    %v1563 = vld [vmem:[#allocation2 + $0x58] sm:$0xff]
    %v1564 = vld [vmem:[#allocation2 + $0x60] sm:$0xff]
    %v1565 = vld [vmem:[#allocation2 + $0x68] sm:$0xff]
    %v1566 = vld [vmem:[#allocation2 + $0x70] sm:$0xff]
    %v1567 = vld [vmem:[#allocation2 + $0x78] sm:$0xff]
    %v1568 = vld [vmem:[#allocation2 + $0x80] sm:$0xff]
    %v1569 = vld [vmem:[#allocation2 + $0x88] sm:$0xff]
    %v1570 = vld [vmem:[#allocation2 + $0x90] sm:$0xff]
    %v1571 = vld [vmem:[#allocation2 + $0x98] sm:$0xff]
    %v1572 = vld [vmem:[#allocation2 + $0xa0] sm:$0xff]
    %v1573 = vld [vmem:[#allocation2 + $0xa8] sm:$0xff]
    %v1574 = vld [vmem:[#allocation2 + $0xb0] sm:$0xff]
    %v1575 = vld [vmem:[#allocation2 + $0xb8] sm:$0xff]
    %v1576 = vld [vmem:[#allocation2 + $0xc0] sm:$0xff]
    %v1577 = vld [vmem:[#allocation2 + $0xc8] sm:$0xff]
    %v1578 = vld [vmem:[#allocation2 + $0xd0] sm:$0xff]
    %v1579 = vld [vmem:[#allocation2 + $0xd8] sm:$0xff]
    %v1580 = vld [vmem:[#allocation2 + $0xe0] sm:$0xff]
    %v1581 = vld [vmem:[#allocation2 + $0xe8] sm:$0xff]
    %v1582 = vld [vmem:[#allocation2 + $0xf0] sm:$0xff]
    %v1583 = vld [vmem:[#allocation2 + $0xf8] sm:$0xff]
    %v1584 = vld [vmem:[#allocation2 + $0x100] sm:$0xff]
    %v1585 = vld [vmem:[#allocation2 + $0x108] sm:$0xff]
    %v1586 = vld [vmem:[#allocation2 + $0x110] sm:$0xff]
    %v1587 = vld [vmem:[#allocation2 + $0x118] sm:$0xff]
    %v1588 = vld [vmem:[#allocation2 + $0x120] sm:$0xff]
    %v1589 = vld [vmem:[#allocation2 + $0x128] sm:$0xff]
    %v1590 = vld [vmem:[#allocation2 + $0x130] sm:$0xff]
    %v1591 = vld [vmem:[#allocation2 + $0x138] sm:$0xff]
    %v1592 = vld [vmem:[#allocation2 + $0x140] sm:$0xff]
    %v1593 = vld [vmem:[#allocation2 + $0x148] sm:$0xff]
    %v1594 = vld [vmem:[#allocation2 + $0x150] sm:$0xff]
    %v1595 = vld [vmem:[#allocation2 + $0x158] sm:$0xff]
    %v1596 = vld [vmem:[#allocation2 + $0x160] sm:$0xff]
    %v1597 = vld [vmem:[#allocation2 + $0x168] sm:$0xff]
    %v1598 = vld [vmem:[#allocation2 + $0x170] sm:$0xff]
    %v1599 = vld [vmem:[#allocation2 + $0x178] sm:$0xff]
    %v1600 = vld [vmem:[#allocation2 + $0x180] sm:$0xff]
    %v1601 = vld [vmem:[#allocation2 + $0x188] sm:$0xff]
    %v1602 = vld [vmem:[#allocation2 + $0x190] sm:$0xff]
    %v1603 = vld [vmem:[#allocation2 + $0x198] sm:$0xff]
    %v1604 = vld [vmem:[#allocation2 + $0x1a0] sm:$0xff]
    %v1605 = vld [vmem:[#allocation2 + $0x1a8] sm:$0xff]
    %v1606 = vld [vmem:[#allocation2 + $0x1b0] sm:$0xff]
    %v1607 = vld [vmem:[#allocation2 + $0x1b8] sm:$0xff]
    %v1608 = vld [vmem:[#allocation2 + $0x1c0] sm:$0xff]
    %v1609 = vld [vmem:[#allocation2 + $0x1c8] sm:$0xff]
    %v1610 = vld [vmem:[#allocation2 + $0x1d0] sm:$0xff]
    %v1611 = vld [vmem:[#allocation2 + $0x1d8] sm:$0xff]
    %v1612 = vld [vmem:[#allocation2 + $0x1e0] sm:$0xff]
    %v1613 = vld [vmem:[#allocation2 + $0x1e8] sm:$0xff]
    %v1614 = vld [vmem:[#allocation2 + $0x1f0] sm:$0xff]
    %v1615 = vld [vmem:[#allocation2 + $0x1f8] sm:$0xff]
    %v1616 = vld [vmem:[#allocation2 + $0x200] sm:$0xff]
    %v1617 = vld [vmem:[#allocation2 + $0x208] sm:$0xff]
    %v1618 = vld [vmem:[#allocation2 + $0x210] sm:$0xff]
    %v1619 = vld [vmem:[#allocation2 + $0x218] sm:$0xff]
    %v1620 = vld [vmem:[#allocation2 + $0x220] sm:$0xff]
    %v1621 = vld [vmem:[#allocation2 + $0x228] sm:$0xff]
    %v1622 = vld [vmem:[#allocation2 + $0x230] sm:$0xff]
    %v1623 = vld [vmem:[#allocation2 + $0x238] sm:$0xff]
    %v1624 = vld [vmem:[#allocation2 + $0x240] sm:$0xff]
    %v1625 = vld [vmem:[#allocation2 + $0x248] sm:$0xff]
    %v1626 = vld [vmem:[#allocation2 + $0x250] sm:$0xff]
    %v1627 = vld [vmem:[#allocation2 + $0x258] sm:$0xff]
    %v1628 = vld [vmem:[#allocation2 + $0x260] sm:$0xff]
    %v1629 = vld [vmem:[#allocation2 + $0x268] sm:$0xff]
    %v1630 = vld [vmem:[#allocation2 + $0x270] sm:$0xff]
    %v1631 = vld [vmem:[#allocation2 + $0x278] sm:$0xff]
    %v1632 = vld [vmem:[#allocation2 + $0x280] sm:$0xff]
    %v1633 = vld [vmem:[#allocation2 + $0x288] sm:$0xff]
    %v1634 = vld [vmem:[#allocation2 + $0x290] sm:$0xff]
    %v1635 = vld [vmem:[#allocation2 + $0x298] sm:$0xff]
    %v1636 = vld [vmem:[#allocation2 + $0x2a0] sm:$0xff]
    %v1637 = vld [vmem:[#allocation2 + $0x2a8] sm:$0xff]
    %v1638 = vld [vmem:[#allocation2 + $0x2b0] sm:$0xff]
    %v1639 = vld [vmem:[#allocation2 + $0x2b8] sm:$0xff]
    %v1640 = vld [vmem:[#allocation2 + $0x2c0] sm:$0xff]
    %v1641 = vld [vmem:[#allocation2 + $0x2c8] sm:$0xff]
    %v1642 = vld [vmem:[#allocation2 + $0x2d0] sm:$0xff]
    %v1643 = vld [vmem:[#allocation2 + $0x2d8] sm:$0xff]
    %v1644 = vld [vmem:[#allocation2 + $0x2e0] sm:$0xff]
    %v1645 = vld [vmem:[#allocation2 + $0x2e8] sm:$0xff]
    %v1646 = vld [vmem:[#allocation2 + $0x2f0] sm:$0xff]
    %v1647 = vld [vmem:[#allocation2 + $0x2f8] sm:$0xff]
    %v1744 = vunpack.c.l.b16 %v1552
    %v1745 = vunpack.c.h.b16 %v1552
    %v1746 = vunpack.c.l.b16 %v1553
    %v1747 = vunpack.c.h.b16 %v1553
    %v1748 = vunpack.c.l.b16 %v1554
    %v1749 = vunpack.c.h.b16 %v1554
    %v1750 = vunpack.c.l.b16 %v1555
    %v1751 = vunpack.c.h.b16 %v1555
    %v1752 = vunpack.c.l.b16 %v1556
    %v1753 = vunpack.c.h.b16 %v1556
    %v1754 = vunpack.c.l.b16 %v1557
    %v1755 = vunpack.c.h.b16 %v1557
    %v1756 = vunpack.c.l.b16 %v1558
    %v1757 = vunpack.c.h.b16 %v1558
    %v1758 = vunpack.c.l.b16 %v1559
    %v1759 = vunpack.c.h.b16 %v1559
    %v1760 = vunpack.c.l.b16 %v1560
    %v1761 = vunpack.c.h.b16 %v1560
    %v1762 = vunpack.c.l.b16 %v1561
    %v1763 = vunpack.c.h.b16 %v1561
    %v1764 = vunpack.c.l.b16 %v1562
    %v1765 = vunpack.c.h.b16 %v1562
    %v1766 = vunpack.c.l.b16 %v1563
    %v1767 = vunpack.c.h.b16 %v1563
    %v1768 = vunpack.c.l.b16 %v1564
    %v1769 = vunpack.c.h.b16 %v1564
    %v1770 = vunpack.c.l.b16 %v1565
    %v1771 = vunpack.c.h.b16 %v1565
    %v1772 = vunpack.c.l.b16 %v1566
    %v1773 = vunpack.c.h.b16 %v1566
    %v1774 = vunpack.c.l.b16 %v1567
    %v1775 = vunpack.c.h.b16 %v1567
    %v1776 = vunpack.c.l.b16 %v1568
    %v1777 = vunpack.c.h.b16 %v1568
    %v1778 = vunpack.c.l.b16 %v1569
    %v1779 = vunpack.c.h.b16 %v1569
    %v1780 = vunpack.c.l.b16 %v1570
    %v1781 = vunpack.c.h.b16 %v1570
    %v1782 = vunpack.c.l.b16 %v1571
    %v1783 = vunpack.c.h.b16 %v1571
    %v1784 = vunpack.c.l.b16 %v1572
    %v1785 = vunpack.c.h.b16 %v1572
    %v1786 = vunpack.c.l.b16 %v1573
    %v1787 = vunpack.c.h.b16 %v1573
    %v1788 = vunpack.c.l.b16 %v1574
    %v1789 = vunpack.c.h.b16 %v1574
    %v1790 = vunpack.c.l.b16 %v1575
    %v1791 = vunpack.c.h.b16 %v1575
    %v1792 = vunpack.c.l.b16 %v1576
    %v1793 = vunpack.c.h.b16 %v1576
    %v1794 = vunpack.c.l.b16 %v1577
    %v1795 = vunpack.c.h.b16 %v1577
    %v1796 = vunpack.c.l.b16 %v1578
    %v1797 = vunpack.c.h.b16 %v1578
    %v1798 = vunpack.c.l.b16 %v1579
    %v1799 = vunpack.c.h.b16 %v1579
    %v1800 = vunpack.c.l.b16 %v1580
    %v1801 = vunpack.c.h.b16 %v1580
    %v1802 = vunpack.c.l.b16 %v1581
    %v1803 = vunpack.c.h.b16 %v1581
    %v1804 = vunpack.c.l.b16 %v1582
    %v1805 = vunpack.c.h.b16 %v1582
    %v1806 = vunpack.c.l.b16 %v1583
    %v1807 = vunpack.c.h.b16 %v1583
    %v1808 = vunpack.c.l.b16 %v1584
    %v1809 = vunpack.c.h.b16 %v1584
    %v1810 = vunpack.c.l.b16 %v1585
    %v1811 = vunpack.c.h.b16 %v1585
    %v1812 = vunpack.c.l.b16 %v1586
    %v1813 = vunpack.c.h.b16 %v1586
    %v1814 = vunpack.c.l.b16 %v1587
    %v1815 = vunpack.c.h.b16 %v1587
    %v1816 = vunpack.c.l.b16 %v1588
    %v1817 = vunpack.c.h.b16 %v1588
    %v1818 = vunpack.c.l.b16 %v1589
    %v1819 = vunpack.c.h.b16 %v1589
    %v1820 = vunpack.c.l.b16 %v1590
    %v1821 = vunpack.c.h.b16 %v1590
    %v1822 = vunpack.c.l.b16 %v1591
    %v1823 = vunpack.c.h.b16 %v1591
    %v1824 = vunpack.c.l.b16 %v1592
    %v1825 = vunpack.c.h.b16 %v1592
    %v1826 = vunpack.c.l.b16 %v1593
    %v1827 = vunpack.c.h.b16 %v1593
    %v1828 = vunpack.c.l.b16 %v1594
    %v1829 = vunpack.c.h.b16 %v1594
    %v1830 = vunpack.c.l.b16 %v1595
    %v1831 = vunpack.c.h.b16 %v1595
    %v1832 = vunpack.c.l.b16 %v1596
    %v1833 = vunpack.c.h.b16 %v1596
    %v1834 = vunpack.c.l.b16 %v1597
    %v1835 = vunpack.c.h.b16 %v1597
    %v1836 = vunpack.c.l.b16 %v1598
    %v1837 = vunpack.c.h.b16 %v1598
    %v1838 = vunpack.c.l.b16 %v1599
    %v1839 = vunpack.c.h.b16 %v1599
    %v1840 = vunpack.c.l.b16 %v1600
    %v1841 = vunpack.c.h.b16 %v1600
    %v1842 = vunpack.c.l.b16 %v1601
    %v1843 = vunpack.c.h.b16 %v1601
    %v1844 = vunpack.c.l.b16 %v1602
    %v1845 = vunpack.c.h.b16 %v1602
    %v1846 = vunpack.c.l.b16 %v1603
    %v1847 = vunpack.c.h.b16 %v1603
    %v1848 = vunpack.c.l.b16 %v1604
    %v1849 = vunpack.c.h.b16 %v1604
    %v1850 = vunpack.c.l.b16 %v1605
    %v1851 = vunpack.c.h.b16 %v1605
    %v1852 = vunpack.c.l.b16 %v1606
    %v1853 = vunpack.c.h.b16 %v1606
    %v1854 = vunpack.c.l.b16 %v1607
    %v1855 = vunpack.c.h.b16 %v1607
    %v1856 = vunpack.c.l.b16 %v1608
    %v1857 = vunpack.c.h.b16 %v1608
    %v1858 = vunpack.c.l.b16 %v1609
    %v1859 = vunpack.c.h.b16 %v1609
    %v1860 = vunpack.c.l.b16 %v1610
    %v1861 = vunpack.c.h.b16 %v1610
    %v1862 = vunpack.c.l.b16 %v1611
    %v1863 = vunpack.c.h.b16 %v1611
    %v1864 = vunpack.c.l.b16 %v1612
    %v1865 = vunpack.c.h.b16 %v1612
    %v1866 = vunpack.c.l.b16 %v1613
    %v1867 = vunpack.c.h.b16 %v1613
    %v1868 = vunpack.c.l.b16 %v1614
    %v1869 = vunpack.c.h.b16 %v1614
    %v1870 = vunpack.c.l.b16 %v1615
    %v1871 = vunpack.c.h.b16 %v1615
    %v1872 = vunpack.c.l.b16 %v1616
    %v1873 = vunpack.c.h.b16 %v1616
    %v1874 = vunpack.c.l.b16 %v1617
    %v1875 = vunpack.c.h.b16 %v1617
    %v1876 = vunpack.c.l.b16 %v1618
    %v1877 = vunpack.c.h.b16 %v1618
    %v1878 = vunpack.c.l.b16 %v1619
    %v1879 = vunpack.c.h.b16 %v1619
    %v1880 = vunpack.c.l.b16 %v1620
    %v1881 = vunpack.c.h.b16 %v1620
    %v1882 = vunpack.c.l.b16 %v1621
    %v1883 = vunpack.c.h.b16 %v1621
    %v1884 = vunpack.c.l.b16 %v1622
    %v1885 = vunpack.c.h.b16 %v1622
    %v1886 = vunpack.c.l.b16 %v1623
    %v1887 = vunpack.c.h.b16 %v1623
    %v1888 = vunpack.c.l.b16 %v1624
    %v1889 = vunpack.c.h.b16 %v1624
    %v1890 = vunpack.c.l.b16 %v1625
    %v1891 = vunpack.c.h.b16 %v1625
    %v1892 = vunpack.c.l.b16 %v1626
    %v1893 = vunpack.c.h.b16 %v1626
    %v1894 = vunpack.c.l.b16 %v1627
    %v1895 = vunpack.c.h.b16 %v1627
    %v1896 = vunpack.c.l.b16 %v1628
    %v1897 = vunpack.c.h.b16 %v1628
    %v1898 = vunpack.c.l.b16 %v1629
    %v1899 = vunpack.c.h.b16 %v1629
    %v1900 = vunpack.c.l.b16 %v1630
    %v1901 = vunpack.c.h.b16 %v1630
    %v1902 = vunpack.c.l.b16 %v1631
    %v1903 = vunpack.c.h.b16 %v1631
    %v1904 = vunpack.c.l.b16 %v1632
    %v1905 = vunpack.c.h.b16 %v1632
    %v1906 = vunpack.c.l.b16 %v1633
    %v1907 = vunpack.c.h.b16 %v1633
    %v1908 = vunpack.c.l.b16 %v1634
    %v1909 = vunpack.c.h.b16 %v1634
    %v1910 = vunpack.c.l.b16 %v1635
    %v1911 = vunpack.c.h.b16 %v1635
    %v1912 = vunpack.c.l.b16 %v1636
    %v1913 = vunpack.c.h.b16 %v1636
    %v1914 = vunpack.c.l.b16 %v1637
    %v1915 = vunpack.c.h.b16 %v1637
    %v1916 = vunpack.c.l.b16 %v1638
    %v1917 = vunpack.c.h.b16 %v1638
    %v1918 = vunpack.c.l.b16 %v1639
    %v1919 = vunpack.c.h.b16 %v1639
    %v1920 = vunpack.c.l.b16 %v1640
    %v1921 = vunpack.c.h.b16 %v1640
    %v1922 = vunpack.c.l.b16 %v1641
    %v1923 = vunpack.c.h.b16 %v1641
    %v1924 = vunpack.c.l.b16 %v1642
    %v1925 = vunpack.c.h.b16 %v1642
    %v1926 = vunpack.c.l.b16 %v1643
    %v1927 = vunpack.c.h.b16 %v1643
    %v1928 = vunpack.c.l.b16 %v1644
    %v1929 = vunpack.c.h.b16 %v1644
    %v1930 = vunpack.c.l.b16 %v1645
    %v1931 = vunpack.c.h.b16 %v1645
    %v1932 = vunpack.c.l.b16 %v1646
    %v1933 = vunpack.c.h.b16 %v1646
    %v1934 = vunpack.c.l.b16 %v1647
    %v1935 = vunpack.c.h.b16 %v1647
    %v1936 = vpack.c.b16 %v1746, %v1744
    %v1937 = vpack.c.b16 %v1747, %v1745
    %v1938 = vpack.c.b16 %v1750, %v1748
    %v1939 = vpack.c.b16 %v1751, %v1749
    %v1940 = vpack.c.b16 %v1754, %v1752
    %v1941 = vpack.c.b16 %v1755, %v1753
    %v1942 = vpack.c.b16 %v1758, %v1756
    %v1943 = vpack.c.b16 %v1759, %v1757
    %v1944 = vpack.c.b16 %v1762, %v1760
    %v1945 = vpack.c.b16 %v1763, %v1761
    %v1946 = vpack.c.b16 %v1766, %v1764
    %v1947 = vpack.c.b16 %v1767, %v1765
    %v1948 = vpack.c.b16 %v1770, %v1768
    %v1949 = vpack.c.b16 %v1771, %v1769
    %v1950 = vpack.c.b16 %v1774, %v1772
    %v1951 = vpack.c.b16 %v1775, %v1773
    %v1952 = vpack.c.b16 %v1778, %v1776
    %v1953 = vpack.c.b16 %v1779, %v1777
    %v1954 = vpack.c.b16 %v1782, %v1780
    %v1955 = vpack.c.b16 %v1783, %v1781
    %v1956 = vpack.c.b16 %v1786, %v1784
    %v1957 = vpack.c.b16 %v1787, %v1785
    %v1958 = vpack.c.b16 %v1790, %v1788
    %v1959 = vpack.c.b16 %v1791, %v1789
    %v1960 = vpack.c.b16 %v1794, %v1792
    %v1961 = vpack.c.b16 %v1795, %v1793
    %v1962 = vpack.c.b16 %v1798, %v1796
    %v1963 = vpack.c.b16 %v1799, %v1797
    %v1964 = vpack.c.b16 %v1802, %v1800
    %v1965 = vpack.c.b16 %v1803, %v1801
    %v1966 = vpack.c.b16 %v1806, %v1804
    %v1967 = vpack.c.b16 %v1807, %v1805
    %v1968 = vpack.c.b16 %v1810, %v1808
    %v1969 = vpack.c.b16 %v1811, %v1809
    %v1970 = vpack.c.b16 %v1814, %v1812
    %v1971 = vpack.c.b16 %v1815, %v1813
    %v1972 = vpack.c.b16 %v1818, %v1816
    %v1973 = vpack.c.b16 %v1819, %v1817
    %v1974 = vpack.c.b16 %v1822, %v1820
    %v1975 = vpack.c.b16 %v1823, %v1821
    %v1976 = vpack.c.b16 %v1826, %v1824
    %v1977 = vpack.c.b16 %v1827, %v1825
    %v1978 = vpack.c.b16 %v1830, %v1828
    %v1979 = vpack.c.b16 %v1831, %v1829
    %v1980 = vpack.c.b16 %v1834, %v1832
    %v1981 = vpack.c.b16 %v1835, %v1833
    %v1982 = vpack.c.b16 %v1838, %v1836
    %v1983 = vpack.c.b16 %v1839, %v1837
    %v1984 = vpack.c.b16 %v1842, %v1840
    %v1985 = vpack.c.b16 %v1843, %v1841
    %v1986 = vpack.c.b16 %v1846, %v1844
    %v1987 = vpack.c.b16 %v1847, %v1845
    %v1988 = vpack.c.b16 %v1850, %v1848
    %v1989 = vpack.c.b16 %v1851, %v1849
    %v1990 = vpack.c.b16 %v1854, %v1852
    %v1991 = vpack.c.b16 %v1855, %v1853
    %v1992 = vpack.c.b16 %v1858, %v1856
    %v1993 = vpack.c.b16 %v1859, %v1857
    %v1994 = vpack.c.b16 %v1862, %v1860
    %v1995 = vpack.c.b16 %v1863, %v1861
    %v1996 = vpack.c.b16 %v1866, %v1864
    %v1997 = vpack.c.b16 %v1867, %v1865
    %v1998 = vpack.c.b16 %v1870, %v1868
    %v1999 = vpack.c.b16 %v1871, %v1869
    %v2000 = vpack.c.b16 %v1874, %v1872
    %v2001 = vpack.c.b16 %v1875, %v1873
    %v2002 = vpack.c.b16 %v1878, %v1876
    %v2003 = vpack.c.b16 %v1879, %v1877
    %v2004 = vpack.c.b16 %v1882, %v1880
    %v2005 = vpack.c.b16 %v1883, %v1881
    %v2006 = vpack.c.b16 %v1886, %v1884
    %v2007 = vpack.c.b16 %v1887, %v1885
    %v2008 = vpack.c.b16 %v1890, %v1888
    %v2009 = vpack.c.b16 %v1891, %v1889
    %v2010 = vpack.c.b16 %v1894, %v1892
    %v2011 = vpack.c.b16 %v1895, %v1893
    %v2012 = vpack.c.b16 %v1898, %v1896
    %v2013 = vpack.c.b16 %v1899, %v1897
    %v2014 = vpack.c.b16 %v1902, %v1900
    %v2015 = vpack.c.b16 %v1903, %v1901
    %v2016 = vpack.c.b16 %v1906, %v1904
    %v2017 = vpack.c.b16 %v1907, %v1905
    %v2018 = vpack.c.b16 %v1910, %v1908
    %v2019 = vpack.c.b16 %v1911, %v1909
    %v2020 = vpack.c.b16 %v1914, %v1912
    %v2021 = vpack.c.b16 %v1915, %v1913
    %v2022 = vpack.c.b16 %v1918, %v1916
    %v2023 = vpack.c.b16 %v1919, %v1917
    %v2024 = vpack.c.b16 %v1922, %v1920
    %v2025 = vpack.c.b16 %v1923, %v1921
    %v2026 = vpack.c.b16 %v1926, %v1924
    %v2027 = vpack.c.b16 %v1927, %v1925
    %v2028 = vpack.c.b16 %v1930, %v1928
    %v2029 = vpack.c.b16 %v1931, %v1929
    %v2030 = vpack.c.b16 %v1934, %v1932
    %v2031 = vpack.c.b16 %v1935, %v1933
    %vm2080 = vcmask 31744
    %v2082 = vsel %vm2080, %v1937, 0
    %v2085 = vsel %vm2080, %v1939, 0
    %v2088 = vsel %vm2080, %v1941, 0
    %v2091 = vsel %vm2080, %v1943, 0
    %v2094 = vsel %vm2080, %v1945, 0
    %v2097 = vsel %vm2080, %v1947, 0
    %v2100 = vsel %vm2080, %v1949, 0
    %v2103 = vsel %vm2080, %v1951, 0
    %v2106 = vsel %vm2080, %v1953, 0
    %v2109 = vsel %vm2080, %v1955, 0
    %v2112 = vsel %vm2080, %v1957, 0
    %v2115 = vsel %vm2080, %v1959, 0
    %v2118 = vsel %vm2080, %v1961, 0
    %v2121 = vsel %vm2080, %v1963, 0
    %v2124 = vsel %vm2080, %v1965, 0
    %v2127 = vsel %vm2080, %v1967, 0
    %v2130 = vsel %vm2080, %v1969, 0
    %v2133 = vsel %vm2080, %v1971, 0
    %v2136 = vsel %vm2080, %v1973, 0
    %v2139 = vsel %vm2080, %v1975, 0
    %v2142 = vsel %vm2080, %v1977, 0
    %v2145 = vsel %vm2080, %v1979, 0
    %v2148 = vsel %vm2080, %v1981, 0
    %v2151 = vsel %vm2080, %v1983, 0
    %v2154 = vsel %vm2080, %v1985, 0
    %v2157 = vsel %vm2080, %v1987, 0
    %v2160 = vsel %vm2080, %v1989, 0
    %v2163 = vsel %vm2080, %v1991, 0
    %v2166 = vsel %vm2080, %v1993, 0
    %v2169 = vsel %vm2080, %v1995, 0
    %v2172 = vsel %vm2080, %v1997, 0
    %v2175 = vsel %vm2080, %v1999, 0
    %v2178 = vsel %vm2080, %v2001, 0
    %v2181 = vsel %vm2080, %v2003, 0
    %v2184 = vsel %vm2080, %v2005, 0
    %v2187 = vsel %vm2080, %v2007, 0
    %v2190 = vsel %vm2080, %v2009, 0
    %v2193 = vsel %vm2080, %v2011, 0
    %v2196 = vsel %vm2080, %v2013, 0
    %v2199 = vsel %vm2080, %v2015, 0
    %v2202 = vsel %vm2080, %v2017, 0
    %v2205 = vsel %vm2080, %v2019, 0
    %v2208 = vsel %vm2080, %v2021, 0
    %v2211 = vsel %vm2080, %v2023, 0
    %v2214 = vsel %vm2080, %v2025, 0
    %v2217 = vsel %vm2080, %v2027, 0
    %v2220 = vsel %vm2080, %v2029, 0
    %v2223 = vsel %vm2080, %v2031, 0
    %vm2225 = vcmask 1041408
    %v2227 = vsel %vm2225, %v1547, 0
    %2229 = vmatprep.subr.bf16.mxu0 0
    %2230 = vmatpush1.bf16.msra.mxu0 %v1546
    %2231 = vmatprep.subr.bf16.mxu0 0
    %2232 = vmatpush1.bf16.msra.mxu0 %v1545
    %2233 = vmatprep.subr.bf16.mxu0 0
    %2234 = vmatpush1.bf16.msra.mxu0 %v1544
    %2235 = vmatprep.subr.bf16.mxu0 0
    %2236 = vmatpush1.bf16.msra.mxu0 %v1543
    %2237 = vmatprep.subr.bf16.mxu0 0
    %2238 = vmatpush1.bf16.msra.mxu0 %v1542
    %2239 = vmatprep.subr.bf16.mxu0 0
    %2240 = vmatpush1.bf16.msra.mxu0 %v1541
    %2241 = vmatprep.subr.bf16.mxu0 0
    %2242 = vmatpush1.bf16.msra.mxu0 %v1540
    %2243 = vmatprep.subr.bf16.mxu0 0
    %2244 = vmatpush1.bf16.msra.mxu0 %v1539
    %2245 = vmatprep.subr.bf16.mxu0 0
    %2246 = vmatpush2.bf16.msra.mxu0 0
    %2247 = vmatprep.subr.bf16.mxu0 0
    %2248 = vmatpush2.bf16.msra.mxu0 0
    %2249 = vmatprep.subr.bf16.mxu0 0
    %2250 = vmatpush2.bf16.msra.mxu0 0
    %2251 = vmatprep.subr.bf16.mxu0 0
    %2252 = vmatpush2.bf16.msra.mxu0 0
    %2253 = vmatprep.subr.bf16.mxu0 0
    %2254 = vmatpush2.bf16.msra.mxu0 0
    %2255 = vmatprep.subr.bf16.mxu0 0
    %2256 = vmatpush2.bf16.msra.mxu0 0
    %2257 = vmatprep.subr.bf16.mxu0 0
    %2258 = vmatpush2.bf16.msra.mxu0 0
    %2259 = vmatprep.subr.bf16.mxu0 0
    %2260 = vmatpush2.bf16.msra.mxu0 %v2227
    %2261 = vmatprep.mubr.bf16.mxu0 %v2082
    %2262 = vmatmul.mubr.bf16.gmra.mxu0 %v1936
    %v2263 = vpop.f32.mrf.mxu0
    %v2264 = vadd.f32 0.0, %v2263
    %v2265 = vpop.f32.mrf.mxu0
    %v2266 = vpop.f32.mrf.mxu0
    %v2267 = vadd.f32 0.0, %v2266
    %v2268 = vpop.f32.mrf.mxu0
    %2269 = vmatprep.mubr.bf16.mxu0 %v2085
    %2270 = vmatmul.mubr.bf16.gmra.mxu0 %v1938
    %v2271 = vpop.f32.mrf.mxu0
    %v2272 = vadd.f32 0.0, %v2271
    %v2273 = vpop.f32.mrf.mxu0
    %v2274 = vpop.f32.mrf.mxu0
    %v2275 = vadd.f32 0.0, %v2274
    %v2276 = vpop.f32.mrf.mxu0
    %2277 = vmatprep.mubr.bf16.mxu0 %v2088
    %2278 = vmatmul.mubr.bf16.gmra.mxu0 %v1940
    %v2279 = vpop.f32.mrf.mxu0
    %v2280 = vadd.f32 0.0, %v2279
    %v2281 = vpop.f32.mrf.mxu0
    %v2282 = vpop.f32.mrf.mxu0
    %v2283 = vadd.f32 0.0, %v2282
    %v2284 = vpop.f32.mrf.mxu0
    %2285 = vmatprep.mubr.bf16.mxu0 %v2091
    %2286 = vmatmul.mubr.bf16.gmra.mxu0 %v1942
    %v2287 = vpop.f32.mrf.mxu0
    %v2288 = vadd.f32 0.0, %v2287
    %v2289 = vpop.f32.mrf.mxu0
    %v2290 = vpop.f32.mrf.mxu0
    %v2291 = vadd.f32 0.0, %v2290
    %v2292 = vpop.f32.mrf.mxu0
    %2293 = vmatprep.mubr.bf16.mxu0 %v2094
    %2294 = vmatmul.mubr.bf16.gmra.mxu0 %v1944
    %v2295 = vpop.f32.mrf.mxu0
    %v2296 = vadd.f32 0.0, %v2295
    %v2297 = vpop.f32.mrf.mxu0
    %v2298 = vpop.f32.mrf.mxu0
    %v2299 = vadd.f32 0.0, %v2298
    %v2300 = vpop.f32.mrf.mxu0
    %2301 = vmatprep.mubr.bf16.mxu0 %v2097
    %2302 = vmatmul.mubr.bf16.gmra.mxu0 %v1946
    %v2303 = vpop.f32.mrf.mxu0
    %v2304 = vadd.f32 0.0, %v2303
    %v2305 = vpop.f32.mrf.mxu0
    %v2306 = vpop.f32.mrf.mxu0
    %v2307 = vadd.f32 0.0, %v2306
    %v2308 = vpop.f32.mrf.mxu0
    %2309 = vmatprep.mubr.bf16.mxu0 %v2100
    %2310 = vmatmul.mubr.bf16.gmra.mxu0 %v1948
    %v2311 = vpop.f32.mrf.mxu0
    %v2312 = vadd.f32 0.0, %v2311
    %v2313 = vpop.f32.mrf.mxu0
    %v2314 = vpop.f32.mrf.mxu0
    %v2315 = vadd.f32 0.0, %v2314
    %v2316 = vpop.f32.mrf.mxu0
    %2317 = vmatprep.mubr.bf16.mxu0 %v2103
    %2318 = vmatmul.mubr.bf16.gmra.mxu0 %v1950
    %v2319 = vpop.f32.mrf.mxu0
    %v2320 = vadd.f32 0.0, %v2319
    %v2321 = vpop.f32.mrf.mxu0
    %v2322 = vpop.f32.mrf.mxu0
    %v2323 = vadd.f32 0.0, %v2322
    %v2324 = vpop.f32.mrf.mxu0
    %2325 = vmatprep.mubr.bf16.mxu0 %v2106
    %2326 = vmatmul.mubr.bf16.gmra.mxu0 %v1952
    %v2327 = vpop.f32.mrf.mxu0
    %v2328 = vadd.f32 0.0, %v2327
    %v2329 = vpop.f32.mrf.mxu0
    %v2330 = vpop.f32.mrf.mxu0
    %v2331 = vadd.f32 0.0, %v2330
    %v2332 = vpop.f32.mrf.mxu0
    %2333 = vmatprep.mubr.bf16.mxu0 %v2109
    %2334 = vmatmul.mubr.bf16.gmra.mxu0 %v1954
    %v2335 = vpop.f32.mrf.mxu0
    %v2336 = vadd.f32 0.0, %v2335
    %v2337 = vpop.f32.mrf.mxu0
    %v2338 = vpop.f32.mrf.mxu0
    %v2339 = vadd.f32 0.0, %v2338
    %v2340 = vpop.f32.mrf.mxu0
    %2341 = vmatprep.mubr.bf16.mxu0 %v2112
    %2342 = vmatmul.mubr.bf16.gmra.mxu0 %v1956
    %v2343 = vpop.f32.mrf.mxu0
    %v2344 = vadd.f32 0.0, %v2343
    %v2345 = vpop.f32.mrf.mxu0
    %v2346 = vpop.f32.mrf.mxu0
    %v2347 = vadd.f32 0.0, %v2346
    %v2348 = vpop.f32.mrf.mxu0
    %2349 = vmatprep.mubr.bf16.mxu0 %v2115
    %2350 = vmatmul.mubr.bf16.gmra.mxu0 %v1958
    %v2351 = vpop.f32.mrf.mxu0
    %v2352 = vadd.f32 0.0, %v2351
    %v2353 = vpop.f32.mrf.mxu0
    %v2354 = vpop.f32.mrf.mxu0
    %v2355 = vadd.f32 0.0, %v2354
    %v2356 = vpop.f32.mrf.mxu0
    %2357 = vmatprep.mubr.bf16.mxu0 %v2118
    %2358 = vmatmul.mubr.bf16.gmra.mxu0 %v1960
    %v2359 = vpop.f32.mrf.mxu0
    %v2360 = vadd.f32 0.0, %v2359
    %v2361 = vpop.f32.mrf.mxu0
    %v2362 = vpop.f32.mrf.mxu0
    %v2363 = vadd.f32 0.0, %v2362
    %v2364 = vpop.f32.mrf.mxu0
    %2365 = vmatprep.mubr.bf16.mxu0 %v2121
    %2366 = vmatmul.mubr.bf16.gmra.mxu0 %v1962
    %v2367 = vpop.f32.mrf.mxu0
    %v2368 = vadd.f32 0.0, %v2367
    %v2369 = vpop.f32.mrf.mxu0
    %v2370 = vpop.f32.mrf.mxu0
    %v2371 = vadd.f32 0.0, %v2370
    %v2372 = vpop.f32.mrf.mxu0
    %2373 = vmatprep.mubr.bf16.mxu0 %v2124
    %2374 = vmatmul.mubr.bf16.gmra.mxu0 %v1964
    %v2375 = vpop.f32.mrf.mxu0
    %v2376 = vadd.f32 0.0, %v2375
    %v2377 = vpop.f32.mrf.mxu0
    %v2378 = vpop.f32.mrf.mxu0
    %v2379 = vadd.f32 0.0, %v2378
    %v2380 = vpop.f32.mrf.mxu0
    %2381 = vmatprep.mubr.bf16.mxu0 %v2127
    %2382 = vmatmul.mubr.bf16.gmra.mxu0 %v1966
    %v2383 = vpop.f32.mrf.mxu0
    %v2384 = vadd.f32 0.0, %v2383
    %v2385 = vpop.f32.mrf.mxu0
    %v2386 = vpop.f32.mrf.mxu0
    %v2387 = vadd.f32 0.0, %v2386
    %v2388 = vpop.f32.mrf.mxu0
    %2389 = vmatprep.mubr.bf16.mxu0 %v2130
    %2390 = vmatmul.mubr.bf16.gmra.mxu0 %v1968
    %v2391 = vpop.f32.mrf.mxu0
    %v2392 = vadd.f32 0.0, %v2391
    %v2393 = vpop.f32.mrf.mxu0
    %v2394 = vpop.f32.mrf.mxu0
    %v2395 = vadd.f32 0.0, %v2394
    %v2396 = vpop.f32.mrf.mxu0
    %2397 = vmatprep.mubr.bf16.mxu0 %v2133
    %2398 = vmatmul.mubr.bf16.gmra.mxu0 %v1970
    %v2399 = vpop.f32.mrf.mxu0
    %v2400 = vadd.f32 0.0, %v2399
    %v2401 = vpop.f32.mrf.mxu0
    %v2402 = vpop.f32.mrf.mxu0
    %v2403 = vadd.f32 0.0, %v2402
    %v2404 = vpop.f32.mrf.mxu0
    %2405 = vmatprep.mubr.bf16.mxu0 %v2136
    %2406 = vmatmul.mubr.bf16.gmra.mxu0 %v1972
    %v2407 = vpop.f32.mrf.mxu0
    %v2408 = vadd.f32 0.0, %v2407
    %v2409 = vpop.f32.mrf.mxu0
    %v2410 = vpop.f32.mrf.mxu0
    %v2411 = vadd.f32 0.0, %v2410
    %v2412 = vpop.f32.mrf.mxu0
    %2413 = vmatprep.mubr.bf16.mxu0 %v2139
    %2414 = vmatmul.mubr.bf16.gmra.mxu0 %v1974
    %v2415 = vpop.f32.mrf.mxu0
    %v2416 = vadd.f32 0.0, %v2415
    %v2417 = vpop.f32.mrf.mxu0
    %v2418 = vpop.f32.mrf.mxu0
    %v2419 = vadd.f32 0.0, %v2418
    %v2420 = vpop.f32.mrf.mxu0
    %2421 = vmatprep.mubr.bf16.mxu0 %v2142
    %2422 = vmatmul.mubr.bf16.gmra.mxu0 %v1976
    %v2423 = vpop.f32.mrf.mxu0
    %v2424 = vadd.f32 0.0, %v2423
    %v2425 = vpop.f32.mrf.mxu0
    %v2426 = vpop.f32.mrf.mxu0
    %v2427 = vadd.f32 0.0, %v2426
    %v2428 = vpop.f32.mrf.mxu0
    %2429 = vmatprep.mubr.bf16.mxu0 %v2145
    %2430 = vmatmul.mubr.bf16.gmra.mxu0 %v1978
    %v2431 = vpop.f32.mrf.mxu0
    %v2432 = vadd.f32 0.0, %v2431
    %v2433 = vpop.f32.mrf.mxu0
    %v2434 = vpop.f32.mrf.mxu0
    %v2435 = vadd.f32 0.0, %v2434
    %v2436 = vpop.f32.mrf.mxu0
    %2437 = vmatprep.mubr.bf16.mxu0 %v2148
    %2438 = vmatmul.mubr.bf16.gmra.mxu0 %v1980
    %v2439 = vpop.f32.mrf.mxu0
    %v2440 = vadd.f32 0.0, %v2439
    %v2441 = vpop.f32.mrf.mxu0
    %v2442 = vpop.f32.mrf.mxu0
    %v2443 = vadd.f32 0.0, %v2442
    %v2444 = vpop.f32.mrf.mxu0
    %2445 = vmatprep.mubr.bf16.mxu0 %v2151
    %2446 = vmatmul.mubr.bf16.gmra.mxu0 %v1982
    %v2447 = vpop.f32.mrf.mxu0
    %v2448 = vadd.f32 0.0, %v2447
    %v2449 = vpop.f32.mrf.mxu0
    %v2450 = vpop.f32.mrf.mxu0
    %v2451 = vadd.f32 0.0, %v2450
    %v2452 = vpop.f32.mrf.mxu0
    %2453 = vmatprep.mubr.bf16.mxu0 %v2154
    %2454 = vmatmul.mubr.bf16.gmra.mxu0 %v1984
    %v2455 = vpop.f32.mrf.mxu0
    %v2456 = vadd.f32 0.0, %v2455
    %v2457 = vpop.f32.mrf.mxu0
    %v2458 = vpop.f32.mrf.mxu0
    %v2459 = vadd.f32 0.0, %v2458
    %v2460 = vpop.f32.mrf.mxu0
    %2461 = vmatprep.mubr.bf16.mxu0 %v2157
    %2462 = vmatmul.mubr.bf16.gmra.mxu0 %v1986
    %v2463 = vpop.f32.mrf.mxu0
    %v2464 = vadd.f32 0.0, %v2463
    %v2465 = vpop.f32.mrf.mxu0
    %v2466 = vpop.f32.mrf.mxu0
    %v2467 = vadd.f32 0.0, %v2466
    %v2468 = vpop.f32.mrf.mxu0
    %2469 = vmatprep.mubr.bf16.mxu0 %v2160
    %2470 = vmatmul.mubr.bf16.gmra.mxu0 %v1988
    %v2471 = vpop.f32.mrf.mxu0
    %v2472 = vadd.f32 0.0, %v2471
    %v2473 = vpop.f32.mrf.mxu0
    %v2474 = vpop.f32.mrf.mxu0
    %v2475 = vadd.f32 0.0, %v2474
    %v2476 = vpop.f32.mrf.mxu0
    %2477 = vmatprep.mubr.bf16.mxu0 %v2163
    %2478 = vmatmul.mubr.bf16.gmra.mxu0 %v1990
    %v2479 = vpop.f32.mrf.mxu0
    %v2480 = vadd.f32 0.0, %v2479
    %v2481 = vpop.f32.mrf.mxu0
    %v2482 = vpop.f32.mrf.mxu0
    %v2483 = vadd.f32 0.0, %v2482
    %v2484 = vpop.f32.mrf.mxu0
    %2485 = vmatprep.mubr.bf16.mxu0 %v2166
    %2486 = vmatmul.mubr.bf16.gmra.mxu0 %v1992
    %v2487 = vpop.f32.mrf.mxu0
    %v2488 = vadd.f32 0.0, %v2487
    %v2489 = vpop.f32.mrf.mxu0
    %v2490 = vpop.f32.mrf.mxu0
    %v2491 = vadd.f32 0.0, %v2490
    %v2492 = vpop.f32.mrf.mxu0
    %2493 = vmatprep.mubr.bf16.mxu0 %v2169
    %2494 = vmatmul.mubr.bf16.gmra.mxu0 %v1994
    %v2495 = vpop.f32.mrf.mxu0
    %v2496 = vadd.f32 0.0, %v2495
    %v2497 = vpop.f32.mrf.mxu0
    %v2498 = vpop.f32.mrf.mxu0
    %v2499 = vadd.f32 0.0, %v2498
    %v2500 = vpop.f32.mrf.mxu0
    %2501 = vmatprep.mubr.bf16.mxu0 %v2172
    %2502 = vmatmul.mubr.bf16.gmra.mxu0 %v1996
    %v2503 = vpop.f32.mrf.mxu0
    %v2504 = vadd.f32 0.0, %v2503
    %v2505 = vpop.f32.mrf.mxu0
    %v2506 = vpop.f32.mrf.mxu0
    %v2507 = vadd.f32 0.0, %v2506
    %v2508 = vpop.f32.mrf.mxu0
    %2509 = vmatprep.mubr.bf16.mxu0 %v2175
    %2510 = vmatmul.mubr.bf16.gmra.mxu0 %v1998
    %v2511 = vpop.f32.mrf.mxu0
    %v2512 = vadd.f32 0.0, %v2511
    %v2513 = vpop.f32.mrf.mxu0
    %v2514 = vpop.f32.mrf.mxu0
    %v2515 = vadd.f32 0.0, %v2514
    %v2516 = vpop.f32.mrf.mxu0
    %2517 = vmatprep.mubr.bf16.mxu0 %v2178
    %2518 = vmatmul.mubr.bf16.gmra.mxu0 %v2000
    %v2519 = vpop.f32.mrf.mxu0
    %v2520 = vadd.f32 0.0, %v2519
    %v2521 = vpop.f32.mrf.mxu0
    %v2522 = vpop.f32.mrf.mxu0
    %v2523 = vadd.f32 0.0, %v2522
    %v2524 = vpop.f32.mrf.mxu0
    %2525 = vmatprep.mubr.bf16.mxu0 %v2181
    %2526 = vmatmul.mubr.bf16.gmra.mxu0 %v2002
    %v2527 = vpop.f32.mrf.mxu0
    %v2528 = vadd.f32 0.0, %v2527
    %v2529 = vpop.f32.mrf.mxu0
    %v2530 = vpop.f32.mrf.mxu0
    %v2531 = vadd.f32 0.0, %v2530
    %v2532 = vpop.f32.mrf.mxu0
    %2533 = vmatprep.mubr.bf16.mxu0 %v2184
    %2534 = vmatmul.mubr.bf16.gmra.mxu0 %v2004
    %v2535 = vpop.f32.mrf.mxu0
    %v2536 = vadd.f32 0.0, %v2535
    %v2537 = vpop.f32.mrf.mxu0
    %v2538 = vpop.f32.mrf.mxu0
    %v2539 = vadd.f32 0.0, %v2538
    %v2540 = vpop.f32.mrf.mxu0
    %2541 = vmatprep.mubr.bf16.mxu0 %v2187
    %2542 = vmatmul.mubr.bf16.gmra.mxu0 %v2006
    %v2543 = vpop.f32.mrf.mxu0
    %v2544 = vadd.f32 0.0, %v2543
    %v2545 = vpop.f32.mrf.mxu0
    %v2546 = vpop.f32.mrf.mxu0
    %v2547 = vadd.f32 0.0, %v2546
    %v2548 = vpop.f32.mrf.mxu0
    %2549 = vmatprep.mubr.bf16.mxu0 %v2190
    %2550 = vmatmul.mubr.bf16.gmra.mxu0 %v2008
    %v2551 = vpop.f32.mrf.mxu0
    %v2552 = vadd.f32 0.0, %v2551
    %v2553 = vpop.f32.mrf.mxu0
    %v2554 = vpop.f32.mrf.mxu0
    %v2555 = vadd.f32 0.0, %v2554
    %v2556 = vpop.f32.mrf.mxu0
    %2557 = vmatprep.mubr.bf16.mxu0 %v2193
    %2558 = vmatmul.mubr.bf16.gmra.mxu0 %v2010
    %v2559 = vpop.f32.mrf.mxu0
    %v2560 = vadd.f32 0.0, %v2559
    %v2561 = vpop.f32.mrf.mxu0
    %v2562 = vpop.f32.mrf.mxu0
    %v2563 = vadd.f32 0.0, %v2562
    %v2564 = vpop.f32.mrf.mxu0
    %2565 = vmatprep.mubr.bf16.mxu0 %v2196
    %2566 = vmatmul.mubr.bf16.gmra.mxu0 %v2012
    %v2567 = vpop.f32.mrf.mxu0
    %v2568 = vadd.f32 0.0, %v2567
    %v2569 = vpop.f32.mrf.mxu0
    %v2570 = vpop.f32.mrf.mxu0
    %v2571 = vadd.f32 0.0, %v2570
    %v2572 = vpop.f32.mrf.mxu0
    %2573 = vmatprep.mubr.bf16.mxu0 %v2199
    %2574 = vmatmul.mubr.bf16.gmra.mxu0 %v2014
    %v2575 = vpop.f32.mrf.mxu0
    %v2576 = vadd.f32 0.0, %v2575
    %v2577 = vpop.f32.mrf.mxu0
    %v2578 = vpop.f32.mrf.mxu0
    %v2579 = vadd.f32 0.0, %v2578
    %v2580 = vpop.f32.mrf.mxu0
    %2581 = vmatprep.mubr.bf16.mxu0 %v2202
    %2582 = vmatmul.mubr.bf16.gmra.mxu0 %v2016
    %v2583 = vpop.f32.mrf.mxu0
    %v2584 = vadd.f32 0.0, %v2583
    %v2585 = vpop.f32.mrf.mxu0
    %v2586 = vpop.f32.mrf.mxu0
    %v2587 = vadd.f32 0.0, %v2586
    %v2588 = vpop.f32.mrf.mxu0
    %2589 = vmatprep.mubr.bf16.mxu0 %v2205
    %2590 = vmatmul.mubr.bf16.gmra.mxu0 %v2018
    %v2591 = vpop.f32.mrf.mxu0
    %v2592 = vadd.f32 0.0, %v2591
    %v2593 = vpop.f32.mrf.mxu0
    %v2594 = vpop.f32.mrf.mxu0
    %v2595 = vadd.f32 0.0, %v2594
    %v2596 = vpop.f32.mrf.mxu0
    %2597 = vmatprep.mubr.bf16.mxu0 %v2208
    %2598 = vmatmul.mubr.bf16.gmra.mxu0 %v2020
    %v2599 = vpop.f32.mrf.mxu0
    %v2600 = vadd.f32 0.0, %v2599
    %v2601 = vpop.f32.mrf.mxu0
    %v2602 = vpop.f32.mrf.mxu0
    %v2603 = vadd.f32 0.0, %v2602
    %v2604 = vpop.f32.mrf.mxu0
    %2605 = vmatprep.mubr.bf16.mxu0 %v2211
    %2606 = vmatmul.mubr.bf16.gmra.mxu0 %v2022
    %v2607 = vpop.f32.mrf.mxu0
    %v2608 = vadd.f32 0.0, %v2607
    %v2609 = vpop.f32.mrf.mxu0
    %v2610 = vpop.f32.mrf.mxu0
    %v2611 = vadd.f32 0.0, %v2610
    %v2612 = vpop.f32.mrf.mxu0
    %2613 = vmatprep.mubr.bf16.mxu0 %v2214
    %2614 = vmatmul.mubr.bf16.gmra.mxu0 %v2024
    %v2615 = vpop.f32.mrf.mxu0
    %v2616 = vadd.f32 0.0, %v2615
    %v2617 = vpop.f32.mrf.mxu0
    %v2618 = vpop.f32.mrf.mxu0
    %v2619 = vadd.f32 0.0, %v2618
    %v2620 = vpop.f32.mrf.mxu0
    %2621 = vmatprep.mubr.bf16.mxu0 %v2217
    %2622 = vmatmul.mubr.bf16.gmra.mxu0 %v2026
    %v2623 = vpop.f32.mrf.mxu0
    %v2624 = vadd.f32 0.0, %v2623
    %v2625 = vpop.f32.mrf.mxu0
    %v2626 = vpop.f32.mrf.mxu0
    %v2627 = vadd.f32 0.0, %v2626
    %v2628 = vpop.f32.mrf.mxu0
    %2629 = vmatprep.mubr.bf16.mxu0 %v2220
    %2630 = vmatmul.mubr.bf16.gmra.mxu0 %v2028
    %v2631 = vpop.f32.mrf.mxu0
    %v2632 = vadd.f32 0.0, %v2631
    %v2633 = vpop.f32.mrf.mxu0
    %v2634 = vpop.f32.mrf.mxu0
    %v2635 = vadd.f32 0.0, %v2634
    %v2636 = vpop.f32.mrf.mxu0
    %2637 = vmatprep.mubr.bf16.mxu0 %v2223
    %2638 = vmatmul.mubr.bf16.gmra.mxu0 %v2030
    %v2639 = vpop.f32.mrf.mxu0
    %v2640 = vadd.f32 0.0, %v2639
    %v2641 = vpop.f32.mrf.mxu0
    %v2642 = vpop.f32.mrf.mxu0
    %v2643 = vadd.f32 0.0, %v2642
    %v2644 = vpop.f32.mrf.mxu0
    %2645 = vdwg.mxu0
    %v2646 = vpack.c.bf16 %v2267, %v2264
    %v2647 = vpack.c.bf16 %v2275, %v2272
    %v2648 = vpack.c.bf16 %v2283, %v2280
    %v2649 = vpack.c.bf16 %v2291, %v2288
    %v2650 = vpack.c.bf16 %v2299, %v2296
    %v2651 = vpack.c.bf16 %v2307, %v2304
    %v2652 = vpack.c.bf16 %v2315, %v2312
    %v2653 = vpack.c.bf16 %v2323, %v2320
    %v2654 = vpack.c.bf16 %v2331, %v2328
    %v2655 = vpack.c.bf16 %v2339, %v2336
    %v2656 = vpack.c.bf16 %v2347, %v2344
    %v2657 = vpack.c.bf16 %v2355, %v2352
    %v2658 = vpack.c.bf16 %v2363, %v2360
    %v2659 = vpack.c.bf16 %v2371, %v2368
    %v2660 = vpack.c.bf16 %v2379, %v2376
    %v2661 = vpack.c.bf16 %v2387, %v2384
    %v2662 = vpack.c.bf16 %v2395, %v2392
    %v2663 = vpack.c.bf16 %v2403, %v2400
    %v2664 = vpack.c.bf16 %v2411, %v2408
    %v2665 = vpack.c.bf16 %v2419, %v2416
    %v2666 = vpack.c.bf16 %v2427, %v2424
    %v2667 = vpack.c.bf16 %v2435, %v2432
    %v2668 = vpack.c.bf16 %v2443, %v2440
    %v2669 = vpack.c.bf16 %v2451, %v2448
    %v2670 = vpack.c.bf16 %v2459, %v2456
    %v2671 = vpack.c.bf16 %v2467, %v2464
    %v2672 = vpack.c.bf16 %v2475, %v2472
    %v2673 = vpack.c.bf16 %v2483, %v2480
    %v2674 = vpack.c.bf16 %v2491, %v2488
    %v2675 = vpack.c.bf16 %v2499, %v2496
    %v2676 = vpack.c.bf16 %v2507, %v2504
    %v2677 = vpack.c.bf16 %v2515, %v2512
    %v2678 = vpack.c.bf16 %v2523, %v2520
    %v2679 = vpack.c.bf16 %v2531, %v2528
    %v2680 = vpack.c.bf16 %v2539, %v2536
    %v2681 = vpack.c.bf16 %v2547, %v2544
    %v2682 = vpack.c.bf16 %v2555, %v2552
    %v2683 = vpack.c.bf16 %v2563, %v2560
    %v2684 = vpack.c.bf16 %v2571, %v2568
    %v2685 = vpack.c.bf16 %v2579, %v2576
    %v2686 = vpack.c.bf16 %v2587, %v2584
    %v2687 = vpack.c.bf16 %v2595, %v2592
    %v2688 = vpack.c.bf16 %v2603, %v2600
    %v2689 = vpack.c.bf16 %v2611, %v2608
    %v2690 = vpack.c.bf16 %v2619, %v2616
    %v2691 = vpack.c.bf16 %v2627, %v2624
    %v2692 = vpack.c.bf16 %v2635, %v2632
    %v2693 = vpack.c.bf16 %v2643, %v2640
    %v2694 = vld [vmem:[%s3] sm:$0xf]
    %v2695 = vld [vmem:[%s3 + $0x4] sm:$0xf]
    %v2696 = vld [vmem:[%s3 + $0x8] sm:$0xf]
    %v2697 = vld [vmem:[%s3 + $0xc] sm:$0xf]
    %s2698 = scalar_lea.vmem %s3, 16
    %v2699 = vld [vmem:[%s2698] sm:$0xf]
    %v2700 = vld [vmem:[%s2698 + $0x4] sm:$0xf]
    %v2701 = vld [vmem:[%s2698 + $0x8] sm:$0xf]
    %v2702 = vld [vmem:[%s2698 + $0xc] sm:$0xf]
    %v2707 = vunpack.c.l.b16 %v2699
    %v2708 = vunpack.c.l.b16 %v2700
    %v2709 = vunpack.c.l.b16 %v2701
    %v2710 = vunpack.c.l.b16 %v2702
    %v2711 = vpack.c.b16 %v2708, %v2707
    %v2712 = vpack.c.b16 %v2710, %v2709
    %vm2715 = vcmask 261120
    %v2717 = vsel %vm2715, %v2649, 0
    %v2720 = vsel %vm2715, %v2650, 0
    %v2723 = vsel %vm2715, %v2651, 0
    %2725 = vmatprep.subr.bf16.mxu0 0
    %2726 = vmatpush1.bf16.msra.mxu0 0
    %2727 = vmatprep.subr.bf16.mxu0 0
    %2728 = vmatpush1.bf16.msra.mxu0 0
    %2729 = vmatprep.subr.bf16.mxu0 0
    %2730 = vmatpush1.bf16.msra.mxu0 0
    %2731 = vmatprep.subr.bf16.mxu0 0
    %2732 = vmatpush1.bf16.msra.mxu0 0
    %2733 = vmatprep.subr.bf16.mxu0 0
    %2734 = vmatpush1.bf16.msra.mxu0 0
    %2735 = vmatprep.subr.bf16.mxu0 0
    %2736 = vmatpush1.bf16.msra.mxu0 0
    %2737 = vmatprep.subr.bf16.mxu0 0
    %2738 = vmatpush1.bf16.msra.mxu0 %v2712
    %2739 = vmatprep.subr.bf16.mxu0 0
    %2740 = vmatpush1.bf16.msra.mxu0 %v2711
    %2741 = vmatprep.subr.bf16.mxu0 0
    %2742 = vmatpush2.bf16.msra.mxu0 0
    %2743 = vmatprep.subr.bf16.mxu0 0
    %2744 = vmatpush2.bf16.msra.mxu0 0
    %2745 = vmatprep.subr.bf16.mxu0 0
    %2746 = vmatpush2.bf16.msra.mxu0 0
    %2747 = vmatprep.subr.bf16.mxu0 0
    %2748 = vmatpush2.bf16.msra.mxu0 0
    %2749 = vmatprep.subr.bf16.mxu0 0
    %2750 = vmatpush2.bf16.msra.mxu0 0
    %2751 = vmatprep.subr.bf16.mxu0 0
    %2752 = vmatpush2.bf16.msra.mxu0 0
    %2753 = vmatprep.subr.bf16.mxu0 0
    %2754 = vmatpush2.bf16.msra.mxu0 0
    %2755 = vmatprep.subr.bf16.mxu0 0
    %2756 = vmatpush2.bf16.msra.mxu0 0
    %2757 = vmatprep.mubr.bf16.mxu0 0
    %2758 = vmatmul.mubr.bf16.gmra.mxu0 %v2717
    %v2759 = vpop.f32.mrf.mxu0
    %v2760 = vadd.f32 0.0, %v2759
    %v2761 = vpop.f32.mrf.mxu0
    %v2762 = vpop.f32.mrf.mxu0
    %v2763 = vadd.f32 0.0, %v2762
    %v2764 = vpop.f32.mrf.mxu0
    %2765 = vmatprep.mubr.bf16.mxu0 0
    %2766 = vmatmul.mubr.bf16.gmra.mxu0 %v2720
    %v2767 = vpop.f32.mrf.mxu0
    %v2768 = vadd.f32 0.0, %v2767
    %v2769 = vpop.f32.mrf.mxu0
    %v2770 = vpop.f32.mrf.mxu0
    %v2771 = vadd.f32 0.0, %v2770
    %v2772 = vpop.f32.mrf.mxu0
    %2773 = vmatprep.mubr.bf16.mxu0 0
    %2774 = vmatmul.mubr.bf16.gmra.mxu0 %v2723
    %v2775 = vpop.f32.mrf.mxu0
    %v2776 = vadd.f32 0.0, %v2775
    %v2777 = vpop.f32.mrf.mxu0
    %v2778 = vpop.f32.mrf.mxu0
    %v2779 = vadd.f32 0.0, %v2778
    %v2780 = vpop.f32.mrf.mxu0
    %2781 = vdwg.mxu0
    %v2786 = vunpack.c.l.b16 %v2694
    %v2787 = vunpack.c.l.b16 %v2695
    %v2788 = vunpack.c.l.b16 %v2696
    %v2789 = vunpack.c.l.b16 %v2697
    %v2790 = vpack.c.b16 %v2787, %v2786
    %v2791 = vpack.c.b16 %v2789, %v2788
    %v2795 = vsel %vm2715, %v2646, 0
    %v2798 = vsel %vm2715, %v2647, 0
    %v2801 = vsel %vm2715, %v2648, 0
    %2803 = vmatprep.subr.bf16.mxu0 0
    %2804 = vmatpush1.bf16.msra.mxu0 0
    %2805 = vmatprep.subr.bf16.mxu0 0
    %2806 = vmatpush1.bf16.msra.mxu0 0
    %2807 = vmatprep.subr.bf16.mxu0 0
    %2808 = vmatpush1.bf16.msra.mxu0 0
    %2809 = vmatprep.subr.bf16.mxu0 0
    %2810 = vmatpush1.bf16.msra.mxu0 0
    %2811 = vmatprep.subr.bf16.mxu0 0
    %2812 = vmatpush1.bf16.msra.mxu0 0
    %2813 = vmatprep.subr.bf16.mxu0 0
    %2814 = vmatpush1.bf16.msra.mxu0 0
    %2815 = vmatprep.subr.bf16.mxu0 0
    %2816 = vmatpush1.bf16.msra.mxu0 %v2791
    %2817 = vmatprep.subr.bf16.mxu0 0
    %2818 = vmatpush1.bf16.msra.mxu0 %v2790
    %2819 = vmatprep.subr.bf16.mxu0 0
    %2820 = vmatpush2.bf16.msra.mxu0 0
    %2821 = vmatprep.subr.bf16.mxu0 0
    %2822 = vmatpush2.bf16.msra.mxu0 0
    %2823 = vmatprep.subr.bf16.mxu0 0
    %2824 = vmatpush2.bf16.msra.mxu0 0
    %2825 = vmatprep.subr.bf16.mxu0 0
    %2826 = vmatpush2.bf16.msra.mxu0 0
    %2827 = vmatprep.subr.bf16.mxu0 0
    %2828 = vmatpush2.bf16.msra.mxu0 0
    %2829 = vmatprep.subr.bf16.mxu0 0
    %2830 = vmatpush2.bf16.msra.mxu0 0
    %2831 = vmatprep.subr.bf16.mxu0 0
    %2832 = vmatpush2.bf16.msra.mxu0 0
    %2833 = vmatprep.subr.bf16.mxu0 0
    %2834 = vmatpush2.bf16.msra.mxu0 0
    %2835 = vmatprep.mubr.bf16.mxu0 0
    %2836 = vmatmul.mubr.bf16.gmra.mxu0 %v2795
    %v2837 = vpop.f32.mrf.mxu0
    %v2838 = vadd.f32 %v2760, %v2837
    %v2839 = vpop.f32.mrf.mxu0
    %v2840 = vpop.f32.mrf.mxu0
    %v2841 = vadd.f32 %v2763, %v2840
    %v2842 = vpop.f32.mrf.mxu0
    %2843 = vmatprep.mubr.bf16.mxu0 0
    %2844 = vmatmul.mubr.bf16.gmra.mxu0 %v2798
    %v2845 = vpop.f32.mrf.mxu0
    %v2846 = vadd.f32 %v2768, %v2845
    %v2847 = vpop.f32.mrf.mxu0
    %v2848 = vpop.f32.mrf.mxu0
    %v2849 = vadd.f32 %v2771, %v2848
    %v2850 = vpop.f32.mrf.mxu0
    %2851 = vmatprep.mubr.bf16.mxu0 0
    %2852 = vmatmul.mubr.bf16.gmra.mxu0 %v2801
    %v2853 = vpop.f32.mrf.mxu0
    %v2854 = vadd.f32 %v2776, %v2853
    %v2855 = vpop.f32.mrf.mxu0
    %v2856 = vpop.f32.mrf.mxu0
    %v2857 = vadd.f32 %v2779, %v2856
    %v2858 = vpop.f32.mrf.mxu0
    %2859 = vdwg.mxu0
    %s2860 = scalar_lea.vmem %s3, 32
    %v2861 = vld [vmem:[%s2860] sm:$0xf]
    %v2862 = vld [vmem:[%s2860 + $0x4] sm:$0xf]
    %v2863 = vld [vmem:[%s2860 + $0x8] sm:$0xf]
    %v2864 = vld [vmem:[%s2860 + $0xc] sm:$0xf]
    %v2869 = vunpack.c.l.b16 %v2861
    %v2870 = vunpack.c.l.b16 %v2862
    %v2871 = vunpack.c.l.b16 %v2863
    %v2872 = vunpack.c.l.b16 %v2864
    %v2873 = vpack.c.b16 %v2870, %v2869
    %v2874 = vpack.c.b16 %v2872, %v2871
    %v2878 = vsel %vm2715, %v2652, 0
    %v2881 = vsel %vm2715, %v2653, 0
    %v2884 = vsel %vm2715, %v2654, 0
    %2886 = vmatprep.subr.bf16.mxu0 0
    %2887 = vmatpush1.bf16.msra.mxu0 0
    %2888 = vmatprep.subr.bf16.mxu0 0
    %2889 = vmatpush1.bf16.msra.mxu0 0
    %2890 = vmatprep.subr.bf16.mxu0 0
    %2891 = vmatpush1.bf16.msra.mxu0 0
    %2892 = vmatprep.subr.bf16.mxu0 0
    %2893 = vmatpush1.bf16.msra.mxu0 0
    %2894 = vmatprep.subr.bf16.mxu0 0
    %2895 = vmatpush1.bf16.msra.mxu0 0
    %2896 = vmatprep.subr.bf16.mxu0 0
    %2897 = vmatpush1.bf16.msra.mxu0 0
    %2898 = vmatprep.subr.bf16.mxu0 0
    %2899 = vmatpush1.bf16.msra.mxu0 %v2874
    %2900 = vmatprep.subr.bf16.mxu0 0
    %2901 = vmatpush1.bf16.msra.mxu0 %v2873
    %2902 = vmatprep.subr.bf16.mxu0 0
    %2903 = vmatpush2.bf16.msra.mxu0 0
    %2904 = vmatprep.subr.bf16.mxu0 0
    %2905 = vmatpush2.bf16.msra.mxu0 0
    %2906 = vmatprep.subr.bf16.mxu0 0
    %2907 = vmatpush2.bf16.msra.mxu0 0
    %2908 = vmatprep.subr.bf16.mxu0 0
    %2909 = vmatpush2.bf16.msra.mxu0 0
    %2910 = vmatprep.subr.bf16.mxu0 0
    %2911 = vmatpush2.bf16.msra.mxu0 0
    %2912 = vmatprep.subr.bf16.mxu0 0
    %2913 = vmatpush2.bf16.msra.mxu0 0
    %2914 = vmatprep.subr.bf16.mxu0 0
    %2915 = vmatpush2.bf16.msra.mxu0 0
    %2916 = vmatprep.subr.bf16.mxu0 0
    %2917 = vmatpush2.bf16.msra.mxu0 0
    %2918 = vmatprep.mubr.bf16.mxu0 0
    %2919 = vmatmul.mubr.bf16.gmra.mxu0 %v2878
    %v2920 = vpop.f32.mrf.mxu0
    %v2921 = vadd.f32 0.0, %v2920
    %v2922 = vpop.f32.mrf.mxu0
    %v2923 = vpop.f32.mrf.mxu0
    %v2924 = vadd.f32 0.0, %v2923
    %v2925 = vpop.f32.mrf.mxu0
    %2926 = vmatprep.mubr.bf16.mxu0 0
    %2927 = vmatmul.mubr.bf16.gmra.mxu0 %v2881
    %v2928 = vpop.f32.mrf.mxu0
    %v2929 = vadd.f32 0.0, %v2928
    %v2930 = vpop.f32.mrf.mxu0
    %v2931 = vpop.f32.mrf.mxu0
    %v2932 = vadd.f32 0.0, %v2931
    %v2933 = vpop.f32.mrf.mxu0
    %2934 = vmatprep.mubr.bf16.mxu0 0
    %2935 = vmatmul.mubr.bf16.gmra.mxu0 %v2884
    %v2936 = vpop.f32.mrf.mxu0
    %v2937 = vadd.f32 0.0, %v2936
    %v2938 = vpop.f32.mrf.mxu0
    %v2939 = vpop.f32.mrf.mxu0
    %v2940 = vadd.f32 0.0, %v2939
    %v2941 = vpop.f32.mrf.mxu0
    %2942 = vdwg.mxu0
    %v2943 = vadd.f32 %v2838, %v2921
    %v2944 = vadd.f32 %v2841, %v2924
    %v2945 = vadd.f32 %v2846, %v2929
    %v2946 = vadd.f32 %v2849, %v2932
    %v2947 = vadd.f32 %v2854, %v2937
    %v2948 = vadd.f32 %v2857, %v2940
    %s2949 = scalar_lea.vmem %s3, 48
    %v2950 = vld [vmem:[%s2949] sm:$0xf]
    %v2951 = vld [vmem:[%s2949 + $0x4] sm:$0xf]
    %v2952 = vld [vmem:[%s2949 + $0x8] sm:$0xf]
    %v2953 = vld [vmem:[%s2949 + $0xc] sm:$0xf]
    %v2958 = vunpack.c.l.b16 %v2950
    %v2959 = vunpack.c.l.b16 %v2951
    %v2960 = vunpack.c.l.b16 %v2952
    %v2961 = vunpack.c.l.b16 %v2953
    %v2962 = vpack.c.b16 %v2959, %v2958
    %v2963 = vpack.c.b16 %v2961, %v2960
    %v2967 = vsel %vm2715, %v2655, 0
    %v2970 = vsel %vm2715, %v2656, 0
    %v2973 = vsel %vm2715, %v2657, 0
    %2975 = vmatprep.subr.bf16.mxu0 0
    %2976 = vmatpush1.bf16.msra.mxu0 0
    %2977 = vmatprep.subr.bf16.mxu0 0
    %2978 = vmatpush1.bf16.msra.mxu0 0
    %2979 = vmatprep.subr.bf16.mxu0 0
    %2980 = vmatpush1.bf16.msra.mxu0 0
    %2981 = vmatprep.subr.bf16.mxu0 0
    %2982 = vmatpush1.bf16.msra.mxu0 0
    %2983 = vmatprep.subr.bf16.mxu0 0
    %2984 = vmatpush1.bf16.msra.mxu0 0
    %2985 = vmatprep.subr.bf16.mxu0 0
    %2986 = vmatpush1.bf16.msra.mxu0 0
    %2987 = vmatprep.subr.bf16.mxu0 0
    %2988 = vmatpush1.bf16.msra.mxu0 %v2963
    %2989 = vmatprep.subr.bf16.mxu0 0
    %2990 = vmatpush1.bf16.msra.mxu0 %v2962
    %2991 = vmatprep.subr.bf16.mxu0 0
    %2992 = vmatpush2.bf16.msra.mxu0 0
    %2993 = vmatprep.subr.bf16.mxu0 0
    %2994 = vmatpush2.bf16.msra.mxu0 0
    %2995 = vmatprep.subr.bf16.mxu0 0
    %2996 = vmatpush2.bf16.msra.mxu0 0
    %2997 = vmatprep.subr.bf16.mxu0 0
    %2998 = vmatpush2.bf16.msra.mxu0 0
    %2999 = vmatprep.subr.bf16.mxu0 0
    %3000 = vmatpush2.bf16.msra.mxu0 0
    %3001 = vmatprep.subr.bf16.mxu0 0
    %3002 = vmatpush2.bf16.msra.mxu0 0
    %3003 = vmatprep.subr.bf16.mxu0 0
    %3004 = vmatpush2.bf16.msra.mxu0 0
    %3005 = vmatprep.subr.bf16.mxu0 0
    %3006 = vmatpush2.bf16.msra.mxu0 0
    %3007 = vmatprep.mubr.bf16.mxu0 0
    %3008 = vmatmul.mubr.bf16.gmra.mxu0 %v2967
    %v3009 = vpop.f32.mrf.mxu0
    %v3010 = vadd.f32 0.0, %v3009
    %v3011 = vpop.f32.mrf.mxu0
    %v3012 = vpop.f32.mrf.mxu0
    %v3013 = vadd.f32 0.0, %v3012
    %v3014 = vpop.f32.mrf.mxu0
    %3015 = vmatprep.mubr.bf16.mxu0 0
    %3016 = vmatmul.mubr.bf16.gmra.mxu0 %v2970
    %v3017 = vpop.f32.mrf.mxu0
    %v3018 = vadd.f32 0.0, %v3017
    %v3019 = vpop.f32.mrf.mxu0
    %v3020 = vpop.f32.mrf.mxu0
    %v3021 = vadd.f32 0.0, %v3020
    %v3022 = vpop.f32.mrf.mxu0
    %3023 = vmatprep.mubr.bf16.mxu0 0
    %3024 = vmatmul.mubr.bf16.gmra.mxu0 %v2973
    %v3025 = vpop.f32.mrf.mxu0
    %v3026 = vadd.f32 0.0, %v3025
    %v3027 = vpop.f32.mrf.mxu0
    %v3028 = vpop.f32.mrf.mxu0
    %v3029 = vadd.f32 0.0, %v3028
    %v3030 = vpop.f32.mrf.mxu0
    %3031 = vdwg.mxu0
    %v3032 = vadd.f32 %v2943, %v3010
    %v3033 = vadd.f32 %v2944, %v3013
    %v3034 = vadd.f32 %v2945, %v3018
    %v3035 = vadd.f32 %v2946, %v3021
    %v3036 = vadd.f32 %v2947, %v3026
    %v3037 = vadd.f32 %v2948, %v3029
    %s3038 = scalar_lea.vmem %s3, 64
    %v3039 = vld [vmem:[%s3038] sm:$0xf]
    %v3040 = vld [vmem:[%s3038 + $0x4] sm:$0xf]
    %v3041 = vld [vmem:[%s3038 + $0x8] sm:$0xf]
    %v3042 = vld [vmem:[%s3038 + $0xc] sm:$0xf]
    %v3047 = vunpack.c.l.b16 %v3039
    %v3048 = vunpack.c.l.b16 %v3040
    %v3049 = vunpack.c.l.b16 %v3041
    %v3050 = vunpack.c.l.b16 %v3042
    %v3051 = vpack.c.b16 %v3048, %v3047
    %v3052 = vpack.c.b16 %v3050, %v3049
    %v3056 = vsel %vm2715, %v2658, 0
    %v3059 = vsel %vm2715, %v2659, 0
    %v3062 = vsel %vm2715, %v2660, 0
    %3064 = vmatprep.subr.bf16.mxu0 0
    %3065 = vmatpush1.bf16.msra.mxu0 0
    %3066 = vmatprep.subr.bf16.mxu0 0
    %3067 = vmatpush1.bf16.msra.mxu0 0
    %3068 = vmatprep.subr.bf16.mxu0 0
    %3069 = vmatpush1.bf16.msra.mxu0 0
    %3070 = vmatprep.subr.bf16.mxu0 0
    %3071 = vmatpush1.bf16.msra.mxu0 0
    %3072 = vmatprep.subr.bf16.mxu0 0
    %3073 = vmatpush1.bf16.msra.mxu0 0
    %3074 = vmatprep.subr.bf16.mxu0 0
    %3075 = vmatpush1.bf16.msra.mxu0 0
    %3076 = vmatprep.subr.bf16.mxu0 0
    %3077 = vmatpush1.bf16.msra.mxu0 %v3052
    %3078 = vmatprep.subr.bf16.mxu0 0
    %3079 = vmatpush1.bf16.msra.mxu0 %v3051
    %3080 = vmatprep.subr.bf16.mxu0 0
    %3081 = vmatpush2.bf16.msra.mxu0 0
    %3082 = vmatprep.subr.bf16.mxu0 0
    %3083 = vmatpush2.bf16.msra.mxu0 0
    %3084 = vmatprep.subr.bf16.mxu0 0
    %3085 = vmatpush2.bf16.msra.mxu0 0
    %3086 = vmatprep.subr.bf16.mxu0 0
    %3087 = vmatpush2.bf16.msra.mxu0 0
    %3088 = vmatprep.subr.bf16.mxu0 0
    %3089 = vmatpush2.bf16.msra.mxu0 0
    %3090 = vmatprep.subr.bf16.mxu0 0
    %3091 = vmatpush2.bf16.msra.mxu0 0
    %3092 = vmatprep.subr.bf16.mxu0 0
    %3093 = vmatpush2.bf16.msra.mxu0 0
    %3094 = vmatprep.subr.bf16.mxu0 0
    %3095 = vmatpush2.bf16.msra.mxu0 0
    %3096 = vmatprep.mubr.bf16.mxu0 0
    %3097 = vmatmul.mubr.bf16.gmra.mxu0 %v3056
    %v3098 = vpop.f32.mrf.mxu0
    %v3099 = vadd.f32 0.0, %v3098
    %v3100 = vpop.f32.mrf.mxu0
    %v3101 = vpop.f32.mrf.mxu0
    %v3102 = vadd.f32 0.0, %v3101
    %v3103 = vpop.f32.mrf.mxu0
    %3104 = vmatprep.mubr.bf16.mxu0 0
    %3105 = vmatmul.mubr.bf16.gmra.mxu0 %v3059
    %v3106 = vpop.f32.mrf.mxu0
    %v3107 = vadd.f32 0.0, %v3106
    %v3108 = vpop.f32.mrf.mxu0
    %v3109 = vpop.f32.mrf.mxu0
    %v3110 = vadd.f32 0.0, %v3109
    %v3111 = vpop.f32.mrf.mxu0
    %3112 = vmatprep.mubr.bf16.mxu0 0
    %3113 = vmatmul.mubr.bf16.gmra.mxu0 %v3062
    %v3114 = vpop.f32.mrf.mxu0
    %v3115 = vadd.f32 0.0, %v3114
    %v3116 = vpop.f32.mrf.mxu0
    %v3117 = vpop.f32.mrf.mxu0
    %v3118 = vadd.f32 0.0, %v3117
    %v3119 = vpop.f32.mrf.mxu0
    %3120 = vdwg.mxu0
    %v3121 = vadd.f32 %v3032, %v3099
    %v3122 = vadd.f32 %v3033, %v3102
    %v3123 = vadd.f32 %v3034, %v3107
    %v3124 = vadd.f32 %v3035, %v3110
    %v3125 = vadd.f32 %v3036, %v3115
    %v3126 = vadd.f32 %v3037, %v3118
    %s3127 = scalar_lea.vmem %s3, 80
    %v3128 = vld [vmem:[%s3127] sm:$0xf]
    %v3129 = vld [vmem:[%s3127 + $0x4] sm:$0xf]
    %v3130 = vld [vmem:[%s3127 + $0x8] sm:$0xf]
    %v3131 = vld [vmem:[%s3127 + $0xc] sm:$0xf]
    %v3136 = vunpack.c.l.b16 %v3128
    %v3137 = vunpack.c.l.b16 %v3129
    %v3138 = vunpack.c.l.b16 %v3130
    %v3139 = vunpack.c.l.b16 %v3131
    %v3140 = vpack.c.b16 %v3137, %v3136
    %v3141 = vpack.c.b16 %v3139, %v3138
    %v3145 = vsel %vm2715, %v2661, 0
    %v3148 = vsel %vm2715, %v2662, 0
    %v3151 = vsel %vm2715, %v2663, 0
    %3153 = vmatprep.subr.bf16.mxu0 0
    %3154 = vmatpush1.bf16.msra.mxu0 0
    %3155 = vmatprep.subr.bf16.mxu0 0
    %3156 = vmatpush1.bf16.msra.mxu0 0
    %3157 = vmatprep.subr.bf16.mxu0 0
    %3158 = vmatpush1.bf16.msra.mxu0 0
    %3159 = vmatprep.subr.bf16.mxu0 0
    %3160 = vmatpush1.bf16.msra.mxu0 0
    %3161 = vmatprep.subr.bf16.mxu0 0
    %3162 = vmatpush1.bf16.msra.mxu0 0
    %3163 = vmatprep.subr.bf16.mxu0 0
    %3164 = vmatpush1.bf16.msra.mxu0 0
    %3165 = vmatprep.subr.bf16.mxu0 0
    %3166 = vmatpush1.bf16.msra.mxu0 %v3141
    %3167 = vmatprep.subr.bf16.mxu0 0
    %3168 = vmatpush1.bf16.msra.mxu0 %v3140
    %3169 = vmatprep.subr.bf16.mxu0 0
    %3170 = vmatpush2.bf16.msra.mxu0 0
    %3171 = vmatprep.subr.bf16.mxu0 0
    %3172 = vmatpush2.bf16.msra.mxu0 0
    %3173 = vmatprep.subr.bf16.mxu0 0
    %3174 = vmatpush2.bf16.msra.mxu0 0
    %3175 = vmatprep.subr.bf16.mxu0 0
    %3176 = vmatpush2.bf16.msra.mxu0 0
    %3177 = vmatprep.subr.bf16.mxu0 0
    %3178 = vmatpush2.bf16.msra.mxu0 0
    %3179 = vmatprep.subr.bf16.mxu0 0
    %3180 = vmatpush2.bf16.msra.mxu0 0
    %3181 = vmatprep.subr.bf16.mxu0 0
    %3182 = vmatpush2.bf16.msra.mxu0 0
    %3183 = vmatprep.subr.bf16.mxu0 0
    %3184 = vmatpush2.bf16.msra.mxu0 0
    %3185 = vmatprep.mubr.bf16.mxu0 0
    %3186 = vmatmul.mubr.bf16.gmra.mxu0 %v3145
    %v3187 = vpop.f32.mrf.mxu0
    %v3188 = vadd.f32 0.0, %v3187
    %v3189 = vpop.f32.mrf.mxu0
    %v3190 = vpop.f32.mrf.mxu0
    %v3191 = vadd.f32 0.0, %v3190
    %v3192 = vpop.f32.mrf.mxu0
    %3193 = vmatprep.mubr.bf16.mxu0 0
    %3194 = vmatmul.mubr.bf16.gmra.mxu0 %v3148
    %v3195 = vpop.f32.mrf.mxu0
    %v3196 = vadd.f32 0.0, %v3195
    %v3197 = vpop.f32.mrf.mxu0
    %v3198 = vpop.f32.mrf.mxu0
    %v3199 = vadd.f32 0.0, %v3198
    %v3200 = vpop.f32.mrf.mxu0
    %3201 = vmatprep.mubr.bf16.mxu0 0
    %3202 = vmatmul.mubr.bf16.gmra.mxu0 %v3151
    %v3203 = vpop.f32.mrf.mxu0
    %v3204 = vadd.f32 0.0, %v3203
    %v3205 = vpop.f32.mrf.mxu0
    %v3206 = vpop.f32.mrf.mxu0
    %v3207 = vadd.f32 0.0, %v3206
    %v3208 = vpop.f32.mrf.mxu0
    %3209 = vdwg.mxu0
    %v3210 = vadd.f32 %v3121, %v3188
    %v3211 = vadd.f32 %v3122, %v3191
    %v3212 = vadd.f32 %v3123, %v3196
    %v3213 = vadd.f32 %v3124, %v3199
    %v3214 = vadd.f32 %v3125, %v3204
    %v3215 = vadd.f32 %v3126, %v3207
    %s3216 = scalar_lea.vmem %s3, 96
    %v3217 = vld [vmem:[%s3216] sm:$0xf]
    %v3218 = vld [vmem:[%s3216 + $0x4] sm:$0xf]
    %v3219 = vld [vmem:[%s3216 + $0x8] sm:$0xf]
    %v3220 = vld [vmem:[%s3216 + $0xc] sm:$0xf]
    %v3225 = vunpack.c.l.b16 %v3217
    %v3226 = vunpack.c.l.b16 %v3218
    %v3227 = vunpack.c.l.b16 %v3219
    %v3228 = vunpack.c.l.b16 %v3220
    %v3229 = vpack.c.b16 %v3226, %v3225
    %v3230 = vpack.c.b16 %v3228, %v3227
    %v3234 = vsel %vm2715, %v2664, 0
    %v3237 = vsel %vm2715, %v2665, 0
    %v3240 = vsel %vm2715, %v2666, 0
    %3242 = vmatprep.subr.bf16.mxu0 0
    %3243 = vmatpush1.bf16.msra.mxu0 0
    %3244 = vmatprep.subr.bf16.mxu0 0
    %3245 = vmatpush1.bf16.msra.mxu0 0
    %3246 = vmatprep.subr.bf16.mxu0 0
    %3247 = vmatpush1.bf16.msra.mxu0 0
    %3248 = vmatprep.subr.bf16.mxu0 0
    %3249 = vmatpush1.bf16.msra.mxu0 0
    %3250 = vmatprep.subr.bf16.mxu0 0
    %3251 = vmatpush1.bf16.msra.mxu0 0
    %3252 = vmatprep.subr.bf16.mxu0 0
    %3253 = vmatpush1.bf16.msra.mxu0 0
    %3254 = vmatprep.subr.bf16.mxu0 0
    %3255 = vmatpush1.bf16.msra.mxu0 %v3230
    %3256 = vmatprep.subr.bf16.mxu0 0
    %3257 = vmatpush1.bf16.msra.mxu0 %v3229
    %3258 = vmatprep.subr.bf16.mxu0 0
    %3259 = vmatpush2.bf16.msra.mxu0 0
    %3260 = vmatprep.subr.bf16.mxu0 0
    %3261 = vmatpush2.bf16.msra.mxu0 0
    %3262 = vmatprep.subr.bf16.mxu0 0
    %3263 = vmatpush2.bf16.msra.mxu0 0
    %3264 = vmatprep.subr.bf16.mxu0 0
    %3265 = vmatpush2.bf16.msra.mxu0 0
    %3266 = vmatprep.subr.bf16.mxu0 0
    %3267 = vmatpush2.bf16.msra.mxu0 0
    %3268 = vmatprep.subr.bf16.mxu0 0
    %3269 = vmatpush2.bf16.msra.mxu0 0
    %3270 = vmatprep.subr.bf16.mxu0 0
    %3271 = vmatpush2.bf16.msra.mxu0 0
    %3272 = vmatprep.subr.bf16.mxu0 0
    %3273 = vmatpush2.bf16.msra.mxu0 0
    %3274 = vmatprep.mubr.bf16.mxu0 0
    %3275 = vmatmul.mubr.bf16.gmra.mxu0 %v3234
    %v3276 = vpop.f32.mrf.mxu0
    %v3277 = vadd.f32 0.0, %v3276
    %v3278 = vpop.f32.mrf.mxu0
    %v3279 = vpop.f32.mrf.mxu0
    %v3280 = vadd.f32 0.0, %v3279
    %v3281 = vpop.f32.mrf.mxu0
    %3282 = vmatprep.mubr.bf16.mxu0 0
    %3283 = vmatmul.mubr.bf16.gmra.mxu0 %v3237
    %v3284 = vpop.f32.mrf.mxu0
    %v3285 = vadd.f32 0.0, %v3284
    %v3286 = vpop.f32.mrf.mxu0
    %v3287 = vpop.f32.mrf.mxu0
    %v3288 = vadd.f32 0.0, %v3287
    %v3289 = vpop.f32.mrf.mxu0
    %3290 = vmatprep.mubr.bf16.mxu0 0
    %3291 = vmatmul.mubr.bf16.gmra.mxu0 %v3240
    %v3292 = vpop.f32.mrf.mxu0
    %v3293 = vadd.f32 0.0, %v3292
    %v3294 = vpop.f32.mrf.mxu0
    %v3295 = vpop.f32.mrf.mxu0
    %v3296 = vadd.f32 0.0, %v3295
    %v3297 = vpop.f32.mrf.mxu0
    %3298 = vdwg.mxu0
    %v3299 = vadd.f32 %v3210, %v3277
    %v3300 = vadd.f32 %v3211, %v3280
    %v3301 = vadd.f32 %v3212, %v3285
    %v3302 = vadd.f32 %v3213, %v3288
    %v3303 = vadd.f32 %v3214, %v3293
    %v3304 = vadd.f32 %v3215, %v3296
    %s3305 = scalar_lea.vmem %s3, 112
    %v3306 = vld [vmem:[%s3305] sm:$0xf]
    %v3307 = vld [vmem:[%s3305 + $0x4] sm:$0xf]
    %v3308 = vld [vmem:[%s3305 + $0x8] sm:$0xf]
    %v3309 = vld [vmem:[%s3305 + $0xc] sm:$0xf]
    %v3314 = vunpack.c.l.b16 %v3306
    %v3315 = vunpack.c.l.b16 %v3307
    %v3316 = vunpack.c.l.b16 %v3308
    %v3317 = vunpack.c.l.b16 %v3309
    %v3318 = vpack.c.b16 %v3315, %v3314
    %v3319 = vpack.c.b16 %v3317, %v3316
    %v3323 = vsel %vm2715, %v2667, 0
    %v3326 = vsel %vm2715, %v2668, 0
    %v3329 = vsel %vm2715, %v2669, 0
    %3331 = vmatprep.subr.bf16.mxu0 0
    %3332 = vmatpush1.bf16.msra.mxu0 0
    %3333 = vmatprep.subr.bf16.mxu0 0
    %3334 = vmatpush1.bf16.msra.mxu0 0
    %3335 = vmatprep.subr.bf16.mxu0 0
    %3336 = vmatpush1.bf16.msra.mxu0 0
    %3337 = vmatprep.subr.bf16.mxu0 0
    %3338 = vmatpush1.bf16.msra.mxu0 0
    %3339 = vmatprep.subr.bf16.mxu0 0
    %3340 = vmatpush1.bf16.msra.mxu0 0
    %3341 = vmatprep.subr.bf16.mxu0 0
    %3342 = vmatpush1.bf16.msra.mxu0 0
    %3343 = vmatprep.subr.bf16.mxu0 0
    %3344 = vmatpush1.bf16.msra.mxu0 %v3319
    %3345 = vmatprep.subr.bf16.mxu0 0
    %3346 = vmatpush1.bf16.msra.mxu0 %v3318
    %3347 = vmatprep.subr.bf16.mxu0 0
    %3348 = vmatpush2.bf16.msra.mxu0 0
    %3349 = vmatprep.subr.bf16.mxu0 0
    %3350 = vmatpush2.bf16.msra.mxu0 0
    %3351 = vmatprep.subr.bf16.mxu0 0
    %3352 = vmatpush2.bf16.msra.mxu0 0
    %3353 = vmatprep.subr.bf16.mxu0 0
    %3354 = vmatpush2.bf16.msra.mxu0 0
    %3355 = vmatprep.subr.bf16.mxu0 0
    %3356 = vmatpush2.bf16.msra.mxu0 0
    %3357 = vmatprep.subr.bf16.mxu0 0
    %3358 = vmatpush2.bf16.msra.mxu0 0
    %3359 = vmatprep.subr.bf16.mxu0 0
    %3360 = vmatpush2.bf16.msra.mxu0 0
    %3361 = vmatprep.subr.bf16.mxu0 0
    %3362 = vmatpush2.bf16.msra.mxu0 0
    %3363 = vmatprep.mubr.bf16.mxu0 0
    %3364 = vmatmul.mubr.bf16.gmra.mxu0 %v3323
    %v3365 = vpop.f32.mrf.mxu0
    %v3366 = vadd.f32 0.0, %v3365
    %v3367 = vpop.f32.mrf.mxu0
    %v3368 = vpop.f32.mrf.mxu0
    %v3369 = vadd.f32 0.0, %v3368
    %v3370 = vpop.f32.mrf.mxu0
    %3371 = vmatprep.mubr.bf16.mxu0 0
    %3372 = vmatmul.mubr.bf16.gmra.mxu0 %v3326
    %v3373 = vpop.f32.mrf.mxu0
    %v3374 = vadd.f32 0.0, %v3373
    %v3375 = vpop.f32.mrf.mxu0
    %v3376 = vpop.f32.mrf.mxu0
    %v3377 = vadd.f32 0.0, %v3376
    %v3378 = vpop.f32.mrf.mxu0
    %3379 = vmatprep.mubr.bf16.mxu0 0
    %3380 = vmatmul.mubr.bf16.gmra.mxu0 %v3329
    %v3381 = vpop.f32.mrf.mxu0
    %v3382 = vadd.f32 0.0, %v3381
    %v3383 = vpop.f32.mrf.mxu0
    %v3384 = vpop.f32.mrf.mxu0
    %v3385 = vadd.f32 0.0, %v3384
    %v3386 = vpop.f32.mrf.mxu0
    %3387 = vdwg.mxu0
    %v3388 = vadd.f32 %v3299, %v3366
    %v3389 = vadd.f32 %v3300, %v3369
    %v3390 = vadd.f32 %v3301, %v3374
    %v3391 = vadd.f32 %v3302, %v3377
    %v3392 = vadd.f32 %v3303, %v3382
    %v3393 = vadd.f32 %v3304, %v3385
    %s3394 = scalar_lea.vmem %s3, 128
    %v3395 = vld [vmem:[%s3394] sm:$0xf]
    %v3396 = vld [vmem:[%s3394 + $0x4] sm:$0xf]
    %v3397 = vld [vmem:[%s3394 + $0x8] sm:$0xf]
    %v3398 = vld [vmem:[%s3394 + $0xc] sm:$0xf]
    %v3403 = vunpack.c.l.b16 %v3395
    %v3404 = vunpack.c.l.b16 %v3396
    %v3405 = vunpack.c.l.b16 %v3397
    %v3406 = vunpack.c.l.b16 %v3398
    %v3407 = vpack.c.b16 %v3404, %v3403
    %v3408 = vpack.c.b16 %v3406, %v3405
    %v3412 = vsel %vm2715, %v2670, 0
    %v3415 = vsel %vm2715, %v2671, 0
    %v3418 = vsel %vm2715, %v2672, 0
    %3420 = vmatprep.subr.bf16.mxu0 0
    %3421 = vmatpush1.bf16.msra.mxu0 0
    %3422 = vmatprep.subr.bf16.mxu0 0
    %3423 = vmatpush1.bf16.msra.mxu0 0
    %3424 = vmatprep.subr.bf16.mxu0 0
    %3425 = vmatpush1.bf16.msra.mxu0 0
    %3426 = vmatprep.subr.bf16.mxu0 0
    %3427 = vmatpush1.bf16.msra.mxu0 0
    %3428 = vmatprep.subr.bf16.mxu0 0
    %3429 = vmatpush1.bf16.msra.mxu0 0
    %3430 = vmatprep.subr.bf16.mxu0 0
    %3431 = vmatpush1.bf16.msra.mxu0 0
    %3432 = vmatprep.subr.bf16.mxu0 0
    %3433 = vmatpush1.bf16.msra.mxu0 %v3408
    %3434 = vmatprep.subr.bf16.mxu0 0
    %3435 = vmatpush1.bf16.msra.mxu0 %v3407
    %3436 = vmatprep.subr.bf16.mxu0 0
    %3437 = vmatpush2.bf16.msra.mxu0 0
    %3438 = vmatprep.subr.bf16.mxu0 0
    %3439 = vmatpush2.bf16.msra.mxu0 0
    %3440 = vmatprep.subr.bf16.mxu0 0
    %3441 = vmatpush2.bf16.msra.mxu0 0
    %3442 = vmatprep.subr.bf16.mxu0 0
    %3443 = vmatpush2.bf16.msra.mxu0 0
    %3444 = vmatprep.subr.bf16.mxu0 0
    %3445 = vmatpush2.bf16.msra.mxu0 0
    %3446 = vmatprep.subr.bf16.mxu0 0
    %3447 = vmatpush2.bf16.msra.mxu0 0
    %3448 = vmatprep.subr.bf16.mxu0 0
    %3449 = vmatpush2.bf16.msra.mxu0 0
    %3450 = vmatprep.subr.bf16.mxu0 0
    %3451 = vmatpush2.bf16.msra.mxu0 0
    %3452 = vmatprep.mubr.bf16.mxu0 0
    %3453 = vmatmul.mubr.bf16.gmra.mxu0 %v3412
    %v3454 = vpop.f32.mrf.mxu0
    %v3455 = vadd.f32 0.0, %v3454
    %v3456 = vpop.f32.mrf.mxu0
    %v3457 = vpop.f32.mrf.mxu0
    %v3458 = vadd.f32 0.0, %v3457
    %v3459 = vpop.f32.mrf.mxu0
    %3460 = vmatprep.mubr.bf16.mxu0 0
    %3461 = vmatmul.mubr.bf16.gmra.mxu0 %v3415
    %v3462 = vpop.f32.mrf.mxu0
    %v3463 = vadd.f32 0.0, %v3462
    %v3464 = vpop.f32.mrf.mxu0
    %v3465 = vpop.f32.mrf.mxu0
    %v3466 = vadd.f32 0.0, %v3465
    %v3467 = vpop.f32.mrf.mxu0
    %3468 = vmatprep.mubr.bf16.mxu0 0
    %3469 = vmatmul.mubr.bf16.gmra.mxu0 %v3418
    %v3470 = vpop.f32.mrf.mxu0
    %v3471 = vadd.f32 0.0, %v3470
    %v3472 = vpop.f32.mrf.mxu0
    %v3473 = vpop.f32.mrf.mxu0
    %v3474 = vadd.f32 0.0, %v3473
    %v3475 = vpop.f32.mrf.mxu0
    %3476 = vdwg.mxu0
    %v3477 = vadd.f32 %v3388, %v3455
    %v3478 = vadd.f32 %v3389, %v3458
    %v3479 = vadd.f32 %v3390, %v3463
    %v3480 = vadd.f32 %v3391, %v3466
    %v3481 = vadd.f32 %v3392, %v3471
    %v3482 = vadd.f32 %v3393, %v3474
    %s3483 = scalar_lea.vmem %s3, 144
    %v3484 = vld [vmem:[%s3483] sm:$0xf]
    %v3485 = vld [vmem:[%s3483 + $0x4] sm:$0xf]
    %v3486 = vld [vmem:[%s3483 + $0x8] sm:$0xf]
    %v3487 = vld [vmem:[%s3483 + $0xc] sm:$0xf]
    %v3492 = vunpack.c.l.b16 %v3484
    %v3493 = vunpack.c.l.b16 %v3485
    %v3494 = vunpack.c.l.b16 %v3486
    %v3495 = vunpack.c.l.b16 %v3487
    %v3496 = vpack.c.b16 %v3493, %v3492
    %v3497 = vpack.c.b16 %v3495, %v3494
    %v3501 = vsel %vm2715, %v2673, 0
    %v3504 = vsel %vm2715, %v2674, 0
    %v3507 = vsel %vm2715, %v2675, 0
    %3509 = vmatprep.subr.bf16.mxu0 0
    %3510 = vmatpush1.bf16.msra.mxu0 0
    %3511 = vmatprep.subr.bf16.mxu0 0
    %3512 = vmatpush1.bf16.msra.mxu0 0
    %3513 = vmatprep.subr.bf16.mxu0 0
    %3514 = vmatpush1.bf16.msra.mxu0 0
    %3515 = vmatprep.subr.bf16.mxu0 0
    %3516 = vmatpush1.bf16.msra.mxu0 0
    %3517 = vmatprep.subr.bf16.mxu0 0
    %3518 = vmatpush1.bf16.msra.mxu0 0
    %3519 = vmatprep.subr.bf16.mxu0 0
    %3520 = vmatpush1.bf16.msra.mxu0 0
    %3521 = vmatprep.subr.bf16.mxu0 0
    %3522 = vmatpush1.bf16.msra.mxu0 %v3497
    %3523 = vmatprep.subr.bf16.mxu0 0
    %3524 = vmatpush1.bf16.msra.mxu0 %v3496
    %3525 = vmatprep.subr.bf16.mxu0 0
    %3526 = vmatpush2.bf16.msra.mxu0 0
    %3527 = vmatprep.subr.bf16.mxu0 0
    %3528 = vmatpush2.bf16.msra.mxu0 0
    %3529 = vmatprep.subr.bf16.mxu0 0
    %3530 = vmatpush2.bf16.msra.mxu0 0
    %3531 = vmatprep.subr.bf16.mxu0 0
    %3532 = vmatpush2.bf16.msra.mxu0 0
    %3533 = vmatprep.subr.bf16.mxu0 0
    %3534 = vmatpush2.bf16.msra.mxu0 0
    %3535 = vmatprep.subr.bf16.mxu0 0
    %3536 = vmatpush2.bf16.msra.mxu0 0
    %3537 = vmatprep.subr.bf16.mxu0 0
    %3538 = vmatpush2.bf16.msra.mxu0 0
    %3539 = vmatprep.subr.bf16.mxu0 0
    %3540 = vmatpush2.bf16.msra.mxu0 0
    %3541 = vmatprep.mubr.bf16.mxu0 0
    %3542 = vmatmul.mubr.bf16.gmra.mxu0 %v3501
    %v3543 = vpop.f32.mrf.mxu0
    %v3544 = vadd.f32 0.0, %v3543
    %v3545 = vpop.f32.mrf.mxu0
    %v3546 = vpop.f32.mrf.mxu0
    %v3547 = vadd.f32 0.0, %v3546
    %v3548 = vpop.f32.mrf.mxu0
    %3549 = vmatprep.mubr.bf16.mxu0 0
    %3550 = vmatmul.mubr.bf16.gmra.mxu0 %v3504
    %v3551 = vpop.f32.mrf.mxu0
    %v3552 = vadd.f32 0.0, %v3551
    %v3553 = vpop.f32.mrf.mxu0
    %v3554 = vpop.f32.mrf.mxu0
    %v3555 = vadd.f32 0.0, %v3554
    %v3556 = vpop.f32.mrf.mxu0
    %3557 = vmatprep.mubr.bf16.mxu0 0
    %3558 = vmatmul.mubr.bf16.gmra.mxu0 %v3507
    %v3559 = vpop.f32.mrf.mxu0
    %v3560 = vadd.f32 0.0, %v3559
    %v3561 = vpop.f32.mrf.mxu0
    %v3562 = vpop.f32.mrf.mxu0
    %v3563 = vadd.f32 0.0, %v3562
    %v3564 = vpop.f32.mrf.mxu0
    %3565 = vdwg.mxu0
    %v3566 = vadd.f32 %v3477, %v3544
    %v3567 = vadd.f32 %v3478, %v3547
    %v3568 = vadd.f32 %v3479, %v3552
    %v3569 = vadd.f32 %v3480, %v3555
    %v3570 = vadd.f32 %v3481, %v3560
    %v3571 = vadd.f32 %v3482, %v3563
    %s3572 = scalar_lea.vmem %s3, 160
    %v3573 = vld [vmem:[%s3572] sm:$0xf]
    %v3574 = vld [vmem:[%s3572 + $0x4] sm:$0xf]
    %v3575 = vld [vmem:[%s3572 + $0x8] sm:$0xf]
    %v3576 = vld [vmem:[%s3572 + $0xc] sm:$0xf]
    %v3581 = vunpack.c.l.b16 %v3573
    %v3582 = vunpack.c.l.b16 %v3574
    %v3583 = vunpack.c.l.b16 %v3575
    %v3584 = vunpack.c.l.b16 %v3576
    %v3585 = vpack.c.b16 %v3582, %v3581
    %v3586 = vpack.c.b16 %v3584, %v3583
    %v3590 = vsel %vm2715, %v2676, 0
    %v3593 = vsel %vm2715, %v2677, 0
    %v3596 = vsel %vm2715, %v2678, 0
    %3598 = vmatprep.subr.bf16.mxu0 0
    %3599 = vmatpush1.bf16.msra.mxu0 0
    %3600 = vmatprep.subr.bf16.mxu0 0
    %3601 = vmatpush1.bf16.msra.mxu0 0
    %3602 = vmatprep.subr.bf16.mxu0 0
    %3603 = vmatpush1.bf16.msra.mxu0 0
    %3604 = vmatprep.subr.bf16.mxu0 0
    %3605 = vmatpush1.bf16.msra.mxu0 0
    %3606 = vmatprep.subr.bf16.mxu0 0
    %3607 = vmatpush1.bf16.msra.mxu0 0
    %3608 = vmatprep.subr.bf16.mxu0 0
    %3609 = vmatpush1.bf16.msra.mxu0 0
    %3610 = vmatprep.subr.bf16.mxu0 0
    %3611 = vmatpush1.bf16.msra.mxu0 %v3586
    %3612 = vmatprep.subr.bf16.mxu0 0
    %3613 = vmatpush1.bf16.msra.mxu0 %v3585
    %3614 = vmatprep.subr.bf16.mxu0 0
    %3615 = vmatpush2.bf16.msra.mxu0 0
    %3616 = vmatprep.subr.bf16.mxu0 0
    %3617 = vmatpush2.bf16.msra.mxu0 0
    %3618 = vmatprep.subr.bf16.mxu0 0
    %3619 = vmatpush2.bf16.msra.mxu0 0
    %3620 = vmatprep.subr.bf16.mxu0 0
    %3621 = vmatpush2.bf16.msra.mxu0 0
    %3622 = vmatprep.subr.bf16.mxu0 0
    %3623 = vmatpush2.bf16.msra.mxu0 0
    %3624 = vmatprep.subr.bf16.mxu0 0
    %3625 = vmatpush2.bf16.msra.mxu0 0
    %3626 = vmatprep.subr.bf16.mxu0 0
    %3627 = vmatpush2.bf16.msra.mxu0 0
    %3628 = vmatprep.subr.bf16.mxu0 0
    %3629 = vmatpush2.bf16.msra.mxu0 0
    %3630 = vmatprep.mubr.bf16.mxu0 0
    %3631 = vmatmul.mubr.bf16.gmra.mxu0 %v3590
    %v3632 = vpop.f32.mrf.mxu0
    %v3633 = vadd.f32 0.0, %v3632
    %v3634 = vpop.f32.mrf.mxu0
    %v3635 = vpop.f32.mrf.mxu0
    %v3636 = vadd.f32 0.0, %v3635
    %v3637 = vpop.f32.mrf.mxu0
    %3638 = vmatprep.mubr.bf16.mxu0 0
    %3639 = vmatmul.mubr.bf16.gmra.mxu0 %v3593
    %v3640 = vpop.f32.mrf.mxu0
    %v3641 = vadd.f32 0.0, %v3640
    %v3642 = vpop.f32.mrf.mxu0
    %v3643 = vpop.f32.mrf.mxu0
    %v3644 = vadd.f32 0.0, %v3643
    %v3645 = vpop.f32.mrf.mxu0
    %3646 = vmatprep.mubr.bf16.mxu0 0
    %3647 = vmatmul.mubr.bf16.gmra.mxu0 %v3596
    %v3648 = vpop.f32.mrf.mxu0
    %v3649 = vadd.f32 0.0, %v3648
    %v3650 = vpop.f32.mrf.mxu0
    %v3651 = vpop.f32.mrf.mxu0
    %v3652 = vadd.f32 0.0, %v3651
    %v3653 = vpop.f32.mrf.mxu0
    %3654 = vdwg.mxu0
    %v3655 = vadd.f32 %v3566, %v3633
    %v3656 = vadd.f32 %v3567, %v3636
    %v3657 = vadd.f32 %v3568, %v3641
    %v3658 = vadd.f32 %v3569, %v3644
    %v3659 = vadd.f32 %v3570, %v3649
    %v3660 = vadd.f32 %v3571, %v3652
    %s3661 = scalar_lea.vmem %s3, 176
    %v3662 = vld [vmem:[%s3661] sm:$0xf]
    %v3663 = vld [vmem:[%s3661 + $0x4] sm:$0xf]
    %v3664 = vld [vmem:[%s3661 + $0x8] sm:$0xf]
    %v3665 = vld [vmem:[%s3661 + $0xc] sm:$0xf]
    %v3670 = vunpack.c.l.b16 %v3662
    %v3671 = vunpack.c.l.b16 %v3663
    %v3672 = vunpack.c.l.b16 %v3664
    %v3673 = vunpack.c.l.b16 %v3665
    %v3674 = vpack.c.b16 %v3671, %v3670
    %v3675 = vpack.c.b16 %v3673, %v3672
    %v3679 = vsel %vm2715, %v2679, 0
    %v3682 = vsel %vm2715, %v2680, 0
    %v3685 = vsel %vm2715, %v2681, 0
    %3687 = vmatprep.subr.bf16.mxu0 0
    %3688 = vmatpush1.bf16.msra.mxu0 0
    %3689 = vmatprep.subr.bf16.mxu0 0
    %3690 = vmatpush1.bf16.msra.mxu0 0
    %3691 = vmatprep.subr.bf16.mxu0 0
    %3692 = vmatpush1.bf16.msra.mxu0 0
    %3693 = vmatprep.subr.bf16.mxu0 0
    %3694 = vmatpush1.bf16.msra.mxu0 0
    %3695 = vmatprep.subr.bf16.mxu0 0
    %3696 = vmatpush1.bf16.msra.mxu0 0
    %3697 = vmatprep.subr.bf16.mxu0 0
    %3698 = vmatpush1.bf16.msra.mxu0 0
    %3699 = vmatprep.subr.bf16.mxu0 0
    %3700 = vmatpush1.bf16.msra.mxu0 %v3675
    %3701 = vmatprep.subr.bf16.mxu0 0
    %3702 = vmatpush1.bf16.msra.mxu0 %v3674
    %3703 = vmatprep.subr.bf16.mxu0 0
    %3704 = vmatpush2.bf16.msra.mxu0 0
    %3705 = vmatprep.subr.bf16.mxu0 0
    %3706 = vmatpush2.bf16.msra.mxu0 0
    %3707 = vmatprep.subr.bf16.mxu0 0
    %3708 = vmatpush2.bf16.msra.mxu0 0
    %3709 = vmatprep.subr.bf16.mxu0 0
    %3710 = vmatpush2.bf16.msra.mxu0 0
    %3711 = vmatprep.subr.bf16.mxu0 0
    %3712 = vmatpush2.bf16.msra.mxu0 0
    %3713 = vmatprep.subr.bf16.mxu0 0
    %3714 = vmatpush2.bf16.msra.mxu0 0
    %3715 = vmatprep.subr.bf16.mxu0 0
    %3716 = vmatpush2.bf16.msra.mxu0 0
    %3717 = vmatprep.subr.bf16.mxu0 0
    %3718 = vmatpush2.bf16.msra.mxu0 0
    %3719 = vmatprep.mubr.bf16.mxu0 0
    %3720 = vmatmul.mubr.bf16.gmra.mxu0 %v3679
    %v3721 = vpop.f32.mrf.mxu0
    %v3722 = vadd.f32 0.0, %v3721
    %v3723 = vpop.f32.mrf.mxu0
    %v3724 = vpop.f32.mrf.mxu0
    %v3725 = vadd.f32 0.0, %v3724
    %v3726 = vpop.f32.mrf.mxu0
    %3727 = vmatprep.mubr.bf16.mxu0 0
    %3728 = vmatmul.mubr.bf16.gmra.mxu0 %v3682
    %v3729 = vpop.f32.mrf.mxu0
    %v3730 = vadd.f32 0.0, %v3729
    %v3731 = vpop.f32.mrf.mxu0
    %v3732 = vpop.f32.mrf.mxu0
    %v3733 = vadd.f32 0.0, %v3732
    %v3734 = vpop.f32.mrf.mxu0
    %3735 = vmatprep.mubr.bf16.mxu0 0
    %3736 = vmatmul.mubr.bf16.gmra.mxu0 %v3685
    %v3737 = vpop.f32.mrf.mxu0
    %v3738 = vadd.f32 0.0, %v3737
    %v3739 = vpop.f32.mrf.mxu0
    %v3740 = vpop.f32.mrf.mxu0
    %v3741 = vadd.f32 0.0, %v3740
    %v3742 = vpop.f32.mrf.mxu0
    %3743 = vdwg.mxu0
    %v3744 = vadd.f32 %v3655, %v3722
    %v3745 = vadd.f32 %v3656, %v3725
    %v3746 = vadd.f32 %v3657, %v3730
    %v3747 = vadd.f32 %v3658, %v3733
    %v3748 = vadd.f32 %v3659, %v3738
    %v3749 = vadd.f32 %v3660, %v3741
    %s3750 = scalar_lea.vmem %s3, 192
    %v3751 = vld [vmem:[%s3750] sm:$0xf]
    %v3752 = vld [vmem:[%s3750 + $0x4] sm:$0xf]
    %v3753 = vld [vmem:[%s3750 + $0x8] sm:$0xf]
    %v3754 = vld [vmem:[%s3750 + $0xc] sm:$0xf]
    %v3759 = vunpack.c.l.b16 %v3751
    %v3760 = vunpack.c.l.b16 %v3752
    %v3761 = vunpack.c.l.b16 %v3753
    %v3762 = vunpack.c.l.b16 %v3754
    %v3763 = vpack.c.b16 %v3760, %v3759
    %v3764 = vpack.c.b16 %v3762, %v3761
    %v3768 = vsel %vm2715, %v2682, 0
    %v3771 = vsel %vm2715, %v2683, 0
    %v3774 = vsel %vm2715, %v2684, 0
    %3776 = vmatprep.subr.bf16.mxu0 0
    %3777 = vmatpush1.bf16.msra.mxu0 0
    %3778 = vmatprep.subr.bf16.mxu0 0
    %3779 = vmatpush1.bf16.msra.mxu0 0
    %3780 = vmatprep.subr.bf16.mxu0 0
    %3781 = vmatpush1.bf16.msra.mxu0 0
    %3782 = vmatprep.subr.bf16.mxu0 0
    %3783 = vmatpush1.bf16.msra.mxu0 0
    %3784 = vmatprep.subr.bf16.mxu0 0
    %3785 = vmatpush1.bf16.msra.mxu0 0
    %3786 = vmatprep.subr.bf16.mxu0 0
    %3787 = vmatpush1.bf16.msra.mxu0 0
    %3788 = vmatprep.subr.bf16.mxu0 0
    %3789 = vmatpush1.bf16.msra.mxu0 %v3764
    %3790 = vmatprep.subr.bf16.mxu0 0
    %3791 = vmatpush1.bf16.msra.mxu0 %v3763
    %3792 = vmatprep.subr.bf16.mxu0 0
    %3793 = vmatpush2.bf16.msra.mxu0 0
    %3794 = vmatprep.subr.bf16.mxu0 0
    %3795 = vmatpush2.bf16.msra.mxu0 0
    %3796 = vmatprep.subr.bf16.mxu0 0
    %3797 = vmatpush2.bf16.msra.mxu0 0
    %3798 = vmatprep.subr.bf16.mxu0 0
    %3799 = vmatpush2.bf16.msra.mxu0 0
    %3800 = vmatprep.subr.bf16.mxu0 0
    %3801 = vmatpush2.bf16.msra.mxu0 0
    %3802 = vmatprep.subr.bf16.mxu0 0
    %3803 = vmatpush2.bf16.msra.mxu0 0
    %3804 = vmatprep.subr.bf16.mxu0 0
    %3805 = vmatpush2.bf16.msra.mxu0 0
    %3806 = vmatprep.subr.bf16.mxu0 0
    %3807 = vmatpush2.bf16.msra.mxu0 0
    %3808 = vmatprep.mubr.bf16.mxu0 0
    %3809 = vmatmul.mubr.bf16.gmra.mxu0 %v3768
    %v3810 = vpop.f32.mrf.mxu0
    %v3811 = vadd.f32 0.0, %v3810
    %v3812 = vpop.f32.mrf.mxu0
    %v3813 = vpop.f32.mrf.mxu0
    %v3814 = vadd.f32 0.0, %v3813
    %v3815 = vpop.f32.mrf.mxu0
    %3816 = vmatprep.mubr.bf16.mxu0 0
    %3817 = vmatmul.mubr.bf16.gmra.mxu0 %v3771
    %v3818 = vpop.f32.mrf.mxu0
    %v3819 = vadd.f32 0.0, %v3818
    %v3820 = vpop.f32.mrf.mxu0
    %v3821 = vpop.f32.mrf.mxu0
    %v3822 = vadd.f32 0.0, %v3821
    %v3823 = vpop.f32.mrf.mxu0
    %3824 = vmatprep.mubr.bf16.mxu0 0
    %3825 = vmatmul.mubr.bf16.gmra.mxu0 %v3774
    %v3826 = vpop.f32.mrf.mxu0
    %v3827 = vadd.f32 0.0, %v3826
    %v3828 = vpop.f32.mrf.mxu0
    %v3829 = vpop.f32.mrf.mxu0
    %v3830 = vadd.f32 0.0, %v3829
    %v3831 = vpop.f32.mrf.mxu0
    %3832 = vdwg.mxu0
    %v3833 = vadd.f32 %v3744, %v3811
    %v3834 = vadd.f32 %v3745, %v3814
    %v3835 = vadd.f32 %v3746, %v3819
    %v3836 = vadd.f32 %v3747, %v3822
    %v3837 = vadd.f32 %v3748, %v3827
    %v3838 = vadd.f32 %v3749, %v3830
    %s3839 = scalar_lea.vmem %s3, 208
    %v3840 = vld [vmem:[%s3839] sm:$0xf]
    %v3841 = vld [vmem:[%s3839 + $0x4] sm:$0xf]
    %v3842 = vld [vmem:[%s3839 + $0x8] sm:$0xf]
    %v3843 = vld [vmem:[%s3839 + $0xc] sm:$0xf]
    %v3848 = vunpack.c.l.b16 %v3840
    %v3849 = vunpack.c.l.b16 %v3841
    %v3850 = vunpack.c.l.b16 %v3842
    %v3851 = vunpack.c.l.b16 %v3843
    %v3852 = vpack.c.b16 %v3849, %v3848
    %v3853 = vpack.c.b16 %v3851, %v3850
    %v3857 = vsel %vm2715, %v2685, 0
    %v3860 = vsel %vm2715, %v2686, 0
    %v3863 = vsel %vm2715, %v2687, 0
    %3865 = vmatprep.subr.bf16.mxu0 0
    %3866 = vmatpush1.bf16.msra.mxu0 0
    %3867 = vmatprep.subr.bf16.mxu0 0
    %3868 = vmatpush1.bf16.msra.mxu0 0
    %3869 = vmatprep.subr.bf16.mxu0 0
    %3870 = vmatpush1.bf16.msra.mxu0 0
    %3871 = vmatprep.subr.bf16.mxu0 0
    %3872 = vmatpush1.bf16.msra.mxu0 0
    %3873 = vmatprep.subr.bf16.mxu0 0
    %3874 = vmatpush1.bf16.msra.mxu0 0
    %3875 = vmatprep.subr.bf16.mxu0 0
    %3876 = vmatpush1.bf16.msra.mxu0 0
    %3877 = vmatprep.subr.bf16.mxu0 0
    %3878 = vmatpush1.bf16.msra.mxu0 %v3853
    %3879 = vmatprep.subr.bf16.mxu0 0
    %3880 = vmatpush1.bf16.msra.mxu0 %v3852
    %3881 = vmatprep.subr.bf16.mxu0 0
    %3882 = vmatpush2.bf16.msra.mxu0 0
    %3883 = vmatprep.subr.bf16.mxu0 0
    %3884 = vmatpush2.bf16.msra.mxu0 0
    %3885 = vmatprep.subr.bf16.mxu0 0
    %3886 = vmatpush2.bf16.msra.mxu0 0
    %3887 = vmatprep.subr.bf16.mxu0 0
    %3888 = vmatpush2.bf16.msra.mxu0 0
    %3889 = vmatprep.subr.bf16.mxu0 0
    %3890 = vmatpush2.bf16.msra.mxu0 0
    %3891 = vmatprep.subr.bf16.mxu0 0
    %3892 = vmatpush2.bf16.msra.mxu0 0
    %3893 = vmatprep.subr.bf16.mxu0 0
    %3894 = vmatpush2.bf16.msra.mxu0 0
    %3895 = vmatprep.subr.bf16.mxu0 0
    %3896 = vmatpush2.bf16.msra.mxu0 0
    %3897 = vmatprep.mubr.bf16.mxu0 0
    %3898 = vmatmul.mubr.bf16.gmra.mxu0 %v3857
    %v3899 = vpop.f32.mrf.mxu0
    %v3900 = vadd.f32 0.0, %v3899
    %v3901 = vpop.f32.mrf.mxu0
    %v3902 = vpop.f32.mrf.mxu0
    %v3903 = vadd.f32 0.0, %v3902
    %v3904 = vpop.f32.mrf.mxu0
    %3905 = vmatprep.mubr.bf16.mxu0 0
    %3906 = vmatmul.mubr.bf16.gmra.mxu0 %v3860
    %v3907 = vpop.f32.mrf.mxu0
    %v3908 = vadd.f32 0.0, %v3907
    %v3909 = vpop.f32.mrf.mxu0
    %v3910 = vpop.f32.mrf.mxu0
    %v3911 = vadd.f32 0.0, %v3910
    %v3912 = vpop.f32.mrf.mxu0
    %3913 = vmatprep.mubr.bf16.mxu0 0
    %3914 = vmatmul.mubr.bf16.gmra.mxu0 %v3863
    %v3915 = vpop.f32.mrf.mxu0
    %v3916 = vadd.f32 0.0, %v3915
    %v3917 = vpop.f32.mrf.mxu0
    %v3918 = vpop.f32.mrf.mxu0
    %v3919 = vadd.f32 0.0, %v3918
    %v3920 = vpop.f32.mrf.mxu0
    %3921 = vdwg.mxu0
    %v3922 = vadd.f32 %v3833, %v3900
    %v3923 = vadd.f32 %v3834, %v3903
    %v3924 = vadd.f32 %v3835, %v3908
    %v3925 = vadd.f32 %v3836, %v3911
    %v3926 = vadd.f32 %v3837, %v3916
    %v3927 = vadd.f32 %v3838, %v3919
    %s3928 = scalar_lea.vmem %s3, 224
    %v3929 = vld [vmem:[%s3928] sm:$0xf]
    %v3930 = vld [vmem:[%s3928 + $0x4] sm:$0xf]
    %v3931 = vld [vmem:[%s3928 + $0x8] sm:$0xf]
    %v3932 = vld [vmem:[%s3928 + $0xc] sm:$0xf]
    %v3937 = vunpack.c.l.b16 %v3929
    %v3938 = vunpack.c.l.b16 %v3930
    %v3939 = vunpack.c.l.b16 %v3931
    %v3940 = vunpack.c.l.b16 %v3932
    %v3941 = vpack.c.b16 %v3938, %v3937
    %v3942 = vpack.c.b16 %v3940, %v3939
    %v3946 = vsel %vm2715, %v2688, 0
    %v3949 = vsel %vm2715, %v2689, 0
    %v3952 = vsel %vm2715, %v2690, 0
    %3954 = vmatprep.subr.bf16.mxu0 0
    %3955 = vmatpush1.bf16.msra.mxu0 0
    %3956 = vmatprep.subr.bf16.mxu0 0
    %3957 = vmatpush1.bf16.msra.mxu0 0
    %3958 = vmatprep.subr.bf16.mxu0 0
    %3959 = vmatpush1.bf16.msra.mxu0 0
    %3960 = vmatprep.subr.bf16.mxu0 0
    %3961 = vmatpush1.bf16.msra.mxu0 0
    %3962 = vmatprep.subr.bf16.mxu0 0
    %3963 = vmatpush1.bf16.msra.mxu0 0
    %3964 = vmatprep.subr.bf16.mxu0 0
    %3965 = vmatpush1.bf16.msra.mxu0 0
    %3966 = vmatprep.subr.bf16.mxu0 0
    %3967 = vmatpush1.bf16.msra.mxu0 %v3942
    %3968 = vmatprep.subr.bf16.mxu0 0
    %3969 = vmatpush1.bf16.msra.mxu0 %v3941
    %3970 = vmatprep.subr.bf16.mxu0 0
    %3971 = vmatpush2.bf16.msra.mxu0 0
    %3972 = vmatprep.subr.bf16.mxu0 0
    %3973 = vmatpush2.bf16.msra.mxu0 0
    %3974 = vmatprep.subr.bf16.mxu0 0
    %3975 = vmatpush2.bf16.msra.mxu0 0
    %3976 = vmatprep.subr.bf16.mxu0 0
    %3977 = vmatpush2.bf16.msra.mxu0 0
    %3978 = vmatprep.subr.bf16.mxu0 0
    %3979 = vmatpush2.bf16.msra.mxu0 0
    %3980 = vmatprep.subr.bf16.mxu0 0
    %3981 = vmatpush2.bf16.msra.mxu0 0
    %3982 = vmatprep.subr.bf16.mxu0 0
    %3983 = vmatpush2.bf16.msra.mxu0 0
    %3984 = vmatprep.subr.bf16.mxu0 0
    %3985 = vmatpush2.bf16.msra.mxu0 0
    %3986 = vmatprep.mubr.bf16.mxu0 0
    %3987 = vmatmul.mubr.bf16.gmra.mxu0 %v3946
    %v3988 = vpop.f32.mrf.mxu0
    %v3989 = vadd.f32 0.0, %v3988
    %v3990 = vpop.f32.mrf.mxu0
    %v3991 = vpop.f32.mrf.mxu0
    %v3992 = vadd.f32 0.0, %v3991
    %v3993 = vpop.f32.mrf.mxu0
    %3994 = vmatprep.mubr.bf16.mxu0 0
    %3995 = vmatmul.mubr.bf16.gmra.mxu0 %v3949
    %v3996 = vpop.f32.mrf.mxu0
    %v3997 = vadd.f32 0.0, %v3996
    %v3998 = vpop.f32.mrf.mxu0
    %v3999 = vpop.f32.mrf.mxu0
    %v4000 = vadd.f32 0.0, %v3999
    %v4001 = vpop.f32.mrf.mxu0
    %4002 = vmatprep.mubr.bf16.mxu0 0
    %4003 = vmatmul.mubr.bf16.gmra.mxu0 %v3952
    %v4004 = vpop.f32.mrf.mxu0
    %v4005 = vadd.f32 0.0, %v4004
    %v4006 = vpop.f32.mrf.mxu0
    %v4007 = vpop.f32.mrf.mxu0
    %v4008 = vadd.f32 0.0, %v4007
    %v4009 = vpop.f32.mrf.mxu0
    %4010 = vdwg.mxu0
    %v4011 = vadd.f32 %v3922, %v3989
    %v4012 = vadd.f32 %v3923, %v3992
    %v4013 = vadd.f32 %v3924, %v3997
    %v4014 = vadd.f32 %v3925, %v4000
    %v4015 = vadd.f32 %v3926, %v4005
    %v4016 = vadd.f32 %v3927, %v4008
    %s4017 = scalar_lea.vmem %s3, 240
    %v4018 = vld [vmem:[%s4017] sm:$0xf]
    %v4019 = vld [vmem:[%s4017 + $0x4] sm:$0xf]
    %v4020 = vld [vmem:[%s4017 + $0x8] sm:$0xf]
    %v4021 = vld [vmem:[%s4017 + $0xc] sm:$0xf]
    %v4026 = vunpack.c.l.b16 %v4018
    %v4027 = vunpack.c.l.b16 %v4019
    %v4028 = vunpack.c.l.b16 %v4020
    %v4029 = vunpack.c.l.b16 %v4021
    %v4030 = vpack.c.b16 %v4027, %v4026
    %v4031 = vpack.c.b16 %v4029, %v4028
    %v4035 = vsel %vm2715, %v2691, 0
    %v4038 = vsel %vm2715, %v2692, 0
    %v4041 = vsel %vm2715, %v2693, 0
    %4043 = vmatprep.subr.bf16.mxu0 0
    %4044 = vmatpush1.bf16.msra.mxu0 0
    %4045 = vmatprep.subr.bf16.mxu0 0
    %4046 = vmatpush1.bf16.msra.mxu0 0
    %4047 = vmatprep.subr.bf16.mxu0 0
    %4048 = vmatpush1.bf16.msra.mxu0 0
    %4049 = vmatprep.subr.bf16.mxu0 0
    %4050 = vmatpush1.bf16.msra.mxu0 0
    %4051 = vmatprep.subr.bf16.mxu0 0
    %4052 = vmatpush1.bf16.msra.mxu0 0
    %4053 = vmatprep.subr.bf16.mxu0 0
    %4054 = vmatpush1.bf16.msra.mxu0 0
    %4055 = vmatprep.subr.bf16.mxu0 0
    %4056 = vmatpush1.bf16.msra.mxu0 %v4031
    %4057 = vmatprep.subr.bf16.mxu0 0
    %4058 = vmatpush1.bf16.msra.mxu0 %v4030
    %4059 = vmatprep.subr.bf16.mxu0 0
    %4060 = vmatpush2.bf16.msra.mxu0 0
    %4061 = vmatprep.subr.bf16.mxu0 0
    %4062 = vmatpush2.bf16.msra.mxu0 0
    %4063 = vmatprep.subr.bf16.mxu0 0
    %4064 = vmatpush2.bf16.msra.mxu0 0
    %4065 = vmatprep.subr.bf16.mxu0 0
    %4066 = vmatpush2.bf16.msra.mxu0 0
    %4067 = vmatprep.subr.bf16.mxu0 0
    %4068 = vmatpush2.bf16.msra.mxu0 0
    %4069 = vmatprep.subr.bf16.mxu0 0
    %4070 = vmatpush2.bf16.msra.mxu0 0
    %4071 = vmatprep.subr.bf16.mxu0 0
    %4072 = vmatpush2.bf16.msra.mxu0 0
    %4073 = vmatprep.subr.bf16.mxu0 0
    %4074 = vmatpush2.bf16.msra.mxu0 0
    %4075 = vmatprep.mubr.bf16.mxu0 0
    %4076 = vmatmul.mubr.bf16.gmra.mxu0 %v4035
    %v4077 = vpop.f32.mrf.mxu0
    %v4078 = vadd.f32 0.0, %v4077
    %v4079 = vpop.f32.mrf.mxu0
    %v4080 = vpop.f32.mrf.mxu0
    %v4081 = vadd.f32 0.0, %v4080
    %v4082 = vpop.f32.mrf.mxu0
    %4083 = vmatprep.mubr.bf16.mxu0 0
    %4084 = vmatmul.mubr.bf16.gmra.mxu0 %v4038
    %v4085 = vpop.f32.mrf.mxu0
    %v4086 = vadd.f32 0.0, %v4085
    %v4087 = vpop.f32.mrf.mxu0
    %v4088 = vpop.f32.mrf.mxu0
    %v4089 = vadd.f32 0.0, %v4088
    %v4090 = vpop.f32.mrf.mxu0
    %4091 = vmatprep.mubr.bf16.mxu0 0
    %4092 = vmatmul.mubr.bf16.gmra.mxu0 %v4041
    %v4093 = vpop.f32.mrf.mxu0
    %v4094 = vadd.f32 0.0, %v4093
    %v4095 = vpop.f32.mrf.mxu0
    %v4096 = vpop.f32.mrf.mxu0
    %v4097 = vadd.f32 0.0, %v4096
    %v4098 = vpop.f32.mrf.mxu0
    %4099 = vdwg.mxu0
    %v4100 = vadd.f32 %v4011, %v4078
    %v4101 = vadd.f32 %v4012, %v4081
    %v4102 = vadd.f32 %v4013, %v4086
    %v4103 = vadd.f32 %v4014, %v4089
    %v4104 = vadd.f32 %v4015, %v4094
    %v4105 = vadd.f32 %v4016, %v4097
    %v4106 = vld [vmem:[%s4] sm:$0x1]
    %v4108 = vlaneseq
    %v4109 = vshrl.u32 %v4108, 7
    %v4110 = vsub.s32 0, %v4109
    %v4111 = vrot.slane %v4106, %v4110
    %v4113 = vadd.f32 %v4100, %v4111
    %v4114 = vadd.f32 %v4101, %v4111
    %v4115 = vadd.f32 %v4102, %v4111
    %v4116 = vadd.f32 %v4103, %v4111
    %v4117 = vadd.f32 %v4104, %v4111
    %v4118 = vadd.f32 %v4105, %v4111
    %v4119 = vmax.f32 %v4113, 0.0
    %v4120 = vmax.f32 %v4114, 0.0
    %v4121 = vmax.f32 %v4115, 0.0
    %v4122 = vmax.f32 %v4116, 0.0
    %v4123 = vmax.f32 %v4117, 0.0
    %v4124 = vmax.f32 %v4118, 0.0
    %v4125 = vpack.c.bf16 %v4120, %v4119
    %v4126 = vpack.c.bf16 %v4122, %v4121
    %v4127 = vpack.c.bf16 %v4124, %v4123
    %s4128 = smul.u32 4, 54
    %s4129 = smul.u32 %s4128, 1
    %s4130 = sshll.u32 %s4129, 4
    %4131 = dma.done %s273, %s4130
    %v4132 = vld [vmem:[#allocation3] sm:$0xf]
    %v4133 = vld [vmem:[#allocation3 + $0x4] sm:$0xf]
    %v4134 = vld [vmem:[#allocation3 + $0x8] sm:$0xf]
    %v4135 = vld [vmem:[#allocation3 + $0xc] sm:$0xf]
    %v4136 = vld [vmem:[#allocation3 + $0x10] sm:$0xf]
    %v4137 = vld [vmem:[#allocation3 + $0x14] sm:$0xf]
    %v4138 = vld [vmem:[#allocation3 + $0x18] sm:$0xf]
    %v4139 = vld [vmem:[#allocation3 + $0x1c] sm:$0xf]
    %v4140 = vld [vmem:[#allocation3 + $0x20] sm:$0xf]
    %v4141 = vld [vmem:[#allocation3 + $0x24] sm:$0xf]
    %v4142 = vld [vmem:[#allocation3 + $0x28] sm:$0xf]
    %v4143 = vld [vmem:[#allocation3 + $0x2c] sm:$0xf]
    %v4144 = vld [vmem:[#allocation3 + $0x30] sm:$0xf]
    %v4145 = vld [vmem:[#allocation3 + $0x34] sm:$0xf]
    %v4146 = vld [vmem:[#allocation3 + $0x38] sm:$0xf]
    %v4147 = vld [vmem:[#allocation3 + $0x3c] sm:$0xf]
    %v4148 = vld [vmem:[#allocation3 + $0x40] sm:$0xf]
    %v4149 = vld [vmem:[#allocation3 + $0x44] sm:$0xf]
    %v4150 = vld [vmem:[#allocation3 + $0x48] sm:$0xf]
    %v4151 = vld [vmem:[#allocation3 + $0x4c] sm:$0xf]
    %v4152 = vld [vmem:[#allocation3 + $0x50] sm:$0xf]
    %v4153 = vld [vmem:[#allocation3 + $0x54] sm:$0xf]
    %v4154 = vld [vmem:[#allocation3 + $0x58] sm:$0xf]
    %v4155 = vld [vmem:[#allocation3 + $0x5c] sm:$0xf]
    %v4156 = vld [vmem:[#allocation3 + $0x60] sm:$0xf]
    %v4157 = vld [vmem:[#allocation3 + $0x64] sm:$0xf]
    %v4158 = vld [vmem:[#allocation3 + $0x68] sm:$0xf]
    %v4159 = vld [vmem:[#allocation3 + $0x6c] sm:$0xf]
    %v4160 = vld [vmem:[#allocation3 + $0x70] sm:$0xf]
    %v4161 = vld [vmem:[#allocation3 + $0x74] sm:$0xf]
    %v4162 = vld [vmem:[#allocation3 + $0x78] sm:$0xf]
    %v4163 = vld [vmem:[#allocation3 + $0x7c] sm:$0xf]
    %v4164 = vld [vmem:[#allocation3 + $0x80] sm:$0xf]
    %v4165 = vld [vmem:[#allocation3 + $0x84] sm:$0xf]
    %v4166 = vld [vmem:[#allocation3 + $0x88] sm:$0xf]
    %v4167 = vld [vmem:[#allocation3 + $0x8c] sm:$0xf]
    %v4168 = vld [vmem:[#allocation3 + $0x90] sm:$0xf]
    %v4169 = vld [vmem:[#allocation3 + $0x94] sm:$0xf]
    %v4170 = vld [vmem:[#allocation3 + $0x98] sm:$0xf]
    %v4171 = vld [vmem:[#allocation3 + $0x9c] sm:$0xf]
    %v4172 = vld [vmem:[#allocation3 + $0xa0] sm:$0xf]
    %v4173 = vld [vmem:[#allocation3 + $0xa4] sm:$0xf]
    %v4174 = vld [vmem:[#allocation3 + $0xa8] sm:$0xf]
    %v4175 = vld [vmem:[#allocation3 + $0xac] sm:$0xf]
    %v4176 = vld [vmem:[#allocation3 + $0xb0] sm:$0xf]
    %v4177 = vld [vmem:[#allocation3 + $0xb4] sm:$0xf]
    %v4178 = vld [vmem:[#allocation3 + $0xb8] sm:$0xf]
    %v4179 = vld [vmem:[#allocation3 + $0xbc] sm:$0xf]
    %v4180 = vld [vmem:[#allocation3 + $0xc0] sm:$0xf]
    %v4181 = vld [vmem:[#allocation3 + $0xc4] sm:$0xf]
    %v4182 = vld [vmem:[#allocation3 + $0xc8] sm:$0xf]
    %v4183 = vld [vmem:[#allocation3 + $0xcc] sm:$0xf]
    %v4184 = vld [vmem:[#allocation3 + $0xd0] sm:$0xf]
    %v4185 = vld [vmem:[#allocation3 + $0xd4] sm:$0xf]
    %v4240 = vunpack.c.l.b16 %v4132
    %v4241 = vunpack.c.l.b16 %v4133
    %v4242 = vunpack.c.l.b16 %v4134
    %v4243 = vunpack.c.l.b16 %v4135
    %v4244 = vunpack.c.l.b16 %v4136
    %v4245 = vunpack.c.l.b16 %v4137
    %v4246 = vunpack.c.l.b16 %v4138
    %v4247 = vunpack.c.l.b16 %v4139
    %v4248 = vunpack.c.l.b16 %v4140
    %v4249 = vunpack.c.l.b16 %v4141
    %v4250 = vunpack.c.l.b16 %v4142
    %v4251 = vunpack.c.l.b16 %v4143
    %v4252 = vunpack.c.l.b16 %v4144
    %v4253 = vunpack.c.l.b16 %v4145
    %v4254 = vunpack.c.l.b16 %v4146
    %v4255 = vunpack.c.l.b16 %v4147
    %v4256 = vunpack.c.l.b16 %v4148
    %v4257 = vunpack.c.l.b16 %v4149
    %v4258 = vunpack.c.l.b16 %v4150
    %v4259 = vunpack.c.l.b16 %v4151
    %v4260 = vunpack.c.l.b16 %v4152
    %v4261 = vunpack.c.l.b16 %v4153
    %v4262 = vunpack.c.l.b16 %v4154
    %v4263 = vunpack.c.l.b16 %v4155
    %v4264 = vunpack.c.l.b16 %v4156
    %v4265 = vunpack.c.l.b16 %v4157
    %v4266 = vunpack.c.l.b16 %v4158
    %v4267 = vunpack.c.l.b16 %v4159
    %v4268 = vunpack.c.l.b16 %v4160
    %v4269 = vunpack.c.l.b16 %v4161
    %v4270 = vunpack.c.l.b16 %v4162
    %v4271 = vunpack.c.l.b16 %v4163
    %v4272 = vunpack.c.l.b16 %v4164
    %v4273 = vunpack.c.l.b16 %v4165
    %v4274 = vunpack.c.l.b16 %v4166
    %v4275 = vunpack.c.l.b16 %v4167
    %v4276 = vunpack.c.l.b16 %v4168
    %v4277 = vunpack.c.l.b16 %v4169
    %v4278 = vunpack.c.l.b16 %v4170
    %v4279 = vunpack.c.l.b16 %v4171
    %v4280 = vunpack.c.l.b16 %v4172
    %v4281 = vunpack.c.l.b16 %v4173
    %v4282 = vunpack.c.l.b16 %v4174
    %v4283 = vunpack.c.l.b16 %v4175
    %v4284 = vunpack.c.l.b16 %v4176
    %v4285 = vunpack.c.l.b16 %v4177
    %v4286 = vunpack.c.l.b16 %v4178
    %v4287 = vunpack.c.l.b16 %v4179
    %v4288 = vunpack.c.l.b16 %v4180
    %v4289 = vunpack.c.l.b16 %v4181
    %v4290 = vunpack.c.l.b16 %v4182
    %v4291 = vunpack.c.l.b16 %v4183
    %v4292 = vunpack.c.l.b16 %v4184
    %v4293 = vunpack.c.l.b16 %v4185
    %v4294 = vpack.c.b16 %v4241, %v4240
    %v4295 = vpack.c.b16 %v4243, %v4242
    %v4296 = vpack.c.b16 %v4245, %v4244
    %v4297 = vpack.c.b16 %v4247, %v4246
    %v4298 = vpack.c.b16 %v4249, %v4248
    %v4299 = vpack.c.b16 %v4251, %v4250
    %v4300 = vpack.c.b16 %v4253, %v4252
    %v4301 = vpack.c.b16 %v4255, %v4254
    %v4302 = vpack.c.b16 %v4257, %v4256
    %v4303 = vpack.c.b16 %v4259, %v4258
    %v4304 = vpack.c.b16 %v4261, %v4260
    %v4305 = vpack.c.b16 %v4263, %v4262
    %v4306 = vpack.c.b16 %v4265, %v4264
    %v4307 = vpack.c.b16 %v4267, %v4266
    %v4308 = vpack.c.b16 %v4269, %v4268
    %v4309 = vpack.c.b16 %v4271, %v4270
    %v4310 = vpack.c.b16 %v4273, %v4272
    %v4311 = vpack.c.b16 %v4275, %v4274
    %v4312 = vpack.c.b16 %v4277, %v4276
    %v4313 = vpack.c.b16 %v4279, %v4278
    %v4314 = vpack.c.b16 %v4281, %v4280
    %v4315 = vpack.c.b16 %v4283, %v4282
    %v4316 = vpack.c.b16 %v4285, %v4284
    %v4317 = vpack.c.b16 %v4287, %v4286
    %v4318 = vpack.c.b16 %v4289, %v4288
    %v4319 = vpack.c.b16 %v4291, %v4290
    %v4320 = vpack.c.b16 %v4293, %v4292
    %vm4321 = vcmask 392192
    %v4323 = vsel %vm4321, %v4294, 0
    %v4326 = vsel %vm4321, %v4295, 0
    %v4329 = vsel %vm4321, %v4296, 0
    %v4332 = vsel %vm4321, %v4297, 0
    %v4335 = vsel %vm4321, %v4298, 0
    %v4338 = vsel %vm4321, %v4299, 0
    %v4341 = vsel %vm4321, %v4300, 0
    %v4344 = vsel %vm4321, %v4301, 0
    %v4347 = vsel %vm4321, %v4302, 0
    %v4350 = vsel %vm4321, %v4303, 0
    %v4353 = vsel %vm4321, %v4304, 0
    %v4356 = vsel %vm4321, %v4305, 0
    %v4359 = vsel %vm4321, %v4306, 0
    %v4362 = vsel %vm4321, %v4307, 0
    %v4365 = vsel %vm4321, %v4308, 0
    %v4368 = vsel %vm4321, %v4309, 0
    %v4371 = vsel %vm4321, %v4310, 0
    %v4374 = vsel %vm4321, %v4311, 0
    %v4377 = vsel %vm4321, %v4312, 0
    %v4380 = vsel %vm4321, %v4313, 0
    %v4383 = vsel %vm4321, %v4314, 0
    %v4386 = vsel %vm4321, %v4315, 0
    %v4389 = vsel %vm4321, %v4316, 0
    %v4392 = vsel %vm4321, %v4317, 0
    %v4395 = vsel %vm4321, %v4318, 0
    %v4398 = vsel %vm4321, %v4319, 0
    %v4401 = vsel %vm4321, %v4320, 0
    %4403 = vmatprep.subr.bf16.mxu0 0
    %4404 = vmatpush1.bf16.msra.mxu0 0
    %4405 = vmatprep.subr.bf16.mxu0 0
    %4406 = vmatpush1.bf16.msra.mxu0 0
    %4407 = vmatprep.subr.bf16.mxu0 0
    %4408 = vmatpush1.bf16.msra.mxu0 0
    %4409 = vmatprep.subr.bf16.mxu0 0
    %4410 = vmatpush1.bf16.msra.mxu0 0
    %4411 = vmatprep.subr.bf16.mxu0 0
    %4412 = vmatpush1.bf16.msra.mxu0 0
    %4413 = vmatprep.subr.bf16.mxu0 0
    %4414 = vmatpush1.bf16.msra.mxu0 %v4127
    %4415 = vmatprep.subr.bf16.mxu0 0
    %4416 = vmatpush1.bf16.msra.mxu0 %v4126
    %4417 = vmatprep.subr.bf16.mxu0 0
    %4418 = vmatpush1.bf16.msra.mxu0 %v4125
    %4419 = vmatprep.subr.bf16.mxu0 0
    %4420 = vmatpush2.bf16.msra.mxu0 0
    %4421 = vmatprep.subr.bf16.mxu0 0
    %4422 = vmatpush2.bf16.msra.mxu0 0
    %4423 = vmatprep.subr.bf16.mxu0 0
    %4424 = vmatpush2.bf16.msra.mxu0 0
    %4425 = vmatprep.subr.bf16.mxu0 0
    %4426 = vmatpush2.bf16.msra.mxu0 0
    %4427 = vmatprep.subr.bf16.mxu0 0
    %4428 = vmatpush2.bf16.msra.mxu0 0
    %4429 = vmatprep.subr.bf16.mxu0 0
    %4430 = vmatpush2.bf16.msra.mxu0 0
    %4431 = vmatprep.subr.bf16.mxu0 0
    %4432 = vmatpush2.bf16.msra.mxu0 0
    %4433 = vmatprep.subr.bf16.mxu0 0
    %4434 = vmatpush2.bf16.msra.mxu0 0
    %4435 = vmatprep.mubr.bf16.mxu0 0
    %4436 = vmatmul.mubr.bf16.gmra.mxu0 %v4323
    %v4437 = vpop.f32.mrf.mxu0
    %v4438 = vadd.f32 0.0, %v4437
    %v4439 = vpop.f32.mrf.mxu0
    %v4440 = vpop.f32.mrf.mxu0
    %v4441 = vadd.f32 0.0, %v4440
    %v4442 = vpop.f32.mrf.mxu0
    %4443 = vmatprep.mubr.bf16.mxu0 0
    %4444 = vmatmul.mubr.bf16.gmra.mxu0 %v4326
    %v4445 = vpop.f32.mrf.mxu0
    %v4446 = vadd.f32 0.0, %v4445
    %v4447 = vpop.f32.mrf.mxu0
    %v4448 = vpop.f32.mrf.mxu0
    %v4449 = vadd.f32 0.0, %v4448
    %v4450 = vpop.f32.mrf.mxu0
    %4451 = vmatprep.mubr.bf16.mxu0 0
    %4452 = vmatmul.mubr.bf16.gmra.mxu0 %v4329
    %v4453 = vpop.f32.mrf.mxu0
    %v4454 = vadd.f32 0.0, %v4453
    %v4455 = vpop.f32.mrf.mxu0
    %v4456 = vpop.f32.mrf.mxu0
    %v4457 = vadd.f32 0.0, %v4456
    %v4458 = vpop.f32.mrf.mxu0
    %4459 = vmatprep.mubr.bf16.mxu0 0
    %4460 = vmatmul.mubr.bf16.gmra.mxu0 %v4332
    %v4461 = vpop.f32.mrf.mxu0
    %v4462 = vadd.f32 0.0, %v4461
    %v4463 = vpop.f32.mrf.mxu0
    %v4464 = vpop.f32.mrf.mxu0
    %v4465 = vadd.f32 0.0, %v4464
    %v4466 = vpop.f32.mrf.mxu0
    %4467 = vmatprep.mubr.bf16.mxu0 0
    %4468 = vmatmul.mubr.bf16.gmra.mxu0 %v4335
    %v4469 = vpop.f32.mrf.mxu0
    %v4470 = vadd.f32 0.0, %v4469
    %v4471 = vpop.f32.mrf.mxu0
    %v4472 = vpop.f32.mrf.mxu0
    %v4473 = vadd.f32 0.0, %v4472
    %v4474 = vpop.f32.mrf.mxu0
    %4475 = vmatprep.mubr.bf16.mxu0 0
    %4476 = vmatmul.mubr.bf16.gmra.mxu0 %v4338
    %v4477 = vpop.f32.mrf.mxu0
    %v4478 = vadd.f32 0.0, %v4477
    %v4479 = vpop.f32.mrf.mxu0
    %v4480 = vpop.f32.mrf.mxu0
    %v4481 = vadd.f32 0.0, %v4480
    %v4482 = vpop.f32.mrf.mxu0
    %4483 = vmatprep.mubr.bf16.mxu0 0
    %4484 = vmatmul.mubr.bf16.gmra.mxu0 %v4341
    %v4485 = vpop.f32.mrf.mxu0
    %v4486 = vadd.f32 0.0, %v4485
    %v4487 = vpop.f32.mrf.mxu0
    %v4488 = vpop.f32.mrf.mxu0
    %v4489 = vadd.f32 0.0, %v4488
    %v4490 = vpop.f32.mrf.mxu0
    %4491 = vmatprep.mubr.bf16.mxu0 0
    %4492 = vmatmul.mubr.bf16.gmra.mxu0 %v4344
    %v4493 = vpop.f32.mrf.mxu0
    %v4494 = vadd.f32 0.0, %v4493
    %v4495 = vpop.f32.mrf.mxu0
    %v4496 = vpop.f32.mrf.mxu0
    %v4497 = vadd.f32 0.0, %v4496
    %v4498 = vpop.f32.mrf.mxu0
    %4499 = vmatprep.mubr.bf16.mxu0 0
    %4500 = vmatmul.mubr.bf16.gmra.mxu0 %v4347
    %v4501 = vpop.f32.mrf.mxu0
    %v4502 = vadd.f32 0.0, %v4501
    %v4503 = vpop.f32.mrf.mxu0
    %v4504 = vpop.f32.mrf.mxu0
    %v4505 = vadd.f32 0.0, %v4504
    %v4506 = vpop.f32.mrf.mxu0
    %4507 = vmatprep.mubr.bf16.mxu0 0
    %4508 = vmatmul.mubr.bf16.gmra.mxu0 %v4350
    %v4509 = vpop.f32.mrf.mxu0
    %v4510 = vadd.f32 0.0, %v4509
    %v4511 = vpop.f32.mrf.mxu0
    %v4512 = vpop.f32.mrf.mxu0
    %v4513 = vadd.f32 0.0, %v4512
    %v4514 = vpop.f32.mrf.mxu0
    %4515 = vmatprep.mubr.bf16.mxu0 0
    %4516 = vmatmul.mubr.bf16.gmra.mxu0 %v4353
    %v4517 = vpop.f32.mrf.mxu0
    %v4518 = vadd.f32 0.0, %v4517
    %v4519 = vpop.f32.mrf.mxu0
    %v4520 = vpop.f32.mrf.mxu0
    %v4521 = vadd.f32 0.0, %v4520
    %v4522 = vpop.f32.mrf.mxu0
    %4523 = vmatprep.mubr.bf16.mxu0 0
    %4524 = vmatmul.mubr.bf16.gmra.mxu0 %v4356
    %v4525 = vpop.f32.mrf.mxu0
    %v4526 = vadd.f32 0.0, %v4525
    %v4527 = vpop.f32.mrf.mxu0
    %v4528 = vpop.f32.mrf.mxu0
    %v4529 = vadd.f32 0.0, %v4528
    %v4530 = vpop.f32.mrf.mxu0
    %4531 = vmatprep.mubr.bf16.mxu0 0
    %4532 = vmatmul.mubr.bf16.gmra.mxu0 %v4359
    %v4533 = vpop.f32.mrf.mxu0
    %v4534 = vadd.f32 0.0, %v4533
    %v4535 = vpop.f32.mrf.mxu0
    %v4536 = vpop.f32.mrf.mxu0
    %v4537 = vadd.f32 0.0, %v4536
    %v4538 = vpop.f32.mrf.mxu0
    %4539 = vmatprep.mubr.bf16.mxu0 0
    %4540 = vmatmul.mubr.bf16.gmra.mxu0 %v4362
    %v4541 = vpop.f32.mrf.mxu0
    %v4542 = vadd.f32 0.0, %v4541
    %v4543 = vpop.f32.mrf.mxu0
    %v4544 = vpop.f32.mrf.mxu0
    %v4545 = vadd.f32 0.0, %v4544
    %v4546 = vpop.f32.mrf.mxu0
    %4547 = vmatprep.mubr.bf16.mxu0 0
    %4548 = vmatmul.mubr.bf16.gmra.mxu0 %v4365
    %v4549 = vpop.f32.mrf.mxu0
    %v4550 = vadd.f32 0.0, %v4549
    %v4551 = vpop.f32.mrf.mxu0
    %v4552 = vpop.f32.mrf.mxu0
    %v4553 = vadd.f32 0.0, %v4552
    %v4554 = vpop.f32.mrf.mxu0
    %4555 = vmatprep.mubr.bf16.mxu0 0
    %4556 = vmatmul.mubr.bf16.gmra.mxu0 %v4368
    %v4557 = vpop.f32.mrf.mxu0
    %v4558 = vadd.f32 0.0, %v4557
    %v4559 = vpop.f32.mrf.mxu0
    %v4560 = vpop.f32.mrf.mxu0
    %v4561 = vadd.f32 0.0, %v4560
    %v4562 = vpop.f32.mrf.mxu0
    %4563 = vmatprep.mubr.bf16.mxu0 0
    %4564 = vmatmul.mubr.bf16.gmra.mxu0 %v4371
    %v4565 = vpop.f32.mrf.mxu0
    %v4566 = vadd.f32 0.0, %v4565
    %v4567 = vpop.f32.mrf.mxu0
    %v4568 = vpop.f32.mrf.mxu0
    %v4569 = vadd.f32 0.0, %v4568
    %v4570 = vpop.f32.mrf.mxu0
    %4571 = vmatprep.mubr.bf16.mxu0 0
    %4572 = vmatmul.mubr.bf16.gmra.mxu0 %v4374
    %v4573 = vpop.f32.mrf.mxu0
    %v4574 = vadd.f32 0.0, %v4573
    %v4575 = vpop.f32.mrf.mxu0
    %v4576 = vpop.f32.mrf.mxu0
    %v4577 = vadd.f32 0.0, %v4576
    %v4578 = vpop.f32.mrf.mxu0
    %4579 = vmatprep.mubr.bf16.mxu0 0
    %4580 = vmatmul.mubr.bf16.gmra.mxu0 %v4377
    %v4581 = vpop.f32.mrf.mxu0
    %v4582 = vadd.f32 0.0, %v4581
    %v4583 = vpop.f32.mrf.mxu0
    %v4584 = vpop.f32.mrf.mxu0
    %v4585 = vadd.f32 0.0, %v4584
    %v4586 = vpop.f32.mrf.mxu0
    %4587 = vmatprep.mubr.bf16.mxu0 0
    %4588 = vmatmul.mubr.bf16.gmra.mxu0 %v4380
    %v4589 = vpop.f32.mrf.mxu0
    %v4590 = vadd.f32 0.0, %v4589
    %v4591 = vpop.f32.mrf.mxu0
    %v4592 = vpop.f32.mrf.mxu0
    %v4593 = vadd.f32 0.0, %v4592
    %v4594 = vpop.f32.mrf.mxu0
    %4595 = vmatprep.mubr.bf16.mxu0 0
    %4596 = vmatmul.mubr.bf16.gmra.mxu0 %v4383
    %v4597 = vpop.f32.mrf.mxu0
    %v4598 = vadd.f32 0.0, %v4597
    %v4599 = vpop.f32.mrf.mxu0
    %v4600 = vpop.f32.mrf.mxu0
    %v4601 = vadd.f32 0.0, %v4600
    %v4602 = vpop.f32.mrf.mxu0
    %4603 = vmatprep.mubr.bf16.mxu0 0
    %4604 = vmatmul.mubr.bf16.gmra.mxu0 %v4386
    %v4605 = vpop.f32.mrf.mxu0
    %v4606 = vadd.f32 0.0, %v4605
    %v4607 = vpop.f32.mrf.mxu0
    %v4608 = vpop.f32.mrf.mxu0
    %v4609 = vadd.f32 0.0, %v4608
    %v4610 = vpop.f32.mrf.mxu0
    %4611 = vmatprep.mubr.bf16.mxu0 0
    %4612 = vmatmul.mubr.bf16.gmra.mxu0 %v4389
    %v4613 = vpop.f32.mrf.mxu0
    %v4614 = vadd.f32 0.0, %v4613
    %v4615 = vpop.f32.mrf.mxu0
    %v4616 = vpop.f32.mrf.mxu0
    %v4617 = vadd.f32 0.0, %v4616
    %v4618 = vpop.f32.mrf.mxu0
    %4619 = vmatprep.mubr.bf16.mxu0 0
    %4620 = vmatmul.mubr.bf16.gmra.mxu0 %v4392
    %v4621 = vpop.f32.mrf.mxu0
    %v4622 = vadd.f32 0.0, %v4621
    %v4623 = vpop.f32.mrf.mxu0
    %v4624 = vpop.f32.mrf.mxu0
    %v4625 = vadd.f32 0.0, %v4624
    %v4626 = vpop.f32.mrf.mxu0
    %4627 = vmatprep.mubr.bf16.mxu0 0
    %4628 = vmatmul.mubr.bf16.gmra.mxu0 %v4395
    %v4629 = vpop.f32.mrf.mxu0
    %v4630 = vadd.f32 0.0, %v4629
    %v4631 = vpop.f32.mrf.mxu0
    %v4632 = vpop.f32.mrf.mxu0
    %v4633 = vadd.f32 0.0, %v4632
    %v4634 = vpop.f32.mrf.mxu0
    %4635 = vmatprep.mubr.bf16.mxu0 0
    %4636 = vmatmul.mubr.bf16.gmra.mxu0 %v4398
    %v4637 = vpop.f32.mrf.mxu0
    %v4638 = vadd.f32 0.0, %v4637
    %v4639 = vpop.f32.mrf.mxu0
    %v4640 = vpop.f32.mrf.mxu0
    %v4641 = vadd.f32 0.0, %v4640
    %v4642 = vpop.f32.mrf.mxu0
    %4643 = vmatprep.mubr.bf16.mxu0 0
    %4644 = vmatmul.mubr.bf16.gmra.mxu0 %v4401
    %v4645 = vpop.f32.mrf.mxu0
    %v4646 = vadd.f32 0.0, %v4645
    %v4647 = vpop.f32.mrf.mxu0
    %v4648 = vpop.f32.mrf.mxu0
    %v4649 = vadd.f32 0.0, %v4648
    %v4650 = vpop.f32.mrf.mxu0
    %4651 = vdwg.mxu0
    %v4652 = vpack.c.bf16 %v4441, %v4438
    %v4653 = vpack.c.bf16 %v4449, %v4446
    %v4654 = vpack.c.bf16 %v4457, %v4454
    %v4655 = vpack.c.bf16 %v4465, %v4462
    %v4656 = vpack.c.bf16 %v4473, %v4470
    %v4657 = vpack.c.bf16 %v4481, %v4478
    %v4658 = vpack.c.bf16 %v4489, %v4486
    %v4659 = vpack.c.bf16 %v4497, %v4494
    %v4660 = vpack.c.bf16 %v4505, %v4502
    %v4661 = vpack.c.bf16 %v4513, %v4510
    %v4662 = vpack.c.bf16 %v4521, %v4518
    %v4663 = vpack.c.bf16 %v4529, %v4526
    %v4664 = vpack.c.bf16 %v4537, %v4534
    %v4665 = vpack.c.bf16 %v4545, %v4542
    %v4666 = vpack.c.bf16 %v4553, %v4550
    %v4667 = vpack.c.bf16 %v4561, %v4558
    %v4668 = vpack.c.bf16 %v4569, %v4566
    %v4669 = vpack.c.bf16 %v4577, %v4574
    %v4670 = vpack.c.bf16 %v4585, %v4582
    %v4671 = vpack.c.bf16 %v4593, %v4590
    %v4672 = vpack.c.bf16 %v4601, %v4598
    %v4673 = vpack.c.bf16 %v4609, %v4606
    %v4674 = vpack.c.bf16 %v4617, %v4614
    %v4675 = vpack.c.bf16 %v4625, %v4622
    %v4676 = vpack.c.bf16 %v4633, %v4630
    %v4677 = vpack.c.bf16 %v4641, %v4638
    %v4678 = vpack.c.bf16 %v4649, %v4646
    %v4679 = vld [vmem:[%s5] sm:$0xf]
    %v4680 = vld [vmem:[%s5 + $0x4] sm:$0xf]
    %v4681 = vld [vmem:[%s5 + $0x8] sm:$0xf]
    %v4682 = vld [vmem:[%s5 + $0xc] sm:$0xf]
    %v4683 = vld [vmem:[%s5 + $0x10] sm:$0xf]
    %v4684 = vld [vmem:[%s5 + $0x14] sm:$0xf]
    %v4685 = vld [vmem:[%s5 + $0x18] sm:$0xf]
    %v4686 = vld [vmem:[%s5 + $0x1c] sm:$0xf]
    %s4687 = scalar_lea.vmem %s5, 32
    %v4688 = vld [vmem:[%s4687] sm:$0xf]
    %v4689 = vld [vmem:[%s4687 + $0x4] sm:$0xf]
    %v4690 = vld [vmem:[%s4687 + $0x8] sm:$0xf]
    %v4691 = vld [vmem:[%s4687 + $0xc] sm:$0xf]
    %v4692 = vld [vmem:[%s4687 + $0x10] sm:$0xf]
    %v4693 = vld [vmem:[%s4687 + $0x14] sm:$0xf]
    %v4694 = vld [vmem:[%s4687 + $0x18] sm:$0xf]
    %v4695 = vld [vmem:[%s4687 + $0x1c] sm:$0xf]
    %v4704 = vunpack.c.l.b16 %v4688
    %v4705 = vunpack.c.l.b16 %v4689
    %v4706 = vunpack.c.l.b16 %v4690
    %v4707 = vunpack.c.l.b16 %v4691
    %v4708 = vunpack.c.l.b16 %v4692
    %v4709 = vunpack.c.l.b16 %v4693
    %v4710 = vunpack.c.l.b16 %v4694
    %v4711 = vunpack.c.l.b16 %v4695
    %v4712 = vpack.c.b16 %v4705, %v4704
    %v4713 = vpack.c.b16 %v4707, %v4706
    %v4714 = vpack.c.b16 %v4709, %v4708
    %v4715 = vpack.c.b16 %v4711, %v4710
    %vm4720 = vcmask 523264
    %v4722 = vsel %vm4720, %v4655, 0
    %v4725 = vsel %vm4720, %v4656, 0
    %v4728 = vsel %vm4720, %v4657, 0
    %4730 = vmatprep.subr.bf16.mxu0 0
    %4731 = vmatpush1.bf16.msra.mxu0 0
    %4732 = vmatprep.subr.bf16.mxu0 0
    %4733 = vmatpush1.bf16.msra.mxu0 0
    %4734 = vmatprep.subr.bf16.mxu0 0
    %4735 = vmatpush1.bf16.msra.mxu0 0
    %4736 = vmatprep.subr.bf16.mxu0 0
    %4737 = vmatpush1.bf16.msra.mxu0 0
    %4738 = vmatprep.subr.bf16.mxu0 0
    %4739 = vmatpush1.bf16.msra.mxu0 %v4715
    %4740 = vmatprep.subr.bf16.mxu0 0
    %4741 = vmatpush1.bf16.msra.mxu0 %v4714
    %4742 = vmatprep.subr.bf16.mxu0 0
    %4743 = vmatpush1.bf16.msra.mxu0 %v4713
    %4744 = vmatprep.subr.bf16.mxu0 0
    %4745 = vmatpush1.bf16.msra.mxu0 %v4712
    %4746 = vmatprep.subr.bf16.mxu0 0
    %4747 = vmatpush2.bf16.msra.mxu0 0
    %4748 = vmatprep.subr.bf16.mxu0 0
    %4749 = vmatpush2.bf16.msra.mxu0 0
    %4750 = vmatprep.subr.bf16.mxu0 0
    %4751 = vmatpush2.bf16.msra.mxu0 0
    %4752 = vmatprep.subr.bf16.mxu0 0
    %4753 = vmatpush2.bf16.msra.mxu0 0
    %4754 = vmatprep.subr.bf16.mxu0 0
    %4755 = vmatpush2.bf16.msra.mxu0 0
    %4756 = vmatprep.subr.bf16.mxu0 0
    %4757 = vmatpush2.bf16.msra.mxu0 0
    %4758 = vmatprep.subr.bf16.mxu0 0
    %4759 = vmatpush2.bf16.msra.mxu0 0
    %4760 = vmatprep.subr.bf16.mxu0 0
    %4761 = vmatpush2.bf16.msra.mxu0 0
    %4762 = vmatprep.mubr.bf16.mxu0 0
    %4763 = vmatmul.mubr.bf16.gmra.mxu0 %v4722
    %v4764 = vpop.f32.mrf.mxu0
    %v4765 = vadd.f32 0.0, %v4764
    %v4766 = vpop.f32.mrf.mxu0
    %v4767 = vpop.f32.mrf.mxu0
    %v4768 = vadd.f32 0.0, %v4767
    %v4769 = vpop.f32.mrf.mxu0
    %4770 = vmatprep.mubr.bf16.mxu0 0
    %4771 = vmatmul.mubr.bf16.gmra.mxu0 %v4725
    %v4772 = vpop.f32.mrf.mxu0
    %v4773 = vadd.f32 0.0, %v4772
    %v4774 = vpop.f32.mrf.mxu0
    %v4775 = vpop.f32.mrf.mxu0
    %v4776 = vadd.f32 0.0, %v4775
    %v4777 = vpop.f32.mrf.mxu0
    %4778 = vmatprep.mubr.bf16.mxu0 0
    %4779 = vmatmul.mubr.bf16.gmra.mxu0 %v4728
    %v4780 = vpop.f32.mrf.mxu0
    %v4781 = vadd.f32 0.0, %v4780
    %v4782 = vpop.f32.mrf.mxu0
    %v4783 = vpop.f32.mrf.mxu0
    %v4784 = vadd.f32 0.0, %v4783
    %v4785 = vpop.f32.mrf.mxu0
    %4786 = vdwg.mxu0
    %v4795 = vunpack.c.l.b16 %v4679
    %v4796 = vunpack.c.l.b16 %v4680
    %v4797 = vunpack.c.l.b16 %v4681
    %v4798 = vunpack.c.l.b16 %v4682
    %v4799 = vunpack.c.l.b16 %v4683
    %v4800 = vunpack.c.l.b16 %v4684
    %v4801 = vunpack.c.l.b16 %v4685
    %v4802 = vunpack.c.l.b16 %v4686
    %v4803 = vpack.c.b16 %v4796, %v4795
    %v4804 = vpack.c.b16 %v4798, %v4797
    %v4805 = vpack.c.b16 %v4800, %v4799
    %v4806 = vpack.c.b16 %v4802, %v4801
    %v4812 = vsel %vm4720, %v4652, 0
    %v4815 = vsel %vm4720, %v4653, 0
    %v4818 = vsel %vm4720, %v4654, 0
    %4820 = vmatprep.subr.bf16.mxu0 0
    %4821 = vmatpush1.bf16.msra.mxu0 0
    %4822 = vmatprep.subr.bf16.mxu0 0
    %4823 = vmatpush1.bf16.msra.mxu0 0
    %4824 = vmatprep.subr.bf16.mxu0 0
    %4825 = vmatpush1.bf16.msra.mxu0 0
    %4826 = vmatprep.subr.bf16.mxu0 0
    %4827 = vmatpush1.bf16.msra.mxu0 0
    %4828 = vmatprep.subr.bf16.mxu0 0
    %4829 = vmatpush1.bf16.msra.mxu0 %v4806
    %4830 = vmatprep.subr.bf16.mxu0 0
    %4831 = vmatpush1.bf16.msra.mxu0 %v4805
    %4832 = vmatprep.subr.bf16.mxu0 0
    %4833 = vmatpush1.bf16.msra.mxu0 %v4804
    %4834 = vmatprep.subr.bf16.mxu0 0
    %4835 = vmatpush1.bf16.msra.mxu0 %v4803
    %4836 = vmatprep.subr.bf16.mxu0 0
    %4837 = vmatpush2.bf16.msra.mxu0 0
    %4838 = vmatprep.subr.bf16.mxu0 0
    %4839 = vmatpush2.bf16.msra.mxu0 0
    %4840 = vmatprep.subr.bf16.mxu0 0
    %4841 = vmatpush2.bf16.msra.mxu0 0
    %4842 = vmatprep.subr.bf16.mxu0 0
    %4843 = vmatpush2.bf16.msra.mxu0 0
    %4844 = vmatprep.subr.bf16.mxu0 0
    %4845 = vmatpush2.bf16.msra.mxu0 0
    %4846 = vmatprep.subr.bf16.mxu0 0
    %4847 = vmatpush2.bf16.msra.mxu0 0
    %4848 = vmatprep.subr.bf16.mxu0 0
    %4849 = vmatpush2.bf16.msra.mxu0 0
    %4850 = vmatprep.subr.bf16.mxu0 0
    %4851 = vmatpush2.bf16.msra.mxu0 0
    %4852 = vmatprep.mubr.bf16.mxu0 0
    %4853 = vmatmul.mubr.bf16.gmra.mxu0 %v4812
    %v4854 = vpop.f32.mrf.mxu0
    %v4855 = vadd.f32 %v4765, %v4854
    %v4856 = vpop.f32.mrf.mxu0
    %v4857 = vpop.f32.mrf.mxu0
    %v4858 = vadd.f32 %v4768, %v4857
    %v4859 = vpop.f32.mrf.mxu0
    %4860 = vmatprep.mubr.bf16.mxu0 0
    %4861 = vmatmul.mubr.bf16.gmra.mxu0 %v4815
    %v4862 = vpop.f32.mrf.mxu0
    %v4863 = vadd.f32 %v4773, %v4862
    %v4864 = vpop.f32.mrf.mxu0
    %v4865 = vpop.f32.mrf.mxu0
    %v4866 = vadd.f32 %v4776, %v4865
    %v4867 = vpop.f32.mrf.mxu0
    %4868 = vmatprep.mubr.bf16.mxu0 0
    %4869 = vmatmul.mubr.bf16.gmra.mxu0 %v4818
    %v4870 = vpop.f32.mrf.mxu0
    %v4871 = vadd.f32 %v4781, %v4870
    %v4872 = vpop.f32.mrf.mxu0
    %v4873 = vpop.f32.mrf.mxu0
    %v4874 = vadd.f32 %v4784, %v4873
    %v4875 = vpop.f32.mrf.mxu0
    %4876 = vdwg.mxu0
    %s4877 = scalar_lea.vmem %s5, 64
    %v4878 = vld [vmem:[%s4877] sm:$0xf]
    %v4879 = vld [vmem:[%s4877 + $0x4] sm:$0xf]
    %v4880 = vld [vmem:[%s4877 + $0x8] sm:$0xf]
    %v4881 = vld [vmem:[%s4877 + $0xc] sm:$0xf]
    %v4882 = vld [vmem:[%s4877 + $0x10] sm:$0xf]
    %v4883 = vld [vmem:[%s4877 + $0x14] sm:$0xf]
    %v4884 = vld [vmem:[%s4877 + $0x18] sm:$0xf]
    %v4885 = vld [vmem:[%s4877 + $0x1c] sm:$0xf]
    %v4894 = vunpack.c.l.b16 %v4878
    %v4895 = vunpack.c.l.b16 %v4879
    %v4896 = vunpack.c.l.b16 %v4880
    %v4897 = vunpack.c.l.b16 %v4881
    %v4898 = vunpack.c.l.b16 %v4882
    %v4899 = vunpack.c.l.b16 %v4883
    %v4900 = vunpack.c.l.b16 %v4884
    %v4901 = vunpack.c.l.b16 %v4885
    %v4902 = vpack.c.b16 %v4895, %v4894
    %v4903 = vpack.c.b16 %v4897, %v4896
    %v4904 = vpack.c.b16 %v4899, %v4898
    %v4905 = vpack.c.b16 %v4901, %v4900
    %v4911 = vsel %vm4720, %v4658, 0
    %v4914 = vsel %vm4720, %v4659, 0
    %v4917 = vsel %vm4720, %v4660, 0
    %4919 = vmatprep.subr.bf16.mxu0 0
    %4920 = vmatpush1.bf16.msra.mxu0 0
    %4921 = vmatprep.subr.bf16.mxu0 0
    %4922 = vmatpush1.bf16.msra.mxu0 0
    %4923 = vmatprep.subr.bf16.mxu0 0
    %4924 = vmatpush1.bf16.msra.mxu0 0
    %4925 = vmatprep.subr.bf16.mxu0 0
    %4926 = vmatpush1.bf16.msra.mxu0 0
    %4927 = vmatprep.subr.bf16.mxu0 0
    %4928 = vmatpush1.bf16.msra.mxu0 %v4905
    %4929 = vmatprep.subr.bf16.mxu0 0
    %4930 = vmatpush1.bf16.msra.mxu0 %v4904
    %4931 = vmatprep.subr.bf16.mxu0 0
    %4932 = vmatpush1.bf16.msra.mxu0 %v4903
    %4933 = vmatprep.subr.bf16.mxu0 0
    %4934 = vmatpush1.bf16.msra.mxu0 %v4902
    %4935 = vmatprep.subr.bf16.mxu0 0
    %4936 = vmatpush2.bf16.msra.mxu0 0
    %4937 = vmatprep.subr.bf16.mxu0 0
    %4938 = vmatpush2.bf16.msra.mxu0 0
    %4939 = vmatprep.subr.bf16.mxu0 0
    %4940 = vmatpush2.bf16.msra.mxu0 0
    %4941 = vmatprep.subr.bf16.mxu0 0
    %4942 = vmatpush2.bf16.msra.mxu0 0
    %4943 = vmatprep.subr.bf16.mxu0 0
    %4944 = vmatpush2.bf16.msra.mxu0 0
    %4945 = vmatprep.subr.bf16.mxu0 0
    %4946 = vmatpush2.bf16.msra.mxu0 0
    %4947 = vmatprep.subr.bf16.mxu0 0
    %4948 = vmatpush2.bf16.msra.mxu0 0
    %4949 = vmatprep.subr.bf16.mxu0 0
    %4950 = vmatpush2.bf16.msra.mxu0 0
    %4951 = vmatprep.mubr.bf16.mxu0 0
    %4952 = vmatmul.mubr.bf16.gmra.mxu0 %v4911
    %v4953 = vpop.f32.mrf.mxu0
    %v4954 = vadd.f32 0.0, %v4953
    %v4955 = vpop.f32.mrf.mxu0
    %v4956 = vpop.f32.mrf.mxu0
    %v4957 = vadd.f32 0.0, %v4956
    %v4958 = vpop.f32.mrf.mxu0
    %4959 = vmatprep.mubr.bf16.mxu0 0
    %4960 = vmatmul.mubr.bf16.gmra.mxu0 %v4914
    %v4961 = vpop.f32.mrf.mxu0
    %v4962 = vadd.f32 0.0, %v4961
    %v4963 = vpop.f32.mrf.mxu0
    %v4964 = vpop.f32.mrf.mxu0
    %v4965 = vadd.f32 0.0, %v4964
    %v4966 = vpop.f32.mrf.mxu0
    %4967 = vmatprep.mubr.bf16.mxu0 0
    %4968 = vmatmul.mubr.bf16.gmra.mxu0 %v4917
    %v4969 = vpop.f32.mrf.mxu0
    %v4970 = vadd.f32 0.0, %v4969
    %v4971 = vpop.f32.mrf.mxu0
    %v4972 = vpop.f32.mrf.mxu0
    %v4973 = vadd.f32 0.0, %v4972
    %v4974 = vpop.f32.mrf.mxu0
    %4975 = vdwg.mxu0
    %v4976 = vadd.f32 %v4855, %v4954
    %v4977 = vadd.f32 %v4858, %v4957
    %v4978 = vadd.f32 %v4863, %v4962
    %v4979 = vadd.f32 %v4866, %v4965
    %v4980 = vadd.f32 %v4871, %v4970
    %v4981 = vadd.f32 %v4874, %v4973
    %s4982 = scalar_lea.vmem %s5, 96
    %v4983 = vld [vmem:[%s4982] sm:$0xf]
    %v4984 = vld [vmem:[%s4982 + $0x4] sm:$0xf]
    %v4985 = vld [vmem:[%s4982 + $0x8] sm:$0xf]
    %v4986 = vld [vmem:[%s4982 + $0xc] sm:$0xf]
    %v4987 = vld [vmem:[%s4982 + $0x10] sm:$0xf]
    %v4988 = vld [vmem:[%s4982 + $0x14] sm:$0xf]
    %v4989 = vld [vmem:[%s4982 + $0x18] sm:$0xf]
    %v4990 = vld [vmem:[%s4982 + $0x1c] sm:$0xf]
    %v4999 = vunpack.c.l.b16 %v4983
    %v5000 = vunpack.c.l.b16 %v4984
    %v5001 = vunpack.c.l.b16 %v4985
    %v5002 = vunpack.c.l.b16 %v4986
    %v5003 = vunpack.c.l.b16 %v4987
    %v5004 = vunpack.c.l.b16 %v4988
    %v5005 = vunpack.c.l.b16 %v4989
    %v5006 = vunpack.c.l.b16 %v4990
    %v5007 = vpack.c.b16 %v5000, %v4999
    %v5008 = vpack.c.b16 %v5002, %v5001
    %v5009 = vpack.c.b16 %v5004, %v5003
    %v5010 = vpack.c.b16 %v5006, %v5005
    %v5016 = vsel %vm4720, %v4661, 0
    %v5019 = vsel %vm4720, %v4662, 0
    %v5022 = vsel %vm4720, %v4663, 0
    %5024 = vmatprep.subr.bf16.mxu0 0
    %5025 = vmatpush1.bf16.msra.mxu0 0
    %5026 = vmatprep.subr.bf16.mxu0 0
    %5027 = vmatpush1.bf16.msra.mxu0 0
    %5028 = vmatprep.subr.bf16.mxu0 0
    %5029 = vmatpush1.bf16.msra.mxu0 0
    %5030 = vmatprep.subr.bf16.mxu0 0
    %5031 = vmatpush1.bf16.msra.mxu0 0
    %5032 = vmatprep.subr.bf16.mxu0 0
    %5033 = vmatpush1.bf16.msra.mxu0 %v5010
    %5034 = vmatprep.subr.bf16.mxu0 0
    %5035 = vmatpush1.bf16.msra.mxu0 %v5009
    %5036 = vmatprep.subr.bf16.mxu0 0
    %5037 = vmatpush1.bf16.msra.mxu0 %v5008
    %5038 = vmatprep.subr.bf16.mxu0 0
    %5039 = vmatpush1.bf16.msra.mxu0 %v5007
    %5040 = vmatprep.subr.bf16.mxu0 0
    %5041 = vmatpush2.bf16.msra.mxu0 0
    %5042 = vmatprep.subr.bf16.mxu0 0
    %5043 = vmatpush2.bf16.msra.mxu0 0
    %5044 = vmatprep.subr.bf16.mxu0 0
    %5045 = vmatpush2.bf16.msra.mxu0 0
    %5046 = vmatprep.subr.bf16.mxu0 0
    %5047 = vmatpush2.bf16.msra.mxu0 0
    %5048 = vmatprep.subr.bf16.mxu0 0
    %5049 = vmatpush2.bf16.msra.mxu0 0
    %5050 = vmatprep.subr.bf16.mxu0 0
    %5051 = vmatpush2.bf16.msra.mxu0 0
    %5052 = vmatprep.subr.bf16.mxu0 0
    %5053 = vmatpush2.bf16.msra.mxu0 0
    %5054 = vmatprep.subr.bf16.mxu0 0
    %5055 = vmatpush2.bf16.msra.mxu0 0
    %5056 = vmatprep.mubr.bf16.mxu0 0
    %5057 = vmatmul.mubr.bf16.gmra.mxu0 %v5016
    %v5058 = vpop.f32.mrf.mxu0
    %v5059 = vadd.f32 0.0, %v5058
    %v5060 = vpop.f32.mrf.mxu0
    %v5061 = vpop.f32.mrf.mxu0
    %v5062 = vadd.f32 0.0, %v5061
    %v5063 = vpop.f32.mrf.mxu0
    %5064 = vmatprep.mubr.bf16.mxu0 0
    %5065 = vmatmul.mubr.bf16.gmra.mxu0 %v5019
    %v5066 = vpop.f32.mrf.mxu0
    %v5067 = vadd.f32 0.0, %v5066
    %v5068 = vpop.f32.mrf.mxu0
    %v5069 = vpop.f32.mrf.mxu0
    %v5070 = vadd.f32 0.0, %v5069
    %v5071 = vpop.f32.mrf.mxu0
    %5072 = vmatprep.mubr.bf16.mxu0 0
    %5073 = vmatmul.mubr.bf16.gmra.mxu0 %v5022
    %v5074 = vpop.f32.mrf.mxu0
    %v5075 = vadd.f32 0.0, %v5074
    %v5076 = vpop.f32.mrf.mxu0
    %v5077 = vpop.f32.mrf.mxu0
    %v5078 = vadd.f32 0.0, %v5077
    %v5079 = vpop.f32.mrf.mxu0
    %5080 = vdwg.mxu0
    %v5081 = vadd.f32 %v4976, %v5059
    %v5082 = vadd.f32 %v4977, %v5062
    %v5083 = vadd.f32 %v4978, %v5067
    %v5084 = vadd.f32 %v4979, %v5070
    %v5085 = vadd.f32 %v4980, %v5075
    %v5086 = vadd.f32 %v4981, %v5078
    %s5087 = scalar_lea.vmem %s5, 128
    %v5088 = vld [vmem:[%s5087] sm:$0xf]
    %v5089 = vld [vmem:[%s5087 + $0x4] sm:$0xf]
    %v5090 = vld [vmem:[%s5087 + $0x8] sm:$0xf]
    %v5091 = vld [vmem:[%s5087 + $0xc] sm:$0xf]
    %v5092 = vld [vmem:[%s5087 + $0x10] sm:$0xf]
    %v5093 = vld [vmem:[%s5087 + $0x14] sm:$0xf]
    %v5094 = vld [vmem:[%s5087 + $0x18] sm:$0xf]
    %v5095 = vld [vmem:[%s5087 + $0x1c] sm:$0xf]
    %v5104 = vunpack.c.l.b16 %v5088
    %v5105 = vunpack.c.l.b16 %v5089
    %v5106 = vunpack.c.l.b16 %v5090
    %v5107 = vunpack.c.l.b16 %v5091
    %v5108 = vunpack.c.l.b16 %v5092
    %v5109 = vunpack.c.l.b16 %v5093
    %v5110 = vunpack.c.l.b16 %v5094
    %v5111 = vunpack.c.l.b16 %v5095
    %v5112 = vpack.c.b16 %v5105, %v5104
    %v5113 = vpack.c.b16 %v5107, %v5106
    %v5114 = vpack.c.b16 %v5109, %v5108
    %v5115 = vpack.c.b16 %v5111, %v5110
    %v5121 = vsel %vm4720, %v4664, 0
    %v5124 = vsel %vm4720, %v4665, 0
    %v5127 = vsel %vm4720, %v4666, 0
    %5129 = vmatprep.subr.bf16.mxu0 0
    %5130 = vmatpush1.bf16.msra.mxu0 0
    %5131 = vmatprep.subr.bf16.mxu0 0
    %5132 = vmatpush1.bf16.msra.mxu0 0
    %5133 = vmatprep.subr.bf16.mxu0 0
    %5134 = vmatpush1.bf16.msra.mxu0 0
    %5135 = vmatprep.subr.bf16.mxu0 0
    %5136 = vmatpush1.bf16.msra.mxu0 0
    %5137 = vmatprep.subr.bf16.mxu0 0
    %5138 = vmatpush1.bf16.msra.mxu0 %v5115
    %5139 = vmatprep.subr.bf16.mxu0 0
    %5140 = vmatpush1.bf16.msra.mxu0 %v5114
    %5141 = vmatprep.subr.bf16.mxu0 0
    %5142 = vmatpush1.bf16.msra.mxu0 %v5113
    %5143 = vmatprep.subr.bf16.mxu0 0
    %5144 = vmatpush1.bf16.msra.mxu0 %v5112
    %5145 = vmatprep.subr.bf16.mxu0 0
    %5146 = vmatpush2.bf16.msra.mxu0 0
    %5147 = vmatprep.subr.bf16.mxu0 0
    %5148 = vmatpush2.bf16.msra.mxu0 0
    %5149 = vmatprep.subr.bf16.mxu0 0
    %5150 = vmatpush2.bf16.msra.mxu0 0
    %5151 = vmatprep.subr.bf16.mxu0 0
    %5152 = vmatpush2.bf16.msra.mxu0 0
    %5153 = vmatprep.subr.bf16.mxu0 0
    %5154 = vmatpush2.bf16.msra.mxu0 0
    %5155 = vmatprep.subr.bf16.mxu0 0
    %5156 = vmatpush2.bf16.msra.mxu0 0
    %5157 = vmatprep.subr.bf16.mxu0 0
    %5158 = vmatpush2.bf16.msra.mxu0 0
    %5159 = vmatprep.subr.bf16.mxu0 0
    %5160 = vmatpush2.bf16.msra.mxu0 0
    %5161 = vmatprep.mubr.bf16.mxu0 0
    %5162 = vmatmul.mubr.bf16.gmra.mxu0 %v5121
    %v5163 = vpop.f32.mrf.mxu0
    %v5164 = vadd.f32 0.0, %v5163
    %v5165 = vpop.f32.mrf.mxu0
    %v5166 = vpop.f32.mrf.mxu0
    %v5167 = vadd.f32 0.0, %v5166
    %v5168 = vpop.f32.mrf.mxu0
    %5169 = vmatprep.mubr.bf16.mxu0 0
    %5170 = vmatmul.mubr.bf16.gmra.mxu0 %v5124
    %v5171 = vpop.f32.mrf.mxu0
    %v5172 = vadd.f32 0.0, %v5171
    %v5173 = vpop.f32.mrf.mxu0
    %v5174 = vpop.f32.mrf.mxu0
    %v5175 = vadd.f32 0.0, %v5174
    %v5176 = vpop.f32.mrf.mxu0
    %5177 = vmatprep.mubr.bf16.mxu0 0
    %5178 = vmatmul.mubr.bf16.gmra.mxu0 %v5127
    %v5179 = vpop.f32.mrf.mxu0
    %v5180 = vadd.f32 0.0, %v5179
    %v5181 = vpop.f32.mrf.mxu0
    %v5182 = vpop.f32.mrf.mxu0
    %v5183 = vadd.f32 0.0, %v5182
    %v5184 = vpop.f32.mrf.mxu0
    %5185 = vdwg.mxu0
    %v5186 = vadd.f32 %v5081, %v5164
    %v5187 = vadd.f32 %v5082, %v5167
    %v5188 = vadd.f32 %v5083, %v5172
    %v5189 = vadd.f32 %v5084, %v5175
    %v5190 = vadd.f32 %v5085, %v5180
    %v5191 = vadd.f32 %v5086, %v5183
    %s5192 = scalar_lea.vmem %s5, 160
    %v5193 = vld [vmem:[%s5192] sm:$0xf]
    %v5194 = vld [vmem:[%s5192 + $0x4] sm:$0xf]
    %v5195 = vld [vmem:[%s5192 + $0x8] sm:$0xf]
    %v5196 = vld [vmem:[%s5192 + $0xc] sm:$0xf]
    %v5197 = vld [vmem:[%s5192 + $0x10] sm:$0xf]
    %v5198 = vld [vmem:[%s5192 + $0x14] sm:$0xf]
    %v5199 = vld [vmem:[%s5192 + $0x18] sm:$0xf]
    %v5200 = vld [vmem:[%s5192 + $0x1c] sm:$0xf]
    %v5209 = vunpack.c.l.b16 %v5193
    %v5210 = vunpack.c.l.b16 %v5194
    %v5211 = vunpack.c.l.b16 %v5195
    %v5212 = vunpack.c.l.b16 %v5196
    %v5213 = vunpack.c.l.b16 %v5197
    %v5214 = vunpack.c.l.b16 %v5198
    %v5215 = vunpack.c.l.b16 %v5199
    %v5216 = vunpack.c.l.b16 %v5200
    %v5217 = vpack.c.b16 %v5210, %v5209
    %v5218 = vpack.c.b16 %v5212, %v5211
    %v5219 = vpack.c.b16 %v5214, %v5213
    %v5220 = vpack.c.b16 %v5216, %v5215
    %v5226 = vsel %vm4720, %v4667, 0
    %v5229 = vsel %vm4720, %v4668, 0
    %v5232 = vsel %vm4720, %v4669, 0
    %5234 = vmatprep.subr.bf16.mxu0 0
    %5235 = vmatpush1.bf16.msra.mxu0 0
    %5236 = vmatprep.subr.bf16.mxu0 0
    %5237 = vmatpush1.bf16.msra.mxu0 0
    %5238 = vmatprep.subr.bf16.mxu0 0
    %5239 = vmatpush1.bf16.msra.mxu0 0
    %5240 = vmatprep.subr.bf16.mxu0 0
    %5241 = vmatpush1.bf16.msra.mxu0 0
    %5242 = vmatprep.subr.bf16.mxu0 0
    %5243 = vmatpush1.bf16.msra.mxu0 %v5220
    %5244 = vmatprep.subr.bf16.mxu0 0
    %5245 = vmatpush1.bf16.msra.mxu0 %v5219
    %5246 = vmatprep.subr.bf16.mxu0 0
    %5247 = vmatpush1.bf16.msra.mxu0 %v5218
    %5248 = vmatprep.subr.bf16.mxu0 0
    %5249 = vmatpush1.bf16.msra.mxu0 %v5217
    %5250 = vmatprep.subr.bf16.mxu0 0
    %5251 = vmatpush2.bf16.msra.mxu0 0
    %5252 = vmatprep.subr.bf16.mxu0 0
    %5253 = vmatpush2.bf16.msra.mxu0 0
    %5254 = vmatprep.subr.bf16.mxu0 0
    %5255 = vmatpush2.bf16.msra.mxu0 0
    %5256 = vmatprep.subr.bf16.mxu0 0
    %5257 = vmatpush2.bf16.msra.mxu0 0
    %5258 = vmatprep.subr.bf16.mxu0 0
    %5259 = vmatpush2.bf16.msra.mxu0 0
    %5260 = vmatprep.subr.bf16.mxu0 0
    %5261 = vmatpush2.bf16.msra.mxu0 0
    %5262 = vmatprep.subr.bf16.mxu0 0
    %5263 = vmatpush2.bf16.msra.mxu0 0
    %5264 = vmatprep.subr.bf16.mxu0 0
    %5265 = vmatpush2.bf16.msra.mxu0 0
    %5266 = vmatprep.mubr.bf16.mxu0 0
    %5267 = vmatmul.mubr.bf16.gmra.mxu0 %v5226
    %v5268 = vpop.f32.mrf.mxu0
    %v5269 = vadd.f32 0.0, %v5268
    %v5270 = vpop.f32.mrf.mxu0
    %v5271 = vpop.f32.mrf.mxu0
    %v5272 = vadd.f32 0.0, %v5271
    %v5273 = vpop.f32.mrf.mxu0
    %5274 = vmatprep.mubr.bf16.mxu0 0
    %5275 = vmatmul.mubr.bf16.gmra.mxu0 %v5229
    %v5276 = vpop.f32.mrf.mxu0
    %v5277 = vadd.f32 0.0, %v5276
    %v5278 = vpop.f32.mrf.mxu0
    %v5279 = vpop.f32.mrf.mxu0
    %v5280 = vadd.f32 0.0, %v5279
    %v5281 = vpop.f32.mrf.mxu0
    %5282 = vmatprep.mubr.bf16.mxu0 0
    %5283 = vmatmul.mubr.bf16.gmra.mxu0 %v5232
    %v5284 = vpop.f32.mrf.mxu0
    %v5285 = vadd.f32 0.0, %v5284
    %v5286 = vpop.f32.mrf.mxu0
    %v5287 = vpop.f32.mrf.mxu0
    %v5288 = vadd.f32 0.0, %v5287
    %v5289 = vpop.f32.mrf.mxu0
    %5290 = vdwg.mxu0
    %v5291 = vadd.f32 %v5186, %v5269
    %v5292 = vadd.f32 %v5187, %v5272
    %v5293 = vadd.f32 %v5188, %v5277
    %v5294 = vadd.f32 %v5189, %v5280
    %v5295 = vadd.f32 %v5190, %v5285
    %v5296 = vadd.f32 %v5191, %v5288
    %s5297 = scalar_lea.vmem %s5, 192
    %v5298 = vld [vmem:[%s5297] sm:$0xf]
    %v5299 = vld [vmem:[%s5297 + $0x4] sm:$0xf]
    %v5300 = vld [vmem:[%s5297 + $0x8] sm:$0xf]
    %v5301 = vld [vmem:[%s5297 + $0xc] sm:$0xf]
    %v5302 = vld [vmem:[%s5297 + $0x10] sm:$0xf]
    %v5303 = vld [vmem:[%s5297 + $0x14] sm:$0xf]
    %v5304 = vld [vmem:[%s5297 + $0x18] sm:$0xf]
    %v5305 = vld [vmem:[%s5297 + $0x1c] sm:$0xf]
    %v5314 = vunpack.c.l.b16 %v5298
    %v5315 = vunpack.c.l.b16 %v5299
    %v5316 = vunpack.c.l.b16 %v5300
    %v5317 = vunpack.c.l.b16 %v5301
    %v5318 = vunpack.c.l.b16 %v5302
    %v5319 = vunpack.c.l.b16 %v5303
    %v5320 = vunpack.c.l.b16 %v5304
    %v5321 = vunpack.c.l.b16 %v5305
    %v5322 = vpack.c.b16 %v5315, %v5314
    %v5323 = vpack.c.b16 %v5317, %v5316
    %v5324 = vpack.c.b16 %v5319, %v5318
    %v5325 = vpack.c.b16 %v5321, %v5320
    %v5331 = vsel %vm4720, %v4670, 0
    %v5334 = vsel %vm4720, %v4671, 0
    %v5337 = vsel %vm4720, %v4672, 0
    %5339 = vmatprep.subr.bf16.mxu0 0
    %5340 = vmatpush1.bf16.msra.mxu0 0
    %5341 = vmatprep.subr.bf16.mxu0 0
    %5342 = vmatpush1.bf16.msra.mxu0 0
    %5343 = vmatprep.subr.bf16.mxu0 0
    %5344 = vmatpush1.bf16.msra.mxu0 0
    %5345 = vmatprep.subr.bf16.mxu0 0
    %5346 = vmatpush1.bf16.msra.mxu0 0
    %5347 = vmatprep.subr.bf16.mxu0 0
    %5348 = vmatpush1.bf16.msra.mxu0 %v5325
    %5349 = vmatprep.subr.bf16.mxu0 0
    %5350 = vmatpush1.bf16.msra.mxu0 %v5324
    %5351 = vmatprep.subr.bf16.mxu0 0
    %5352 = vmatpush1.bf16.msra.mxu0 %v5323
    %5353 = vmatprep.subr.bf16.mxu0 0
    %5354 = vmatpush1.bf16.msra.mxu0 %v5322
    %5355 = vmatprep.subr.bf16.mxu0 0
    %5356 = vmatpush2.bf16.msra.mxu0 0
    %5357 = vmatprep.subr.bf16.mxu0 0
    %5358 = vmatpush2.bf16.msra.mxu0 0
    %5359 = vmatprep.subr.bf16.mxu0 0
    %5360 = vmatpush2.bf16.msra.mxu0 0
    %5361 = vmatprep.subr.bf16.mxu0 0
    %5362 = vmatpush2.bf16.msra.mxu0 0
    %5363 = vmatprep.subr.bf16.mxu0 0
    %5364 = vmatpush2.bf16.msra.mxu0 0
    %5365 = vmatprep.subr.bf16.mxu0 0
    %5366 = vmatpush2.bf16.msra.mxu0 0
    %5367 = vmatprep.subr.bf16.mxu0 0
    %5368 = vmatpush2.bf16.msra.mxu0 0
    %5369 = vmatprep.subr.bf16.mxu0 0
    %5370 = vmatpush2.bf16.msra.mxu0 0
    %5371 = vmatprep.mubr.bf16.mxu0 0
    %5372 = vmatmul.mubr.bf16.gmra.mxu0 %v5331
    %v5373 = vpop.f32.mrf.mxu0
    %v5374 = vadd.f32 0.0, %v5373
    %v5375 = vpop.f32.mrf.mxu0
    %v5376 = vpop.f32.mrf.mxu0
    %v5377 = vadd.f32 0.0, %v5376
    %v5378 = vpop.f32.mrf.mxu0
    %5379 = vmatprep.mubr.bf16.mxu0 0
    %5380 = vmatmul.mubr.bf16.gmra.mxu0 %v5334
    %v5381 = vpop.f32.mrf.mxu0
    %v5382 = vadd.f32 0.0, %v5381
    %v5383 = vpop.f32.mrf.mxu0
    %v5384 = vpop.f32.mrf.mxu0
    %v5385 = vadd.f32 0.0, %v5384
    %v5386 = vpop.f32.mrf.mxu0
    %5387 = vmatprep.mubr.bf16.mxu0 0
    %5388 = vmatmul.mubr.bf16.gmra.mxu0 %v5337
    %v5389 = vpop.f32.mrf.mxu0
    %v5390 = vadd.f32 0.0, %v5389
    %v5391 = vpop.f32.mrf.mxu0
    %v5392 = vpop.f32.mrf.mxu0
    %v5393 = vadd.f32 0.0, %v5392
    %v5394 = vpop.f32.mrf.mxu0
    %5395 = vdwg.mxu0
    %v5396 = vadd.f32 %v5291, %v5374
    %v5397 = vadd.f32 %v5292, %v5377
    %v5398 = vadd.f32 %v5293, %v5382
    %v5399 = vadd.f32 %v5294, %v5385
    %v5400 = vadd.f32 %v5295, %v5390
    %v5401 = vadd.f32 %v5296, %v5393
    %s5402 = scalar_lea.vmem %s5, 224
    %v5403 = vld [vmem:[%s5402] sm:$0xf]
    %v5404 = vld [vmem:[%s5402 + $0x4] sm:$0xf]
    %v5405 = vld [vmem:[%s5402 + $0x8] sm:$0xf]
    %v5406 = vld [vmem:[%s5402 + $0xc] sm:$0xf]
    %v5407 = vld [vmem:[%s5402 + $0x10] sm:$0xf]
    %v5408 = vld [vmem:[%s5402 + $0x14] sm:$0xf]
    %v5409 = vld [vmem:[%s5402 + $0x18] sm:$0xf]
    %v5410 = vld [vmem:[%s5402 + $0x1c] sm:$0xf]
    %v5419 = vunpack.c.l.b16 %v5403
    %v5420 = vunpack.c.l.b16 %v5404
    %v5421 = vunpack.c.l.b16 %v5405
    %v5422 = vunpack.c.l.b16 %v5406
    %v5423 = vunpack.c.l.b16 %v5407
    %v5424 = vunpack.c.l.b16 %v5408
    %v5425 = vunpack.c.l.b16 %v5409
    %v5426 = vunpack.c.l.b16 %v5410
    %v5427 = vpack.c.b16 %v5420, %v5419
    %v5428 = vpack.c.b16 %v5422, %v5421
    %v5429 = vpack.c.b16 %v5424, %v5423
    %v5430 = vpack.c.b16 %v5426, %v5425
    %v5436 = vsel %vm4720, %v4673, 0
    %v5439 = vsel %vm4720, %v4674, 0
    %v5442 = vsel %vm4720, %v4675, 0
    %5444 = vmatprep.subr.bf16.mxu0 0
    %5445 = vmatpush1.bf16.msra.mxu0 0
    %5446 = vmatprep.subr.bf16.mxu0 0
    %5447 = vmatpush1.bf16.msra.mxu0 0
    %5448 = vmatprep.subr.bf16.mxu0 0
    %5449 = vmatpush1.bf16.msra.mxu0 0
    %5450 = vmatprep.subr.bf16.mxu0 0
    %5451 = vmatpush1.bf16.msra.mxu0 0
    %5452 = vmatprep.subr.bf16.mxu0 0
    %5453 = vmatpush1.bf16.msra.mxu0 %v5430
    %5454 = vmatprep.subr.bf16.mxu0 0
    %5455 = vmatpush1.bf16.msra.mxu0 %v5429
    %5456 = vmatprep.subr.bf16.mxu0 0
    %5457 = vmatpush1.bf16.msra.mxu0 %v5428
    %5458 = vmatprep.subr.bf16.mxu0 0
    %5459 = vmatpush1.bf16.msra.mxu0 %v5427
    %5460 = vmatprep.subr.bf16.mxu0 0
    %5461 = vmatpush2.bf16.msra.mxu0 0
    %5462 = vmatprep.subr.bf16.mxu0 0
    %5463 = vmatpush2.bf16.msra.mxu0 0
    %5464 = vmatprep.subr.bf16.mxu0 0
    %5465 = vmatpush2.bf16.msra.mxu0 0
    %5466 = vmatprep.subr.bf16.mxu0 0
    %5467 = vmatpush2.bf16.msra.mxu0 0
    %5468 = vmatprep.subr.bf16.mxu0 0
    %5469 = vmatpush2.bf16.msra.mxu0 0
    %5470 = vmatprep.subr.bf16.mxu0 0
    %5471 = vmatpush2.bf16.msra.mxu0 0
    %5472 = vmatprep.subr.bf16.mxu0 0
    %5473 = vmatpush2.bf16.msra.mxu0 0
    %5474 = vmatprep.subr.bf16.mxu0 0
    %5475 = vmatpush2.bf16.msra.mxu0 0
    %5476 = vmatprep.mubr.bf16.mxu0 0
    %5477 = vmatmul.mubr.bf16.gmra.mxu0 %v5436
    %v5478 = vpop.f32.mrf.mxu0
    %v5479 = vadd.f32 0.0, %v5478
    %v5480 = vpop.f32.mrf.mxu0
    %v5481 = vpop.f32.mrf.mxu0
    %v5482 = vadd.f32 0.0, %v5481
    %v5483 = vpop.f32.mrf.mxu0
    %5484 = vmatprep.mubr.bf16.mxu0 0
    %5485 = vmatmul.mubr.bf16.gmra.mxu0 %v5439
    %v5486 = vpop.f32.mrf.mxu0
    %v5487 = vadd.f32 0.0, %v5486
    %v5488 = vpop.f32.mrf.mxu0
    %v5489 = vpop.f32.mrf.mxu0
    %v5490 = vadd.f32 0.0, %v5489
    %v5491 = vpop.f32.mrf.mxu0
    %5492 = vmatprep.mubr.bf16.mxu0 0
    %5493 = vmatmul.mubr.bf16.gmra.mxu0 %v5442
    %v5494 = vpop.f32.mrf.mxu0
    %v5495 = vadd.f32 0.0, %v5494
    %v5496 = vpop.f32.mrf.mxu0
    %v5497 = vpop.f32.mrf.mxu0
    %v5498 = vadd.f32 0.0, %v5497
    %v5499 = vpop.f32.mrf.mxu0
    %5500 = vdwg.mxu0
    %v5501 = vadd.f32 %v5396, %v5479
    %v5502 = vadd.f32 %v5397, %v5482
    %v5503 = vadd.f32 %v5398, %v5487
    %v5504 = vadd.f32 %v5399, %v5490
    %v5505 = vadd.f32 %v5400, %v5495
    %v5506 = vadd.f32 %v5401, %v5498
    %s5507 = scalar_lea.vmem %s5, 256
    %v5508 = vld [vmem:[%s5507] sm:$0xf]
    %v5509 = vld [vmem:[%s5507 + $0x4] sm:$0xf]
    %v5510 = vld [vmem:[%s5507 + $0x8] sm:$0xf]
    %v5511 = vld [vmem:[%s5507 + $0xc] sm:$0xf]
    %v5512 = vld [vmem:[%s5507 + $0x10] sm:$0xf]
    %v5513 = vld [vmem:[%s5507 + $0x14] sm:$0xf]
    %v5514 = vld [vmem:[%s5507 + $0x18] sm:$0xf]
    %v5515 = vld [vmem:[%s5507 + $0x1c] sm:$0xf]
    %v5524 = vunpack.c.l.b16 %v5508
    %v5525 = vunpack.c.l.b16 %v5509
    %v5526 = vunpack.c.l.b16 %v5510
    %v5527 = vunpack.c.l.b16 %v5511
    %v5528 = vunpack.c.l.b16 %v5512
    %v5529 = vunpack.c.l.b16 %v5513
    %v5530 = vunpack.c.l.b16 %v5514
    %v5531 = vunpack.c.l.b16 %v5515
    %v5532 = vpack.c.b16 %v5525, %v5524
    %v5533 = vpack.c.b16 %v5527, %v5526
    %v5534 = vpack.c.b16 %v5529, %v5528
    %v5535 = vpack.c.b16 %v5531, %v5530
    %v5541 = vsel %vm4720, %v4676, 0
    %v5544 = vsel %vm4720, %v4677, 0
    %v5547 = vsel %vm4720, %v4678, 0
    %5549 = vmatprep.subr.bf16.mxu0 0
    %5550 = vmatpush1.bf16.msra.mxu0 0
    %5551 = vmatprep.subr.bf16.mxu0 0
    %5552 = vmatpush1.bf16.msra.mxu0 0
    %5553 = vmatprep.subr.bf16.mxu0 0
    %5554 = vmatpush1.bf16.msra.mxu0 0
    %5555 = vmatprep.subr.bf16.mxu0 0
    %5556 = vmatpush1.bf16.msra.mxu0 0
    %5557 = vmatprep.subr.bf16.mxu0 0
    %5558 = vmatpush1.bf16.msra.mxu0 %v5535
    %5559 = vmatprep.subr.bf16.mxu0 0
    %5560 = vmatpush1.bf16.msra.mxu0 %v5534
    %5561 = vmatprep.subr.bf16.mxu0 0
    %5562 = vmatpush1.bf16.msra.mxu0 %v5533
    %5563 = vmatprep.subr.bf16.mxu0 0
    %5564 = vmatpush1.bf16.msra.mxu0 %v5532
    %5565 = vmatprep.subr.bf16.mxu0 0
    %5566 = vmatpush2.bf16.msra.mxu0 0
    %5567 = vmatprep.subr.bf16.mxu0 0
    %5568 = vmatpush2.bf16.msra.mxu0 0
    %5569 = vmatprep.subr.bf16.mxu0 0
    %5570 = vmatpush2.bf16.msra.mxu0 0
    %5571 = vmatprep.subr.bf16.mxu0 0
    %5572 = vmatpush2.bf16.msra.mxu0 0
    %5573 = vmatprep.subr.bf16.mxu0 0
    %5574 = vmatpush2.bf16.msra.mxu0 0
    %5575 = vmatprep.subr.bf16.mxu0 0
    %5576 = vmatpush2.bf16.msra.mxu0 0
    %5577 = vmatprep.subr.bf16.mxu0 0
    %5578 = vmatpush2.bf16.msra.mxu0 0
    %5579 = vmatprep.subr.bf16.mxu0 0
    %5580 = vmatpush2.bf16.msra.mxu0 0
    %5581 = vmatprep.mubr.bf16.mxu0 0
    %5582 = vmatmul.mubr.bf16.gmra.mxu0 %v5541
    %v5583 = vpop.f32.mrf.mxu0
    %v5584 = vadd.f32 0.0, %v5583
    %v5585 = vpop.f32.mrf.mxu0
    %v5586 = vpop.f32.mrf.mxu0
    %v5587 = vadd.f32 0.0, %v5586
    %v5588 = vpop.f32.mrf.mxu0
    %5589 = vmatprep.mubr.bf16.mxu0 0
    %5590 = vmatmul.mubr.bf16.gmra.mxu0 %v5544
    %v5591 = vpop.f32.mrf.mxu0
    %v5592 = vadd.f32 0.0, %v5591
    %v5593 = vpop.f32.mrf.mxu0
    %v5594 = vpop.f32.mrf.mxu0
    %v5595 = vadd.f32 0.0, %v5594
    %v5596 = vpop.f32.mrf.mxu0
    %5597 = vmatprep.mubr.bf16.mxu0 0
    %5598 = vmatmul.mubr.bf16.gmra.mxu0 %v5547
    %v5599 = vpop.f32.mrf.mxu0
    %v5600 = vadd.f32 0.0, %v5599
    %v5601 = vpop.f32.mrf.mxu0
    %v5602 = vpop.f32.mrf.mxu0
    %v5603 = vadd.f32 0.0, %v5602
    %v5604 = vpop.f32.mrf.mxu0
    %5605 = vdwg.mxu0
    %v5606 = vadd.f32 %v5501, %v5584
    %v5607 = vadd.f32 %v5502, %v5587
    %v5608 = vadd.f32 %v5503, %v5592
    %v5609 = vadd.f32 %v5504, %v5595
    %v5610 = vadd.f32 %v5505, %v5600
    %v5611 = vadd.f32 %v5506, %v5603
    %v5612 = vld [vmem:[%s6] sm:$0x1]
    %v5614 = vlaneseq
    %v5615 = vshrl.u32 %v5614, 7
    %v5616 = vsub.s32 0, %v5615
    %v5617 = vrot.slane %v5612, %v5616
    %v5619 = vadd.f32 %v5606, %v5617
    %v5620 = vadd.f32 %v5607, %v5617
    %v5621 = vadd.f32 %v5608, %v5617
    %v5622 = vadd.f32 %v5609, %v5617
    %v5623 = vadd.f32 %v5610, %v5617
    %v5624 = vadd.f32 %v5611, %v5617
    %v5625 = vmax.f32 %v5619, 0.0
    %v5626 = vmax.f32 %v5620, 0.0
    %v5627 = vmax.f32 %v5621, 0.0
    %v5628 = vmax.f32 %v5622, 0.0
    %v5629 = vmax.f32 %v5623, 0.0
    %v5630 = vmax.f32 %v5624, 0.0
    %5631 = vst.msk [vmem:[#allocation5] sm:$0xff] %vm4720, %v5625
    %5632 = vst.msk [vmem:[#allocation5 + $0x8] sm:$0xff] %vm4720, %v5626
    %5633 = vst.msk [vmem:[#allocation5 + $0x10] sm:$0xff] %vm4720, %v5627
    %5634 = vst.msk [vmem:[#allocation5 + $0x18] sm:$0xff] %vm4720, %v5628
    %5635 = vst.msk [vmem:[#allocation5 + $0x20] sm:$0xff] %vm4720, %v5629
    %5636 = vst.msk [vmem:[#allocation5 + $0x28] sm:$0xff] %vm4720, %v5630
    %v5637 = vld [vmem:[#allocation5] sm:$0x1]
    %vm5638 = vcmask 516096
    %5639 = vst.msk [vmem:[#allocation6] sm:$0x1] %vm5638, %v5637
    %v5640 = vld [vmem:[#allocation5 + $0x1] sm:$0x1]
    %v5643 = vunpack.c.l.s4 1983009808
    %v5644 = vunpack.c.0.s8 %v5643
    %v5645 = vlaneseq
    %v5646 = vshrl.u32 %v5645, 7
    %v5647 = vsub.s32 %v5644, %v5646
    %v5648 = vrot.slane %v5640, %v5647
    %5649 = vrot.lane.b32.xlu0 %v5648, 64
    %v5650 = vpop.permute.xlu0 %5649
    %vm5652 = vcmask 1040896
    %5653 = vst.msk [vmem:[#allocation6] sm:$0x1] %vm5652, %v5650
    %v5654 = vld [vmem:[#allocation5 + $0x2] sm:$0x1]
    %5655 = vst.msk [vmem:[#allocation6 + $0x2] sm:$0x1] %vm5638, %v5654
    %v5656 = vld [vmem:[#allocation5 + $0x3] sm:$0x1]
    %v5659 = vunpack.c.l.s4 1983009808
    %v5660 = vunpack.c.0.s8 %v5659
    %v5661 = vlaneseq
    %v5662 = vshrl.u32 %v5661, 7
    %v5663 = vsub.s32 %v5660, %v5662
    %v5664 = vrot.slane %v5656, %v5663
    %5665 = vrot.lane.b32.xlu0 %v5664, 64
    %v5666 = vpop.permute.xlu0 %5665
    %5668 = vst.msk [vmem:[#allocation6 + $0x2] sm:$0x1] %vm5652, %v5666
    %v5669 = vld [vmem:[#allocation5 + $0x4] sm:$0x1]
    %5670 = vst.msk [vmem:[#allocation6 + $0x4] sm:$0x1] %vm5638, %v5669
    %v5671 = vld [vmem:[#allocation5 + $0x5] sm:$0x1]
    %v5674 = vunpack.c.l.s4 1983009808
    %v5675 = vunpack.c.0.s8 %v5674
    %v5676 = vlaneseq
    %v5677 = vshrl.u32 %v5676, 7
    %v5678 = vsub.s32 %v5675, %v5677
    %v5679 = vrot.slane %v5671, %v5678
    %5680 = vrot.lane.b32.xlu0 %v5679, 64
    %v5681 = vpop.permute.xlu0 %5680
    %5683 = vst.msk [vmem:[#allocation6 + $0x4] sm:$0x1] %vm5652, %v5681
    %v5684 = vld [vmem:[#allocation5 + $0x6] sm:$0x1]
    %5685 = vst.msk [vmem:[#allocation6 + $0x6] sm:$0x1] %vm5638, %v5684
    %v5686 = vld [vmem:[#allocation5 + $0x7] sm:$0x1]
    %v5689 = vunpack.c.l.s4 1983009808
    %v5690 = vunpack.c.0.s8 %v5689
    %v5691 = vlaneseq
    %v5692 = vshrl.u32 %v5691, 7
    %v5693 = vsub.s32 %v5690, %v5692
    %v5694 = vrot.slane %v5686, %v5693
    %5695 = vrot.lane.b32.xlu0 %v5694, 64
    %v5696 = vpop.permute.xlu0 %5695
    %5698 = vst.msk [vmem:[#allocation6 + $0x6] sm:$0x1] %vm5652, %v5696
    %v5699 = vld [vmem:[#allocation5 + $0x8] sm:$0x1]
    %5700 = vst.msk [vmem:[#allocation6 + $0x8] sm:$0x1] %vm5638, %v5699
    %v5701 = vld [vmem:[#allocation5 + $0x9] sm:$0x1]
    %v5704 = vunpack.c.l.s4 1983009808
    %v5705 = vunpack.c.0.s8 %v5704
    %v5706 = vlaneseq
    %v5707 = vshrl.u32 %v5706, 7
    %v5708 = vsub.s32 %v5705, %v5707
    %v5709 = vrot.slane %v5701, %v5708
    %5710 = vrot.lane.b32.xlu0 %v5709, 64
    %v5711 = vpop.permute.xlu0 %5710
    %5713 = vst.msk [vmem:[#allocation6 + $0x8] sm:$0x1] %vm5652, %v5711
    %v5714 = vld [vmem:[#allocation5 + $0xa] sm:$0x1]
    %5715 = vst.msk [vmem:[#allocation6 + $0xa] sm:$0x1] %vm5638, %v5714
    %v5716 = vld [vmem:[#allocation5 + $0xb] sm:$0x1]
    %v5719 = vunpack.c.l.s4 1983009808
    %v5720 = vunpack.c.0.s8 %v5719
    %v5721 = vlaneseq
    %v5722 = vshrl.u32 %v5721, 7
    %v5723 = vsub.s32 %v5720, %v5722
    %v5724 = vrot.slane %v5716, %v5723
    %5725 = vrot.lane.b32.xlu0 %v5724, 64
    %v5726 = vpop.permute.xlu0 %5725
    %5728 = vst.msk [vmem:[#allocation6 + $0xa] sm:$0x1] %vm5652, %v5726
    %v5729 = vld [vmem:[#allocation5 + $0xc] sm:$0x1]
    %5730 = vst.msk [vmem:[#allocation6 + $0xc] sm:$0x1] %vm5638, %v5729
    %v5731 = vld [vmem:[#allocation5 + $0xd] sm:$0x1]
    %v5734 = vunpack.c.l.s4 1983009808
    %v5735 = vunpack.c.0.s8 %v5734
    %v5736 = vlaneseq
    %v5737 = vshrl.u32 %v5736, 7
    %v5738 = vsub.s32 %v5735, %v5737
    %v5739 = vrot.slane %v5731, %v5738
    %5740 = vrot.lane.b32.xlu0 %v5739, 64
    %v5741 = vpop.permute.xlu0 %5740
    %5743 = vst.msk [vmem:[#allocation6 + $0xc] sm:$0x1] %vm5652, %v5741
    %v5744 = vld [vmem:[#allocation5 + $0xe] sm:$0x1]
    %5745 = vst.msk [vmem:[#allocation6 + $0xe] sm:$0x1] %vm5638, %v5744
    %v5746 = vld [vmem:[#allocation5 + $0xf] sm:$0x1]
    %v5749 = vunpack.c.l.s4 1983009808
    %v5750 = vunpack.c.0.s8 %v5749
    %v5751 = vlaneseq
    %v5752 = vshrl.u32 %v5751, 7
    %v5753 = vsub.s32 %v5750, %v5752
    %v5754 = vrot.slane %v5746, %v5753
    %5755 = vrot.lane.b32.xlu0 %v5754, 64
    %v5756 = vpop.permute.xlu0 %5755
    %5758 = vst.msk [vmem:[#allocation6 + $0xe] sm:$0x1] %vm5652, %v5756
    %v5759 = vld [vmem:[#allocation5 + $0x10] sm:$0x1]
    %5760 = vst.msk [vmem:[#allocation6 + $0x10] sm:$0x1] %vm5638, %v5759
    %v5761 = vld [vmem:[#allocation5 + $0x11] sm:$0x1]
    %v5764 = vunpack.c.l.s4 1983009808
    %v5765 = vunpack.c.0.s8 %v5764
    %v5766 = vlaneseq
    %v5767 = vshrl.u32 %v5766, 7
    %v5768 = vsub.s32 %v5765, %v5767
    %v5769 = vrot.slane %v5761, %v5768
    %5770 = vrot.lane.b32.xlu0 %v5769, 64
    %v5771 = vpop.permute.xlu0 %5770
    %5773 = vst.msk [vmem:[#allocation6 + $0x10] sm:$0x1] %vm5652, %v5771
    %v5774 = vld [vmem:[#allocation5 + $0x12] sm:$0x1]
    %5775 = vst.msk [vmem:[#allocation6 + $0x12] sm:$0x1] %vm5638, %v5774
    %v5776 = vld [vmem:[#allocation5 + $0x13] sm:$0x1]
    %v5779 = vunpack.c.l.s4 1983009808
    %v5780 = vunpack.c.0.s8 %v5779
    %v5781 = vlaneseq
    %v5782 = vshrl.u32 %v5781, 7
    %v5783 = vsub.s32 %v5780, %v5782
    %v5784 = vrot.slane %v5776, %v5783
    %5785 = vrot.lane.b32.xlu0 %v5784, 64
    %v5786 = vpop.permute.xlu0 %5785
    %5788 = vst.msk [vmem:[#allocation6 + $0x12] sm:$0x1] %vm5652, %v5786
    %v5789 = vld [vmem:[#allocation5 + $0x14] sm:$0x1]
    %5790 = vst.msk [vmem:[#allocation6 + $0x14] sm:$0x1] %vm5638, %v5789
    %v5791 = vld [vmem:[#allocation5 + $0x15] sm:$0x1]
    %v5794 = vunpack.c.l.s4 1983009808
    %v5795 = vunpack.c.0.s8 %v5794
    %v5796 = vlaneseq
    %v5797 = vshrl.u32 %v5796, 7
    %v5798 = vsub.s32 %v5795, %v5797
    %v5799 = vrot.slane %v5791, %v5798
    %5800 = vrot.lane.b32.xlu0 %v5799, 64
    %v5801 = vpop.permute.xlu0 %5800
    %5803 = vst.msk [vmem:[#allocation6 + $0x14] sm:$0x1] %vm5652, %v5801
    %v5804 = vld [vmem:[#allocation5 + $0x16] sm:$0x1]
    %5805 = vst.msk [vmem:[#allocation6 + $0x16] sm:$0x1] %vm5638, %v5804
    %v5806 = vld [vmem:[#allocation5 + $0x17] sm:$0x1]
    %v5809 = vunpack.c.l.s4 1983009808
    %v5810 = vunpack.c.0.s8 %v5809
    %v5811 = vlaneseq
    %v5812 = vshrl.u32 %v5811, 7
    %v5813 = vsub.s32 %v5810, %v5812
    %v5814 = vrot.slane %v5806, %v5813
    %5815 = vrot.lane.b32.xlu0 %v5814, 64
    %v5816 = vpop.permute.xlu0 %5815
    %5818 = vst.msk [vmem:[#allocation6 + $0x16] sm:$0x1] %vm5652, %v5816
    %v5819 = vld [vmem:[#allocation5 + $0x18] sm:$0x1]
    %5820 = vst.msk [vmem:[#allocation6 + $0x1] sm:$0x1] %vm5638, %v5819
    %v5821 = vld [vmem:[#allocation5 + $0x19] sm:$0x1]
    %v5824 = vunpack.c.l.s4 1983009808
    %v5825 = vunpack.c.0.s8 %v5824
    %v5826 = vlaneseq
    %v5827 = vshrl.u32 %v5826, 7
    %v5828 = vsub.s32 %v5825, %v5827
    %v5829 = vrot.slane %v5821, %v5828
    %5830 = vrot.lane.b32.xlu0 %v5829, 64
    %v5831 = vpop.permute.xlu0 %5830
    %5833 = vst.msk [vmem:[#allocation6 + $0x1] sm:$0x1] %vm5652, %v5831
    %v5834 = vld [vmem:[#allocation5 + $0x1a] sm:$0x1]
    %5835 = vst.msk [vmem:[#allocation6 + $0x3] sm:$0x1] %vm5638, %v5834
    %v5836 = vld [vmem:[#allocation5 + $0x1b] sm:$0x1]
    %v5839 = vunpack.c.l.s4 1983009808
    %v5840 = vunpack.c.0.s8 %v5839
    %v5841 = vlaneseq
    %v5842 = vshrl.u32 %v5841, 7
    %v5843 = vsub.s32 %v5840, %v5842
    %v5844 = vrot.slane %v5836, %v5843
    %5845 = vrot.lane.b32.xlu0 %v5844, 64
    %v5846 = vpop.permute.xlu0 %5845
    %5848 = vst.msk [vmem:[#allocation6 + $0x3] sm:$0x1] %vm5652, %v5846
    %v5849 = vld [vmem:[#allocation5 + $0x1c] sm:$0x1]
    %5850 = vst.msk [vmem:[#allocation6 + $0x5] sm:$0x1] %vm5638, %v5849
    %v5851 = vld [vmem:[#allocation5 + $0x1d] sm:$0x1]
    %v5854 = vunpack.c.l.s4 1983009808
    %v5855 = vunpack.c.0.s8 %v5854
    %v5856 = vlaneseq
    %v5857 = vshrl.u32 %v5856, 7
    %v5858 = vsub.s32 %v5855, %v5857
    %v5859 = vrot.slane %v5851, %v5858
    %5860 = vrot.lane.b32.xlu0 %v5859, 64
    %v5861 = vpop.permute.xlu0 %5860
    %5863 = vst.msk [vmem:[#allocation6 + $0x5] sm:$0x1] %vm5652, %v5861
    %v5864 = vld [vmem:[#allocation5 + $0x1e] sm:$0x1]
    %5865 = vst.msk [vmem:[#allocation6 + $0x7] sm:$0x1] %vm5638, %v5864
    %v5866 = vld [vmem:[#allocation5 + $0x1f] sm:$0x1]
    %v5869 = vunpack.c.l.s4 1983009808
    %v5870 = vunpack.c.0.s8 %v5869
    %v5871 = vlaneseq
    %v5872 = vshrl.u32 %v5871, 7
    %v5873 = vsub.s32 %v5870, %v5872
    %v5874 = vrot.slane %v5866, %v5873
    %5875 = vrot.lane.b32.xlu0 %v5874, 64
    %v5876 = vpop.permute.xlu0 %5875
    %5878 = vst.msk [vmem:[#allocation6 + $0x7] sm:$0x1] %vm5652, %v5876
    %v5879 = vld [vmem:[#allocation5 + $0x20] sm:$0x1]
    %5880 = vst.msk [vmem:[#allocation6 + $0x9] sm:$0x1] %vm5638, %v5879
    %v5881 = vld [vmem:[#allocation5 + $0x21] sm:$0x1]
    %v5884 = vunpack.c.l.s4 1983009808
    %v5885 = vunpack.c.0.s8 %v5884
    %v5886 = vlaneseq
    %v5887 = vshrl.u32 %v5886, 7
    %v5888 = vsub.s32 %v5885, %v5887
    %v5889 = vrot.slane %v5881, %v5888
    %5890 = vrot.lane.b32.xlu0 %v5889, 64
    %v5891 = vpop.permute.xlu0 %5890
    %5893 = vst.msk [vmem:[#allocation6 + $0x9] sm:$0x1] %vm5652, %v5891
    %v5894 = vld [vmem:[#allocation5 + $0x22] sm:$0x1]
    %5895 = vst.msk [vmem:[#allocation6 + $0xb] sm:$0x1] %vm5638, %v5894
    %v5896 = vld [vmem:[#allocation5 + $0x23] sm:$0x1]
    %v5899 = vunpack.c.l.s4 1983009808
    %v5900 = vunpack.c.0.s8 %v5899
    %v5901 = vlaneseq
    %v5902 = vshrl.u32 %v5901, 7
    %v5903 = vsub.s32 %v5900, %v5902
    %v5904 = vrot.slane %v5896, %v5903
    %5905 = vrot.lane.b32.xlu0 %v5904, 64
    %v5906 = vpop.permute.xlu0 %5905
    %5908 = vst.msk [vmem:[#allocation6 + $0xb] sm:$0x1] %vm5652, %v5906
    %v5909 = vld [vmem:[#allocation5 + $0x24] sm:$0x1]
    %5910 = vst.msk [vmem:[#allocation6 + $0xd] sm:$0x1] %vm5638, %v5909
    %v5911 = vld [vmem:[#allocation5 + $0x25] sm:$0x1]
    %v5914 = vunpack.c.l.s4 1983009808
    %v5915 = vunpack.c.0.s8 %v5914
    %v5916 = vlaneseq
    %v5917 = vshrl.u32 %v5916, 7
    %v5918 = vsub.s32 %v5915, %v5917
    %v5919 = vrot.slane %v5911, %v5918
    %5920 = vrot.lane.b32.xlu0 %v5919, 64
    %v5921 = vpop.permute.xlu0 %5920
    %5923 = vst.msk [vmem:[#allocation6 + $0xd] sm:$0x1] %vm5652, %v5921
    %v5924 = vld [vmem:[#allocation5 + $0x26] sm:$0x1]
    %5925 = vst.msk [vmem:[#allocation6 + $0xf] sm:$0x1] %vm5638, %v5924
    %v5926 = vld [vmem:[#allocation5 + $0x27] sm:$0x1]
    %v5929 = vunpack.c.l.s4 1983009808
    %v5930 = vunpack.c.0.s8 %v5929
    %v5931 = vlaneseq
    %v5932 = vshrl.u32 %v5931, 7
    %v5933 = vsub.s32 %v5930, %v5932
    %v5934 = vrot.slane %v5926, %v5933
    %5935 = vrot.lane.b32.xlu0 %v5934, 64
    %v5936 = vpop.permute.xlu0 %5935
    %5938 = vst.msk [vmem:[#allocation6 + $0xf] sm:$0x1] %vm5652, %v5936
    %v5939 = vld [vmem:[#allocation5 + $0x28] sm:$0x1]
    %5940 = vst.msk [vmem:[#allocation6 + $0x11] sm:$0x1] %vm5638, %v5939
    %v5941 = vld [vmem:[#allocation5 + $0x29] sm:$0x1]
    %v5944 = vunpack.c.l.s4 1983009808
    %v5945 = vunpack.c.0.s8 %v5944
    %v5946 = vlaneseq
    %v5947 = vshrl.u32 %v5946, 7
    %v5948 = vsub.s32 %v5945, %v5947
    %v5949 = vrot.slane %v5941, %v5948
    %5950 = vrot.lane.b32.xlu0 %v5949, 64
    %v5951 = vpop.permute.xlu0 %5950
    %5953 = vst.msk [vmem:[#allocation6 + $0x11] sm:$0x1] %vm5652, %v5951
    %v5954 = vld [vmem:[#allocation5 + $0x2a] sm:$0x1]
    %5955 = vst.msk [vmem:[#allocation6 + $0x13] sm:$0x1] %vm5638, %v5954
    %v5956 = vld [vmem:[#allocation5 + $0x2b] sm:$0x1]
    %v5959 = vunpack.c.l.s4 1983009808
    %v5960 = vunpack.c.0.s8 %v5959
    %v5961 = vlaneseq
    %v5962 = vshrl.u32 %v5961, 7
    %v5963 = vsub.s32 %v5960, %v5962
    %v5964 = vrot.slane %v5956, %v5963
    %5965 = vrot.lane.b32.xlu0 %v5964, 64
    %v5966 = vpop.permute.xlu0 %5965
    %5968 = vst.msk [vmem:[#allocation6 + $0x13] sm:$0x1] %vm5652, %v5966
    %v5969 = vld [vmem:[#allocation5 + $0x2c] sm:$0x1]
    %5970 = vst.msk [vmem:[#allocation6 + $0x15] sm:$0x1] %vm5638, %v5969
    %v5971 = vld [vmem:[#allocation5 + $0x2d] sm:$0x1]
    %v5974 = vunpack.c.l.s4 1983009808
    %v5975 = vunpack.c.0.s8 %v5974
    %v5976 = vlaneseq
    %v5977 = vshrl.u32 %v5976, 7
    %v5978 = vsub.s32 %v5975, %v5977
    %v5979 = vrot.slane %v5971, %v5978
    %5980 = vrot.lane.b32.xlu0 %v5979, 64
    %v5981 = vpop.permute.xlu0 %5980
    %5983 = vst.msk [vmem:[#allocation6 + $0x15] sm:$0x1] %vm5652, %v5981
    %v5984 = vld [vmem:[#allocation5 + $0x2e] sm:$0x1]
    %5985 = vst.msk [vmem:[#allocation6 + $0x17] sm:$0x1] %vm5638, %v5984
    %v5986 = vld [vmem:[#allocation5 + $0x2f] sm:$0x1]
    %v5989 = vunpack.c.l.s4 1983009808
    %v5990 = vunpack.c.0.s8 %v5989
    %v5991 = vlaneseq
    %v5992 = vshrl.u32 %v5991, 7
    %v5993 = vsub.s32 %v5990, %v5992
    %v5994 = vrot.slane %v5986, %v5993
    %5995 = vrot.lane.b32.xlu0 %v5994, 64
    %v5996 = vpop.permute.xlu0 %5995
    %5998 = vst.msk [vmem:[#allocation6 + $0x17] sm:$0x1] %vm5652, %v5996
    %s5999 = smul.u32 4, 192
    %s6000 = smul.u32 %s5999, 4
    %s6001 = sshll.u32 %s6000, 4
    %6002 = dma.done %s369, %s6001
    %v6003 = vld [vmem:[#allocation6] sm:$0xff]
    %v6004 = vld [vmem:[#allocation6 + $0x8] sm:$0xff]
    %v6005 = vld [vmem:[#allocation6 + $0x10] sm:$0xff]
    %v6009 = vcombine.high %v6003, %v6003
    %v6011 = vunpack.c.l.s4 1983009808
    %v6012 = vunpack.c.0.s8 %v6011
    %v6013 = vlaneseq
    %v6014 = vshrl.u32 %v6013, 7
    %v6015 = vsub.s32 %v6012, %v6014
    %v6016 = vrot.slane %v6003, %v6015
    %v6018 = vunpack.c.l.s4 1983009808
    %v6019 = vunpack.c.0.s8 %v6018
    %v6020 = vlaneseq
    %v6021 = vshrl.u32 %v6020, 7
    %v6022 = vsub.s32 %v6019, %v6021
    %v6023 = vrot.slane %v6009, %v6022
    %v6024 = vcombine.high %v6016, %v6016
    %v6025 = vcombine.high %v6023, %v6023
    %v6026 = vcombine.high %v6004, %v6004
    %v6028 = vunpack.c.l.s4 1983009808
    %v6029 = vunpack.c.0.s8 %v6028
    %v6030 = vlaneseq
    %v6031 = vshrl.u32 %v6030, 7
    %v6032 = vsub.s32 %v6029, %v6031
    %v6033 = vrot.slane %v6004, %v6032
    %v6035 = vunpack.c.l.s4 1983009808
    %v6036 = vunpack.c.0.s8 %v6035
    %v6037 = vlaneseq
    %v6038 = vshrl.u32 %v6037, 7
    %v6039 = vsub.s32 %v6036, %v6038
    %v6040 = vrot.slane %v6026, %v6039
    %v6041 = vcombine.high %v6033, %v6033
    %v6042 = vcombine.high %v6040, %v6040
    %v6043 = vcombine.high %v6005, %v6005
    %v6045 = vunpack.c.l.s4 1983009808
    %v6046 = vunpack.c.0.s8 %v6045
    %v6047 = vlaneseq
    %v6048 = vshrl.u32 %v6047, 7
    %v6049 = vsub.s32 %v6046, %v6048
    %v6050 = vrot.slane %v6005, %v6049
    %v6052 = vunpack.c.l.s4 1983009808
    %v6053 = vunpack.c.0.s8 %v6052
    %v6054 = vlaneseq
    %v6055 = vshrl.u32 %v6054, 7
    %v6056 = vsub.s32 %v6053, %v6055
    %v6057 = vrot.slane %v6043, %v6056
    %v6058 = vcombine.high %v6050, %v6050
    %v6059 = vcombine.high %v6057, %v6057
    %v6072 = vpack.c.bf16 %v6016, %v6016
    %v6073 = vpack.c.bf16 %v6024, %v6024
    %v6074 = vpack.c.bf16 %v6023, %v6023
    %v6075 = vpack.c.bf16 %v6025, %v6025
    %v6076 = vpack.c.bf16 %v6033, %v6033
    %v6077 = vpack.c.bf16 %v6041, %v6041
    %v6078 = vpack.c.bf16 %v6040, %v6040
    %v6079 = vpack.c.bf16 %v6042, %v6042
    %v6080 = vpack.c.bf16 %v6050, %v6050
    %v6081 = vpack.c.bf16 %v6058, %v6058
    %v6082 = vpack.c.bf16 %v6057, %v6057
    %v6083 = vpack.c.bf16 %v6059, %v6059
    %v6084 = vld [vmem:[#allocation4] sm:$0xff]
    %v6085 = vld [vmem:[#allocation4 + $0x8] sm:$0xff]
    %v6086 = vld [vmem:[#allocation4 + $0x10] sm:$0xff]
    %v6087 = vld [vmem:[#allocation4 + $0x18] sm:$0xff]
    %v6088 = vld [vmem:[#allocation4 + $0x20] sm:$0xff]
    %v6089 = vld [vmem:[#allocation4 + $0x28] sm:$0xff]
    %v6090 = vld [vmem:[#allocation4 + $0x30] sm:$0xff]
    %v6091 = vld [vmem:[#allocation4 + $0x38] sm:$0xff]
    %v6092 = vld [vmem:[#allocation4 + $0x40] sm:$0xff]
    %v6093 = vld [vmem:[#allocation4 + $0x48] sm:$0xff]
    %v6094 = vld [vmem:[#allocation4 + $0x50] sm:$0xff]
    %v6095 = vld [vmem:[#allocation4 + $0x58] sm:$0xff]
    %v6096 = vld [vmem:[#allocation4 + $0x60] sm:$0xff]
    %v6097 = vld [vmem:[#allocation4 + $0x68] sm:$0xff]
    %v6098 = vld [vmem:[#allocation4 + $0x70] sm:$0xff]
    %v6099 = vld [vmem:[#allocation4 + $0x78] sm:$0xff]
    %v6100 = vld [vmem:[#allocation4 + $0x80] sm:$0xff]
    %v6101 = vld [vmem:[#allocation4 + $0x88] sm:$0xff]
    %v6102 = vld [vmem:[#allocation4 + $0x90] sm:$0xff]
    %v6103 = vld [vmem:[#allocation4 + $0x98] sm:$0xff]
    %v6104 = vld [vmem:[#allocation4 + $0xa0] sm:$0xff]
    %v6105 = vld [vmem:[#allocation4 + $0xa8] sm:$0xff]
    %v6106 = vld [vmem:[#allocation4 + $0xb0] sm:$0xff]
    %v6107 = vld [vmem:[#allocation4 + $0xb8] sm:$0xff]
    %v6108 = vld [vmem:[#allocation4 + $0xc0] sm:$0xff]
    %v6109 = vld [vmem:[#allocation4 + $0xc8] sm:$0xff]
    %v6110 = vld [vmem:[#allocation4 + $0xd0] sm:$0xff]
    %v6111 = vld [vmem:[#allocation4 + $0xd8] sm:$0xff]
    %v6112 = vld [vmem:[#allocation4 + $0xe0] sm:$0xff]
    %v6113 = vld [vmem:[#allocation4 + $0xe8] sm:$0xff]
    %v6114 = vld [vmem:[#allocation4 + $0xf0] sm:$0xff]
    %v6115 = vld [vmem:[#allocation4 + $0xf8] sm:$0xff]
    %v6116 = vld [vmem:[#allocation4 + $0x100] sm:$0xff]
    %v6117 = vld [vmem:[#allocation4 + $0x108] sm:$0xff]
    %v6118 = vld [vmem:[#allocation4 + $0x110] sm:$0xff]
    %v6119 = vld [vmem:[#allocation4 + $0x118] sm:$0xff]
    %v6120 = vld [vmem:[#allocation4 + $0x120] sm:$0xff]
    %v6121 = vld [vmem:[#allocation4 + $0x128] sm:$0xff]
    %v6122 = vld [vmem:[#allocation4 + $0x130] sm:$0xff]
    %v6123 = vld [vmem:[#allocation4 + $0x138] sm:$0xff]
    %v6124 = vld [vmem:[#allocation4 + $0x140] sm:$0xff]
    %v6125 = vld [vmem:[#allocation4 + $0x148] sm:$0xff]
    %v6126 = vld [vmem:[#allocation4 + $0x150] sm:$0xff]
    %v6127 = vld [vmem:[#allocation4 + $0x158] sm:$0xff]
    %v6128 = vld [vmem:[#allocation4 + $0x160] sm:$0xff]
    %v6129 = vld [vmem:[#allocation4 + $0x168] sm:$0xff]
    %v6130 = vld [vmem:[#allocation4 + $0x170] sm:$0xff]
    %v6131 = vld [vmem:[#allocation4 + $0x178] sm:$0xff]
    %v6132 = vld [vmem:[#allocation4 + $0x180] sm:$0xff]
    %v6133 = vld [vmem:[#allocation4 + $0x188] sm:$0xff]
    %v6134 = vld [vmem:[#allocation4 + $0x190] sm:$0xff]
    %v6135 = vld [vmem:[#allocation4 + $0x198] sm:$0xff]
    %v6136 = vld [vmem:[#allocation4 + $0x1a0] sm:$0xff]
    %v6137 = vld [vmem:[#allocation4 + $0x1a8] sm:$0xff]
    %v6138 = vld [vmem:[#allocation4 + $0x1b0] sm:$0xff]
    %v6139 = vld [vmem:[#allocation4 + $0x1b8] sm:$0xff]
    %v6140 = vld [vmem:[#allocation4 + $0x1c0] sm:$0xff]
    %v6141 = vld [vmem:[#allocation4 + $0x1c8] sm:$0xff]
    %v6142 = vld [vmem:[#allocation4 + $0x1d0] sm:$0xff]
    %v6143 = vld [vmem:[#allocation4 + $0x1d8] sm:$0xff]
    %v6144 = vld [vmem:[#allocation4 + $0x1e0] sm:$0xff]
    %v6145 = vld [vmem:[#allocation4 + $0x1e8] sm:$0xff]
    %v6146 = vld [vmem:[#allocation4 + $0x1f0] sm:$0xff]
    %v6147 = vld [vmem:[#allocation4 + $0x1f8] sm:$0xff]
    %v6148 = vld [vmem:[#allocation4 + $0x200] sm:$0xff]
    %v6149 = vld [vmem:[#allocation4 + $0x208] sm:$0xff]
    %v6150 = vld [vmem:[#allocation4 + $0x210] sm:$0xff]
    %v6151 = vld [vmem:[#allocation4 + $0x218] sm:$0xff]
    %v6152 = vld [vmem:[#allocation4 + $0x220] sm:$0xff]
    %v6153 = vld [vmem:[#allocation4 + $0x228] sm:$0xff]
    %v6154 = vld [vmem:[#allocation4 + $0x230] sm:$0xff]
    %v6155 = vld [vmem:[#allocation4 + $0x238] sm:$0xff]
    %v6156 = vld [vmem:[#allocation4 + $0x240] sm:$0xff]
    %v6157 = vld [vmem:[#allocation4 + $0x248] sm:$0xff]
    %v6158 = vld [vmem:[#allocation4 + $0x250] sm:$0xff]
    %v6159 = vld [vmem:[#allocation4 + $0x258] sm:$0xff]
    %v6160 = vld [vmem:[#allocation4 + $0x260] sm:$0xff]
    %v6161 = vld [vmem:[#allocation4 + $0x268] sm:$0xff]
    %v6162 = vld [vmem:[#allocation4 + $0x270] sm:$0xff]
    %v6163 = vld [vmem:[#allocation4 + $0x278] sm:$0xff]
    %v6164 = vld [vmem:[#allocation4 + $0x280] sm:$0xff]
    %v6165 = vld [vmem:[#allocation4 + $0x288] sm:$0xff]
    %v6166 = vld [vmem:[#allocation4 + $0x290] sm:$0xff]
    %v6167 = vld [vmem:[#allocation4 + $0x298] sm:$0xff]
    %v6168 = vld [vmem:[#allocation4 + $0x2a0] sm:$0xff]
    %v6169 = vld [vmem:[#allocation4 + $0x2a8] sm:$0xff]
    %v6170 = vld [vmem:[#allocation4 + $0x2b0] sm:$0xff]
    %v6171 = vld [vmem:[#allocation4 + $0x2b8] sm:$0xff]
    %v6172 = vld [vmem:[#allocation4 + $0x2c0] sm:$0xff]
    %v6173 = vld [vmem:[#allocation4 + $0x2c8] sm:$0xff]
    %v6174 = vld [vmem:[#allocation4 + $0x2d0] sm:$0xff]
    %v6175 = vld [vmem:[#allocation4 + $0x2d8] sm:$0xff]
    %v6176 = vld [vmem:[#allocation4 + $0x2e0] sm:$0xff]
    %v6177 = vld [vmem:[#allocation4 + $0x2e8] sm:$0xff]
    %v6178 = vld [vmem:[#allocation4 + $0x2f0] sm:$0xff]
    %v6179 = vld [vmem:[#allocation4 + $0x2f8] sm:$0xff]
    %v6180 = vld [vmem:[#allocation4 + $0x300] sm:$0xff]
    %v6181 = vld [vmem:[#allocation4 + $0x308] sm:$0xff]
    %v6182 = vld [vmem:[#allocation4 + $0x310] sm:$0xff]
    %v6183 = vld [vmem:[#allocation4 + $0x318] sm:$0xff]
    %v6184 = vld [vmem:[#allocation4 + $0x320] sm:$0xff]
    %v6185 = vld [vmem:[#allocation4 + $0x328] sm:$0xff]
    %v6186 = vld [vmem:[#allocation4 + $0x330] sm:$0xff]
    %v6187 = vld [vmem:[#allocation4 + $0x338] sm:$0xff]
    %v6188 = vld [vmem:[#allocation4 + $0x340] sm:$0xff]
    %v6189 = vld [vmem:[#allocation4 + $0x348] sm:$0xff]
    %v6190 = vld [vmem:[#allocation4 + $0x350] sm:$0xff]
    %v6191 = vld [vmem:[#allocation4 + $0x358] sm:$0xff]
    %v6192 = vld [vmem:[#allocation4 + $0x360] sm:$0xff]
    %v6193 = vld [vmem:[#allocation4 + $0x368] sm:$0xff]
    %v6194 = vld [vmem:[#allocation4 + $0x370] sm:$0xff]
    %v6195 = vld [vmem:[#allocation4 + $0x378] sm:$0xff]
    %v6196 = vld [vmem:[#allocation4 + $0x380] sm:$0xff]
    %v6197 = vld [vmem:[#allocation4 + $0x388] sm:$0xff]
    %v6198 = vld [vmem:[#allocation4 + $0x390] sm:$0xff]
    %v6199 = vld [vmem:[#allocation4 + $0x398] sm:$0xff]
    %v6200 = vld [vmem:[#allocation4 + $0x3a0] sm:$0xff]
    %v6201 = vld [vmem:[#allocation4 + $0x3a8] sm:$0xff]
    %v6202 = vld [vmem:[#allocation4 + $0x3b0] sm:$0xff]
    %v6203 = vld [vmem:[#allocation4 + $0x3b8] sm:$0xff]
    %v6204 = vld [vmem:[#allocation4 + $0x3c0] sm:$0xff]
    %v6205 = vld [vmem:[#allocation4 + $0x3c8] sm:$0xff]
    %v6206 = vld [vmem:[#allocation4 + $0x3d0] sm:$0xff]
    %v6207 = vld [vmem:[#allocation4 + $0x3d8] sm:$0xff]
    %v6208 = vld [vmem:[#allocation4 + $0x3e0] sm:$0xff]
    %v6209 = vld [vmem:[#allocation4 + $0x3e8] sm:$0xff]
    %v6210 = vld [vmem:[#allocation4 + $0x3f0] sm:$0xff]
    %v6211 = vld [vmem:[#allocation4 + $0x3f8] sm:$0xff]
    %v6212 = vld [vmem:[#allocation4 + $0x400] sm:$0xff]
    %v6213 = vld [vmem:[#allocation4 + $0x408] sm:$0xff]
    %v6214 = vld [vmem:[#allocation4 + $0x410] sm:$0xff]
    %v6215 = vld [vmem:[#allocation4 + $0x418] sm:$0xff]
    %v6216 = vld [vmem:[#allocation4 + $0x420] sm:$0xff]
    %v6217 = vld [vmem:[#allocation4 + $0x428] sm:$0xff]
    %v6218 = vld [vmem:[#allocation4 + $0x430] sm:$0xff]
    %v6219 = vld [vmem:[#allocation4 + $0x438] sm:$0xff]
    %v6220 = vld [vmem:[#allocation4 + $0x440] sm:$0xff]
    %v6221 = vld [vmem:[#allocation4 + $0x448] sm:$0xff]
    %v6222 = vld [vmem:[#allocation4 + $0x450] sm:$0xff]
    %v6223 = vld [vmem:[#allocation4 + $0x458] sm:$0xff]
    %v6224 = vld [vmem:[#allocation4 + $0x460] sm:$0xff]
    %v6225 = vld [vmem:[#allocation4 + $0x468] sm:$0xff]
    %v6226 = vld [vmem:[#allocation4 + $0x470] sm:$0xff]
    %v6227 = vld [vmem:[#allocation4 + $0x478] sm:$0xff]
    %v6228 = vld [vmem:[#allocation4 + $0x480] sm:$0xff]
    %v6229 = vld [vmem:[#allocation4 + $0x488] sm:$0xff]
    %v6230 = vld [vmem:[#allocation4 + $0x490] sm:$0xff]
    %v6231 = vld [vmem:[#allocation4 + $0x498] sm:$0xff]
    %v6232 = vld [vmem:[#allocation4 + $0x4a0] sm:$0xff]
    %v6233 = vld [vmem:[#allocation4 + $0x4a8] sm:$0xff]
    %v6234 = vld [vmem:[#allocation4 + $0x4b0] sm:$0xff]
    %v6235 = vld [vmem:[#allocation4 + $0x4b8] sm:$0xff]
    %v6236 = vld [vmem:[#allocation4 + $0x4c0] sm:$0xff]
    %v6237 = vld [vmem:[#allocation4 + $0x4c8] sm:$0xff]
    %v6238 = vld [vmem:[#allocation4 + $0x4d0] sm:$0xff]
    %v6239 = vld [vmem:[#allocation4 + $0x4d8] sm:$0xff]
    %v6240 = vld [vmem:[#allocation4 + $0x4e0] sm:$0xff]
    %v6241 = vld [vmem:[#allocation4 + $0x4e8] sm:$0xff]
    %v6242 = vld [vmem:[#allocation4 + $0x4f0] sm:$0xff]
    %v6243 = vld [vmem:[#allocation4 + $0x4f8] sm:$0xff]
    %v6244 = vld [vmem:[#allocation4 + $0x500] sm:$0xff]
    %v6245 = vld [vmem:[#allocation4 + $0x508] sm:$0xff]
    %v6246 = vld [vmem:[#allocation4 + $0x510] sm:$0xff]
    %v6247 = vld [vmem:[#allocation4 + $0x518] sm:$0xff]
    %v6248 = vld [vmem:[#allocation4 + $0x520] sm:$0xff]
    %v6249 = vld [vmem:[#allocation4 + $0x528] sm:$0xff]
    %v6250 = vld [vmem:[#allocation4 + $0x530] sm:$0xff]
    %v6251 = vld [vmem:[#allocation4 + $0x538] sm:$0xff]
    %v6252 = vld [vmem:[#allocation4 + $0x540] sm:$0xff]
    %v6253 = vld [vmem:[#allocation4 + $0x548] sm:$0xff]
    %v6254 = vld [vmem:[#allocation4 + $0x550] sm:$0xff]
    %v6255 = vld [vmem:[#allocation4 + $0x558] sm:$0xff]
    %v6256 = vld [vmem:[#allocation4 + $0x560] sm:$0xff]
    %v6257 = vld [vmem:[#allocation4 + $0x568] sm:$0xff]
    %v6258 = vld [vmem:[#allocation4 + $0x570] sm:$0xff]
    %v6259 = vld [vmem:[#allocation4 + $0x578] sm:$0xff]
    %v6260 = vld [vmem:[#allocation4 + $0x580] sm:$0xff]
    %v6261 = vld [vmem:[#allocation4 + $0x588] sm:$0xff]
    %v6262 = vld [vmem:[#allocation4 + $0x590] sm:$0xff]
    %v6263 = vld [vmem:[#allocation4 + $0x598] sm:$0xff]
    %v6264 = vld [vmem:[#allocation4 + $0x5a0] sm:$0xff]
    %v6265 = vld [vmem:[#allocation4 + $0x5a8] sm:$0xff]
    %v6266 = vld [vmem:[#allocation4 + $0x5b0] sm:$0xff]
    %v6267 = vld [vmem:[#allocation4 + $0x5b8] sm:$0xff]
    %v6268 = vld [vmem:[#allocation4 + $0x5c0] sm:$0xff]
    %v6269 = vld [vmem:[#allocation4 + $0x5c8] sm:$0xff]
    %v6270 = vld [vmem:[#allocation4 + $0x5d0] sm:$0xff]
    %v6271 = vld [vmem:[#allocation4 + $0x5d8] sm:$0xff]
    %v6272 = vld [vmem:[#allocation4 + $0x5e0] sm:$0xff]
    %v6273 = vld [vmem:[#allocation4 + $0x5e8] sm:$0xff]
    %v6274 = vld [vmem:[#allocation4 + $0x5f0] sm:$0xff]
    %v6275 = vld [vmem:[#allocation4 + $0x5f8] sm:$0xff]
    %v6276 = vld [vmem:[#allocation4 + $0x600] sm:$0xff]
    %v6277 = vld [vmem:[#allocation4 + $0x608] sm:$0xff]
    %v6278 = vld [vmem:[#allocation4 + $0x610] sm:$0xff]
    %v6279 = vld [vmem:[#allocation4 + $0x618] sm:$0xff]
    %v6280 = vld [vmem:[#allocation4 + $0x620] sm:$0xff]
    %v6281 = vld [vmem:[#allocation4 + $0x628] sm:$0xff]
    %v6282 = vld [vmem:[#allocation4 + $0x630] sm:$0xff]
    %v6283 = vld [vmem:[#allocation4 + $0x638] sm:$0xff]
    %v6284 = vld [vmem:[#allocation4 + $0x640] sm:$0xff]
    %v6285 = vld [vmem:[#allocation4 + $0x648] sm:$0xff]
    %v6286 = vld [vmem:[#allocation4 + $0x650] sm:$0xff]
    %v6287 = vld [vmem:[#allocation4 + $0x658] sm:$0xff]
    %v6288 = vld [vmem:[#allocation4 + $0x660] sm:$0xff]
    %v6289 = vld [vmem:[#allocation4 + $0x668] sm:$0xff]
    %v6290 = vld [vmem:[#allocation4 + $0x670] sm:$0xff]
    %v6291 = vld [vmem:[#allocation4 + $0x678] sm:$0xff]
    %v6292 = vld [vmem:[#allocation4 + $0x680] sm:$0xff]
    %v6293 = vld [vmem:[#allocation4 + $0x688] sm:$0xff]
    %v6294 = vld [vmem:[#allocation4 + $0x690] sm:$0xff]
    %v6295 = vld [vmem:[#allocation4 + $0x698] sm:$0xff]
    %v6296 = vld [vmem:[#allocation4 + $0x6a0] sm:$0xff]
    %v6297 = vld [vmem:[#allocation4 + $0x6a8] sm:$0xff]
    %v6298 = vld [vmem:[#allocation4 + $0x6b0] sm:$0xff]
    %v6299 = vld [vmem:[#allocation4 + $0x6b8] sm:$0xff]
    %v6300 = vld [vmem:[#allocation4 + $0x6c0] sm:$0xff]
    %v6301 = vld [vmem:[#allocation4 + $0x6c8] sm:$0xff]
    %v6302 = vld [vmem:[#allocation4 + $0x6d0] sm:$0xff]
    %v6303 = vld [vmem:[#allocation4 + $0x6d8] sm:$0xff]
    %v6304 = vld [vmem:[#allocation4 + $0x6e0] sm:$0xff]
    %v6305 = vld [vmem:[#allocation4 + $0x6e8] sm:$0xff]
    %v6306 = vld [vmem:[#allocation4 + $0x6f0] sm:$0xff]
    %v6307 = vld [vmem:[#allocation4 + $0x6f8] sm:$0xff]
    %v6308 = vld [vmem:[#allocation4 + $0x700] sm:$0xff]
    %v6309 = vld [vmem:[#allocation4 + $0x708] sm:$0xff]
    %v6310 = vld [vmem:[#allocation4 + $0x710] sm:$0xff]
    %v6311 = vld [vmem:[#allocation4 + $0x718] sm:$0xff]
    %v6312 = vld [vmem:[#allocation4 + $0x720] sm:$0xff]
    %v6313 = vld [vmem:[#allocation4 + $0x728] sm:$0xff]
    %v6314 = vld [vmem:[#allocation4 + $0x730] sm:$0xff]
    %v6315 = vld [vmem:[#allocation4 + $0x738] sm:$0xff]
    %v6316 = vld [vmem:[#allocation4 + $0x740] sm:$0xff]
    %v6317 = vld [vmem:[#allocation4 + $0x748] sm:$0xff]
    %v6318 = vld [vmem:[#allocation4 + $0x750] sm:$0xff]
    %v6319 = vld [vmem:[#allocation4 + $0x758] sm:$0xff]
    %v6320 = vld [vmem:[#allocation4 + $0x760] sm:$0xff]
    %v6321 = vld [vmem:[#allocation4 + $0x768] sm:$0xff]
    %v6322 = vld [vmem:[#allocation4 + $0x770] sm:$0xff]
    %v6323 = vld [vmem:[#allocation4 + $0x778] sm:$0xff]
    %v6324 = vld [vmem:[#allocation4 + $0x780] sm:$0xff]
    %v6325 = vld [vmem:[#allocation4 + $0x788] sm:$0xff]
    %v6326 = vld [vmem:[#allocation4 + $0x790] sm:$0xff]
    %v6327 = vld [vmem:[#allocation4 + $0x798] sm:$0xff]
    %v6328 = vld [vmem:[#allocation4 + $0x7a0] sm:$0xff]
    %v6329 = vld [vmem:[#allocation4 + $0x7a8] sm:$0xff]
    %v6330 = vld [vmem:[#allocation4 + $0x7b0] sm:$0xff]
    %v6331 = vld [vmem:[#allocation4 + $0x7b8] sm:$0xff]
    %v6332 = vld [vmem:[#allocation4 + $0x7c0] sm:$0xff]
    %v6333 = vld [vmem:[#allocation4 + $0x7c8] sm:$0xff]
    %v6334 = vld [vmem:[#allocation4 + $0x7d0] sm:$0xff]
    %v6335 = vld [vmem:[#allocation4 + $0x7d8] sm:$0xff]
    %v6336 = vld [vmem:[#allocation4 + $0x7e0] sm:$0xff]
    %v6337 = vld [vmem:[#allocation4 + $0x7e8] sm:$0xff]
    %v6338 = vld [vmem:[#allocation4 + $0x7f0] sm:$0xff]
    %v6339 = vld [vmem:[#allocation4 + $0x7f8] sm:$0xff]
    %v6340 = vld [vmem:[#allocation4 + $0x800] sm:$0xff]
    %v6341 = vld [vmem:[#allocation4 + $0x808] sm:$0xff]
    %v6342 = vld [vmem:[#allocation4 + $0x810] sm:$0xff]
    %v6343 = vld [vmem:[#allocation4 + $0x818] sm:$0xff]
    %v6344 = vld [vmem:[#allocation4 + $0x820] sm:$0xff]
    %v6345 = vld [vmem:[#allocation4 + $0x828] sm:$0xff]
    %v6346 = vld [vmem:[#allocation4 + $0x830] sm:$0xff]
    %v6347 = vld [vmem:[#allocation4 + $0x838] sm:$0xff]
    %v6348 = vld [vmem:[#allocation4 + $0x840] sm:$0xff]
    %v6349 = vld [vmem:[#allocation4 + $0x848] sm:$0xff]
    %v6350 = vld [vmem:[#allocation4 + $0x850] sm:$0xff]
    %v6351 = vld [vmem:[#allocation4 + $0x858] sm:$0xff]
    %v6352 = vld [vmem:[#allocation4 + $0x860] sm:$0xff]
    %v6353 = vld [vmem:[#allocation4 + $0x868] sm:$0xff]
    %v6354 = vld [vmem:[#allocation4 + $0x870] sm:$0xff]
    %v6355 = vld [vmem:[#allocation4 + $0x878] sm:$0xff]
    %v6356 = vld [vmem:[#allocation4 + $0x880] sm:$0xff]
    %v6357 = vld [vmem:[#allocation4 + $0x888] sm:$0xff]
    %v6358 = vld [vmem:[#allocation4 + $0x890] sm:$0xff]
    %v6359 = vld [vmem:[#allocation4 + $0x898] sm:$0xff]
    %v6360 = vld [vmem:[#allocation4 + $0x8a0] sm:$0xff]
    %v6361 = vld [vmem:[#allocation4 + $0x8a8] sm:$0xff]
    %v6362 = vld [vmem:[#allocation4 + $0x8b0] sm:$0xff]
    %v6363 = vld [vmem:[#allocation4 + $0x8b8] sm:$0xff]
    %v6364 = vld [vmem:[#allocation4 + $0x8c0] sm:$0xff]
    %v6365 = vld [vmem:[#allocation4 + $0x8c8] sm:$0xff]
    %v6366 = vld [vmem:[#allocation4 + $0x8d0] sm:$0xff]
    %v6367 = vld [vmem:[#allocation4 + $0x8d8] sm:$0xff]
    %v6368 = vld [vmem:[#allocation4 + $0x8e0] sm:$0xff]
    %v6369 = vld [vmem:[#allocation4 + $0x8e8] sm:$0xff]
    %v6370 = vld [vmem:[#allocation4 + $0x8f0] sm:$0xff]
    %v6371 = vld [vmem:[#allocation4 + $0x8f8] sm:$0xff]
    %v6372 = vld [vmem:[#allocation4 + $0x900] sm:$0xff]
    %v6373 = vld [vmem:[#allocation4 + $0x908] sm:$0xff]
    %v6374 = vld [vmem:[#allocation4 + $0x910] sm:$0xff]
    %v6375 = vld [vmem:[#allocation4 + $0x918] sm:$0xff]
    %v6376 = vld [vmem:[#allocation4 + $0x920] sm:$0xff]
    %v6377 = vld [vmem:[#allocation4 + $0x928] sm:$0xff]
    %v6378 = vld [vmem:[#allocation4 + $0x930] sm:$0xff]
    %v6379 = vld [vmem:[#allocation4 + $0x938] sm:$0xff]
    %v6380 = vld [vmem:[#allocation4 + $0x940] sm:$0xff]
    %v6381 = vld [vmem:[#allocation4 + $0x948] sm:$0xff]
    %v6382 = vld [vmem:[#allocation4 + $0x950] sm:$0xff]
    %v6383 = vld [vmem:[#allocation4 + $0x958] sm:$0xff]
    %v6384 = vld [vmem:[#allocation4 + $0x960] sm:$0xff]
    %v6385 = vld [vmem:[#allocation4 + $0x968] sm:$0xff]
    %v6386 = vld [vmem:[#allocation4 + $0x970] sm:$0xff]
    %v6387 = vld [vmem:[#allocation4 + $0x978] sm:$0xff]
    %v6388 = vld [vmem:[#allocation4 + $0x980] sm:$0xff]
    %v6389 = vld [vmem:[#allocation4 + $0x988] sm:$0xff]
    %v6390 = vld [vmem:[#allocation4 + $0x990] sm:$0xff]
    %v6391 = vld [vmem:[#allocation4 + $0x998] sm:$0xff]
    %v6392 = vld [vmem:[#allocation4 + $0x9a0] sm:$0xff]
    %v6393 = vld [vmem:[#allocation4 + $0x9a8] sm:$0xff]
    %v6394 = vld [vmem:[#allocation4 + $0x9b0] sm:$0xff]
    %v6395 = vld [vmem:[#allocation4 + $0x9b8] sm:$0xff]
    %v6396 = vld [vmem:[#allocation4 + $0x9c0] sm:$0xff]
    %v6397 = vld [vmem:[#allocation4 + $0x9c8] sm:$0xff]
    %v6398 = vld [vmem:[#allocation4 + $0x9d0] sm:$0xff]
    %v6399 = vld [vmem:[#allocation4 + $0x9d8] sm:$0xff]
    %v6400 = vld [vmem:[#allocation4 + $0x9e0] sm:$0xff]
    %v6401 = vld [vmem:[#allocation4 + $0x9e8] sm:$0xff]
    %v6402 = vld [vmem:[#allocation4 + $0x9f0] sm:$0xff]
    %v6403 = vld [vmem:[#allocation4 + $0x9f8] sm:$0xff]
    %v6404 = vld [vmem:[#allocation4 + $0xa00] sm:$0xff]
    %v6405 = vld [vmem:[#allocation4 + $0xa08] sm:$0xff]
    %v6406 = vld [vmem:[#allocation4 + $0xa10] sm:$0xff]
    %v6407 = vld [vmem:[#allocation4 + $0xa18] sm:$0xff]
    %v6408 = vld [vmem:[#allocation4 + $0xa20] sm:$0xff]
    %v6409 = vld [vmem:[#allocation4 + $0xa28] sm:$0xff]
    %v6410 = vld [vmem:[#allocation4 + $0xa30] sm:$0xff]
    %v6411 = vld [vmem:[#allocation4 + $0xa38] sm:$0xff]
    %v6412 = vld [vmem:[#allocation4 + $0xa40] sm:$0xff]
    %v6413 = vld [vmem:[#allocation4 + $0xa48] sm:$0xff]
    %v6414 = vld [vmem:[#allocation4 + $0xa50] sm:$0xff]
    %v6415 = vld [vmem:[#allocation4 + $0xa58] sm:$0xff]
    %v6416 = vld [vmem:[#allocation4 + $0xa60] sm:$0xff]
    %v6417 = vld [vmem:[#allocation4 + $0xa68] sm:$0xff]
    %v6418 = vld [vmem:[#allocation4 + $0xa70] sm:$0xff]
    %v6419 = vld [vmem:[#allocation4 + $0xa78] sm:$0xff]
    %v6420 = vld [vmem:[#allocation4 + $0xa80] sm:$0xff]
    %v6421 = vld [vmem:[#allocation4 + $0xa88] sm:$0xff]
    %v6422 = vld [vmem:[#allocation4 + $0xa90] sm:$0xff]
    %v6423 = vld [vmem:[#allocation4 + $0xa98] sm:$0xff]
    %v6424 = vld [vmem:[#allocation4 + $0xaa0] sm:$0xff]
    %v6425 = vld [vmem:[#allocation4 + $0xaa8] sm:$0xff]
    %v6426 = vld [vmem:[#allocation4 + $0xab0] sm:$0xff]
    %v6427 = vld [vmem:[#allocation4 + $0xab8] sm:$0xff]
    %v6428 = vld [vmem:[#allocation4 + $0xac0] sm:$0xff]
    %v6429 = vld [vmem:[#allocation4 + $0xac8] sm:$0xff]
    %v6430 = vld [vmem:[#allocation4 + $0xad0] sm:$0xff]
    %v6431 = vld [vmem:[#allocation4 + $0xad8] sm:$0xff]
    %v6432 = vld [vmem:[#allocation4 + $0xae0] sm:$0xff]
    %v6433 = vld [vmem:[#allocation4 + $0xae8] sm:$0xff]
    %v6434 = vld [vmem:[#allocation4 + $0xaf0] sm:$0xff]
    %v6435 = vld [vmem:[#allocation4 + $0xaf8] sm:$0xff]
    %v6436 = vld [vmem:[#allocation4 + $0xb00] sm:$0xff]
    %v6437 = vld [vmem:[#allocation4 + $0xb08] sm:$0xff]
    %v6438 = vld [vmem:[#allocation4 + $0xb10] sm:$0xff]
    %v6439 = vld [vmem:[#allocation4 + $0xb18] sm:$0xff]
    %v6440 = vld [vmem:[#allocation4 + $0xb20] sm:$0xff]
    %v6441 = vld [vmem:[#allocation4 + $0xb28] sm:$0xff]
    %v6442 = vld [vmem:[#allocation4 + $0xb30] sm:$0xff]
    %v6443 = vld [vmem:[#allocation4 + $0xb38] sm:$0xff]
    %v6444 = vld [vmem:[#allocation4 + $0xb40] sm:$0xff]
    %v6445 = vld [vmem:[#allocation4 + $0xb48] sm:$0xff]
    %v6446 = vld [vmem:[#allocation4 + $0xb50] sm:$0xff]
    %v6447 = vld [vmem:[#allocation4 + $0xb58] sm:$0xff]
    %v6448 = vld [vmem:[#allocation4 + $0xb60] sm:$0xff]
    %v6449 = vld [vmem:[#allocation4 + $0xb68] sm:$0xff]
    %v6450 = vld [vmem:[#allocation4 + $0xb70] sm:$0xff]
    %v6451 = vld [vmem:[#allocation4 + $0xb78] sm:$0xff]
    %v6452 = vld [vmem:[#allocation4 + $0xb80] sm:$0xff]
    %v6453 = vld [vmem:[#allocation4 + $0xb88] sm:$0xff]
    %v6454 = vld [vmem:[#allocation4 + $0xb90] sm:$0xff]
    %v6455 = vld [vmem:[#allocation4 + $0xb98] sm:$0xff]
    %v6456 = vld [vmem:[#allocation4 + $0xba0] sm:$0xff]
    %v6457 = vld [vmem:[#allocation4 + $0xba8] sm:$0xff]
    %v6458 = vld [vmem:[#allocation4 + $0xbb0] sm:$0xff]
    %v6459 = vld [vmem:[#allocation4 + $0xbb8] sm:$0xff]
    %v6460 = vld [vmem:[#allocation4 + $0xbc0] sm:$0xff]
    %v6461 = vld [vmem:[#allocation4 + $0xbc8] sm:$0xff]
    %v6462 = vld [vmem:[#allocation4 + $0xbd0] sm:$0xff]
    %v6463 = vld [vmem:[#allocation4 + $0xbd8] sm:$0xff]
    %v6464 = vld [vmem:[#allocation4 + $0xbe0] sm:$0xff]
    %v6465 = vld [vmem:[#allocation4 + $0xbe8] sm:$0xff]
    %v6466 = vld [vmem:[#allocation4 + $0xbf0] sm:$0xff]
    %v6467 = vld [vmem:[#allocation4 + $0xbf8] sm:$0xff]
    %v6468 = vld [vmem:[%s7] sm:$0xf]
    %v6470 = vlaneseq
    %v6471 = vshrl.u32 %v6470, 7
    %v6472 = vsub.s32 0, %v6471
    %v6473 = vrot.slane %v6468, %v6472
    %v6474 = vlaneseq
    %v6475 = vshrl.u32 %v6474, 7
    %v6476 = vsub.s32 1, %v6475
    %v6477 = vrot.slane %v6468, %v6476
    %v6478 = vlaneseq
    %v6479 = vshrl.u32 %v6478, 7
    %v6480 = vsub.s32 2, %v6479
    %v6481 = vrot.slane %v6468, %v6480
    %v6482 = vlaneseq
    %v6483 = vshrl.u32 %v6482, 7
    %v6484 = vsub.s32 3, %v6483
    %v6485 = vrot.slane %v6468, %v6484
    %v6874 = vunpack.c.l.b16 %v6084
    %v6875 = vunpack.c.h.b16 %v6084
    %v6876 = vunpack.c.l.b16 %v6085
    %v6877 = vunpack.c.h.b16 %v6085
    %v6878 = vunpack.c.l.b16 %v6086
    %v6879 = vunpack.c.h.b16 %v6086
    %v6880 = vunpack.c.l.b16 %v6087
    %v6881 = vunpack.c.h.b16 %v6087
    %v6882 = vunpack.c.l.b16 %v6088
    %v6883 = vunpack.c.h.b16 %v6088
    %v6884 = vunpack.c.l.b16 %v6089
    %v6885 = vunpack.c.h.b16 %v6089
    %v6886 = vunpack.c.l.b16 %v6090
    %v6887 = vunpack.c.h.b16 %v6090
    %v6888 = vunpack.c.l.b16 %v6091
    %v6889 = vunpack.c.h.b16 %v6091
    %v6890 = vunpack.c.l.b16 %v6092
    %v6891 = vunpack.c.h.b16 %v6092
    %v6892 = vunpack.c.l.b16 %v6093
    %v6893 = vunpack.c.h.b16 %v6093
    %v6894 = vunpack.c.l.b16 %v6094
    %v6895 = vunpack.c.h.b16 %v6094
    %v6896 = vunpack.c.l.b16 %v6095
    %v6897 = vunpack.c.h.b16 %v6095
    %v6898 = vunpack.c.l.b16 %v6096
    %v6899 = vunpack.c.h.b16 %v6096
    %v6900 = vunpack.c.l.b16 %v6097
    %v6901 = vunpack.c.h.b16 %v6097
    %v6902 = vunpack.c.l.b16 %v6098
    %v6903 = vunpack.c.h.b16 %v6098
    %v6904 = vunpack.c.l.b16 %v6099
    %v6905 = vunpack.c.h.b16 %v6099
    %v6906 = vunpack.c.l.b16 %v6100
    %v6907 = vunpack.c.h.b16 %v6100
    %v6908 = vunpack.c.l.b16 %v6101
    %v6909 = vunpack.c.h.b16 %v6101
    %v6910 = vunpack.c.l.b16 %v6102
    %v6911 = vunpack.c.h.b16 %v6102
    %v6912 = vunpack.c.l.b16 %v6103
    %v6913 = vunpack.c.h.b16 %v6103
    %v6914 = vunpack.c.l.b16 %v6104
    %v6915 = vunpack.c.h.b16 %v6104
    %v6916 = vunpack.c.l.b16 %v6105
    %v6917 = vunpack.c.h.b16 %v6105
    %v6918 = vunpack.c.l.b16 %v6106
    %v6919 = vunpack.c.h.b16 %v6106
    %v6920 = vunpack.c.l.b16 %v6107
    %v6921 = vunpack.c.h.b16 %v6107
    %v6922 = vunpack.c.l.b16 %v6108
    %v6923 = vunpack.c.h.b16 %v6108
    %v6924 = vunpack.c.l.b16 %v6109
    %v6925 = vunpack.c.h.b16 %v6109
    %v6926 = vunpack.c.l.b16 %v6110
    %v6927 = vunpack.c.h.b16 %v6110
    %v6928 = vunpack.c.l.b16 %v6111
    %v6929 = vunpack.c.h.b16 %v6111
    %v6930 = vunpack.c.l.b16 %v6112
    %v6931 = vunpack.c.h.b16 %v6112
    %v6932 = vunpack.c.l.b16 %v6113
    %v6933 = vunpack.c.h.b16 %v6113
    %v6934 = vunpack.c.l.b16 %v6114
    %v6935 = vunpack.c.h.b16 %v6114
    %v6936 = vunpack.c.l.b16 %v6115
    %v6937 = vunpack.c.h.b16 %v6115
    %v6938 = vunpack.c.l.b16 %v6116
    %v6939 = vunpack.c.h.b16 %v6116
    %v6940 = vunpack.c.l.b16 %v6117
    %v6941 = vunpack.c.h.b16 %v6117
    %v6942 = vunpack.c.l.b16 %v6118
    %v6943 = vunpack.c.h.b16 %v6118
    %v6944 = vunpack.c.l.b16 %v6119
    %v6945 = vunpack.c.h.b16 %v6119
    %v6946 = vunpack.c.l.b16 %v6120
    %v6947 = vunpack.c.h.b16 %v6120
    %v6948 = vunpack.c.l.b16 %v6121
    %v6949 = vunpack.c.h.b16 %v6121
    %v6950 = vunpack.c.l.b16 %v6122
    %v6951 = vunpack.c.h.b16 %v6122
    %v6952 = vunpack.c.l.b16 %v6123
    %v6953 = vunpack.c.h.b16 %v6123
    %v6954 = vunpack.c.l.b16 %v6124
    %v6955 = vunpack.c.h.b16 %v6124
    %v6956 = vunpack.c.l.b16 %v6125
    %v6957 = vunpack.c.h.b16 %v6125
    %v6958 = vunpack.c.l.b16 %v6126
    %v6959 = vunpack.c.h.b16 %v6126
    %v6960 = vunpack.c.l.b16 %v6127
    %v6961 = vunpack.c.h.b16 %v6127
    %v6962 = vunpack.c.l.b16 %v6128
    %v6963 = vunpack.c.h.b16 %v6128
    %v6964 = vunpack.c.l.b16 %v6129
    %v6965 = vunpack.c.h.b16 %v6129
    %v6966 = vunpack.c.l.b16 %v6130
    %v6967 = vunpack.c.h.b16 %v6130
    %v6968 = vunpack.c.l.b16 %v6131
    %v6969 = vunpack.c.h.b16 %v6131
    %v6970 = vunpack.c.l.b16 %v6132
    %v6971 = vunpack.c.h.b16 %v6132
    %v6972 = vunpack.c.l.b16 %v6133
    %v6973 = vunpack.c.h.b16 %v6133
    %v6974 = vunpack.c.l.b16 %v6134
    %v6975 = vunpack.c.h.b16 %v6134
    %v6976 = vunpack.c.l.b16 %v6135
    %v6977 = vunpack.c.h.b16 %v6135
    %v6978 = vunpack.c.l.b16 %v6136
    %v6979 = vunpack.c.h.b16 %v6136
    %v6980 = vunpack.c.l.b16 %v6137
    %v6981 = vunpack.c.h.b16 %v6137
    %v6982 = vunpack.c.l.b16 %v6138
    %v6983 = vunpack.c.h.b16 %v6138
    %v6984 = vunpack.c.l.b16 %v6139
    %v6985 = vunpack.c.h.b16 %v6139
    %v6986 = vunpack.c.l.b16 %v6140
    %v6987 = vunpack.c.h.b16 %v6140
    %v6988 = vunpack.c.l.b16 %v6141
    %v6989 = vunpack.c.h.b16 %v6141
    %v6990 = vunpack.c.l.b16 %v6142
    %v6991 = vunpack.c.h.b16 %v6142
    %v6992 = vunpack.c.l.b16 %v6143
    %v6993 = vunpack.c.h.b16 %v6143
    %v6994 = vunpack.c.l.b16 %v6144
    %v6995 = vunpack.c.h.b16 %v6144
    %v6996 = vunpack.c.l.b16 %v6145
    %v6997 = vunpack.c.h.b16 %v6145
    %v6998 = vunpack.c.l.b16 %v6146
    %v6999 = vunpack.c.h.b16 %v6146
    %v7000 = vunpack.c.l.b16 %v6147
    %v7001 = vunpack.c.h.b16 %v6147
    %v7002 = vunpack.c.l.b16 %v6148
    %v7003 = vunpack.c.h.b16 %v6148
    %v7004 = vunpack.c.l.b16 %v6149
    %v7005 = vunpack.c.h.b16 %v6149
    %v7006 = vunpack.c.l.b16 %v6150
    %v7007 = vunpack.c.h.b16 %v6150
    %v7008 = vunpack.c.l.b16 %v6151
    %v7009 = vunpack.c.h.b16 %v6151
    %v7010 = vunpack.c.l.b16 %v6152
    %v7011 = vunpack.c.h.b16 %v6152
    %v7012 = vunpack.c.l.b16 %v6153
    %v7013 = vunpack.c.h.b16 %v6153
    %v7014 = vunpack.c.l.b16 %v6154
    %v7015 = vunpack.c.h.b16 %v6154
    %v7016 = vunpack.c.l.b16 %v6155
    %v7017 = vunpack.c.h.b16 %v6155
    %v7018 = vunpack.c.l.b16 %v6156
    %v7019 = vunpack.c.h.b16 %v6156
    %v7020 = vunpack.c.l.b16 %v6157
    %v7021 = vunpack.c.h.b16 %v6157
    %v7022 = vunpack.c.l.b16 %v6158
    %v7023 = vunpack.c.h.b16 %v6158
    %v7024 = vunpack.c.l.b16 %v6159
    %v7025 = vunpack.c.h.b16 %v6159
    %v7026 = vunpack.c.l.b16 %v6160
    %v7027 = vunpack.c.h.b16 %v6160
    %v7028 = vunpack.c.l.b16 %v6161
    %v7029 = vunpack.c.h.b16 %v6161
    %v7030 = vunpack.c.l.b16 %v6162
    %v7031 = vunpack.c.h.b16 %v6162
    %v7032 = vunpack.c.l.b16 %v6163
    %v7033 = vunpack.c.h.b16 %v6163
    %v7034 = vunpack.c.l.b16 %v6164
    %v7035 = vunpack.c.h.b16 %v6164
    %v7036 = vunpack.c.l.b16 %v6165
    %v7037 = vunpack.c.h.b16 %v6165
    %v7038 = vunpack.c.l.b16 %v6166
    %v7039 = vunpack.c.h.b16 %v6166
    %v7040 = vunpack.c.l.b16 %v6167
    %v7041 = vunpack.c.h.b16 %v6167
    %v7042 = vunpack.c.l.b16 %v6168
    %v7043 = vunpack.c.h.b16 %v6168
    %v7044 = vunpack.c.l.b16 %v6169
    %v7045 = vunpack.c.h.b16 %v6169
    %v7046 = vunpack.c.l.b16 %v6170
    %v7047 = vunpack.c.h.b16 %v6170
    %v7048 = vunpack.c.l.b16 %v6171
    %v7049 = vunpack.c.h.b16 %v6171
    %v7050 = vunpack.c.l.b16 %v6172
    %v7051 = vunpack.c.h.b16 %v6172
    %v7052 = vunpack.c.l.b16 %v6173
    %v7053 = vunpack.c.h.b16 %v6173
    %v7054 = vunpack.c.l.b16 %v6174
    %v7055 = vunpack.c.h.b16 %v6174
    %v7056 = vunpack.c.l.b16 %v6175
    %v7057 = vunpack.c.h.b16 %v6175
    %v7058 = vunpack.c.l.b16 %v6176
    %v7059 = vunpack.c.h.b16 %v6176
    %v7060 = vunpack.c.l.b16 %v6177
    %v7061 = vunpack.c.h.b16 %v6177
    %v7062 = vunpack.c.l.b16 %v6178
    %v7063 = vunpack.c.h.b16 %v6178
    %v7064 = vunpack.c.l.b16 %v6179
    %v7065 = vunpack.c.h.b16 %v6179
    %v7066 = vunpack.c.l.b16 %v6180
    %v7067 = vunpack.c.h.b16 %v6180
    %v7068 = vunpack.c.l.b16 %v6181
    %v7069 = vunpack.c.h.b16 %v6181
    %v7070 = vunpack.c.l.b16 %v6182
    %v7071 = vunpack.c.h.b16 %v6182
    %v7072 = vunpack.c.l.b16 %v6183
    %v7073 = vunpack.c.h.b16 %v6183
    %v7074 = vunpack.c.l.b16 %v6184
    %v7075 = vunpack.c.h.b16 %v6184
    %v7076 = vunpack.c.l.b16 %v6185
    %v7077 = vunpack.c.h.b16 %v6185
    %v7078 = vunpack.c.l.b16 %v6186
    %v7079 = vunpack.c.h.b16 %v6186
    %v7080 = vunpack.c.l.b16 %v6187
    %v7081 = vunpack.c.h.b16 %v6187
    %v7082 = vunpack.c.l.b16 %v6188
    %v7083 = vunpack.c.h.b16 %v6188
    %v7084 = vunpack.c.l.b16 %v6189
    %v7085 = vunpack.c.h.b16 %v6189
    %v7086 = vunpack.c.l.b16 %v6190
    %v7087 = vunpack.c.h.b16 %v6190
    %v7088 = vunpack.c.l.b16 %v6191
    %v7089 = vunpack.c.h.b16 %v6191
    %v7090 = vunpack.c.l.b16 %v6192
    %v7091 = vunpack.c.h.b16 %v6192
    %v7092 = vunpack.c.l.b16 %v6193
    %v7093 = vunpack.c.h.b16 %v6193
    %v7094 = vunpack.c.l.b16 %v6194
    %v7095 = vunpack.c.h.b16 %v6194
    %v7096 = vunpack.c.l.b16 %v6195
    %v7097 = vunpack.c.h.b16 %v6195
    %v7098 = vunpack.c.l.b16 %v6196
    %v7099 = vunpack.c.h.b16 %v6196
    %v7100 = vunpack.c.l.b16 %v6197
    %v7101 = vunpack.c.h.b16 %v6197
    %v7102 = vunpack.c.l.b16 %v6198
    %v7103 = vunpack.c.h.b16 %v6198
    %v7104 = vunpack.c.l.b16 %v6199
    %v7105 = vunpack.c.h.b16 %v6199
    %v7106 = vunpack.c.l.b16 %v6200
    %v7107 = vunpack.c.h.b16 %v6200
    %v7108 = vunpack.c.l.b16 %v6201
    %v7109 = vunpack.c.h.b16 %v6201
    %v7110 = vunpack.c.l.b16 %v6202
    %v7111 = vunpack.c.h.b16 %v6202
    %v7112 = vunpack.c.l.b16 %v6203
    %v7113 = vunpack.c.h.b16 %v6203
    %v7114 = vunpack.c.l.b16 %v6204
    %v7115 = vunpack.c.h.b16 %v6204
    %v7116 = vunpack.c.l.b16 %v6205
    %v7117 = vunpack.c.h.b16 %v6205
    %v7118 = vunpack.c.l.b16 %v6206
    %v7119 = vunpack.c.h.b16 %v6206
    %v7120 = vunpack.c.l.b16 %v6207
    %v7121 = vunpack.c.h.b16 %v6207
    %v7122 = vunpack.c.l.b16 %v6208
    %v7123 = vunpack.c.h.b16 %v6208
    %v7124 = vunpack.c.l.b16 %v6209
    %v7125 = vunpack.c.h.b16 %v6209
    %v7126 = vunpack.c.l.b16 %v6210
    %v7127 = vunpack.c.h.b16 %v6210
    %v7128 = vunpack.c.l.b16 %v6211
    %v7129 = vunpack.c.h.b16 %v6211
    %v7130 = vunpack.c.l.b16 %v6212
    %v7131 = vunpack.c.h.b16 %v6212
    %v7132 = vunpack.c.l.b16 %v6213
    %v7133 = vunpack.c.h.b16 %v6213
    %v7134 = vunpack.c.l.b16 %v6214
    %v7135 = vunpack.c.h.b16 %v6214
    %v7136 = vunpack.c.l.b16 %v6215
    %v7137 = vunpack.c.h.b16 %v6215
    %v7138 = vunpack.c.l.b16 %v6216
    %v7139 = vunpack.c.h.b16 %v6216
    %v7140 = vunpack.c.l.b16 %v6217
    %v7141 = vunpack.c.h.b16 %v6217
    %v7142 = vunpack.c.l.b16 %v6218
    %v7143 = vunpack.c.h.b16 %v6218
    %v7144 = vunpack.c.l.b16 %v6219
    %v7145 = vunpack.c.h.b16 %v6219
    %v7146 = vunpack.c.l.b16 %v6220
    %v7147 = vunpack.c.h.b16 %v6220
    %v7148 = vunpack.c.l.b16 %v6221
    %v7149 = vunpack.c.h.b16 %v6221
    %v7150 = vunpack.c.l.b16 %v6222
    %v7151 = vunpack.c.h.b16 %v6222
    %v7152 = vunpack.c.l.b16 %v6223
    %v7153 = vunpack.c.h.b16 %v6223
    %v7154 = vunpack.c.l.b16 %v6224
    %v7155 = vunpack.c.h.b16 %v6224
    %v7156 = vunpack.c.l.b16 %v6225
    %v7157 = vunpack.c.h.b16 %v6225
    %v7158 = vunpack.c.l.b16 %v6226
    %v7159 = vunpack.c.h.b16 %v6226
    %v7160 = vunpack.c.l.b16 %v6227
    %v7161 = vunpack.c.h.b16 %v6227
    %v7162 = vunpack.c.l.b16 %v6228
    %v7163 = vunpack.c.h.b16 %v6228
    %v7164 = vunpack.c.l.b16 %v6229
    %v7165 = vunpack.c.h.b16 %v6229
    %v7166 = vunpack.c.l.b16 %v6230
    %v7167 = vunpack.c.h.b16 %v6230
    %v7168 = vunpack.c.l.b16 %v6231
    %v7169 = vunpack.c.h.b16 %v6231
    %v7170 = vunpack.c.l.b16 %v6232
    %v7171 = vunpack.c.h.b16 %v6232
    %v7172 = vunpack.c.l.b16 %v6233
    %v7173 = vunpack.c.h.b16 %v6233
    %v7174 = vunpack.c.l.b16 %v6234
    %v7175 = vunpack.c.h.b16 %v6234
    %v7176 = vunpack.c.l.b16 %v6235
    %v7177 = vunpack.c.h.b16 %v6235
    %v7178 = vunpack.c.l.b16 %v6236
    %v7179 = vunpack.c.h.b16 %v6236
    %v7180 = vunpack.c.l.b16 %v6237
    %v7181 = vunpack.c.h.b16 %v6237
    %v7182 = vunpack.c.l.b16 %v6238
    %v7183 = vunpack.c.h.b16 %v6238
    %v7184 = vunpack.c.l.b16 %v6239
    %v7185 = vunpack.c.h.b16 %v6239
    %v7186 = vunpack.c.l.b16 %v6240
    %v7187 = vunpack.c.h.b16 %v6240
    %v7188 = vunpack.c.l.b16 %v6241
    %v7189 = vunpack.c.h.b16 %v6241
    %v7190 = vunpack.c.l.b16 %v6242
    %v7191 = vunpack.c.h.b16 %v6242
    %v7192 = vunpack.c.l.b16 %v6243
    %v7193 = vunpack.c.h.b16 %v6243
    %v7194 = vunpack.c.l.b16 %v6244
    %v7195 = vunpack.c.h.b16 %v6244
    %v7196 = vunpack.c.l.b16 %v6245
    %v7197 = vunpack.c.h.b16 %v6245
    %v7198 = vunpack.c.l.b16 %v6246
    %v7199 = vunpack.c.h.b16 %v6246
    %v7200 = vunpack.c.l.b16 %v6247
    %v7201 = vunpack.c.h.b16 %v6247
    %v7202 = vunpack.c.l.b16 %v6248
    %v7203 = vunpack.c.h.b16 %v6248
    %v7204 = vunpack.c.l.b16 %v6249
    %v7205 = vunpack.c.h.b16 %v6249
    %v7206 = vunpack.c.l.b16 %v6250
    %v7207 = vunpack.c.h.b16 %v6250
    %v7208 = vunpack.c.l.b16 %v6251
    %v7209 = vunpack.c.h.b16 %v6251
    %v7210 = vunpack.c.l.b16 %v6252
    %v7211 = vunpack.c.h.b16 %v6252
    %v7212 = vunpack.c.l.b16 %v6253
    %v7213 = vunpack.c.h.b16 %v6253
    %v7214 = vunpack.c.l.b16 %v6254
    %v7215 = vunpack.c.h.b16 %v6254
    %v7216 = vunpack.c.l.b16 %v6255
    %v7217 = vunpack.c.h.b16 %v6255
    %v7218 = vunpack.c.l.b16 %v6256
    %v7219 = vunpack.c.h.b16 %v6256
    %v7220 = vunpack.c.l.b16 %v6257
    %v7221 = vunpack.c.h.b16 %v6257
    %v7222 = vunpack.c.l.b16 %v6258
    %v7223 = vunpack.c.h.b16 %v6258
    %v7224 = vunpack.c.l.b16 %v6259
    %v7225 = vunpack.c.h.b16 %v6259
    %v7226 = vunpack.c.l.b16 %v6260
    %v7227 = vunpack.c.h.b16 %v6260
    %v7228 = vunpack.c.l.b16 %v6261
    %v7229 = vunpack.c.h.b16 %v6261
    %v7230 = vunpack.c.l.b16 %v6262
    %v7231 = vunpack.c.h.b16 %v6262
    %v7232 = vunpack.c.l.b16 %v6263
    %v7233 = vunpack.c.h.b16 %v6263
    %v7234 = vunpack.c.l.b16 %v6264
    %v7235 = vunpack.c.h.b16 %v6264
    %v7236 = vunpack.c.l.b16 %v6265
    %v7237 = vunpack.c.h.b16 %v6265
    %v7238 = vunpack.c.l.b16 %v6266
    %v7239 = vunpack.c.h.b16 %v6266
    %v7240 = vunpack.c.l.b16 %v6267
    %v7241 = vunpack.c.h.b16 %v6267
    %v7242 = vunpack.c.l.b16 %v6268
    %v7243 = vunpack.c.h.b16 %v6268
    %v7244 = vunpack.c.l.b16 %v6269
    %v7245 = vunpack.c.h.b16 %v6269
    %v7246 = vunpack.c.l.b16 %v6270
    %v7247 = vunpack.c.h.b16 %v6270
    %v7248 = vunpack.c.l.b16 %v6271
    %v7249 = vunpack.c.h.b16 %v6271
    %v7250 = vunpack.c.l.b16 %v6272
    %v7251 = vunpack.c.h.b16 %v6272
    %v7252 = vunpack.c.l.b16 %v6273
    %v7253 = vunpack.c.h.b16 %v6273
    %v7254 = vunpack.c.l.b16 %v6274
    %v7255 = vunpack.c.h.b16 %v6274
    %v7256 = vunpack.c.l.b16 %v6275
    %v7257 = vunpack.c.h.b16 %v6275
    %v7258 = vunpack.c.l.b16 %v6276
    %v7259 = vunpack.c.h.b16 %v6276
    %v7260 = vunpack.c.l.b16 %v6277
    %v7261 = vunpack.c.h.b16 %v6277
    %v7262 = vunpack.c.l.b16 %v6278
    %v7263 = vunpack.c.h.b16 %v6278
    %v7264 = vunpack.c.l.b16 %v6279
    %v7265 = vunpack.c.h.b16 %v6279
    %v7266 = vunpack.c.l.b16 %v6280
    %v7267 = vunpack.c.h.b16 %v6280
    %v7268 = vunpack.c.l.b16 %v6281
    %v7269 = vunpack.c.h.b16 %v6281
    %v7270 = vunpack.c.l.b16 %v6282
    %v7271 = vunpack.c.h.b16 %v6282
    %v7272 = vunpack.c.l.b16 %v6283
    %v7273 = vunpack.c.h.b16 %v6283
    %v7274 = vunpack.c.l.b16 %v6284
    %v7275 = vunpack.c.h.b16 %v6284
    %v7276 = vunpack.c.l.b16 %v6285
    %v7277 = vunpack.c.h.b16 %v6285
    %v7278 = vunpack.c.l.b16 %v6286
    %v7279 = vunpack.c.h.b16 %v6286
    %v7280 = vunpack.c.l.b16 %v6287
    %v7281 = vunpack.c.h.b16 %v6287
    %v7282 = vunpack.c.l.b16 %v6288
    %v7283 = vunpack.c.h.b16 %v6288
    %v7284 = vunpack.c.l.b16 %v6289
    %v7285 = vunpack.c.h.b16 %v6289
    %v7286 = vunpack.c.l.b16 %v6290
    %v7287 = vunpack.c.h.b16 %v6290
    %v7288 = vunpack.c.l.b16 %v6291
    %v7289 = vunpack.c.h.b16 %v6291
    %v7290 = vunpack.c.l.b16 %v6292
    %v7291 = vunpack.c.h.b16 %v6292
    %v7292 = vunpack.c.l.b16 %v6293
    %v7293 = vunpack.c.h.b16 %v6293
    %v7294 = vunpack.c.l.b16 %v6294
    %v7295 = vunpack.c.h.b16 %v6294
    %v7296 = vunpack.c.l.b16 %v6295
    %v7297 = vunpack.c.h.b16 %v6295
    %v7298 = vunpack.c.l.b16 %v6296
    %v7299 = vunpack.c.h.b16 %v6296
    %v7300 = vunpack.c.l.b16 %v6297
    %v7301 = vunpack.c.h.b16 %v6297
    %v7302 = vunpack.c.l.b16 %v6298
    %v7303 = vunpack.c.h.b16 %v6298
    %v7304 = vunpack.c.l.b16 %v6299
    %v7305 = vunpack.c.h.b16 %v6299
    %v7306 = vunpack.c.l.b16 %v6300
    %v7307 = vunpack.c.h.b16 %v6300
    %v7308 = vunpack.c.l.b16 %v6301
    %v7309 = vunpack.c.h.b16 %v6301
    %v7310 = vunpack.c.l.b16 %v6302
    %v7311 = vunpack.c.h.b16 %v6302
    %v7312 = vunpack.c.l.b16 %v6303
    %v7313 = vunpack.c.h.b16 %v6303
    %v7314 = vunpack.c.l.b16 %v6304
    %v7315 = vunpack.c.h.b16 %v6304
    %v7316 = vunpack.c.l.b16 %v6305
    %v7317 = vunpack.c.h.b16 %v6305
    %v7318 = vunpack.c.l.b16 %v6306
    %v7319 = vunpack.c.h.b16 %v6306
    %v7320 = vunpack.c.l.b16 %v6307
    %v7321 = vunpack.c.h.b16 %v6307
    %v7322 = vunpack.c.l.b16 %v6308
    %v7323 = vunpack.c.h.b16 %v6308
    %v7324 = vunpack.c.l.b16 %v6309
    %v7325 = vunpack.c.h.b16 %v6309
    %v7326 = vunpack.c.l.b16 %v6310
    %v7327 = vunpack.c.h.b16 %v6310
    %v7328 = vunpack.c.l.b16 %v6311
    %v7329 = vunpack.c.h.b16 %v6311
    %v7330 = vunpack.c.l.b16 %v6312
    %v7331 = vunpack.c.h.b16 %v6312
    %v7332 = vunpack.c.l.b16 %v6313
    %v7333 = vunpack.c.h.b16 %v6313
    %v7334 = vunpack.c.l.b16 %v6314
    %v7335 = vunpack.c.h.b16 %v6314
    %v7336 = vunpack.c.l.b16 %v6315
    %v7337 = vunpack.c.h.b16 %v6315
    %v7338 = vunpack.c.l.b16 %v6316
    %v7339 = vunpack.c.h.b16 %v6316
    %v7340 = vunpack.c.l.b16 %v6317
    %v7341 = vunpack.c.h.b16 %v6317
    %v7342 = vunpack.c.l.b16 %v6318
    %v7343 = vunpack.c.h.b16 %v6318
    %v7344 = vunpack.c.l.b16 %v6319
    %v7345 = vunpack.c.h.b16 %v6319
    %v7346 = vunpack.c.l.b16 %v6320
    %v7347 = vunpack.c.h.b16 %v6320
    %v7348 = vunpack.c.l.b16 %v6321
    %v7349 = vunpack.c.h.b16 %v6321
    %v7350 = vunpack.c.l.b16 %v6322
    %v7351 = vunpack.c.h.b16 %v6322
    %v7352 = vunpack.c.l.b16 %v6323
    %v7353 = vunpack.c.h.b16 %v6323
    %v7354 = vunpack.c.l.b16 %v6324
    %v7355 = vunpack.c.h.b16 %v6324
    %v7356 = vunpack.c.l.b16 %v6325
    %v7357 = vunpack.c.h.b16 %v6325
    %v7358 = vunpack.c.l.b16 %v6326
    %v7359 = vunpack.c.h.b16 %v6326
    %v7360 = vunpack.c.l.b16 %v6327
    %v7361 = vunpack.c.h.b16 %v6327
    %v7362 = vunpack.c.l.b16 %v6328
    %v7363 = vunpack.c.h.b16 %v6328
    %v7364 = vunpack.c.l.b16 %v6329
    %v7365 = vunpack.c.h.b16 %v6329
    %v7366 = vunpack.c.l.b16 %v6330
    %v7367 = vunpack.c.h.b16 %v6330
    %v7368 = vunpack.c.l.b16 %v6331
    %v7369 = vunpack.c.h.b16 %v6331
    %v7370 = vunpack.c.l.b16 %v6332
    %v7371 = vunpack.c.h.b16 %v6332
    %v7372 = vunpack.c.l.b16 %v6333
    %v7373 = vunpack.c.h.b16 %v6333
    %v7374 = vunpack.c.l.b16 %v6334
    %v7375 = vunpack.c.h.b16 %v6334
    %v7376 = vunpack.c.l.b16 %v6335
    %v7377 = vunpack.c.h.b16 %v6335
    %v7378 = vunpack.c.l.b16 %v6336
    %v7379 = vunpack.c.h.b16 %v6336
    %v7380 = vunpack.c.l.b16 %v6337
    %v7381 = vunpack.c.h.b16 %v6337
    %v7382 = vunpack.c.l.b16 %v6338
    %v7383 = vunpack.c.h.b16 %v6338
    %v7384 = vunpack.c.l.b16 %v6339
    %v7385 = vunpack.c.h.b16 %v6339
    %v7386 = vunpack.c.l.b16 %v6340
    %v7387 = vunpack.c.h.b16 %v6340
    %v7388 = vunpack.c.l.b16 %v6341
    %v7389 = vunpack.c.h.b16 %v6341
    %v7390 = vunpack.c.l.b16 %v6342
    %v7391 = vunpack.c.h.b16 %v6342
    %v7392 = vunpack.c.l.b16 %v6343
    %v7393 = vunpack.c.h.b16 %v6343
    %v7394 = vunpack.c.l.b16 %v6344
    %v7395 = vunpack.c.h.b16 %v6344
    %v7396 = vunpack.c.l.b16 %v6345
    %v7397 = vunpack.c.h.b16 %v6345
    %v7398 = vunpack.c.l.b16 %v6346
    %v7399 = vunpack.c.h.b16 %v6346
    %v7400 = vunpack.c.l.b16 %v6347
    %v7401 = vunpack.c.h.b16 %v6347
    %v7402 = vunpack.c.l.b16 %v6348
    %v7403 = vunpack.c.h.b16 %v6348
    %v7404 = vunpack.c.l.b16 %v6349
    %v7405 = vunpack.c.h.b16 %v6349
    %v7406 = vunpack.c.l.b16 %v6350
    %v7407 = vunpack.c.h.b16 %v6350
    %v7408 = vunpack.c.l.b16 %v6351
    %v7409 = vunpack.c.h.b16 %v6351
    %v7410 = vunpack.c.l.b16 %v6352
    %v7411 = vunpack.c.h.b16 %v6352
    %v7412 = vunpack.c.l.b16 %v6353
    %v7413 = vunpack.c.h.b16 %v6353
    %v7414 = vunpack.c.l.b16 %v6354
    %v7415 = vunpack.c.h.b16 %v6354
    %v7416 = vunpack.c.l.b16 %v6355
    %v7417 = vunpack.c.h.b16 %v6355
    %v7418 = vunpack.c.l.b16 %v6356
    %v7419 = vunpack.c.h.b16 %v6356
    %v7420 = vunpack.c.l.b16 %v6357
    %v7421 = vunpack.c.h.b16 %v6357
    %v7422 = vunpack.c.l.b16 %v6358
    %v7423 = vunpack.c.h.b16 %v6358
    %v7424 = vunpack.c.l.b16 %v6359
    %v7425 = vunpack.c.h.b16 %v6359
    %v7426 = vunpack.c.l.b16 %v6360
    %v7427 = vunpack.c.h.b16 %v6360
    %v7428 = vunpack.c.l.b16 %v6361
    %v7429 = vunpack.c.h.b16 %v6361
    %v7430 = vunpack.c.l.b16 %v6362
    %v7431 = vunpack.c.h.b16 %v6362
    %v7432 = vunpack.c.l.b16 %v6363
    %v7433 = vunpack.c.h.b16 %v6363
    %v7434 = vunpack.c.l.b16 %v6364
    %v7435 = vunpack.c.h.b16 %v6364
    %v7436 = vunpack.c.l.b16 %v6365
    %v7437 = vunpack.c.h.b16 %v6365
    %v7438 = vunpack.c.l.b16 %v6366
    %v7439 = vunpack.c.h.b16 %v6366
    %v7440 = vunpack.c.l.b16 %v6367
    %v7441 = vunpack.c.h.b16 %v6367
    %v7442 = vunpack.c.l.b16 %v6368
    %v7443 = vunpack.c.h.b16 %v6368
    %v7444 = vunpack.c.l.b16 %v6369
    %v7445 = vunpack.c.h.b16 %v6369
    %v7446 = vunpack.c.l.b16 %v6370
    %v7447 = vunpack.c.h.b16 %v6370
    %v7448 = vunpack.c.l.b16 %v6371
    %v7449 = vunpack.c.h.b16 %v6371
    %v7450 = vunpack.c.l.b16 %v6372
    %v7451 = vunpack.c.h.b16 %v6372
    %v7452 = vunpack.c.l.b16 %v6373
    %v7453 = vunpack.c.h.b16 %v6373
    %v7454 = vunpack.c.l.b16 %v6374
    %v7455 = vunpack.c.h.b16 %v6374
    %v7456 = vunpack.c.l.b16 %v6375
    %v7457 = vunpack.c.h.b16 %v6375
    %v7458 = vunpack.c.l.b16 %v6376
    %v7459 = vunpack.c.h.b16 %v6376
    %v7460 = vunpack.c.l.b16 %v6377
    %v7461 = vunpack.c.h.b16 %v6377
    %v7462 = vunpack.c.l.b16 %v6378
    %v7463 = vunpack.c.h.b16 %v6378
    %v7464 = vunpack.c.l.b16 %v6379
    %v7465 = vunpack.c.h.b16 %v6379
    %v7466 = vunpack.c.l.b16 %v6380
    %v7467 = vunpack.c.h.b16 %v6380
    %v7468 = vunpack.c.l.b16 %v6381
    %v7469 = vunpack.c.h.b16 %v6381
    %v7470 = vunpack.c.l.b16 %v6382
    %v7471 = vunpack.c.h.b16 %v6382
    %v7472 = vunpack.c.l.b16 %v6383
    %v7473 = vunpack.c.h.b16 %v6383
    %v7474 = vunpack.c.l.b16 %v6384
    %v7475 = vunpack.c.h.b16 %v6384
    %v7476 = vunpack.c.l.b16 %v6385
    %v7477 = vunpack.c.h.b16 %v6385
    %v7478 = vunpack.c.l.b16 %v6386
    %v7479 = vunpack.c.h.b16 %v6386
    %v7480 = vunpack.c.l.b16 %v6387
    %v7481 = vunpack.c.h.b16 %v6387
    %v7482 = vunpack.c.l.b16 %v6388
    %v7483 = vunpack.c.h.b16 %v6388
    %v7484 = vunpack.c.l.b16 %v6389
    %v7485 = vunpack.c.h.b16 %v6389
    %v7486 = vunpack.c.l.b16 %v6390
    %v7487 = vunpack.c.h.b16 %v6390
    %v7488 = vunpack.c.l.b16 %v6391
    %v7489 = vunpack.c.h.b16 %v6391
    %v7490 = vunpack.c.l.b16 %v6392
    %v7491 = vunpack.c.h.b16 %v6392
    %v7492 = vunpack.c.l.b16 %v6393
    %v7493 = vunpack.c.h.b16 %v6393
    %v7494 = vunpack.c.l.b16 %v6394
    %v7495 = vunpack.c.h.b16 %v6394
    %v7496 = vunpack.c.l.b16 %v6395
    %v7497 = vunpack.c.h.b16 %v6395
    %v7498 = vunpack.c.l.b16 %v6396
    %v7499 = vunpack.c.h.b16 %v6396
    %v7500 = vunpack.c.l.b16 %v6397
    %v7501 = vunpack.c.h.b16 %v6397
    %v7502 = vunpack.c.l.b16 %v6398
    %v7503 = vunpack.c.h.b16 %v6398
    %v7504 = vunpack.c.l.b16 %v6399
    %v7505 = vunpack.c.h.b16 %v6399
    %v7506 = vunpack.c.l.b16 %v6400
    %v7507 = vunpack.c.h.b16 %v6400
    %v7508 = vunpack.c.l.b16 %v6401
    %v7509 = vunpack.c.h.b16 %v6401
    %v7510 = vunpack.c.l.b16 %v6402
    %v7511 = vunpack.c.h.b16 %v6402
    %v7512 = vunpack.c.l.b16 %v6403
    %v7513 = vunpack.c.h.b16 %v6403
    %v7514 = vunpack.c.l.b16 %v6404
    %v7515 = vunpack.c.h.b16 %v6404
    %v7516 = vunpack.c.l.b16 %v6405
    %v7517 = vunpack.c.h.b16 %v6405
    %v7518 = vunpack.c.l.b16 %v6406
    %v7519 = vunpack.c.h.b16 %v6406
    %v7520 = vunpack.c.l.b16 %v6407
    %v7521 = vunpack.c.h.b16 %v6407
    %v7522 = vunpack.c.l.b16 %v6408
    %v7523 = vunpack.c.h.b16 %v6408
    %v7524 = vunpack.c.l.b16 %v6409
    %v7525 = vunpack.c.h.b16 %v6409
    %v7526 = vunpack.c.l.b16 %v6410
    %v7527 = vunpack.c.h.b16 %v6410
    %v7528 = vunpack.c.l.b16 %v6411
    %v7529 = vunpack.c.h.b16 %v6411
    %v7530 = vunpack.c.l.b16 %v6412
    %v7531 = vunpack.c.h.b16 %v6412
    %v7532 = vunpack.c.l.b16 %v6413
    %v7533 = vunpack.c.h.b16 %v6413
    %v7534 = vunpack.c.l.b16 %v6414
    %v7535 = vunpack.c.h.b16 %v6414
    %v7536 = vunpack.c.l.b16 %v6415
    %v7537 = vunpack.c.h.b16 %v6415
    %v7538 = vunpack.c.l.b16 %v6416
    %v7539 = vunpack.c.h.b16 %v6416
    %v7540 = vunpack.c.l.b16 %v6417
    %v7541 = vunpack.c.h.b16 %v6417
    %v7542 = vunpack.c.l.b16 %v6418
    %v7543 = vunpack.c.h.b16 %v6418
    %v7544 = vunpack.c.l.b16 %v6419
    %v7545 = vunpack.c.h.b16 %v6419
    %v7546 = vunpack.c.l.b16 %v6420
    %v7547 = vunpack.c.h.b16 %v6420
    %v7548 = vunpack.c.l.b16 %v6421
    %v7549 = vunpack.c.h.b16 %v6421
    %v7550 = vunpack.c.l.b16 %v6422
    %v7551 = vunpack.c.h.b16 %v6422
    %v7552 = vunpack.c.l.b16 %v6423
    %v7553 = vunpack.c.h.b16 %v6423
    %v7554 = vunpack.c.l.b16 %v6424
    %v7555 = vunpack.c.h.b16 %v6424
    %v7556 = vunpack.c.l.b16 %v6425
    %v7557 = vunpack.c.h.b16 %v6425
    %v7558 = vunpack.c.l.b16 %v6426
    %v7559 = vunpack.c.h.b16 %v6426
    %v7560 = vunpack.c.l.b16 %v6427
    %v7561 = vunpack.c.h.b16 %v6427
    %v7562 = vunpack.c.l.b16 %v6428
    %v7563 = vunpack.c.h.b16 %v6428
    %v7564 = vunpack.c.l.b16 %v6429
    %v7565 = vunpack.c.h.b16 %v6429
    %v7566 = vunpack.c.l.b16 %v6430
    %v7567 = vunpack.c.h.b16 %v6430
    %v7568 = vunpack.c.l.b16 %v6431
    %v7569 = vunpack.c.h.b16 %v6431
    %v7570 = vunpack.c.l.b16 %v6432
    %v7571 = vunpack.c.h.b16 %v6432
    %v7572 = vunpack.c.l.b16 %v6433
    %v7573 = vunpack.c.h.b16 %v6433
    %v7574 = vunpack.c.l.b16 %v6434
    %v7575 = vunpack.c.h.b16 %v6434
    %v7576 = vunpack.c.l.b16 %v6435
    %v7577 = vunpack.c.h.b16 %v6435
    %v7578 = vunpack.c.l.b16 %v6436
    %v7579 = vunpack.c.h.b16 %v6436
    %v7580 = vunpack.c.l.b16 %v6437
    %v7581 = vunpack.c.h.b16 %v6437
    %v7582 = vunpack.c.l.b16 %v6438
    %v7583 = vunpack.c.h.b16 %v6438
    %v7584 = vunpack.c.l.b16 %v6439
    %v7585 = vunpack.c.h.b16 %v6439
    %v7586 = vunpack.c.l.b16 %v6440
    %v7587 = vunpack.c.h.b16 %v6440
    %v7588 = vunpack.c.l.b16 %v6441
    %v7589 = vunpack.c.h.b16 %v6441
    %v7590 = vunpack.c.l.b16 %v6442
    %v7591 = vunpack.c.h.b16 %v6442
    %v7592 = vunpack.c.l.b16 %v6443
    %v7593 = vunpack.c.h.b16 %v6443
    %v7594 = vunpack.c.l.b16 %v6444
    %v7595 = vunpack.c.h.b16 %v6444
    %v7596 = vunpack.c.l.b16 %v6445
    %v7597 = vunpack.c.h.b16 %v6445
    %v7598 = vunpack.c.l.b16 %v6446
    %v7599 = vunpack.c.h.b16 %v6446
    %v7600 = vunpack.c.l.b16 %v6447
    %v7601 = vunpack.c.h.b16 %v6447
    %v7602 = vunpack.c.l.b16 %v6448
    %v7603 = vunpack.c.h.b16 %v6448
    %v7604 = vunpack.c.l.b16 %v6449
    %v7605 = vunpack.c.h.b16 %v6449
    %v7606 = vunpack.c.l.b16 %v6450
    %v7607 = vunpack.c.h.b16 %v6450
    %v7608 = vunpack.c.l.b16 %v6451
    %v7609 = vunpack.c.h.b16 %v6451
    %v7610 = vunpack.c.l.b16 %v6452
    %v7611 = vunpack.c.h.b16 %v6452
    %v7612 = vunpack.c.l.b16 %v6453
    %v7613 = vunpack.c.h.b16 %v6453
    %v7614 = vunpack.c.l.b16 %v6454
    %v7615 = vunpack.c.h.b16 %v6454
    %v7616 = vunpack.c.l.b16 %v6455
    %v7617 = vunpack.c.h.b16 %v6455
    %v7618 = vunpack.c.l.b16 %v6456
    %v7619 = vunpack.c.h.b16 %v6456
    %v7620 = vunpack.c.l.b16 %v6457
    %v7621 = vunpack.c.h.b16 %v6457
    %v7622 = vunpack.c.l.b16 %v6458
    %v7623 = vunpack.c.h.b16 %v6458
    %v7624 = vunpack.c.l.b16 %v6459
    %v7625 = vunpack.c.h.b16 %v6459
    %v7626 = vunpack.c.l.b16 %v6460
    %v7627 = vunpack.c.h.b16 %v6460
    %v7628 = vunpack.c.l.b16 %v6461
    %v7629 = vunpack.c.h.b16 %v6461
    %v7630 = vunpack.c.l.b16 %v6462
    %v7631 = vunpack.c.h.b16 %v6462
    %v7632 = vunpack.c.l.b16 %v6463
    %v7633 = vunpack.c.h.b16 %v6463
    %v7634 = vunpack.c.l.b16 %v6464
    %v7635 = vunpack.c.h.b16 %v6464
    %v7636 = vunpack.c.l.b16 %v6465
    %v7637 = vunpack.c.h.b16 %v6465
    %v7638 = vunpack.c.l.b16 %v6466
    %v7639 = vunpack.c.h.b16 %v6466
    %v7640 = vunpack.c.l.b16 %v6467
    %v7641 = vunpack.c.h.b16 %v6467
    %v7642 = vpack.c.b16 %v6878, %v6874
    %v7643 = vpack.c.b16 %v6879, %v6875
    %v7644 = vpack.c.b16 %v6880, %v6876
    %v7645 = vpack.c.b16 %v6881, %v6877
    %v7646 = vpack.c.b16 %v6886, %v6882
    %v7647 = vpack.c.b16 %v6887, %v6883
    %v7648 = vpack.c.b16 %v6888, %v6884
    %v7649 = vpack.c.b16 %v6889, %v6885
    %v7650 = vpack.c.b16 %v6894, %v6890
    %v7651 = vpack.c.b16 %v6895, %v6891
    %v7652 = vpack.c.b16 %v6896, %v6892
    %v7653 = vpack.c.b16 %v6897, %v6893
    %v7654 = vpack.c.b16 %v6902, %v6898
    %v7655 = vpack.c.b16 %v6903, %v6899
    %v7656 = vpack.c.b16 %v6904, %v6900
    %v7657 = vpack.c.b16 %v6905, %v6901
    %v7658 = vpack.c.b16 %v6910, %v6906
    %v7659 = vpack.c.b16 %v6911, %v6907
    %v7660 = vpack.c.b16 %v6912, %v6908
    %v7661 = vpack.c.b16 %v6913, %v6909
    %v7662 = vpack.c.b16 %v6918, %v6914
    %v7663 = vpack.c.b16 %v6919, %v6915
    %v7664 = vpack.c.b16 %v6920, %v6916
    %v7665 = vpack.c.b16 %v6921, %v6917
    %v7666 = vpack.c.b16 %v6926, %v6922
    %v7667 = vpack.c.b16 %v6927, %v6923
    %v7668 = vpack.c.b16 %v6928, %v6924
    %v7669 = vpack.c.b16 %v6929, %v6925
    %v7670 = vpack.c.b16 %v6934, %v6930
    %v7671 = vpack.c.b16 %v6935, %v6931
    %v7672 = vpack.c.b16 %v6936, %v6932
    %v7673 = vpack.c.b16 %v6937, %v6933
    %v7674 = vpack.c.b16 %v6942, %v6938
    %v7675 = vpack.c.b16 %v6943, %v6939
    %v7676 = vpack.c.b16 %v6944, %v6940
    %v7677 = vpack.c.b16 %v6945, %v6941
    %v7678 = vpack.c.b16 %v6950, %v6946
    %v7679 = vpack.c.b16 %v6951, %v6947
    %v7680 = vpack.c.b16 %v6952, %v6948
    %v7681 = vpack.c.b16 %v6953, %v6949
    %v7682 = vpack.c.b16 %v6958, %v6954
    %v7683 = vpack.c.b16 %v6959, %v6955
    %v7684 = vpack.c.b16 %v6960, %v6956
    %v7685 = vpack.c.b16 %v6961, %v6957
    %v7686 = vpack.c.b16 %v6966, %v6962
    %v7687 = vpack.c.b16 %v6967, %v6963
    %v7688 = vpack.c.b16 %v6968, %v6964
    %v7689 = vpack.c.b16 %v6969, %v6965
    %v7690 = vpack.c.b16 %v6974, %v6970
    %v7691 = vpack.c.b16 %v6975, %v6971
    %v7692 = vpack.c.b16 %v6976, %v6972
    %v7693 = vpack.c.b16 %v6977, %v6973
    %v7694 = vpack.c.b16 %v6982, %v6978
    %v7695 = vpack.c.b16 %v6983, %v6979
    %v7696 = vpack.c.b16 %v6984, %v6980
    %v7697 = vpack.c.b16 %v6985, %v6981
    %v7698 = vpack.c.b16 %v6990, %v6986
    %v7699 = vpack.c.b16 %v6991, %v6987
    %v7700 = vpack.c.b16 %v6992, %v6988
    %v7701 = vpack.c.b16 %v6993, %v6989
    %v7702 = vpack.c.b16 %v6998, %v6994
    %v7703 = vpack.c.b16 %v6999, %v6995
    %v7704 = vpack.c.b16 %v7000, %v6996
    %v7705 = vpack.c.b16 %v7001, %v6997
    %v7706 = vpack.c.b16 %v7006, %v7002
    %v7707 = vpack.c.b16 %v7007, %v7003
    %v7708 = vpack.c.b16 %v7008, %v7004
    %v7709 = vpack.c.b16 %v7009, %v7005
    %v7710 = vpack.c.b16 %v7014, %v7010
    %v7711 = vpack.c.b16 %v7015, %v7011
    %v7712 = vpack.c.b16 %v7016, %v7012
    %v7713 = vpack.c.b16 %v7017, %v7013
    %v7714 = vpack.c.b16 %v7022, %v7018
    %v7715 = vpack.c.b16 %v7023, %v7019
    %v7716 = vpack.c.b16 %v7024, %v7020
    %v7717 = vpack.c.b16 %v7025, %v7021
    %v7718 = vpack.c.b16 %v7030, %v7026
    %v7719 = vpack.c.b16 %v7031, %v7027
    %v7720 = vpack.c.b16 %v7032, %v7028
    %v7721 = vpack.c.b16 %v7033, %v7029
    %v7722 = vpack.c.b16 %v7038, %v7034
    %v7723 = vpack.c.b16 %v7039, %v7035
    %v7724 = vpack.c.b16 %v7040, %v7036
    %v7725 = vpack.c.b16 %v7041, %v7037
    %v7726 = vpack.c.b16 %v7046, %v7042
    %v7727 = vpack.c.b16 %v7047, %v7043
    %v7728 = vpack.c.b16 %v7048, %v7044
    %v7729 = vpack.c.b16 %v7049, %v7045
    %v7730 = vpack.c.b16 %v7054, %v7050
    %v7731 = vpack.c.b16 %v7055, %v7051
    %v7732 = vpack.c.b16 %v7056, %v7052
    %v7733 = vpack.c.b16 %v7057, %v7053
    %v7734 = vpack.c.b16 %v7062, %v7058
    %v7735 = vpack.c.b16 %v7063, %v7059
    %v7736 = vpack.c.b16 %v7064, %v7060
    %v7737 = vpack.c.b16 %v7065, %v7061
    %v7738 = vpack.c.b16 %v7070, %v7066
    %v7739 = vpack.c.b16 %v7071, %v7067
    %v7740 = vpack.c.b16 %v7072, %v7068
    %v7741 = vpack.c.b16 %v7073, %v7069
    %v7742 = vpack.c.b16 %v7078, %v7074
    %v7743 = vpack.c.b16 %v7079, %v7075
    %v7744 = vpack.c.b16 %v7080, %v7076
    %v7745 = vpack.c.b16 %v7081, %v7077
    %v7746 = vpack.c.b16 %v7086, %v7082
    %v7747 = vpack.c.b16 %v7087, %v7083
    %v7748 = vpack.c.b16 %v7088, %v7084
    %v7749 = vpack.c.b16 %v7089, %v7085
    %v7750 = vpack.c.b16 %v7094, %v7090
    %v7751 = vpack.c.b16 %v7095, %v7091
    %v7752 = vpack.c.b16 %v7096, %v7092
    %v7753 = vpack.c.b16 %v7097, %v7093
    %v7754 = vpack.c.b16 %v7102, %v7098
    %v7755 = vpack.c.b16 %v7103, %v7099
    %v7756 = vpack.c.b16 %v7104, %v7100
    %v7757 = vpack.c.b16 %v7105, %v7101
    %v7758 = vpack.c.b16 %v7110, %v7106
    %v7759 = vpack.c.b16 %v7111, %v7107
    %v7760 = vpack.c.b16 %v7112, %v7108
    %v7761 = vpack.c.b16 %v7113, %v7109
    %v7762 = vpack.c.b16 %v7118, %v7114
    %v7763 = vpack.c.b16 %v7119, %v7115
    %v7764 = vpack.c.b16 %v7120, %v7116
    %v7765 = vpack.c.b16 %v7121, %v7117
    %v7766 = vpack.c.b16 %v7126, %v7122
    %v7767 = vpack.c.b16 %v7127, %v7123
    %v7768 = vpack.c.b16 %v7128, %v7124
    %v7769 = vpack.c.b16 %v7129, %v7125
    %v7770 = vpack.c.b16 %v7134, %v7130
    %v7771 = vpack.c.b16 %v7135, %v7131
    %v7772 = vpack.c.b16 %v7136, %v7132
    %v7773 = vpack.c.b16 %v7137, %v7133
    %v7774 = vpack.c.b16 %v7142, %v7138
    %v7775 = vpack.c.b16 %v7143, %v7139
    %v7776 = vpack.c.b16 %v7144, %v7140
    %v7777 = vpack.c.b16 %v7145, %v7141
    %v7778 = vpack.c.b16 %v7150, %v7146
    %v7779 = vpack.c.b16 %v7151, %v7147
    %v7780 = vpack.c.b16 %v7152, %v7148
    %v7781 = vpack.c.b16 %v7153, %v7149
    %v7782 = vpack.c.b16 %v7158, %v7154
    %v7783 = vpack.c.b16 %v7159, %v7155
    %v7784 = vpack.c.b16 %v7160, %v7156
    %v7785 = vpack.c.b16 %v7161, %v7157
    %v7786 = vpack.c.b16 %v7166, %v7162
    %v7787 = vpack.c.b16 %v7167, %v7163
    %v7788 = vpack.c.b16 %v7168, %v7164
    %v7789 = vpack.c.b16 %v7169, %v7165
    %v7790 = vpack.c.b16 %v7174, %v7170
    %v7791 = vpack.c.b16 %v7175, %v7171
    %v7792 = vpack.c.b16 %v7176, %v7172
    %v7793 = vpack.c.b16 %v7177, %v7173
    %v7794 = vpack.c.b16 %v7182, %v7178
    %v7795 = vpack.c.b16 %v7183, %v7179
    %v7796 = vpack.c.b16 %v7184, %v7180
    %v7797 = vpack.c.b16 %v7185, %v7181
    %v7798 = vpack.c.b16 %v7190, %v7186
    %v7799 = vpack.c.b16 %v7191, %v7187
    %v7800 = vpack.c.b16 %v7192, %v7188
    %v7801 = vpack.c.b16 %v7193, %v7189
    %v7802 = vpack.c.b16 %v7198, %v7194
    %v7803 = vpack.c.b16 %v7199, %v7195
    %v7804 = vpack.c.b16 %v7200, %v7196
    %v7805 = vpack.c.b16 %v7201, %v7197
    %v7806 = vpack.c.b16 %v7206, %v7202
    %v7807 = vpack.c.b16 %v7207, %v7203
    %v7808 = vpack.c.b16 %v7208, %v7204
    %v7809 = vpack.c.b16 %v7209, %v7205
    %v7810 = vpack.c.b16 %v7214, %v7210
    %v7811 = vpack.c.b16 %v7215, %v7211
    %v7812 = vpack.c.b16 %v7216, %v7212
    %v7813 = vpack.c.b16 %v7217, %v7213
    %v7814 = vpack.c.b16 %v7222, %v7218
    %v7815 = vpack.c.b16 %v7223, %v7219
    %v7816 = vpack.c.b16 %v7224, %v7220
    %v7817 = vpack.c.b16 %v7225, %v7221
    %v7818 = vpack.c.b16 %v7230, %v7226
    %v7819 = vpack.c.b16 %v7231, %v7227
    %v7820 = vpack.c.b16 %v7232, %v7228
    %v7821 = vpack.c.b16 %v7233, %v7229
    %v7822 = vpack.c.b16 %v7238, %v7234
    %v7823 = vpack.c.b16 %v7239, %v7235
    %v7824 = vpack.c.b16 %v7240, %v7236
    %v7825 = vpack.c.b16 %v7241, %v7237
    %v7826 = vpack.c.b16 %v7246, %v7242
    %v7827 = vpack.c.b16 %v7247, %v7243
    %v7828 = vpack.c.b16 %v7248, %v7244
    %v7829 = vpack.c.b16 %v7249, %v7245
    %v7830 = vpack.c.b16 %v7254, %v7250
    %v7831 = vpack.c.b16 %v7255, %v7251
    %v7832 = vpack.c.b16 %v7256, %v7252
    %v7833 = vpack.c.b16 %v7257, %v7253
    %v7834 = vpack.c.b16 %v7262, %v7258
    %v7835 = vpack.c.b16 %v7263, %v7259
    %v7836 = vpack.c.b16 %v7264, %v7260
    %v7837 = vpack.c.b16 %v7265, %v7261
    %v7838 = vpack.c.b16 %v7270, %v7266
    %v7839 = vpack.c.b16 %v7271, %v7267
    %v7840 = vpack.c.b16 %v7272, %v7268
    %v7841 = vpack.c.b16 %v7273, %v7269
    %v7842 = vpack.c.b16 %v7278, %v7274
    %v7843 = vpack.c.b16 %v7279, %v7275
    %v7844 = vpack.c.b16 %v7280, %v7276
    %v7845 = vpack.c.b16 %v7281, %v7277
    %v7846 = vpack.c.b16 %v7286, %v7282
    %v7847 = vpack.c.b16 %v7287, %v7283
    %v7848 = vpack.c.b16 %v7288, %v7284
    %v7849 = vpack.c.b16 %v7289, %v7285
    %v7850 = vpack.c.b16 %v7294, %v7290
    %v7851 = vpack.c.b16 %v7295, %v7291
    %v7852 = vpack.c.b16 %v7296, %v7292
    %v7853 = vpack.c.b16 %v7297, %v7293
    %v7854 = vpack.c.b16 %v7302, %v7298
    %v7855 = vpack.c.b16 %v7303, %v7299
    %v7856 = vpack.c.b16 %v7304, %v7300
    %v7857 = vpack.c.b16 %v7305, %v7301
    %v7858 = vpack.c.b16 %v7310, %v7306
    %v7859 = vpack.c.b16 %v7311, %v7307
    %v7860 = vpack.c.b16 %v7312, %v7308
    %v7861 = vpack.c.b16 %v7313, %v7309
    %v7862 = vpack.c.b16 %v7318, %v7314
    %v7863 = vpack.c.b16 %v7319, %v7315
    %v7864 = vpack.c.b16 %v7320, %v7316
    %v7865 = vpack.c.b16 %v7321, %v7317
    %v7866 = vpack.c.b16 %v7326, %v7322
    %v7867 = vpack.c.b16 %v7327, %v7323
    %v7868 = vpack.c.b16 %v7328, %v7324
    %v7869 = vpack.c.b16 %v7329, %v7325
    %v7870 = vpack.c.b16 %v7334, %v7330
    %v7871 = vpack.c.b16 %v7335, %v7331
    %v7872 = vpack.c.b16 %v7336, %v7332
    %v7873 = vpack.c.b16 %v7337, %v7333
    %v7874 = vpack.c.b16 %v7342, %v7338
    %v7875 = vpack.c.b16 %v7343, %v7339
    %v7876 = vpack.c.b16 %v7344, %v7340
    %v7877 = vpack.c.b16 %v7345, %v7341
    %v7878 = vpack.c.b16 %v7350, %v7346
    %v7879 = vpack.c.b16 %v7351, %v7347
    %v7880 = vpack.c.b16 %v7352, %v7348
    %v7881 = vpack.c.b16 %v7353, %v7349
    %v7882 = vpack.c.b16 %v7358, %v7354
    %v7883 = vpack.c.b16 %v7359, %v7355
    %v7884 = vpack.c.b16 %v7360, %v7356
    %v7885 = vpack.c.b16 %v7361, %v7357
    %v7886 = vpack.c.b16 %v7366, %v7362
    %v7887 = vpack.c.b16 %v7367, %v7363
    %v7888 = vpack.c.b16 %v7368, %v7364
    %v7889 = vpack.c.b16 %v7369, %v7365
    %v7890 = vpack.c.b16 %v7374, %v7370
    %v7891 = vpack.c.b16 %v7375, %v7371
    %v7892 = vpack.c.b16 %v7376, %v7372
    %v7893 = vpack.c.b16 %v7377, %v7373
    %v7894 = vpack.c.b16 %v7382, %v7378
    %v7895 = vpack.c.b16 %v7383, %v7379
    %v7896 = vpack.c.b16 %v7384, %v7380
    %v7897 = vpack.c.b16 %v7385, %v7381
    %v7898 = vpack.c.b16 %v7390, %v7386
    %v7899 = vpack.c.b16 %v7391, %v7387
    %v7900 = vpack.c.b16 %v7392, %v7388
    %v7901 = vpack.c.b16 %v7393, %v7389
    %v7902 = vpack.c.b16 %v7398, %v7394
    %v7903 = vpack.c.b16 %v7399, %v7395
    %v7904 = vpack.c.b16 %v7400, %v7396
    %v7905 = vpack.c.b16 %v7401, %v7397
    %v7906 = vpack.c.b16 %v7406, %v7402
    %v7907 = vpack.c.b16 %v7407, %v7403
    %v7908 = vpack.c.b16 %v7408, %v7404
    %v7909 = vpack.c.b16 %v7409, %v7405
    %v7910 = vpack.c.b16 %v7414, %v7410
    %v7911 = vpack.c.b16 %v7415, %v7411
    %v7912 = vpack.c.b16 %v7416, %v7412
    %v7913 = vpack.c.b16 %v7417, %v7413
    %v7914 = vpack.c.b16 %v7422, %v7418
    %v7915 = vpack.c.b16 %v7423, %v7419
    %v7916 = vpack.c.b16 %v7424, %v7420
    %v7917 = vpack.c.b16 %v7425, %v7421
    %v7918 = vpack.c.b16 %v7430, %v7426
    %v7919 = vpack.c.b16 %v7431, %v7427
    %v7920 = vpack.c.b16 %v7432, %v7428
    %v7921 = vpack.c.b16 %v7433, %v7429
    %v7922 = vpack.c.b16 %v7438, %v7434
    %v7923 = vpack.c.b16 %v7439, %v7435
    %v7924 = vpack.c.b16 %v7440, %v7436
    %v7925 = vpack.c.b16 %v7441, %v7437
    %v7926 = vpack.c.b16 %v7446, %v7442
    %v7927 = vpack.c.b16 %v7447, %v7443
    %v7928 = vpack.c.b16 %v7448, %v7444
    %v7929 = vpack.c.b16 %v7449, %v7445
    %v7930 = vpack.c.b16 %v7454, %v7450
    %v7931 = vpack.c.b16 %v7455, %v7451
    %v7932 = vpack.c.b16 %v7456, %v7452
    %v7933 = vpack.c.b16 %v7457, %v7453
    %v7934 = vpack.c.b16 %v7462, %v7458
    %v7935 = vpack.c.b16 %v7463, %v7459
    %v7936 = vpack.c.b16 %v7464, %v7460
    %v7937 = vpack.c.b16 %v7465, %v7461
    %v7938 = vpack.c.b16 %v7470, %v7466
    %v7939 = vpack.c.b16 %v7471, %v7467
    %v7940 = vpack.c.b16 %v7472, %v7468
    %v7941 = vpack.c.b16 %v7473, %v7469
    %v7942 = vpack.c.b16 %v7478, %v7474
    %v7943 = vpack.c.b16 %v7479, %v7475
    %v7944 = vpack.c.b16 %v7480, %v7476
    %v7945 = vpack.c.b16 %v7481, %v7477
    %v7946 = vpack.c.b16 %v7486, %v7482
    %v7947 = vpack.c.b16 %v7487, %v7483
    %v7948 = vpack.c.b16 %v7488, %v7484
    %v7949 = vpack.c.b16 %v7489, %v7485
    %v7950 = vpack.c.b16 %v7494, %v7490
    %v7951 = vpack.c.b16 %v7495, %v7491
    %v7952 = vpack.c.b16 %v7496, %v7492
    %v7953 = vpack.c.b16 %v7497, %v7493
    %v7954 = vpack.c.b16 %v7502, %v7498
    %v7955 = vpack.c.b16 %v7503, %v7499
    %v7956 = vpack.c.b16 %v7504, %v7500
    %v7957 = vpack.c.b16 %v7505, %v7501
    %v7958 = vpack.c.b16 %v7510, %v7506
    %v7959 = vpack.c.b16 %v7511, %v7507
    %v7960 = vpack.c.b16 %v7512, %v7508
    %v7961 = vpack.c.b16 %v7513, %v7509
    %v7962 = vpack.c.b16 %v7518, %v7514
    %v7963 = vpack.c.b16 %v7519, %v7515
    %v7964 = vpack.c.b16 %v7520, %v7516
    %v7965 = vpack.c.b16 %v7521, %v7517
    %v7966 = vpack.c.b16 %v7526, %v7522
    %v7967 = vpack.c.b16 %v7527, %v7523
    %v7968 = vpack.c.b16 %v7528, %v7524
    %v7969 = vpack.c.b16 %v7529, %v7525
    %v7970 = vpack.c.b16 %v7534, %v7530
    %v7971 = vpack.c.b16 %v7535, %v7531
    %v7972 = vpack.c.b16 %v7536, %v7532
    %v7973 = vpack.c.b16 %v7537, %v7533
    %v7974 = vpack.c.b16 %v7542, %v7538
    %v7975 = vpack.c.b16 %v7543, %v7539
    %v7976 = vpack.c.b16 %v7544, %v7540
    %v7977 = vpack.c.b16 %v7545, %v7541
    %v7978 = vpack.c.b16 %v7550, %v7546
    %v7979 = vpack.c.b16 %v7551, %v7547
    %v7980 = vpack.c.b16 %v7552, %v7548
    %v7981 = vpack.c.b16 %v7553, %v7549
    %v7982 = vpack.c.b16 %v7558, %v7554
    %v7983 = vpack.c.b16 %v7559, %v7555
    %v7984 = vpack.c.b16 %v7560, %v7556
    %v7985 = vpack.c.b16 %v7561, %v7557
    %v7986 = vpack.c.b16 %v7566, %v7562
    %v7987 = vpack.c.b16 %v7567, %v7563
    %v7988 = vpack.c.b16 %v7568, %v7564
    %v7989 = vpack.c.b16 %v7569, %v7565
    %v7990 = vpack.c.b16 %v7574, %v7570
    %v7991 = vpack.c.b16 %v7575, %v7571
    %v7992 = vpack.c.b16 %v7576, %v7572
    %v7993 = vpack.c.b16 %v7577, %v7573
    %v7994 = vpack.c.b16 %v7582, %v7578
    %v7995 = vpack.c.b16 %v7583, %v7579
    %v7996 = vpack.c.b16 %v7584, %v7580
    %v7997 = vpack.c.b16 %v7585, %v7581
    %v7998 = vpack.c.b16 %v7590, %v7586
    %v7999 = vpack.c.b16 %v7591, %v7587
    %v8000 = vpack.c.b16 %v7592, %v7588
    %v8001 = vpack.c.b16 %v7593, %v7589
    %v8002 = vpack.c.b16 %v7598, %v7594
    %v8003 = vpack.c.b16 %v7599, %v7595
    %v8004 = vpack.c.b16 %v7600, %v7596
    %v8005 = vpack.c.b16 %v7601, %v7597
    %v8006 = vpack.c.b16 %v7606, %v7602
    %v8007 = vpack.c.b16 %v7607, %v7603
    %v8008 = vpack.c.b16 %v7608, %v7604
    %v8009 = vpack.c.b16 %v7609, %v7605
    %v8010 = vpack.c.b16 %v7614, %v7610
    %v8011 = vpack.c.b16 %v7615, %v7611
    %v8012 = vpack.c.b16 %v7616, %v7612
    %v8013 = vpack.c.b16 %v7617, %v7613
    %v8014 = vpack.c.b16 %v7622, %v7618
    %v8015 = vpack.c.b16 %v7623, %v7619
    %v8016 = vpack.c.b16 %v7624, %v7620
    %v8017 = vpack.c.b16 %v7625, %v7621
    %v8018 = vpack.c.b16 %v7630, %v7626
    %v8019 = vpack.c.b16 %v7631, %v7627
    %v8020 = vpack.c.b16 %v7632, %v7628
    %v8021 = vpack.c.b16 %v7633, %v7629
    %v8022 = vpack.c.b16 %v7638, %v7634
    %v8023 = vpack.c.b16 %v7639, %v7635
    %v8024 = vpack.c.b16 %v7640, %v7636
    %v8025 = vpack.c.b16 %v7641, %v7637
    %8410 = vmatprep.subr.bf16.mxu0 %v7671
    %8411 = vmatpush1.bf16.msra.mxu0 %v7670
    %8412 = vmatprep.subr.bf16.mxu0 %v7667
    %8413 = vmatpush1.bf16.msra.mxu0 %v7666
    %8414 = vmatprep.subr.bf16.mxu0 %v7663
    %8415 = vmatpush1.bf16.msra.mxu0 %v7662
    %8416 = vmatprep.subr.bf16.mxu0 %v7659
    %8417 = vmatpush1.bf16.msra.mxu0 %v7658
    %8418 = vmatprep.subr.bf16.mxu0 %v7655
    %8419 = vmatpush1.bf16.msra.mxu0 %v7654
    %8420 = vmatprep.subr.bf16.mxu0 %v7651
    %8421 = vmatpush1.bf16.msra.mxu0 %v7650
    %8422 = vmatprep.subr.bf16.mxu0 %v7647
    %8423 = vmatpush1.bf16.msra.mxu0 %v7646
    %8424 = vmatprep.subr.bf16.mxu0 %v7643
    %8425 = vmatpush1.bf16.msra.mxu0 %v7642
    %8426 = vmatprep.subr.bf16.mxu0 %v7703
    %8427 = vmatpush2.bf16.msra.mxu0 %v7702
    %8428 = vmatprep.subr.bf16.mxu0 %v7699
    %8429 = vmatpush2.bf16.msra.mxu0 %v7698
    %8430 = vmatprep.subr.bf16.mxu0 %v7695
    %8431 = vmatpush2.bf16.msra.mxu0 %v7694
    %8432 = vmatprep.subr.bf16.mxu0 %v7691
    %8433 = vmatpush2.bf16.msra.mxu0 %v7690
    %8434 = vmatprep.subr.bf16.mxu0 %v7687
    %8435 = vmatpush2.bf16.msra.mxu0 %v7686
    %8436 = vmatprep.subr.bf16.mxu0 %v7683
    %8437 = vmatpush2.bf16.msra.mxu0 %v7682
    %8438 = vmatprep.subr.bf16.mxu0 %v7679
    %8439 = vmatpush2.bf16.msra.mxu0 %v7678
    %8440 = vmatprep.subr.bf16.mxu0 %v7675
    %8441 = vmatpush2.bf16.msra.mxu0 %v7674
    %8442 = vmatprep.mubr.bf16.mxu0 %v6073
    %8443 = vmatmul.mubr.bf16.gmra.mxu0 %v6072
    %v8444 = vpop.f32.mrf.mxu0
    %v8445 = vadd.f32 %v6473, %v8444
    %v8446 = vpop.f32.mrf.mxu0
    %v8447 = vadd.f32 %v6477, %v8446
    %v8448 = vpop.f32.mrf.mxu0
    %v8449 = vpop.f32.mrf.mxu0
    %8450 = vdwg.mxu0
    %8451 = vmatprep.subr.bf16.mxu0 %v7735
    %8452 = vmatpush1.bf16.msra.mxu0 %v7734
    %8453 = vmatprep.subr.bf16.mxu0 %v7731
    %8454 = vmatpush1.bf16.msra.mxu0 %v7730
    %8455 = vmatprep.subr.bf16.mxu0 %v7727
    %8456 = vmatpush1.bf16.msra.mxu0 %v7726
    %8457 = vmatprep.subr.bf16.mxu0 %v7723
    %8458 = vmatpush1.bf16.msra.mxu0 %v7722
    %8459 = vmatprep.subr.bf16.mxu0 %v7719
    %8460 = vmatpush1.bf16.msra.mxu0 %v7718
    %8461 = vmatprep.subr.bf16.mxu0 %v7715
    %8462 = vmatpush1.bf16.msra.mxu0 %v7714
    %8463 = vmatprep.subr.bf16.mxu0 %v7711
    %8464 = vmatpush1.bf16.msra.mxu0 %v7710
    %8465 = vmatprep.subr.bf16.mxu0 %v7707
    %8466 = vmatpush1.bf16.msra.mxu0 %v7706
    %8467 = vmatprep.subr.bf16.mxu0 %v7767
    %8468 = vmatpush2.bf16.msra.mxu0 %v7766
    %8469 = vmatprep.subr.bf16.mxu0 %v7763
    %8470 = vmatpush2.bf16.msra.mxu0 %v7762
    %8471 = vmatprep.subr.bf16.mxu0 %v7759
    %8472 = vmatpush2.bf16.msra.mxu0 %v7758
    %8473 = vmatprep.subr.bf16.mxu0 %v7755
    %8474 = vmatpush2.bf16.msra.mxu0 %v7754
    %8475 = vmatprep.subr.bf16.mxu0 %v7751
    %8476 = vmatpush2.bf16.msra.mxu0 %v7750
    %8477 = vmatprep.subr.bf16.mxu0 %v7747
    %8478 = vmatpush2.bf16.msra.mxu0 %v7746
    %8479 = vmatprep.subr.bf16.mxu0 %v7743
    %8480 = vmatpush2.bf16.msra.mxu0 %v7742
    %8481 = vmatprep.subr.bf16.mxu0 %v7739
    %8482 = vmatpush2.bf16.msra.mxu0 %v7738
    %8483 = vmatprep.mubr.bf16.mxu0 %v6075
    %8484 = vmatmul.mubr.bf16.gmra.mxu0 %v6074
    %v8485 = vpop.f32.mrf.mxu0
    %v8486 = vadd.f32 %v8445, %v8485
    %v8487 = vpop.f32.mrf.mxu0
    %v8488 = vadd.f32 %v8447, %v8487
    %v8489 = vpop.f32.mrf.mxu0
    %v8490 = vpop.f32.mrf.mxu0
    %8491 = vdwg.mxu0
    %8492 = vmatprep.subr.bf16.mxu0 %v7799
    %8493 = vmatpush1.bf16.msra.mxu0 %v7798
    %8494 = vmatprep.subr.bf16.mxu0 %v7795
    %8495 = vmatpush1.bf16.msra.mxu0 %v7794
    %8496 = vmatprep.subr.bf16.mxu0 %v7791
    %8497 = vmatpush1.bf16.msra.mxu0 %v7790
    %8498 = vmatprep.subr.bf16.mxu0 %v7787
    %8499 = vmatpush1.bf16.msra.mxu0 %v7786
    %8500 = vmatprep.subr.bf16.mxu0 %v7783
    %8501 = vmatpush1.bf16.msra.mxu0 %v7782
    %8502 = vmatprep.subr.bf16.mxu0 %v7779
    %8503 = vmatpush1.bf16.msra.mxu0 %v7778
    %8504 = vmatprep.subr.bf16.mxu0 %v7775
    %8505 = vmatpush1.bf16.msra.mxu0 %v7774
    %8506 = vmatprep.subr.bf16.mxu0 %v7771
    %8507 = vmatpush1.bf16.msra.mxu0 %v7770
    %8508 = vmatprep.subr.bf16.mxu0 %v7831
    %8509 = vmatpush2.bf16.msra.mxu0 %v7830
    %8510 = vmatprep.subr.bf16.mxu0 %v7827
    %8511 = vmatpush2.bf16.msra.mxu0 %v7826
    %8512 = vmatprep.subr.bf16.mxu0 %v7823
    %8513 = vmatpush2.bf16.msra.mxu0 %v7822
    %8514 = vmatprep.subr.bf16.mxu0 %v7819
    %8515 = vmatpush2.bf16.msra.mxu0 %v7818
    %8516 = vmatprep.subr.bf16.mxu0 %v7815
    %8517 = vmatpush2.bf16.msra.mxu0 %v7814
    %8518 = vmatprep.subr.bf16.mxu0 %v7811
    %8519 = vmatpush2.bf16.msra.mxu0 %v7810
    %8520 = vmatprep.subr.bf16.mxu0 %v7807
    %8521 = vmatpush2.bf16.msra.mxu0 %v7806
    %8522 = vmatprep.subr.bf16.mxu0 %v7803
    %8523 = vmatpush2.bf16.msra.mxu0 %v7802
    %8524 = vmatprep.mubr.bf16.mxu0 %v6077
    %8525 = vmatmul.mubr.bf16.gmra.mxu0 %v6076
    %v8526 = vpop.f32.mrf.mxu0
    %v8527 = vadd.f32 %v8486, %v8526
    %v8528 = vpop.f32.mrf.mxu0
    %v8529 = vadd.f32 %v8488, %v8528
    %v8530 = vpop.f32.mrf.mxu0
    %v8531 = vpop.f32.mrf.mxu0
    %8532 = vdwg.mxu0
    %8533 = vmatprep.subr.bf16.mxu0 %v7863
    %8534 = vmatpush1.bf16.msra.mxu0 %v7862
    %8535 = vmatprep.subr.bf16.mxu0 %v7859
    %8536 = vmatpush1.bf16.msra.mxu0 %v7858
    %8537 = vmatprep.subr.bf16.mxu0 %v7855
    %8538 = vmatpush1.bf16.msra.mxu0 %v7854
    %8539 = vmatprep.subr.bf16.mxu0 %v7851
    %8540 = vmatpush1.bf16.msra.mxu0 %v7850
    %8541 = vmatprep.subr.bf16.mxu0 %v7847
    %8542 = vmatpush1.bf16.msra.mxu0 %v7846
    %8543 = vmatprep.subr.bf16.mxu0 %v7843
    %8544 = vmatpush1.bf16.msra.mxu0 %v7842
    %8545 = vmatprep.subr.bf16.mxu0 %v7839
    %8546 = vmatpush1.bf16.msra.mxu0 %v7838
    %8547 = vmatprep.subr.bf16.mxu0 %v7835
    %8548 = vmatpush1.bf16.msra.mxu0 %v7834
    %8549 = vmatprep.subr.bf16.mxu0 %v7895
    %8550 = vmatpush2.bf16.msra.mxu0 %v7894
    %8551 = vmatprep.subr.bf16.mxu0 %v7891
    %8552 = vmatpush2.bf16.msra.mxu0 %v7890
    %8553 = vmatprep.subr.bf16.mxu0 %v7887
    %8554 = vmatpush2.bf16.msra.mxu0 %v7886
    %8555 = vmatprep.subr.bf16.mxu0 %v7883
    %8556 = vmatpush2.bf16.msra.mxu0 %v7882
    %8557 = vmatprep.subr.bf16.mxu0 %v7879
    %8558 = vmatpush2.bf16.msra.mxu0 %v7878
    %8559 = vmatprep.subr.bf16.mxu0 %v7875
    %8560 = vmatpush2.bf16.msra.mxu0 %v7874
    %8561 = vmatprep.subr.bf16.mxu0 %v7871
    %8562 = vmatpush2.bf16.msra.mxu0 %v7870
    %8563 = vmatprep.subr.bf16.mxu0 %v7867
    %8564 = vmatpush2.bf16.msra.mxu0 %v7866
    %8565 = vmatprep.mubr.bf16.mxu0 %v6079
    %8566 = vmatmul.mubr.bf16.gmra.mxu0 %v6078
    %v8567 = vpop.f32.mrf.mxu0
    %v8568 = vadd.f32 %v8527, %v8567
    %v8569 = vpop.f32.mrf.mxu0
    %v8570 = vadd.f32 %v8529, %v8569
    %v8571 = vpop.f32.mrf.mxu0
    %v8572 = vpop.f32.mrf.mxu0
    %8573 = vdwg.mxu0
    %8574 = vmatprep.subr.bf16.mxu0 %v7927
    %8575 = vmatpush1.bf16.msra.mxu0 %v7926
    %8576 = vmatprep.subr.bf16.mxu0 %v7923
    %8577 = vmatpush1.bf16.msra.mxu0 %v7922
    %8578 = vmatprep.subr.bf16.mxu0 %v7919
    %8579 = vmatpush1.bf16.msra.mxu0 %v7918
    %8580 = vmatprep.subr.bf16.mxu0 %v7915
    %8581 = vmatpush1.bf16.msra.mxu0 %v7914
    %8582 = vmatprep.subr.bf16.mxu0 %v7911
    %8583 = vmatpush1.bf16.msra.mxu0 %v7910
    %8584 = vmatprep.subr.bf16.mxu0 %v7907
    %8585 = vmatpush1.bf16.msra.mxu0 %v7906
    %8586 = vmatprep.subr.bf16.mxu0 %v7903
    %8587 = vmatpush1.bf16.msra.mxu0 %v7902
    %8588 = vmatprep.subr.bf16.mxu0 %v7899
    %8589 = vmatpush1.bf16.msra.mxu0 %v7898
    %8590 = vmatprep.subr.bf16.mxu0 %v7959
    %8591 = vmatpush2.bf16.msra.mxu0 %v7958
    %8592 = vmatprep.subr.bf16.mxu0 %v7955
    %8593 = vmatpush2.bf16.msra.mxu0 %v7954
    %8594 = vmatprep.subr.bf16.mxu0 %v7951
    %8595 = vmatpush2.bf16.msra.mxu0 %v7950
    %8596 = vmatprep.subr.bf16.mxu0 %v7947
    %8597 = vmatpush2.bf16.msra.mxu0 %v7946
    %8598 = vmatprep.subr.bf16.mxu0 %v7943
    %8599 = vmatpush2.bf16.msra.mxu0 %v7942
    %8600 = vmatprep.subr.bf16.mxu0 %v7939
    %8601 = vmatpush2.bf16.msra.mxu0 %v7938
    %8602 = vmatprep.subr.bf16.mxu0 %v7935
    %8603 = vmatpush2.bf16.msra.mxu0 %v7934
    %8604 = vmatprep.subr.bf16.mxu0 %v7931
    %8605 = vmatpush2.bf16.msra.mxu0 %v7930
    %8606 = vmatprep.mubr.bf16.mxu0 %v6081
    %8607 = vmatmul.mubr.bf16.gmra.mxu0 %v6080
    %v8608 = vpop.f32.mrf.mxu0
    %v8609 = vadd.f32 %v8568, %v8608
    %v8610 = vpop.f32.mrf.mxu0
    %v8611 = vadd.f32 %v8570, %v8610
    %v8612 = vpop.f32.mrf.mxu0
    %v8613 = vpop.f32.mrf.mxu0
    %8614 = vdwg.mxu0
    %8615 = vmatprep.subr.bf16.mxu0 %v7991
    %8616 = vmatpush1.bf16.msra.mxu0 %v7990
    %8617 = vmatprep.subr.bf16.mxu0 %v7987
    %8618 = vmatpush1.bf16.msra.mxu0 %v7986
    %8619 = vmatprep.subr.bf16.mxu0 %v7983
    %8620 = vmatpush1.bf16.msra.mxu0 %v7982
    %8621 = vmatprep.subr.bf16.mxu0 %v7979
    %8622 = vmatpush1.bf16.msra.mxu0 %v7978
    %8623 = vmatprep.subr.bf16.mxu0 %v7975
    %8624 = vmatpush1.bf16.msra.mxu0 %v7974
    %8625 = vmatprep.subr.bf16.mxu0 %v7971
    %8626 = vmatpush1.bf16.msra.mxu0 %v7970
    %8627 = vmatprep.subr.bf16.mxu0 %v7967
    %8628 = vmatpush1.bf16.msra.mxu0 %v7966
    %8629 = vmatprep.subr.bf16.mxu0 %v7963
    %8630 = vmatpush1.bf16.msra.mxu0 %v7962
    %8631 = vmatprep.subr.bf16.mxu0 %v8023
    %8632 = vmatpush2.bf16.msra.mxu0 %v8022
    %8633 = vmatprep.subr.bf16.mxu0 %v8019
    %8634 = vmatpush2.bf16.msra.mxu0 %v8018
    %8635 = vmatprep.subr.bf16.mxu0 %v8015
    %8636 = vmatpush2.bf16.msra.mxu0 %v8014
    %8637 = vmatprep.subr.bf16.mxu0 %v8011
    %8638 = vmatpush2.bf16.msra.mxu0 %v8010
    %8639 = vmatprep.subr.bf16.mxu0 %v8007
    %8640 = vmatpush2.bf16.msra.mxu0 %v8006
    %8641 = vmatprep.subr.bf16.mxu0 %v8003
    %8642 = vmatpush2.bf16.msra.mxu0 %v8002
    %8643 = vmatprep.subr.bf16.mxu0 %v7999
    %8644 = vmatpush2.bf16.msra.mxu0 %v7998
    %8645 = vmatprep.subr.bf16.mxu0 %v7995
    %8646 = vmatpush2.bf16.msra.mxu0 %v7994
    %8647 = vmatprep.mubr.bf16.mxu0 %v6083
    %8648 = vmatmul.mubr.bf16.gmra.mxu0 %v6082
    %v8649 = vpop.f32.mrf.mxu0
    %v8650 = vadd.f32 %v8609, %v8649
    %v8651 = vpop.f32.mrf.mxu0
    %v8652 = vadd.f32 %v8611, %v8651
    %v8653 = vpop.f32.mrf.mxu0
    %v8654 = vpop.f32.mrf.mxu0
    %8655 = vdwg.mxu0
    %8656 = vmatprep.subr.bf16.mxu0 %v7673
    %8657 = vmatpush1.bf16.msra.mxu0 %v7672
    %8658 = vmatprep.subr.bf16.mxu0 %v7669
    %8659 = vmatpush1.bf16.msra.mxu0 %v7668
    %8660 = vmatprep.subr.bf16.mxu0 %v7665
    %8661 = vmatpush1.bf16.msra.mxu0 %v7664
    %8662 = vmatprep.subr.bf16.mxu0 %v7661
    %8663 = vmatpush1.bf16.msra.mxu0 %v7660
    %8664 = vmatprep.subr.bf16.mxu0 %v7657
    %8665 = vmatpush1.bf16.msra.mxu0 %v7656
    %8666 = vmatprep.subr.bf16.mxu0 %v7653
    %8667 = vmatpush1.bf16.msra.mxu0 %v7652
    %8668 = vmatprep.subr.bf16.mxu0 %v7649
    %8669 = vmatpush1.bf16.msra.mxu0 %v7648
    %8670 = vmatprep.subr.bf16.mxu0 %v7645
    %8671 = vmatpush1.bf16.msra.mxu0 %v7644
    %8672 = vmatprep.subr.bf16.mxu0 %v7705
    %8673 = vmatpush2.bf16.msra.mxu0 %v7704
    %8674 = vmatprep.subr.bf16.mxu0 %v7701
    %8675 = vmatpush2.bf16.msra.mxu0 %v7700
    %8676 = vmatprep.subr.bf16.mxu0 %v7697
    %8677 = vmatpush2.bf16.msra.mxu0 %v7696
    %8678 = vmatprep.subr.bf16.mxu0 %v7693
    %8679 = vmatpush2.bf16.msra.mxu0 %v7692
    %8680 = vmatprep.subr.bf16.mxu0 %v7689
    %8681 = vmatpush2.bf16.msra.mxu0 %v7688
    %8682 = vmatprep.subr.bf16.mxu0 %v7685
    %8683 = vmatpush2.bf16.msra.mxu0 %v7684
    %8684 = vmatprep.subr.bf16.mxu0 %v7681
    %8685 = vmatpush2.bf16.msra.mxu0 %v7680
    %8686 = vmatprep.subr.bf16.mxu0 %v7677
    %8687 = vmatpush2.bf16.msra.mxu0 %v7676
    %8688 = vmatprep.mubr.bf16.mxu0 %v6073
    %8689 = vmatmul.mubr.bf16.gmra.mxu0 %v6072
    %v8690 = vpop.f32.mrf.mxu0
    %v8691 = vadd.f32 %v6481, %v8690
    %v8692 = vpop.f32.mrf.mxu0
    %v8693 = vadd.f32 %v6485, %v8692
    %v8694 = vpop.f32.mrf.mxu0
    %v8695 = vpop.f32.mrf.mxu0
    %8696 = vdwg.mxu0
    %8697 = vmatprep.subr.bf16.mxu0 %v7737
    %8698 = vmatpush1.bf16.msra.mxu0 %v7736
    %8699 = vmatprep.subr.bf16.mxu0 %v7733
    %8700 = vmatpush1.bf16.msra.mxu0 %v7732
    %8701 = vmatprep.subr.bf16.mxu0 %v7729
    %8702 = vmatpush1.bf16.msra.mxu0 %v7728
    %8703 = vmatprep.subr.bf16.mxu0 %v7725
    %8704 = vmatpush1.bf16.msra.mxu0 %v7724
    %8705 = vmatprep.subr.bf16.mxu0 %v7721
    %8706 = vmatpush1.bf16.msra.mxu0 %v7720
    %8707 = vmatprep.subr.bf16.mxu0 %v7717
    %8708 = vmatpush1.bf16.msra.mxu0 %v7716
    %8709 = vmatprep.subr.bf16.mxu0 %v7713
    %8710 = vmatpush1.bf16.msra.mxu0 %v7712
    %8711 = vmatprep.subr.bf16.mxu0 %v7709
    %8712 = vmatpush1.bf16.msra.mxu0 %v7708
    %8713 = vmatprep.subr.bf16.mxu0 %v7769
    %8714 = vmatpush2.bf16.msra.mxu0 %v7768
    %8715 = vmatprep.subr.bf16.mxu0 %v7765
    %8716 = vmatpush2.bf16.msra.mxu0 %v7764
    %8717 = vmatprep.subr.bf16.mxu0 %v7761
    %8718 = vmatpush2.bf16.msra.mxu0 %v7760
    %8719 = vmatprep.subr.bf16.mxu0 %v7757
    %8720 = vmatpush2.bf16.msra.mxu0 %v7756
    %8721 = vmatprep.subr.bf16.mxu0 %v7753
    %8722 = vmatpush2.bf16.msra.mxu0 %v7752
    %8723 = vmatprep.subr.bf16.mxu0 %v7749
    %8724 = vmatpush2.bf16.msra.mxu0 %v7748
    %8725 = vmatprep.subr.bf16.mxu0 %v7745
    %8726 = vmatpush2.bf16.msra.mxu0 %v7744
    %8727 = vmatprep.subr.bf16.mxu0 %v7741
    %8728 = vmatpush2.bf16.msra.mxu0 %v7740
    %8729 = vmatprep.mubr.bf16.mxu0 %v6075
    %8730 = vmatmul.mubr.bf16.gmra.mxu0 %v6074
    %v8731 = vpop.f32.mrf.mxu0
    %v8732 = vadd.f32 %v8691, %v8731
    %v8733 = vpop.f32.mrf.mxu0
    %v8734 = vadd.f32 %v8693, %v8733
    %v8735 = vpop.f32.mrf.mxu0
    %v8736 = vpop.f32.mrf.mxu0
    %8737 = vdwg.mxu0
    %8738 = vmatprep.subr.bf16.mxu0 %v7801
    %8739 = vmatpush1.bf16.msra.mxu0 %v7800
    %8740 = vmatprep.subr.bf16.mxu0 %v7797
    %8741 = vmatpush1.bf16.msra.mxu0 %v7796
    %8742 = vmatprep.subr.bf16.mxu0 %v7793
    %8743 = vmatpush1.bf16.msra.mxu0 %v7792
    %8744 = vmatprep.subr.bf16.mxu0 %v7789
    %8745 = vmatpush1.bf16.msra.mxu0 %v7788
    %8746 = vmatprep.subr.bf16.mxu0 %v7785
    %8747 = vmatpush1.bf16.msra.mxu0 %v7784
    %8748 = vmatprep.subr.bf16.mxu0 %v7781
    %8749 = vmatpush1.bf16.msra.mxu0 %v7780
    %8750 = vmatprep.subr.bf16.mxu0 %v7777
    %8751 = vmatpush1.bf16.msra.mxu0 %v7776
    %8752 = vmatprep.subr.bf16.mxu0 %v7773
    %8753 = vmatpush1.bf16.msra.mxu0 %v7772
    %8754 = vmatprep.subr.bf16.mxu0 %v7833
    %8755 = vmatpush2.bf16.msra.mxu0 %v7832
    %8756 = vmatprep.subr.bf16.mxu0 %v7829
    %8757 = vmatpush2.bf16.msra.mxu0 %v7828
    %8758 = vmatprep.subr.bf16.mxu0 %v7825
    %8759 = vmatpush2.bf16.msra.mxu0 %v7824
    %8760 = vmatprep.subr.bf16.mxu0 %v7821
    %8761 = vmatpush2.bf16.msra.mxu0 %v7820
    %8762 = vmatprep.subr.bf16.mxu0 %v7817
    %8763 = vmatpush2.bf16.msra.mxu0 %v7816
    %8764 = vmatprep.subr.bf16.mxu0 %v7813
    %8765 = vmatpush2.bf16.msra.mxu0 %v7812
    %8766 = vmatprep.subr.bf16.mxu0 %v7809
    %8767 = vmatpush2.bf16.msra.mxu0 %v7808
    %8768 = vmatprep.subr.bf16.mxu0 %v7805
    %8769 = vmatpush2.bf16.msra.mxu0 %v7804
    %8770 = vmatprep.mubr.bf16.mxu0 %v6077
    %8771 = vmatmul.mubr.bf16.gmra.mxu0 %v6076
    %v8772 = vpop.f32.mrf.mxu0
    %v8773 = vadd.f32 %v8732, %v8772
    %v8774 = vpop.f32.mrf.mxu0
    %v8775 = vadd.f32 %v8734, %v8774
    %v8776 = vpop.f32.mrf.mxu0
    %v8777 = vpop.f32.mrf.mxu0
    %8778 = vdwg.mxu0
    %8779 = vmatprep.subr.bf16.mxu0 %v7865
    %8780 = vmatpush1.bf16.msra.mxu0 %v7864
    %8781 = vmatprep.subr.bf16.mxu0 %v7861
    %8782 = vmatpush1.bf16.msra.mxu0 %v7860
    %8783 = vmatprep.subr.bf16.mxu0 %v7857
    %8784 = vmatpush1.bf16.msra.mxu0 %v7856
    %8785 = vmatprep.subr.bf16.mxu0 %v7853
    %8786 = vmatpush1.bf16.msra.mxu0 %v7852
    %8787 = vmatprep.subr.bf16.mxu0 %v7849
    %8788 = vmatpush1.bf16.msra.mxu0 %v7848
    %8789 = vmatprep.subr.bf16.mxu0 %v7845
    %8790 = vmatpush1.bf16.msra.mxu0 %v7844
    %8791 = vmatprep.subr.bf16.mxu0 %v7841
    %8792 = vmatpush1.bf16.msra.mxu0 %v7840
    %8793 = vmatprep.subr.bf16.mxu0 %v7837
    %8794 = vmatpush1.bf16.msra.mxu0 %v7836
    %8795 = vmatprep.subr.bf16.mxu0 %v7897
    %8796 = vmatpush2.bf16.msra.mxu0 %v7896
    %8797 = vmatprep.subr.bf16.mxu0 %v7893
    %8798 = vmatpush2.bf16.msra.mxu0 %v7892
    %8799 = vmatprep.subr.bf16.mxu0 %v7889
    %8800 = vmatpush2.bf16.msra.mxu0 %v7888
    %8801 = vmatprep.subr.bf16.mxu0 %v7885
    %8802 = vmatpush2.bf16.msra.mxu0 %v7884
    %8803 = vmatprep.subr.bf16.mxu0 %v7881
    %8804 = vmatpush2.bf16.msra.mxu0 %v7880
    %8805 = vmatprep.subr.bf16.mxu0 %v7877
    %8806 = vmatpush2.bf16.msra.mxu0 %v7876
    %8807 = vmatprep.subr.bf16.mxu0 %v7873
    %8808 = vmatpush2.bf16.msra.mxu0 %v7872
    %8809 = vmatprep.subr.bf16.mxu0 %v7869
    %8810 = vmatpush2.bf16.msra.mxu0 %v7868
    %8811 = vmatprep.mubr.bf16.mxu0 %v6079
    %8812 = vmatmul.mubr.bf16.gmra.mxu0 %v6078
    %v8813 = vpop.f32.mrf.mxu0
    %v8814 = vadd.f32 %v8773, %v8813
    %v8815 = vpop.f32.mrf.mxu0
    %v8816 = vadd.f32 %v8775, %v8815
    %v8817 = vpop.f32.mrf.mxu0
    %v8818 = vpop.f32.mrf.mxu0
    %8819 = vdwg.mxu0
    %8820 = vmatprep.subr.bf16.mxu0 %v7929
    %8821 = vmatpush1.bf16.msra.mxu0 %v7928
    %8822 = vmatprep.subr.bf16.mxu0 %v7925
    %8823 = vmatpush1.bf16.msra.mxu0 %v7924
    %8824 = vmatprep.subr.bf16.mxu0 %v7921
    %8825 = vmatpush1.bf16.msra.mxu0 %v7920
    %8826 = vmatprep.subr.bf16.mxu0 %v7917
    %8827 = vmatpush1.bf16.msra.mxu0 %v7916
    %8828 = vmatprep.subr.bf16.mxu0 %v7913
    %8829 = vmatpush1.bf16.msra.mxu0 %v7912
    %8830 = vmatprep.subr.bf16.mxu0 %v7909
    %8831 = vmatpush1.bf16.msra.mxu0 %v7908
    %8832 = vmatprep.subr.bf16.mxu0 %v7905
    %8833 = vmatpush1.bf16.msra.mxu0 %v7904
    %8834 = vmatprep.subr.bf16.mxu0 %v7901
    %8835 = vmatpush1.bf16.msra.mxu0 %v7900
    %8836 = vmatprep.subr.bf16.mxu0 %v7961
    %8837 = vmatpush2.bf16.msra.mxu0 %v7960
    %8838 = vmatprep.subr.bf16.mxu0 %v7957
    %8839 = vmatpush2.bf16.msra.mxu0 %v7956
    %8840 = vmatprep.subr.bf16.mxu0 %v7953
    %8841 = vmatpush2.bf16.msra.mxu0 %v7952
    %8842 = vmatprep.subr.bf16.mxu0 %v7949
    %8843 = vmatpush2.bf16.msra.mxu0 %v7948
    %8844 = vmatprep.subr.bf16.mxu0 %v7945
    %8845 = vmatpush2.bf16.msra.mxu0 %v7944
    %8846 = vmatprep.subr.bf16.mxu0 %v7941
    %8847 = vmatpush2.bf16.msra.mxu0 %v7940
    %8848 = vmatprep.subr.bf16.mxu0 %v7937
    %8849 = vmatpush2.bf16.msra.mxu0 %v7936
    %8850 = vmatprep.subr.bf16.mxu0 %v7933
    %8851 = vmatpush2.bf16.msra.mxu0 %v7932
    %8852 = vmatprep.mubr.bf16.mxu0 %v6081
    %8853 = vmatmul.mubr.bf16.gmra.mxu0 %v6080
    %v8854 = vpop.f32.mrf.mxu0
    %v8855 = vadd.f32 %v8814, %v8854
    %v8856 = vpop.f32.mrf.mxu0
    %v8857 = vadd.f32 %v8816, %v8856
    %v8858 = vpop.f32.mrf.mxu0
    %v8859 = vpop.f32.mrf.mxu0
    %8860 = vdwg.mxu0
    %8861 = vmatprep.subr.bf16.mxu0 %v7993
    %8862 = vmatpush1.bf16.msra.mxu0 %v7992
    %8863 = vmatprep.subr.bf16.mxu0 %v7989
    %8864 = vmatpush1.bf16.msra.mxu0 %v7988
    %8865 = vmatprep.subr.bf16.mxu0 %v7985
    %8866 = vmatpush1.bf16.msra.mxu0 %v7984
    %8867 = vmatprep.subr.bf16.mxu0 %v7981
    %8868 = vmatpush1.bf16.msra.mxu0 %v7980
    %8869 = vmatprep.subr.bf16.mxu0 %v7977
    %8870 = vmatpush1.bf16.msra.mxu0 %v7976
    %8871 = vmatprep.subr.bf16.mxu0 %v7973
    %8872 = vmatpush1.bf16.msra.mxu0 %v7972
    %8873 = vmatprep.subr.bf16.mxu0 %v7969
    %8874 = vmatpush1.bf16.msra.mxu0 %v7968
    %8875 = vmatprep.subr.bf16.mxu0 %v7965
    %8876 = vmatpush1.bf16.msra.mxu0 %v7964
    %8877 = vmatprep.subr.bf16.mxu0 %v8025
    %8878 = vmatpush2.bf16.msra.mxu0 %v8024
    %8879 = vmatprep.subr.bf16.mxu0 %v8021
    %8880 = vmatpush2.bf16.msra.mxu0 %v8020
    %8881 = vmatprep.subr.bf16.mxu0 %v8017
    %8882 = vmatpush2.bf16.msra.mxu0 %v8016
    %8883 = vmatprep.subr.bf16.mxu0 %v8013
    %8884 = vmatpush2.bf16.msra.mxu0 %v8012
    %8885 = vmatprep.subr.bf16.mxu0 %v8009
    %8886 = vmatpush2.bf16.msra.mxu0 %v8008
    %8887 = vmatprep.subr.bf16.mxu0 %v8005
    %8888 = vmatpush2.bf16.msra.mxu0 %v8004
    %8889 = vmatprep.subr.bf16.mxu0 %v8001
    %8890 = vmatpush2.bf16.msra.mxu0 %v8000
    %8891 = vmatprep.subr.bf16.mxu0 %v7997
    %8892 = vmatpush2.bf16.msra.mxu0 %v7996
    %8893 = vmatprep.mubr.bf16.mxu0 %v6083
    %8894 = vmatmul.mubr.bf16.gmra.mxu0 %v6082
    %v8895 = vpop.f32.mrf.mxu0
    %v8896 = vadd.f32 %v8855, %v8895
    %v8897 = vpop.f32.mrf.mxu0
    %v8898 = vadd.f32 %v8857, %v8897
    %v8899 = vpop.f32.mrf.mxu0
    %v8900 = vpop.f32.mrf.mxu0
    %8901 = vdwg.mxu0
    %v8902 = vmax.f32 %v8650, 0.0
    %v8903 = vmax.f32 %v8652, 0.0
    %v8904 = vmax.f32 %v8896, 0.0
    %v8905 = vmax.f32 %v8898, 0.0
    %v8906 = vld [vmem:[%s8] sm:$0xff]
    %v8907 = vld [vmem:[%s8 + $0x8] sm:$0xff]
    %v8908 = vld [vmem:[%s8 + $0x10] sm:$0xff]
    %v8909 = vld [vmem:[%s8 + $0x18] sm:$0xff]
    %v8910 = vld [vmem:[%s8 + $0x20] sm:$0xff]
    %v8911 = vld [vmem:[%s8 + $0x28] sm:$0xff]
    %v8912 = vld [vmem:[%s8 + $0x30] sm:$0xff]
    %v8913 = vld [vmem:[%s8 + $0x38] sm:$0xff]
    %v8914 = vld [vmem:[%s8 + $0x40] sm:$0xff]
    %v8915 = vld [vmem:[%s8 + $0x48] sm:$0xff]
    %v8916 = vld [vmem:[%s8 + $0x50] sm:$0xff]
    %v8917 = vld [vmem:[%s8 + $0x58] sm:$0xff]
    %v8918 = vld [vmem:[%s8 + $0x60] sm:$0xff]
    %v8919 = vld [vmem:[%s8 + $0x68] sm:$0xff]
    %v8920 = vld [vmem:[%s8 + $0x70] sm:$0xff]
    %v8921 = vld [vmem:[%s8 + $0x78] sm:$0xff]
    %v8922 = vld [vmem:[%s8 + $0x80] sm:$0xff]
    %v8923 = vld [vmem:[%s8 + $0x88] sm:$0xff]
    %v8924 = vld [vmem:[%s8 + $0x90] sm:$0xff]
    %v8925 = vld [vmem:[%s8 + $0x98] sm:$0xff]
    %v8926 = vld [vmem:[%s8 + $0xa0] sm:$0xff]
    %v8927 = vld [vmem:[%s8 + $0xa8] sm:$0xff]
    %v8928 = vld [vmem:[%s8 + $0xb0] sm:$0xff]
    %v8929 = vld [vmem:[%s8 + $0xb8] sm:$0xff]
    %v8930 = vld [vmem:[%s8 + $0xc0] sm:$0xff]
    %v8931 = vld [vmem:[%s8 + $0xc8] sm:$0xff]
    %v8932 = vld [vmem:[%s8 + $0xd0] sm:$0xff]
    %v8933 = vld [vmem:[%s8 + $0xd8] sm:$0xff]
    %v8934 = vld [vmem:[%s8 + $0xe0] sm:$0xff]
    %v8935 = vld [vmem:[%s8 + $0xe8] sm:$0xff]
    %v8936 = vld [vmem:[%s8 + $0xf0] sm:$0xff]
    %v8937 = vld [vmem:[%s8 + $0xf8] sm:$0xff]
    %v8938 = vld [vmem:[%s8 + $0x100] sm:$0xff]
    %v8939 = vld [vmem:[%s8 + $0x108] sm:$0xff]
    %v8940 = vld [vmem:[%s8 + $0x110] sm:$0xff]
    %v8941 = vld [vmem:[%s8 + $0x118] sm:$0xff]
    %v8942 = vld [vmem:[%s8 + $0x120] sm:$0xff]
    %v8943 = vld [vmem:[%s8 + $0x128] sm:$0xff]
    %v8944 = vld [vmem:[%s8 + $0x130] sm:$0xff]
    %v8945 = vld [vmem:[%s8 + $0x138] sm:$0xff]
    %v8946 = vld [vmem:[%s8 + $0x140] sm:$0xff]
    %v8947 = vld [vmem:[%s8 + $0x148] sm:$0xff]
    %v8948 = vld [vmem:[%s8 + $0x150] sm:$0xff]
    %v8949 = vld [vmem:[%s8 + $0x158] sm:$0xff]
    %v8950 = vld [vmem:[%s8 + $0x160] sm:$0xff]
    %v8951 = vld [vmem:[%s8 + $0x168] sm:$0xff]
    %v8952 = vld [vmem:[%s8 + $0x170] sm:$0xff]
    %v8953 = vld [vmem:[%s8 + $0x178] sm:$0xff]
    %v8954 = vld [vmem:[%s8 + $0x180] sm:$0xff]
    %v8955 = vld [vmem:[%s8 + $0x188] sm:$0xff]
    %v8956 = vld [vmem:[%s8 + $0x190] sm:$0xff]
    %v8957 = vld [vmem:[%s8 + $0x198] sm:$0xff]
    %v8958 = vld [vmem:[%s8 + $0x1a0] sm:$0xff]
    %v8959 = vld [vmem:[%s8 + $0x1a8] sm:$0xff]
    %v8960 = vld [vmem:[%s8 + $0x1b0] sm:$0xff]
    %v8961 = vld [vmem:[%s8 + $0x1b8] sm:$0xff]
    %v8962 = vld [vmem:[%s8 + $0x1c0] sm:$0xff]
    %v8963 = vld [vmem:[%s8 + $0x1c8] sm:$0xff]
    %v8964 = vld [vmem:[%s8 + $0x1d0] sm:$0xff]
    %v8965 = vld [vmem:[%s8 + $0x1d8] sm:$0xff]
    %v8966 = vld [vmem:[%s8 + $0x1e0] sm:$0xff]
    %v8967 = vld [vmem:[%s8 + $0x1e8] sm:$0xff]
    %v8968 = vld [vmem:[%s8 + $0x1f0] sm:$0xff]
    %v8969 = vld [vmem:[%s8 + $0x1f8] sm:$0xff]
    %v8970 = vld [vmem:[%s9] sm:$0x1]
    %v8972 = vlaneseq
    %v8973 = vshrl.u32 %v8972, 7
    %v8974 = vsub.s32 0, %v8973
    %v8975 = vrot.slane %v8970, %v8974
    %8977 = vmatprep.subr.mxu0 0.0
    %8978 = vmatpush1.msra.mxu0 %v8921
    %8979 = vmatprep.subr.mxu0 0.0
    %8980 = vmatpush1.msra.mxu0 %v8920
    %8981 = vmatprep.subr.mxu0 0.0
    %8982 = vmatpush1.msra.mxu0 %v8919
    %8983 = vmatprep.subr.mxu0 0.0
    %8984 = vmatpush1.msra.mxu0 %v8918
    %8985 = vmatprep.subr.mxu0 0.0
    %8986 = vmatpush1.msra.mxu0 %v8917
    %8987 = vmatprep.subr.mxu0 0.0
    %8988 = vmatpush1.msra.mxu0 %v8916
    %8989 = vmatprep.subr.mxu0 0.0
    %8990 = vmatpush1.msra.mxu0 %v8915
    %8991 = vmatprep.subr.mxu0 0.0
    %8992 = vmatpush1.msra.mxu0 %v8914
    %8993 = vmatprep.subr.mxu0 0.0
    %8994 = vmatpush1.msra.mxu0 %v8913
    %8995 = vmatprep.subr.mxu0 0.0
    %8996 = vmatpush1.msra.mxu0 %v8912
    %8997 = vmatprep.subr.mxu0 0.0
    %8998 = vmatpush1.msra.mxu0 %v8911
    %8999 = vmatprep.subr.mxu0 0.0
    %9000 = vmatpush1.msra.mxu0 %v8910
    %9001 = vmatprep.subr.mxu0 0.0
    %9002 = vmatpush1.msra.mxu0 %v8909
    %9003 = vmatprep.subr.mxu0 0.0
    %9004 = vmatpush1.msra.mxu0 %v8908
    %9005 = vmatprep.subr.mxu0 0.0
    %9006 = vmatpush1.msra.mxu0 %v8907
    %9007 = vmatprep.subr.mxu0 0.0
    %9008 = vmatpush1.msra.mxu0 %v8906
    %9009 = vmatprep.subr.mxu0 0.0
    %9010 = vmatpush2.msra.mxu0 %v8937
    %9011 = vmatprep.subr.mxu0 0.0
    %9012 = vmatpush2.msra.mxu0 %v8936
    %9013 = vmatprep.subr.mxu0 0.0
    %9014 = vmatpush2.msra.mxu0 %v8935
    %9015 = vmatprep.subr.mxu0 0.0
    %9016 = vmatpush2.msra.mxu0 %v8934
    %9017 = vmatprep.subr.mxu0 0.0
    %9018 = vmatpush2.msra.mxu0 %v8933
    %9019 = vmatprep.subr.mxu0 0.0
    %9020 = vmatpush2.msra.mxu0 %v8932
    %9021 = vmatprep.subr.mxu0 0.0
    %9022 = vmatpush2.msra.mxu0 %v8931
    %9023 = vmatprep.subr.mxu0 0.0
    %9024 = vmatpush2.msra.mxu0 %v8930
    %9025 = vmatprep.subr.mxu0 0.0
    %9026 = vmatpush2.msra.mxu0 %v8929
    %9027 = vmatprep.subr.mxu0 0.0
    %9028 = vmatpush2.msra.mxu0 %v8928
    %9029 = vmatprep.subr.mxu0 0.0
    %9030 = vmatpush2.msra.mxu0 %v8927
    %9031 = vmatprep.subr.mxu0 0.0
    %9032 = vmatpush2.msra.mxu0 %v8926
    %9033 = vmatprep.subr.mxu0 0.0
    %9034 = vmatpush2.msra.mxu0 %v8925
    %9035 = vmatprep.subr.mxu0 0.0
    %9036 = vmatpush2.msra.mxu0 %v8924
    %9037 = vmatprep.subr.mxu0 0.0
    %9038 = vmatpush2.msra.mxu0 %v8923
    %9039 = vmatprep.subr.mxu0 0.0
    %9040 = vmatpush2.msra.mxu0 %v8922
    %9041 = vmatprep.mubr.f32.mxu0 %v8903
    %9042 = vmatmul.mubr.f32.gmra.mxu0 %v8902
    %v9043 = vpop.f32.mrf.mxu0
    %v9044 = vadd.f32 %v8975, %v9043
    %v9045 = vpop.f32.mrf.mxu0
    %9046 = vdwg.mxu0
    %9047 = vmatprep.subr.mxu0 0.0
    %9048 = vmatpush1.msra.mxu0 %v8953
    %9049 = vmatprep.subr.mxu0 0.0
    %9050 = vmatpush1.msra.mxu0 %v8952
    %9051 = vmatprep.subr.mxu0 0.0
    %9052 = vmatpush1.msra.mxu0 %v8951
    %9053 = vmatprep.subr.mxu0 0.0
    %9054 = vmatpush1.msra.mxu0 %v8950
    %9055 = vmatprep.subr.mxu0 0.0
    %9056 = vmatpush1.msra.mxu0 %v8949
    %9057 = vmatprep.subr.mxu0 0.0
    %9058 = vmatpush1.msra.mxu0 %v8948
    %9059 = vmatprep.subr.mxu0 0.0
    %9060 = vmatpush1.msra.mxu0 %v8947
    %9061 = vmatprep.subr.mxu0 0.0
    %9062 = vmatpush1.msra.mxu0 %v8946
    %9063 = vmatprep.subr.mxu0 0.0
    %9064 = vmatpush1.msra.mxu0 %v8945
    %9065 = vmatprep.subr.mxu0 0.0
    %9066 = vmatpush1.msra.mxu0 %v8944
    %9067 = vmatprep.subr.mxu0 0.0
    %9068 = vmatpush1.msra.mxu0 %v8943
    %9069 = vmatprep.subr.mxu0 0.0
    %9070 = vmatpush1.msra.mxu0 %v8942
    %9071 = vmatprep.subr.mxu0 0.0
    %9072 = vmatpush1.msra.mxu0 %v8941
    %9073 = vmatprep.subr.mxu0 0.0
    %9074 = vmatpush1.msra.mxu0 %v8940
    %9075 = vmatprep.subr.mxu0 0.0
    %9076 = vmatpush1.msra.mxu0 %v8939
    %9077 = vmatprep.subr.mxu0 0.0
    %9078 = vmatpush1.msra.mxu0 %v8938
    %9079 = vmatprep.subr.mxu0 0.0
    %9080 = vmatpush2.msra.mxu0 %v8969
    %9081 = vmatprep.subr.mxu0 0.0
    %9082 = vmatpush2.msra.mxu0 %v8968
    %9083 = vmatprep.subr.mxu0 0.0
    %9084 = vmatpush2.msra.mxu0 %v8967
    %9085 = vmatprep.subr.mxu0 0.0
    %9086 = vmatpush2.msra.mxu0 %v8966
    %9087 = vmatprep.subr.mxu0 0.0
    %9088 = vmatpush2.msra.mxu0 %v8965
    %9089 = vmatprep.subr.mxu0 0.0
    %9090 = vmatpush2.msra.mxu0 %v8964
    %9091 = vmatprep.subr.mxu0 0.0
    %9092 = vmatpush2.msra.mxu0 %v8963
    %9093 = vmatprep.subr.mxu0 0.0
    %9094 = vmatpush2.msra.mxu0 %v8962
    %9095 = vmatprep.subr.mxu0 0.0
    %9096 = vmatpush2.msra.mxu0 %v8961
    %9097 = vmatprep.subr.mxu0 0.0
    %9098 = vmatpush2.msra.mxu0 %v8960
    %9099 = vmatprep.subr.mxu0 0.0
    %9100 = vmatpush2.msra.mxu0 %v8959
    %9101 = vmatprep.subr.mxu0 0.0
    %9102 = vmatpush2.msra.mxu0 %v8958
    %9103 = vmatprep.subr.mxu0 0.0
    %9104 = vmatpush2.msra.mxu0 %v8957
    %9105 = vmatprep.subr.mxu0 0.0
    %9106 = vmatpush2.msra.mxu0 %v8956
    %9107 = vmatprep.subr.mxu0 0.0
    %9108 = vmatpush2.msra.mxu0 %v8955
    %9109 = vmatprep.subr.mxu0 0.0
    %9110 = vmatpush2.msra.mxu0 %v8954
    %9111 = vmatprep.mubr.f32.mxu0 %v8905
    %9112 = vmatmul.mubr.f32.gmra.mxu0 %v8904
    %v9113 = vpop.f32.mrf.mxu0
    %v9114 = vadd.f32 %v9044, %v9113
    %v9115 = vpop.f32.mrf.mxu0
    %9116 = vdwg.mxu0
    %vm9117 = vcmask 25600
    %9118 = vst.msk [vmem:[#allocation8] sm:$0x3] %vm9117, %v9114
    // Predicated region
    $region144: #{qlearning_forward.1} parent=1 // pred_check
      _
    $region145: #{qlearning_forward.1} parent=1 // pred_check_branch
      %9120 = sbr.rel (0) target = $region147
    $region146: #{qlearning_forward.1} parent=1 // pred_region
      %s9122 = ssub.s32 32, 32
      %9123 = vsyncadd [#allocation9], %s9122
      %s9125 = sshll.u32 [#allocation8], 4
      %s9126 = int_to_ptr.vmem [resolvable:$true] %s9125
      %9128 = dma.vmem_to_hbm [thread:$0]  %s9126, 32, %s13, [#allocation9]
    $region147: #{qlearning_forward.1} parent=1 // pred_fallthru
      _
    // Predicated region
    $region148: #{qlearning_forward.1} parent=1 // pred_check
      _
    $region149: #{qlearning_forward.1} parent=1 // pred_check_branch
      %9130 = sbr.rel (0) target = $region151
    $region150: #{qlearning_forward.1} parent=1 // pred_region
      %9131 = dma.done [#allocation9], 32
    $region151: #{qlearning_forward.1} parent=1 // pred_fallthru
      _
    %9132 = vsyncpa [#allocation9], 1
  %9133 = vsyncmov [#allocation7]
  %s9134 = vpop.sfrf %9133
  %p9135 = scmp.eq.s32.totalorder %s9134, 0
  %p9136 = pneg %p9135
  %9138 = shalt.err (%p9136)
  %s9139 = scalar_lea.sflag [#allocation7], 1
  %9140 = vsyncmov %s9139
  %s9141 = vpop.sfrf %9140
  %p9142 = scmp.eq.s32.totalorder %s9141, 0
  %p9143 = pneg %p9142
  %9145 = shalt.err (%p9143)
  %s9146 = scalar_lea.sflag [#allocation7], 2
  %9147 = vsyncmov %s9146
  %s9148 = vpop.sfrf %9147
  %p9149 = scmp.eq.s32.totalorder %s9148, 0
  %p9150 = pneg %p9149
  %9152 = shalt.err (%p9150)

</llo_original>
